<compile_context>
chip_gen: v7x
topology: tpu7x:2x2x1
jax: 0.10.0
libtpu: 0.0.40
codegen_flags: <defaults>
</compile_context>

<pallas_src>
import functools

import jax
import jax.numpy as jnp
from jax.experimental import pallas as pl
from jax.experimental.pallas import tpu as pltpu

_LANE = 128
_MXU_DTYPE = jnp.bfloat16  # matmul operand dtype (accumulation is f32)


def _leaky(x, slope):
    # valid for 0 < slope < 1
    return jnp.maximum(x, slope * x)


def _round_up(x, m):
    return (x + m - 1) // m * m


# ----------------------------------------------------------------------------- kernel ----
def hierarchy_kernel(
    x_ref,      # [TB, G*P, Cin]  bf16  raw point features (channel-last, points flattened)
    eaug_ref,   # [TB, G, 8]      f32   [e0, e1, e2, 1, 0, 0, 0, 0]
    pw_ref,     # [Cin, 2*D]      bf16  cols [0:Cin]  = w1 * bn1_scale, cols [D:2D] = w2 * bn2_scale
    pb_ref,     # [2, D]          f32   row 0[:Cin] = bn1_shift, row 1 = bn2_shift
    gw_ref,     # [4, D, 2*D]     bf16  per graph layer: [ (Wself+Wdiff)*s  |  Wdiff*s ]
    web_ref,    # [8, 4*D]        f32   per layer cols: rows 0..2 = Wedge*s, row 3 = BN shift
    out_ref,    # [TB, D]         f32
):
    TB, GP, Cin = x_ref.shape
    G = eaug_ref.shape[1]
    P = GP // G
    D = out_ref.shape[-1]

    # ---- PointNetEmbedder: two 1x1 convs (channel matmuls) + folded-BN shift + LeakyReLU(0.2)
    x = x_ref[...].reshape(TB * GP, Cin)                                   # bf16
    w1 = pw_ref[0:Cin, 0:Cin]                                              # (Cin, Cin) bf16
    w2 = pw_ref[:, D:2 * D]                                                # (Cin, D)   bf16
    b1 = pb_ref[0:1, 0:Cin]                                                # (1, Cin)   f32
    b2 = pb_ref[1:2, :]                                                    # (1, D)     f32
    h = jnp.dot(x, w1, preferred_element_type=jnp.float32)
    h = _leaky(h + b1, 0.2)
    h = jnp.dot(h.astype(_MXU_DTYPE), w2, preferred_element_type=jnp.float32)
    h = _leaky(h + b2, 0.2)                                                # (TB*GP, D) f32

    # ---- group embeddings: max over the P points of each group (sublane reduce) ----
    g = jnp.max(h.reshape(TB * G, P, D), axis=1)                           # (TB*G, D) f32

    # ---- edge_term + BN shift for ALL 4 graph layers in one small MXU matmul ----
    e = eaug_ref[...].reshape(TB * G, 8)                                   # f32
    ebias = jnp.dot(e, web_ref[...], preferred_element_type=jnp.float32)   # (TB*G, 4*D)
    ebias = ebias.reshape(TB, G, 4 * D)

    # ---- GraphEmbedder: 4 x (fused self/diff matmul + edge/bias add + LeakyReLU(0.1)) ----
    #   dot(x, Wself) + dot(x - x0, Wdiff) == dot(x, Wself + Wdiff) - dot(x0, Wdiff)
    # and dot(x0, Wdiff) is read from row 0 of the right half of the widened matmul.
    xb = g.astype(_MXU_DTYPE)                                              # (TB*G, D)
    act = None
    for i in range(4):                                                     # static unroll
        both = jnp.dot(xb, gw_ref[i], preferred_element_type=jnp.float32)  # (TB*G, 2*D)
        both = both.reshape(TB, G, 2 * D)
        main = both[:, :, 0:D]                                             # dot(x, Wself+Wdiff)
        first = both[:, 0:1, D:2 * D]                                      # dot(x0, Wdiff)
        y = main - first + ebias[:, :, i * D:(i + 1) * D]
        act = _leaky(y, 0.1)                                               # (TB, G, D) f32
        xb = act.astype(_MXU_DTYPE).reshape(TB * G, D)

    # ---- final max over groups, stored as a lane/sublane-dense (TB, D) slab ----
    out_ref[...] = jnp.max(act, axis=1)


# -------------------------------------------------------------------------- parameters ----
def init_params(key, input_dim, embed_dim, graph_dim):
    """Deterministic raw parameters. BN (eval mode) is represented as (scale, shift)."""
    def bn_fold(k, c):
        k1, k2, k3, k4 = jax.random.split(k, 4)
        gamma = 1.0 + 0.1 * jax.random.normal(k1, (1, c), jnp.float32)
        beta = 0.1 * jax.random.normal(k2, (1, c), jnp.float32)
        mean = 0.1 * jax.random.normal(k3, (1, c), jnp.float32)
        var = 1.0 + 0.5 * jax.random.uniform(k4, (1, c), jnp.float32)
        scale = gamma / jnp.sqrt(var + 1e-5)
        shift = beta - mean * scale
        return scale, shift

    keys = jax.random.split(key, 12)
    p = {}
    # PointNetEmbedder
    p["w1"] = 0.1 * jax.random.normal(keys[0], (input_dim, input_dim), jnp.float32)
    p["s1"], p["b1"] = bn_fold(keys[1], input_dim)
    p["w2"] = 0.1 * jax.random.normal(keys[2], (input_dim, embed_dim), jnp.float32)
    p["s2"], p["b2"] = bn_fold(keys[3], embed_dim)
    # GraphEmbedder (4 layers)
    p["gw"], p["gs"], p["gb"] = [], [], []
    in_dims = [2 * embed_dim + 3] + [2 * graph_dim + 3] * 3
    for i in range(4):
        p["gw"].append(0.1 * jax.random.normal(keys[4 + 2 * i],
                                               (in_dims[i], graph_dim), jnp.float32))
        s, b = bn_fold(keys[5 + 2 * i], graph_dim)
        p["gs"].append(s)
        p["gb"].append(b)
    return p


def pack_params(p, input_dim, embed_dim, graph_dim):
    """Fold BN scale into weights, fuse self+diff, widen N with Wdiff, pack edge+bias into one
    MXU operand, zero-pad channels to the 128 lane width, and consolidate into 4 arrays.
    All padded weight/bias lanes are exactly zero and leaky(0) == 0, so padding never leaks
    into the final max (wrapper slices graph_dim back)."""
    D = _round_up(max(embed_dim, graph_dim), _LANE)
    Cin = input_dim
    assert Cin <= D and embed_dim <= D and graph_dim <= D

    # PointNet conv weights (BN scale folded) packed into one bf16 slab + one f32 shift slab.
    pw = jnp.zeros((Cin, 2 * D), jnp.float32)
    pw = pw.at[:, :Cin].set(p["w1"] * p["s1"])
    pw = pw.at[:, D:D + embed_dim].set(p["w2"] * p["s2"])
    pb = jnp.zeros((2, D), jnp.float32)
    pb = pb.at[0, :Cin].set(p["b1"][0])
    pb = pb.at[1, :embed_dim].set(p["b2"][0])

    # Graph layers: per layer [ (Wself+Wdiff)*s | Wdiff*s ]  and  [Wedge*s ; shift] columns.
    gw = jnp.zeros((4, D, 2 * D), jnp.float32)
    web = jnp.zeros((8, 4 * D), jnp.float32)
    in_dims = [embed_dim] + [graph_dim] * 3
    for i in range(4):
        Cl = in_dims[i]
        w = p["gw"][i] * p["gs"][i]                       # (2*Cl+3, graph_dim), BN scale folded
        w_self, w_diff, w_edge = w[:Cl], w[Cl:2 * Cl], w[2 * Cl:]
        gw = gw.at[i, :Cl, :graph_dim].set(w_self + w_diff)
        gw = gw.at[i, :Cl, D:D + graph_dim].set(w_diff)
        web = web.at[:3, i * D:i * D + graph_dim].set(w_edge)
        web = web.at[3, i * D:i * D + graph_dim].set(p["gb"][i][0])

    return {
        "pw": pw.astype(_MXU_DTYPE),       # (Cin, 2D)  bf16
        "pb": pb,                          # (2, D)     f32
        "gw": gw.astype(_MXU_DTYPE),       # (4, D, 2D) bf16
        "web": web,                        # (8, 4D)    f32
    }


# ------------------------------------------------------------------------ tile selection ----
def _vmem_limit_bytes():
    """Per-generation VMEM budget: v7x has 64 MiB physical per TC, v5e/v6e have 128 MiB."""
    try:
        kind = jax.devices()[0].device_kind.lower()
    except Exception:
        return 32 * 1024 * 1024
    if "7" in kind:                      # v7x: 64 MiB physical
        return 48 * 1024 * 1024
    return 80 * 1024 * 1024              # v5e / v6e (128 MiB physical)


def _per_batch_vmem_bytes(G, P, D):
    """Rough per-batch-element VMEM footprint (double-buffered input blocks + f32 temps)."""
    gp = G * P
    x_blk = 2 * gp * _LANE * 2           # x block, Cin lane-padded to 128, bf16, 2 buffers
    e_blk = 2 * G * _LANE * 4            # edge block, 8 -> 128 lanes, f32, 2 buffers
    conv = gp * D * 4                    # conv activations (f32)
    graph = G * (2 * D) * 4 + G * (4 * D) * 4 + 2 * G * D * 4   # both / ebias / act + xb
    out_blk = 2 * D * 4
    return x_blk + e_blk + conv + graph + out_blk


def _auto_tile_b(B, G, cap):
    """Largest batch tile that fits the VMEM cap, restricted to sublane-dense output blocks
    (tile_b % 8 == 0 or tile_b == B).  Keep >= 2 grid steps (v7x 2-TC sharding) once a
    half-size tile already gives >= 256 matmul rows per step."""
    divs = [t for t in range(1, B + 1)
            if B % t == 0 and t <= cap and (t % 8 == 0 or t == B)]
    if not divs:
        return B if B <= cap else 1
    best = divs[-1]
    multi = [t for t in divs if B // t >= 2]
    if multi and multi[-1] * G >= 256:
        best = multi[-1]
    return best


# ----------------------------------------------------------------------------- wrapper ----
@functools.partial(jax.jit, static_argnames=("graph_dim", "tile_b"))
def single_hierarchy_forward(raw_features_nchw, edge_vectors, packed, *, graph_dim, tile_b=None):
    # raw_features_nchw: [B, Cin, G, P], edge_vectors: [B, 3, G]  (PyTorch NCHW convention)
    B, Cin, G, P = raw_features_nchw.shape
    D = packed["pb"].shape[-1]
    # Kernel layout requirements (sublane-aligned reshapes); generalizing needs wrapper padding.
    assert P % 8 == 0, "points-per-group must be a multiple of 8"
    assert G % 8 == 0, "groups must be a multiple of 8"

    # Layout plumbing stays in XLA: channel-last, flatten points, bf16 halves HBM traffic.
    x = jnp.transpose(raw_features_nchw, (0, 2, 3, 1)).reshape(B, G * P, Cin).astype(_MXU_DTYPE)
    edge = jnp.transpose(edge_vectors, (0, 2, 1)).astype(jnp.float32)       # (B, G, 3)
    # Augment edges with a constant-1 column (bias row of the fused edge+bias matmul) and
    # zero-pad the contraction dim to 8 sublanes.
    e_aug = jnp.concatenate(
        [edge, jnp.ones((B, G, 1), jnp.float32), jnp.zeros((B, G, 4), jnp.float32)], axis=-1)

    vmem_limit = _vmem_limit_bytes()
    if tile_b is None:
        budget = max(_per_batch_vmem_bytes(G, P, D),
                     vmem_limit // 2 - 2 * 1024 * 1024)   # headroom: resident weights + scratch
        cap = max(1, budget // _per_batch_vmem_bytes(G, P, D))
        tile_b = _auto_tile_b(B, G, cap)
    assert B % tile_b == 0
    assert tile_b % 8 == 0 or tile_b == B, "tile_b must keep the output block sublane-dense"

    grid = (B // tile_b,)
    c2 = lambda b: (0, 0)     # noqa: E731  weights stay resident in VMEM across grid steps
    c3 = lambda b: (0, 0, 0)  # noqa: E731

    in_specs = [
        pl.BlockSpec((tile_b, G * P, Cin), lambda b: (b, 0, 0)),
        pl.BlockSpec((tile_b, G, 8), lambda b: (b, 0, 0)),
        pl.BlockSpec(packed["pw"].shape, c2),
        pl.BlockSpec(packed["pb"].shape, c2),
        pl.BlockSpec(packed["gw"].shape, c3),
        pl.BlockSpec(packed["web"].shape, c2),
    ]

    out = pl.pallas_call(
        hierarchy_kernel,
        out_shape=jax.ShapeDtypeStruct((B, D), jnp.float32),
        grid=grid,
        in_specs=in_specs,
        out_specs=pl.BlockSpec((tile_b, D), lambda b: (b, 0)),
        compiler_params=pltpu.CompilerParams(
            dimension_semantics=("parallel",),
            vmem_limit_bytes=vmem_limit,
        ),
    )(x, e_aug, packed["pw"], packed["pb"], packed["gw"], packed["web"])

    return out[:, :graph_dim]


# --------------------------------------------------------------------------- reference ----
def reference_forward(raw_nchw, edge_nchw, p):
    """Pure-JAX f32 reference matching the PyTorch module (eval-mode BN)."""
    x = jnp.transpose(raw_nchw, (0, 2, 3, 1)).astype(jnp.float32)   # (B, G, P, Cin)
    e = jnp.transpose(edge_nchw, (0, 2, 1)).astype(jnp.float32)     # (B, G, 3)
    h = _leaky(x @ p["w1"] * p["s1"] + p["b1"], 0.2)
    h = _leaky(h @ p["w2"] * p["s2"] + p["b2"], 0.2)                # (B, G, P, C)
    g = jnp.max(h, axis=2)                                          # (B, G, C)
    for i in range(4):
        cat = jnp.concatenate([g, g - g[:, :1, :], e], axis=-1)     # (B, G, 2C+3)
        g = _leaky(cat @ p["gw"][i] * p["gs"][i] + p["gb"][i], 0.1)
    return jnp.max(g, axis=1)                                       # (B, Cg)


# -------------------------------------------------------------------------------- main ----
if __name__ == "__main__":
    # Small shapes consistent with the module's forward:
    #   raw_features [B, input_dim, G, P], edge_vectors [B, 3, G]
    B, input_dim, embed_dim, graph_dim = 16, 4, 32, 32
    G, P = 16, 8

    key = jax.random.PRNGKey(0)
    k_x, k_e, k_p = jax.random.split(key, 3)
    raw_features = jax.random.normal(k_x, (B, input_dim, G, P), jnp.float32)
    edge_vectors = jax.random.normal(k_e, (B, 3, G), jnp.float32)

    params = init_params(k_p, input_dim, embed_dim, graph_dim)
    packed = pack_params(params, input_dim, embed_dim, graph_dim)
    ref = reference_forward(raw_features, edge_vectors, params)

    # Auto-tiled run (picks the largest VMEM-feasible batch tile).
    out = single_hierarchy_forward(raw_features, edge_vectors, packed, graph_dim=graph_dim)
    out = jax.block_until_ready(out)
    assert out.shape == (B, graph_dim), out.shape
    assert bool(jnp.all(jnp.isfinite(out)))
    # bf16 matmul operands -> allow a few 1e-2 of drift vs. the f32 reference.
    assert bool(jnp.allclose(out, ref, rtol=5e-2, atol=3e-2)), float(jnp.max(jnp.abs(out - ref)))

    # Explicit multi-step grid (tile_b=8 -> grid=(2,)), exercises pipelining / 2-TC sharding.
    out2 = jax.block_until_ready(
        single_hierarchy_forward(raw_features, edge_vectors, packed,
                                 graph_dim=graph_dim, tile_b=8))
    assert bool(jnp.allclose(out2, ref, rtol=5e-2, atol=3e-2)), \
        float(jnp.max(jnp.abs(out2 - ref)))

    print("KERNEL_OK")
</pallas_src>

<mosaic_0001>
module attributes {stable_mosaic.version = 11 : i64} {
  func.func @hierarchy_kernel(%arg0: i32, %arg1: memref<16x128x4xbf16, #tpu.memory_space<vmem>>, %arg2: memref<16x16x8xf32, #tpu.memory_space<vmem>>, %arg3: memref<4x256xbf16, #tpu.memory_space<vmem>>, %arg4: memref<2x128xf32, #tpu.memory_space<vmem>>, %arg5: memref<4x128x256xbf16, #tpu.memory_space<vmem>>, %arg6: memref<8x512xf32, #tpu.memory_space<vmem>>, %arg7: memref<16x128xf32, #tpu.memory_space<vmem>>) attributes {dimension_semantics = [#tpu.dimension_semantics<parallel>], iteration_bounds = array<i64: 1>, scalar_prefetch = 0 : i64, scratch_operands = 0 : i64, tpu.core_type = #tpu.core_type<tc>, window_params = [{transform_indices = @transform_0, window_bounds = array<i64: 16, 128, 4>}, {transform_indices = @transform_1, window_bounds = array<i64: 16, 16, 8>}, {pipeline_mode = #tpu.pipeline_mode<synchronous>, transform_indices = @transform_2, window_bounds = array<i64: 4, 256>}, {pipeline_mode = #tpu.pipeline_mode<synchronous>, transform_indices = @transform_3, window_bounds = array<i64: 2, 128>}, {pipeline_mode = #tpu.pipeline_mode<synchronous>, transform_indices = @transform_4, window_bounds = array<i64: 4, 128, 256>}, {pipeline_mode = #tpu.pipeline_mode<synchronous>, transform_indices = @transform_5, window_bounds = array<i64: 8, 512>}, {transform_indices = @transform_6, window_bounds = array<i64: 16, 128>}]} {
    %c0 = arith.constant 0 : index
    %c0_0 = arith.constant 0 : index
    %c0_1 = arith.constant 0 : index
    %0 = vector.load %arg1[%c0, %c0_0, %c0_1] : memref<16x128x4xbf16, #tpu.memory_space<vmem>>, vector<16x128x4xbf16>
    %1 = vector.shape_cast %0 : vector<16x128x4xbf16> to vector<2048x4xbf16>
    %c0_2 = arith.constant 0 : index
    %c0_3 = arith.constant 0 : index
    %2 = vector.load %arg3[%c0_2, %c0_3] : memref<4x256xbf16, #tpu.memory_space<vmem>>, vector<4x4xbf16>
    %c0_4 = arith.constant 0 : index
    %c128 = arith.constant 128 : index
    %3 = vector.load %arg3[%c0_4, %c128] : memref<4x256xbf16, #tpu.memory_space<vmem>>, vector<4x128xbf16>
    %c0_5 = arith.constant 0 : index
    %c0_6 = arith.constant 0 : index
    %4 = vector.load %arg4[%c0_5, %c0_6] : memref<2x128xf32, #tpu.memory_space<vmem>>, vector<1x4xf32>
    %c1 = arith.constant 1 : index
    %c0_7 = arith.constant 0 : index
    %5 = vector.load %arg4[%c1, %c0_7] : memref<2x128xf32, #tpu.memory_space<vmem>>, vector<1x128xf32>
    %cst = arith.constant dense<0.000000e+00> : vector<2048x4xf32>
    %6 = tpu.matmul %1, %2, %cst {dimension_numbers = #tpu.dot_dimension_numbers<[1], [0], [0], [1], [0, 0, 1, 1], [], []>} : vector<2048x4xbf16>, vector<4x4xbf16>, vector<2048x4xf32> -> vector<2048x4xf32>
    %7 = vector.broadcast %4 : vector<1x4xf32> to vector<2048x4xf32>
    %8 = arith.addf %6, %7 : vector<2048x4xf32>
    %cst_8 = arith.constant 2.000000e-01 : f32
    %9 = vector.broadcast %cst_8 : f32 to vector<2048x4xf32>
    %10 = arith.mulf %9, %8 : vector<2048x4xf32>
    %11 = arith.maximumf %8, %10 : vector<2048x4xf32>
    %12 = arith.truncf %11 : vector<2048x4xf32> to vector<2048x4xbf16>
    %cst_9 = arith.constant dense<0.000000e+00> : vector<2048x128xf32>
    %13 = tpu.matmul %12, %3, %cst_9 {dimension_numbers = #tpu.dot_dimension_numbers<[1], [0], [0], [1], [0, 0, 1, 1], [], []>} : vector<2048x4xbf16>, vector<4x128xbf16>, vector<2048x128xf32> -> vector<2048x128xf32>
    %14 = vector.broadcast %5 : vector<1x128xf32> to vector<2048x128xf32>
    %15 = arith.addf %13, %14 : vector<2048x128xf32>
    %cst_10 = arith.constant 2.000000e-01 : f32
    %16 = vector.broadcast %cst_10 : f32 to vector<2048x128xf32>
    %17 = arith.mulf %16, %15 : vector<2048x128xf32>
    %18 = arith.maximumf %15, %17 : vector<2048x128xf32>
    %19 = vector.shape_cast %18 : vector<2048x128xf32> to vector<256x8x128xf32>
    %cst_11 = arith.constant dense<0xFF800000> : vector<256x128xf32>
    %20 = vector.multi_reduction <maximumf>, %19, %cst_11 [1] : vector<256x8x128xf32> to vector<256x128xf32>
    %c0_12 = arith.constant 0 : index
    %c0_13 = arith.constant 0 : index
    %c0_14 = arith.constant 0 : index
    %21 = vector.load %arg2[%c0_12, %c0_13, %c0_14] : memref<16x16x8xf32, #tpu.memory_space<vmem>>, vector<16x16x8xf32>
    %22 = vector.shape_cast %21 : vector<16x16x8xf32> to vector<256x8xf32>
    %c0_15 = arith.constant 0 : index
    %c0_16 = arith.constant 0 : index
    %23 = vector.load %arg6[%c0_15, %c0_16] : memref<8x512xf32, #tpu.memory_space<vmem>>, vector<8x512xf32>
    %cst_17 = arith.constant dense<0.000000e+00> : vector<256x512xf32>
    %24 = tpu.matmul %22, %23, %cst_17 {dimension_numbers = #tpu.dot_dimension_numbers<[1], [0], [0], [1], [0, 0, 1, 1], [], []>} : vector<256x8xf32>, vector<8x512xf32>, vector<256x512xf32> -> vector<256x512xf32>
    %25 = vector.shape_cast %24 : vector<256x512xf32> to vector<16x16x512xf32>
    %26 = arith.truncf %20 : vector<256x128xf32> to vector<256x128xbf16>
    %c0_18 = arith.constant 0 : index
    %c0_19 = arith.constant 0 : index
    %c0_20 = arith.constant 0 : index
    %27 = vector.load %arg5[%c0_18, %c0_19, %c0_20] : memref<4x128x256xbf16, #tpu.memory_space<vmem>>, vector<1x128x256xbf16>
    %28 = vector.shape_cast %27 : vector<1x128x256xbf16> to vector<128x256xbf16>
    %cst_21 = arith.constant dense<0.000000e+00> : vector<256x256xf32>
    %29 = tpu.matmul %26, %28, %cst_21 {dimension_numbers = #tpu.dot_dimension_numbers<[1], [0], [0], [1], [0, 0, 1, 1], [], []>} : vector<256x128xbf16>, vector<128x256xbf16>, vector<256x256xf32> -> vector<256x256xf32>
    %30 = vector.shape_cast %29 : vector<256x256xf32> to vector<16x16x256xf32>
    %31 = vector.extract_strided_slice %30 {offsets = [0, 0, 0], sizes = [16, 16, 128], strides = [1, 1, 1]} : vector<16x16x256xf32> to vector<16x16x128xf32>
    %32 = vector.extract_strided_slice %30 {offsets = [0, 0, 128], sizes = [16, 1, 128], strides = [1, 1, 1]} : vector<16x16x256xf32> to vector<16x1x128xf32>
    %33 = vector.broadcast %32 : vector<16x1x128xf32> to vector<16x16x128xf32>
    %34 = arith.subf %31, %33 : vector<16x16x128xf32>
    %35 = vector.extract_strided_slice %25 {offsets = [0, 0, 0], sizes = [16, 16, 128], strides = [1, 1, 1]} : vector<16x16x512xf32> to vector<16x16x128xf32>
    %36 = arith.addf %34, %35 : vector<16x16x128xf32>
    %cst_22 = arith.constant 1.000000e-01 : f32
    %37 = vector.broadcast %cst_22 : f32 to vector<16x16x128xf32>
    %38 = arith.mulf %37, %36 : vector<16x16x128xf32>
    %39 = arith.maximumf %36, %38 : vector<16x16x128xf32>
    %40 = arith.truncf %39 : vector<16x16x128xf32> to vector<16x16x128xbf16>
    %41 = vector.shape_cast %40 : vector<16x16x128xbf16> to vector<256x128xbf16>
    %c1_23 = arith.constant 1 : index
    %c0_24 = arith.constant 0 : index
    %c0_25 = arith.constant 0 : index
    %42 = vector.load %arg5[%c1_23, %c0_24, %c0_25] : memref<4x128x256xbf16, #tpu.memory_space<vmem>>, vector<1x128x256xbf16>
    %43 = vector.shape_cast %42 : vector<1x128x256xbf16> to vector<128x256xbf16>
    %cst_26 = arith.constant dense<0.000000e+00> : vector<256x256xf32>
    %44 = tpu.matmul %41, %43, %cst_26 {dimension_numbers = #tpu.dot_dimension_numbers<[1], [0], [0], [1], [0, 0, 1, 1], [], []>} : vector<256x128xbf16>, vector<128x256xbf16>, vector<256x256xf32> -> vector<256x256xf32>
    %45 = vector.shape_cast %44 : vector<256x256xf32> to vector<16x16x256xf32>
    %46 = vector.extract_strided_slice %45 {offsets = [0, 0, 0], sizes = [16, 16, 128], strides = [1, 1, 1]} : vector<16x16x256xf32> to vector<16x16x128xf32>
    %47 = vector.extract_strided_slice %45 {offsets = [0, 0, 128], sizes = [16, 1, 128], strides = [1, 1, 1]} : vector<16x16x256xf32> to vector<16x1x128xf32>
    %48 = vector.broadcast %47 : vector<16x1x128xf32> to vector<16x16x128xf32>
    %49 = arith.subf %46, %48 : vector<16x16x128xf32>
    %50 = vector.extract_strided_slice %25 {offsets = [0, 0, 128], sizes = [16, 16, 128], strides = [1, 1, 1]} : vector<16x16x512xf32> to vector<16x16x128xf32>
    %51 = arith.addf %49, %50 : vector<16x16x128xf32>
    %cst_27 = arith.constant 1.000000e-01 : f32
    %52 = vector.broadcast %cst_27 : f32 to vector<16x16x128xf32>
    %53 = arith.mulf %52, %51 : vector<16x16x128xf32>
    %54 = arith.maximumf %51, %53 : vector<16x16x128xf32>
    %55 = arith.truncf %54 : vector<16x16x128xf32> to vector<16x16x128xbf16>
    %56 = vector.shape_cast %55 : vector<16x16x128xbf16> to vector<256x128xbf16>
    %c2 = arith.constant 2 : index
    %c0_28 = arith.constant 0 : index
    %c0_29 = arith.constant 0 : index
    %57 = vector.load %arg5[%c2, %c0_28, %c0_29] : memref<4x128x256xbf16, #tpu.memory_space<vmem>>, vector<1x128x256xbf16>
    %58 = vector.shape_cast %57 : vector<1x128x256xbf16> to vector<128x256xbf16>
    %cst_30 = arith.constant dense<0.000000e+00> : vector<256x256xf32>
    %59 = tpu.matmul %56, %58, %cst_30 {dimension_numbers = #tpu.dot_dimension_numbers<[1], [0], [0], [1], [0, 0, 1, 1], [], []>} : vector<256x128xbf16>, vector<128x256xbf16>, vector<256x256xf32> -> vector<256x256xf32>
    %60 = vector.shape_cast %59 : vector<256x256xf32> to vector<16x16x256xf32>
    %61 = vector.extract_strided_slice %60 {offsets = [0, 0, 0], sizes = [16, 16, 128], strides = [1, 1, 1]} : vector<16x16x256xf32> to vector<16x16x128xf32>
    %62 = vector.extract_strided_slice %60 {offsets = [0, 0, 128], sizes = [16, 1, 128], strides = [1, 1, 1]} : vector<16x16x256xf32> to vector<16x1x128xf32>
    %63 = vector.broadcast %62 : vector<16x1x128xf32> to vector<16x16x128xf32>
    %64 = arith.subf %61, %63 : vector<16x16x128xf32>
    %65 = vector.extract_strided_slice %25 {offsets = [0, 0, 256], sizes = [16, 16, 128], strides = [1, 1, 1]} : vector<16x16x512xf32> to vector<16x16x128xf32>
    %66 = arith.addf %64, %65 : vector<16x16x128xf32>
    %cst_31 = arith.constant 1.000000e-01 : f32
    %67 = vector.broadcast %cst_31 : f32 to vector<16x16x128xf32>
    %68 = arith.mulf %67, %66 : vector<16x16x128xf32>
    %69 = arith.maximumf %66, %68 : vector<16x16x128xf32>
    %70 = arith.truncf %69 : vector<16x16x128xf32> to vector<16x16x128xbf16>
    %71 = vector.shape_cast %70 : vector<16x16x128xbf16> to vector<256x128xbf16>
    %c3 = arith.constant 3 : index
    %c0_32 = arith.constant 0 : index
    %c0_33 = arith.constant 0 : index
    %72 = vector.load %arg5[%c3, %c0_32, %c0_33] : memref<4x128x256xbf16, #tpu.memory_space<vmem>>, vector<1x128x256xbf16>
    %73 = vector.shape_cast %72 : vector<1x128x256xbf16> to vector<128x256xbf16>
    %cst_34 = arith.constant dense<0.000000e+00> : vector<256x256xf32>
    %74 = tpu.matmul %71, %73, %cst_34 {dimension_numbers = #tpu.dot_dimension_numbers<[1], [0], [0], [1], [0, 0, 1, 1], [], []>} : vector<256x128xbf16>, vector<128x256xbf16>, vector<256x256xf32> -> vector<256x256xf32>
    %75 = vector.shape_cast %74 : vector<256x256xf32> to vector<16x16x256xf32>
    %76 = vector.extract_strided_slice %75 {offsets = [0, 0, 0], sizes = [16, 16, 128], strides = [1, 1, 1]} : vector<16x16x256xf32> to vector<16x16x128xf32>
    %77 = vector.extract_strided_slice %75 {offsets = [0, 0, 128], sizes = [16, 1, 128], strides = [1, 1, 1]} : vector<16x16x256xf32> to vector<16x1x128xf32>
    %78 = vector.broadcast %77 : vector<16x1x128xf32> to vector<16x16x128xf32>
    %79 = arith.subf %76, %78 : vector<16x16x128xf32>
    %80 = vector.extract_strided_slice %25 {offsets = [0, 0, 384], sizes = [16, 16, 128], strides = [1, 1, 1]} : vector<16x16x512xf32> to vector<16x16x128xf32>
    %81 = arith.addf %79, %80 : vector<16x16x128xf32>
    %cst_35 = arith.constant 1.000000e-01 : f32
    %82 = vector.broadcast %cst_35 : f32 to vector<16x16x128xf32>
    %83 = arith.mulf %82, %81 : vector<16x16x128xf32>
    %84 = arith.maximumf %81, %83 : vector<16x16x128xf32>
    %cst_36 = arith.constant dense<0xFF800000> : vector<16x128xf32>
    %85 = vector.multi_reduction <maximumf>, %84, %cst_36 [1] : vector<16x16x128xf32> to vector<16x128xf32>
    %c0_37 = arith.constant 0 : index
    %c0_38 = arith.constant 0 : index
    %86 = vector.load %arg7[%c0_37, %c0_38] : memref<16x128xf32, #tpu.memory_space<vmem>>, vector<16x128xf32>
    tpu.vector_store %arg7[%c0_37, %c0_38], %85 {strides = array<i32>} : memref<16x128xf32, #tpu.memory_space<vmem>>, vector<16x128xf32>,
    return
  }
  func.func @transform_0(%arg0: i32) -> (i32, i32, i32) {
    %c0_i32 = arith.constant 0 : i32
    %c0_i32_0 = arith.constant 0 : i32
    %c0_i32_1 = arith.constant 0 : i32
    return %arg0, %c0_i32, %c0_i32_0 : i32, i32, i32
  }
  func.func @transform_1(%arg0: i32) -> (i32, i32, i32) {
    %c0_i32 = arith.constant 0 : i32
    %c0_i32_0 = arith.constant 0 : i32
    %c0_i32_1 = arith.constant 0 : i32
    return %arg0, %c0_i32, %c0_i32_0 : i32, i32, i32
  }
  func.func @transform_2(%arg0: i32) -> (i32, i32) {
    %c0_i32 = arith.constant 0 : i32
    %c0_i32_0 = arith.constant 0 : i32
    %c0_i32_1 = arith.constant 0 : i32
    return %c0_i32, %c0_i32_0 : i32, i32
  }
  func.func @transform_3(%arg0: i32) -> (i32, i32) {
    %c0_i32 = arith.constant 0 : i32
    %c0_i32_0 = arith.constant 0 : i32
    %c0_i32_1 = arith.constant 0 : i32
    return %c0_i32, %c0_i32_0 : i32, i32
  }
  func.func @transform_4(%arg0: i32) -> (i32, i32, i32) {
    %c0_i32 = arith.constant 0 : i32
    %c0_i32_0 = arith.constant 0 : i32
    %c0_i32_1 = arith.constant 0 : i32
    %c0_i32_2 = arith.constant 0 : i32
    return %c0_i32, %c0_i32_0, %c0_i32_1 : i32, i32, i32
  }
  func.func @transform_5(%arg0: i32) -> (i32, i32) {
    %c0_i32 = arith.constant 0 : i32
    %c0_i32_0 = arith.constant 0 : i32
    %c0_i32_1 = arith.constant 0 : i32
    return %c0_i32, %c0_i32_0 : i32, i32
  }
  func.func @transform_6(%arg0: i32) -> (i32, i32) {
    %c0_i32 = arith.constant 0 : i32
    %c0_i32_0 = arith.constant 0 : i32
    return %arg0, %c0_i32 : i32, i32
  }
}

</mosaic_0001>

<llo_original>
// kernel: single_hierarchy_forward.1
$region0: #{single_hierarchy_forward.1}
  #allocation0 [shape = 'u32[]', space=smem, size = 0x4, offset = 0x4, fixed_abs, tag = 'smem constant byte address 0x4 - core index']
  #allocation1 [shape = 'u32[144,128]{1,0:T(1,128)}', space=vmem, size = 0x12000, scoped, tag = 'internal scratch']
  %s0 = inlined_call_operand.hbm [shape: bf16[16,128,4], index: 0, kind: input, shape index: {}]
  %s1 = inlined_call_operand.hbm [shape: f32[16,16,8], index: 1, kind: input, shape index: {}]
  %s2 = inlined_call_operand.hbm [shape: bf16[4,256], index: 2, kind: input, shape index: {}]
  %s3 = inlined_call_operand.hbm [shape: f32[2,128], index: 3, kind: input, shape index: {}]
  %s4 = inlined_call_operand.hbm [shape: bf16[4,128,256], index: 4, kind: input, shape index: {}]
  %s5 = inlined_call_operand.hbm [shape: f32[8,512], index: 5, kind: input, shape index: {}]
  %s6 = inlined_call_operand.hbm [shape: f32[16,128], index: 6, kind: output, shape index: {}]
  %s7 = sld [smem:[#allocation0]]
  $region58: #{single_hierarchy_forward.1} parent=0
    _
  %s9 = ssub.s32 1, %s7
  %s10 = scalar_select 0, %s9, %s7
  $region1: #{single_hierarchy_forward.1} parent=0
    #allocation2 [shape = 'u8[524288]{0}', space=vmem, size = 0x80000, scoped, tag = 'input window, operand 0, single buffered']
    #allocation3 [shape = 's32[1]{0}', space=sflag, size = 0x4, scoped, tag = 'scoped memory for single_hierarchy_forward.1']
    #allocation4 [shape = 's32[1]{0}', space=sflag, size = 0x4, scoped, tag = 'scoped memory for single_hierarchy_forward.1']
    #allocation5 [shape = 'u8[131072]{0}', space=vmem, size = 0x20000, scoped, tag = 'input window, operand 1, single buffered']
    #allocation6 [shape = 's32[1]{0}', space=sflag, size = 0x4, scoped, tag = 'scoped memory for single_hierarchy_forward.1']
    #allocation7 [shape = 'u8[2048]{0}', space=vmem, size = 0x800, scoped, tag = 'input window, operand 2, single buffered']
    #allocation8 [shape = 'u8[1024]{0}', space=vmem, size = 0x400, scoped, tag = 'input window, operand 3, single buffered']
    #allocation9 [shape = 's32[1]{0}', space=sflag, size = 0x4, scoped, tag = 'scoped memory for single_hierarchy_forward.1']
    #allocation10 [shape = 'u8[262144]{0}', space=vmem, size = 0x40000, scoped, tag = 'input window, operand 4, single buffered']
    #allocation11 [shape = 'u8[16384]{0}', space=vmem, size = 0x4000, scoped, tag = 'input window, operand 5, single buffered']
    #allocation12 [shape = 's32[1]{0}', space=sflag, size = 0x4, scoped, tag = 'scoped memory for single_hierarchy_forward.1']
    #allocation13 [shape = 'u8[8192]{0}', space=vmem, size = 0x2000, scoped, tag = 'output window, operand 0, single buffered']
    %11 = vsyncpa [#allocation3], 0
    %12 = vsyncpa [#allocation6], 0
    %13 = vsyncpa [#allocation9], 0
    %14 = vsyncpa [#allocation12], 0
    %15 = vsyncpa [#allocation4], 0
    // Predicated region
    $region2: #{single_hierarchy_forward.1} parent=1 // pred_check
      _
    $region3: #{single_hierarchy_forward.1} parent=1 // pred_check_branch
      %17 = sbr.rel (0) target = $region5
    $region4: #{single_hierarchy_forward.1} parent=1 // pred_region
      %s19 = ssub.s32 16384, 16384
      %20 = vsyncadd [#allocation3], %s19
      %s21 = sshll.u32 [#allocation2], 4
      %s22 = int_to_ptr.vmem [resolvable:$true] %s21
      %27 = dma.hbm_to_vmem [thread:$0]  %s0, 16384, %s22, [#allocation3], 64, 64, 4
    $region5: #{single_hierarchy_forward.1} parent=1 // pred_fallthru
      _
    // Predicated region
    $region6: #{single_hierarchy_forward.1} parent=1 // pred_check
      _
    $region7: #{single_hierarchy_forward.1} parent=1 // pred_check_branch
      %29 = sbr.rel (0) target = $region9
    $region8: #{single_hierarchy_forward.1} parent=1 // pred_region
      %s31 = ssub.s32 4096, 4096
      %32 = vsyncadd [#allocation6], %s31
      %s33 = sshll.u32 [#allocation5], 4
      %s34 = int_to_ptr.vmem [resolvable:$true] %s33
      %39 = dma.hbm_to_vmem [thread:$0]  %s1, 4096, %s34, [#allocation6], 128, 128, 8
    $region9: #{single_hierarchy_forward.1} parent=1 // pred_fallthru
      _
    // Predicated region
    $region10: #{single_hierarchy_forward.1} parent=1 // pred_check
      _
    $region11: #{single_hierarchy_forward.1} parent=1 // pred_check_branch
      %41 = sbr.rel (0) target = $region13
    $region12: #{single_hierarchy_forward.1} parent=1 // pred_region
      %s43 = ssub.s32 64, 64
      %44 = vsyncadd [#allocation6], %s43
      %s46 = sshll.u32 [#allocation7], 4
      %s47 = int_to_ptr.vmem [resolvable:$true] %s46
      %49 = dma.hbm_to_vmem [thread:$0]  %s2, 64, %s47, [#allocation6]
    $region13: #{single_hierarchy_forward.1} parent=1 // pred_fallthru
      _
    // Predicated region
    $region14: #{single_hierarchy_forward.1} parent=1 // pred_check
      _
    $region15: #{single_hierarchy_forward.1} parent=1 // pred_check_branch
      %51 = sbr.rel (0) target = $region17
    $region16: #{single_hierarchy_forward.1} parent=1 // pred_region
      %s53 = ssub.s32 32, 32
      %54 = vsyncadd [#allocation9], %s53
      %s56 = sshll.u32 [#allocation8], 4
      %s57 = int_to_ptr.vmem [resolvable:$true] %s56
      %59 = dma.hbm_to_vmem [thread:$0]  %s3, 32, %s57, [#allocation9]
    $region17: #{single_hierarchy_forward.1} parent=1 // pred_fallthru
      _
    // Predicated region
    $region18: #{single_hierarchy_forward.1} parent=1 // pred_check
      _
    $region19: #{single_hierarchy_forward.1} parent=1 // pred_check_branch
      %61 = sbr.rel (0) target = $region21
    $region20: #{single_hierarchy_forward.1} parent=1 // pred_region
      %s63 = ssub.s32 8192, 8192
      %64 = vsyncadd [#allocation9], %s63
      %s65 = sshll.u32 [#allocation10], 4
      %s66 = int_to_ptr.vmem [resolvable:$true] %s65
      %71 = dma.hbm_to_vmem [thread:$0]  %s4, 8192, %s66, [#allocation9], 128, 128, 8
    $region21: #{single_hierarchy_forward.1} parent=1 // pred_fallthru
      _
    // Predicated region
    $region22: #{single_hierarchy_forward.1} parent=1 // pred_check
      _
    $region23: #{single_hierarchy_forward.1} parent=1 // pred_check_branch
      %73 = sbr.rel (0) target = $region25
    $region24: #{single_hierarchy_forward.1} parent=1 // pred_region
      %s75 = ssub.s32 512, 512
      %76 = vsyncadd [#allocation12], %s75
      %s78 = sshll.u32 [#allocation11], 4
      %s79 = int_to_ptr.vmem [resolvable:$true] %s78
      %81 = dma.hbm_to_vmem [thread:$0]  %s5, 512, %s79, [#allocation12]
    $region25: #{single_hierarchy_forward.1} parent=1 // pred_fallthru
      _
    // Predicated region
    $region26: #{single_hierarchy_forward.1} parent=1 // pred_check
      _
    $region27: #{single_hierarchy_forward.1} parent=1 // pred_check_branch
      %83 = sbr.rel (0) target = $region29
    $region28: #{single_hierarchy_forward.1} parent=1 // pred_region
      %84 = dma.done [#allocation3], 16384
    $region29: #{single_hierarchy_forward.1} parent=1 // pred_fallthru
      _
    // Predicated region
    $region30: #{single_hierarchy_forward.1} parent=1 // pred_check
      _
    $region31: #{single_hierarchy_forward.1} parent=1 // pred_check_branch
      %86 = sbr.rel (0) target = $region33
    $region32: #{single_hierarchy_forward.1} parent=1 // pred_region
      %87 = dma.done [#allocation6], 4096
    $region33: #{single_hierarchy_forward.1} parent=1 // pred_fallthru
      _
    // Predicated region
    $region34: #{single_hierarchy_forward.1} parent=1 // pred_check
      _
    $region35: #{single_hierarchy_forward.1} parent=1 // pred_check_branch
      %89 = sbr.rel (0) target = $region37
    $region36: #{single_hierarchy_forward.1} parent=1 // pred_region
      %90 = dma.done [#allocation6], 64
    $region37: #{single_hierarchy_forward.1} parent=1 // pred_fallthru
      _
    // Predicated region
    $region38: #{single_hierarchy_forward.1} parent=1 // pred_check
      _
    $region39: #{single_hierarchy_forward.1} parent=1 // pred_check_branch
      %92 = sbr.rel (0) target = $region41
    $region40: #{single_hierarchy_forward.1} parent=1 // pred_region
      %93 = dma.done [#allocation9], 32
    $region41: #{single_hierarchy_forward.1} parent=1 // pred_fallthru
      _
    // Predicated region
    $region42: #{single_hierarchy_forward.1} parent=1 // pred_check
      _
    $region43: #{single_hierarchy_forward.1} parent=1 // pred_check_branch
      %95 = sbr.rel (0) target = $region45
    $region44: #{single_hierarchy_forward.1} parent=1 // pred_region
      %96 = dma.done [#allocation9], 8192
    $region45: #{single_hierarchy_forward.1} parent=1 // pred_fallthru
      _
    // Predicated region
    $region46: #{single_hierarchy_forward.1} parent=1 // pred_check
      _
    $region47: #{single_hierarchy_forward.1} parent=1 // pred_check_branch
      %98 = sbr.rel (0) target = $region49
    $region48: #{single_hierarchy_forward.1} parent=1 // pred_region
      %99 = dma.done [#allocation12], 512
    $region49: #{single_hierarchy_forward.1} parent=1 // pred_fallthru
      _
    %v101 = vld [vmem:[#allocation2] sm:$0xf]
    %v102 = vld [vmem:[#allocation2 + $0x4] sm:$0xf]
    %v103 = vld [vmem:[#allocation2 + $0x8] sm:$0xf]
    %v104 = vld [vmem:[#allocation2 + $0xc] sm:$0xf]
    %v105 = vld [vmem:[#allocation2 + $0x10] sm:$0xf]
    %v106 = vld [vmem:[#allocation2 + $0x14] sm:$0xf]
    %v107 = vld [vmem:[#allocation2 + $0x18] sm:$0xf]
    %v108 = vld [vmem:[#allocation2 + $0x1c] sm:$0xf]
    %v109 = vld [vmem:[#allocation2 + $0x20] sm:$0xf]
    %v110 = vld [vmem:[#allocation2 + $0x24] sm:$0xf]
    %v111 = vld [vmem:[#allocation2 + $0x28] sm:$0xf]
    %v112 = vld [vmem:[#allocation2 + $0x2c] sm:$0xf]
    %v113 = vld [vmem:[#allocation2 + $0x30] sm:$0xf]
    %v114 = vld [vmem:[#allocation2 + $0x34] sm:$0xf]
    %v115 = vld [vmem:[#allocation2 + $0x38] sm:$0xf]
    %v116 = vld [vmem:[#allocation2 + $0x3c] sm:$0xf]
    %v117 = vld [vmem:[#allocation2 + $0x40] sm:$0xf]
    %v118 = vld [vmem:[#allocation2 + $0x44] sm:$0xf]
    %v119 = vld [vmem:[#allocation2 + $0x48] sm:$0xf]
    %v120 = vld [vmem:[#allocation2 + $0x4c] sm:$0xf]
    %v121 = vld [vmem:[#allocation2 + $0x50] sm:$0xf]
    %v122 = vld [vmem:[#allocation2 + $0x54] sm:$0xf]
    %v123 = vld [vmem:[#allocation2 + $0x58] sm:$0xf]
    %v124 = vld [vmem:[#allocation2 + $0x5c] sm:$0xf]
    %v125 = vld [vmem:[#allocation2 + $0x60] sm:$0xf]
    %v126 = vld [vmem:[#allocation2 + $0x64] sm:$0xf]
    %v127 = vld [vmem:[#allocation2 + $0x68] sm:$0xf]
    %v128 = vld [vmem:[#allocation2 + $0x6c] sm:$0xf]
    %v129 = vld [vmem:[#allocation2 + $0x70] sm:$0xf]
    %v130 = vld [vmem:[#allocation2 + $0x74] sm:$0xf]
    %v131 = vld [vmem:[#allocation2 + $0x78] sm:$0xf]
    %v132 = vld [vmem:[#allocation2 + $0x7c] sm:$0xf]
    %v133 = vld [vmem:[#allocation2 + $0x80] sm:$0xf]
    %v134 = vld [vmem:[#allocation2 + $0x84] sm:$0xf]
    %v135 = vld [vmem:[#allocation2 + $0x88] sm:$0xf]
    %v136 = vld [vmem:[#allocation2 + $0x8c] sm:$0xf]
    %v137 = vld [vmem:[#allocation2 + $0x90] sm:$0xf]
    %v138 = vld [vmem:[#allocation2 + $0x94] sm:$0xf]
    %v139 = vld [vmem:[#allocation2 + $0x98] sm:$0xf]
    %v140 = vld [vmem:[#allocation2 + $0x9c] sm:$0xf]
    %v141 = vld [vmem:[#allocation2 + $0xa0] sm:$0xf]
    %v142 = vld [vmem:[#allocation2 + $0xa4] sm:$0xf]
    %v143 = vld [vmem:[#allocation2 + $0xa8] sm:$0xf]
    %v144 = vld [vmem:[#allocation2 + $0xac] sm:$0xf]
    %v145 = vld [vmem:[#allocation2 + $0xb0] sm:$0xf]
    %v146 = vld [vmem:[#allocation2 + $0xb4] sm:$0xf]
    %v147 = vld [vmem:[#allocation2 + $0xb8] sm:$0xf]
    %v148 = vld [vmem:[#allocation2 + $0xbc] sm:$0xf]
    %v149 = vld [vmem:[#allocation2 + $0xc0] sm:$0xf]
    %v150 = vld [vmem:[#allocation2 + $0xc4] sm:$0xf]
    %v151 = vld [vmem:[#allocation2 + $0xc8] sm:$0xf]
    %v152 = vld [vmem:[#allocation2 + $0xcc] sm:$0xf]
    %v153 = vld [vmem:[#allocation2 + $0xd0] sm:$0xf]
    %v154 = vld [vmem:[#allocation2 + $0xd4] sm:$0xf]
    %v155 = vld [vmem:[#allocation2 + $0xd8] sm:$0xf]
    %v156 = vld [vmem:[#allocation2 + $0xdc] sm:$0xf]
    %v157 = vld [vmem:[#allocation2 + $0xe0] sm:$0xf]
    %v158 = vld [vmem:[#allocation2 + $0xe4] sm:$0xf]
    %v159 = vld [vmem:[#allocation2 + $0xe8] sm:$0xf]
    %v160 = vld [vmem:[#allocation2 + $0xec] sm:$0xf]
    %v161 = vld [vmem:[#allocation2 + $0xf0] sm:$0xf]
    %v162 = vld [vmem:[#allocation2 + $0xf4] sm:$0xf]
    %v163 = vld [vmem:[#allocation2 + $0xf8] sm:$0xf]
    %v164 = vld [vmem:[#allocation2 + $0xfc] sm:$0xf]
    %v165 = vld [vmem:[#allocation2 + $0x100] sm:$0xf]
    %v166 = vld [vmem:[#allocation2 + $0x104] sm:$0xf]
    %v167 = vld [vmem:[#allocation2 + $0x108] sm:$0xf]
    %v168 = vld [vmem:[#allocation2 + $0x10c] sm:$0xf]
    %v169 = vld [vmem:[#allocation2 + $0x110] sm:$0xf]
    %v170 = vld [vmem:[#allocation2 + $0x114] sm:$0xf]
    %v171 = vld [vmem:[#allocation2 + $0x118] sm:$0xf]
    %v172 = vld [vmem:[#allocation2 + $0x11c] sm:$0xf]
    %v173 = vld [vmem:[#allocation2 + $0x120] sm:$0xf]
    %v174 = vld [vmem:[#allocation2 + $0x124] sm:$0xf]
    %v175 = vld [vmem:[#allocation2 + $0x128] sm:$0xf]
    %v176 = vld [vmem:[#allocation2 + $0x12c] sm:$0xf]
    %v177 = vld [vmem:[#allocation2 + $0x130] sm:$0xf]
    %v178 = vld [vmem:[#allocation2 + $0x134] sm:$0xf]
    %v179 = vld [vmem:[#allocation2 + $0x138] sm:$0xf]
    %v180 = vld [vmem:[#allocation2 + $0x13c] sm:$0xf]
    %v181 = vld [vmem:[#allocation2 + $0x140] sm:$0xf]
    %v182 = vld [vmem:[#allocation2 + $0x144] sm:$0xf]
    %v183 = vld [vmem:[#allocation2 + $0x148] sm:$0xf]
    %v184 = vld [vmem:[#allocation2 + $0x14c] sm:$0xf]
    %v185 = vld [vmem:[#allocation2 + $0x150] sm:$0xf]
    %v186 = vld [vmem:[#allocation2 + $0x154] sm:$0xf]
    %v187 = vld [vmem:[#allocation2 + $0x158] sm:$0xf]
    %v188 = vld [vmem:[#allocation2 + $0x15c] sm:$0xf]
    %v189 = vld [vmem:[#allocation2 + $0x160] sm:$0xf]
    %v190 = vld [vmem:[#allocation2 + $0x164] sm:$0xf]
    %v191 = vld [vmem:[#allocation2 + $0x168] sm:$0xf]
    %v192 = vld [vmem:[#allocation2 + $0x16c] sm:$0xf]
    %v193 = vld [vmem:[#allocation2 + $0x170] sm:$0xf]
    %v194 = vld [vmem:[#allocation2 + $0x174] sm:$0xf]
    %v195 = vld [vmem:[#allocation2 + $0x178] sm:$0xf]
    %v196 = vld [vmem:[#allocation2 + $0x17c] sm:$0xf]
    %v197 = vld [vmem:[#allocation2 + $0x180] sm:$0xf]
    %v198 = vld [vmem:[#allocation2 + $0x184] sm:$0xf]
    %v199 = vld [vmem:[#allocation2 + $0x188] sm:$0xf]
    %v200 = vld [vmem:[#allocation2 + $0x18c] sm:$0xf]
    %v201 = vld [vmem:[#allocation2 + $0x190] sm:$0xf]
    %v202 = vld [vmem:[#allocation2 + $0x194] sm:$0xf]
    %v203 = vld [vmem:[#allocation2 + $0x198] sm:$0xf]
    %v204 = vld [vmem:[#allocation2 + $0x19c] sm:$0xf]
    %v205 = vld [vmem:[#allocation2 + $0x1a0] sm:$0xf]
    %v206 = vld [vmem:[#allocation2 + $0x1a4] sm:$0xf]
    %v207 = vld [vmem:[#allocation2 + $0x1a8] sm:$0xf]
    %v208 = vld [vmem:[#allocation2 + $0x1ac] sm:$0xf]
    %v209 = vld [vmem:[#allocation2 + $0x1b0] sm:$0xf]
    %v210 = vld [vmem:[#allocation2 + $0x1b4] sm:$0xf]
    %v211 = vld [vmem:[#allocation2 + $0x1b8] sm:$0xf]
    %v212 = vld [vmem:[#allocation2 + $0x1bc] sm:$0xf]
    %v213 = vld [vmem:[#allocation2 + $0x1c0] sm:$0xf]
    %v214 = vld [vmem:[#allocation2 + $0x1c4] sm:$0xf]
    %v215 = vld [vmem:[#allocation2 + $0x1c8] sm:$0xf]
    %v216 = vld [vmem:[#allocation2 + $0x1cc] sm:$0xf]
    %v217 = vld [vmem:[#allocation2 + $0x1d0] sm:$0xf]
    %v218 = vld [vmem:[#allocation2 + $0x1d4] sm:$0xf]
    %v219 = vld [vmem:[#allocation2 + $0x1d8] sm:$0xf]
    %v220 = vld [vmem:[#allocation2 + $0x1dc] sm:$0xf]
    %v221 = vld [vmem:[#allocation2 + $0x1e0] sm:$0xf]
    %v222 = vld [vmem:[#allocation2 + $0x1e4] sm:$0xf]
    %v223 = vld [vmem:[#allocation2 + $0x1e8] sm:$0xf]
    %v224 = vld [vmem:[#allocation2 + $0x1ec] sm:$0xf]
    %v225 = vld [vmem:[#allocation2 + $0x1f0] sm:$0xf]
    %v226 = vld [vmem:[#allocation2 + $0x1f4] sm:$0xf]
    %v227 = vld [vmem:[#allocation2 + $0x1f8] sm:$0xf]
    %v228 = vld [vmem:[#allocation2 + $0x1fc] sm:$0xf]
    %v229 = vld [vmem:[#allocation2 + $0x200] sm:$0xf]
    %v230 = vld [vmem:[#allocation2 + $0x204] sm:$0xf]
    %v231 = vld [vmem:[#allocation2 + $0x208] sm:$0xf]
    %v232 = vld [vmem:[#allocation2 + $0x20c] sm:$0xf]
    %v233 = vld [vmem:[#allocation2 + $0x210] sm:$0xf]
    %v234 = vld [vmem:[#allocation2 + $0x214] sm:$0xf]
    %v235 = vld [vmem:[#allocation2 + $0x218] sm:$0xf]
    %v236 = vld [vmem:[#allocation2 + $0x21c] sm:$0xf]
    %v237 = vld [vmem:[#allocation2 + $0x220] sm:$0xf]
    %v238 = vld [vmem:[#allocation2 + $0x224] sm:$0xf]
    %v239 = vld [vmem:[#allocation2 + $0x228] sm:$0xf]
    %v240 = vld [vmem:[#allocation2 + $0x22c] sm:$0xf]
    %v241 = vld [vmem:[#allocation2 + $0x230] sm:$0xf]
    %v242 = vld [vmem:[#allocation2 + $0x234] sm:$0xf]
    %v243 = vld [vmem:[#allocation2 + $0x238] sm:$0xf]
    %v244 = vld [vmem:[#allocation2 + $0x23c] sm:$0xf]
    %v245 = vld [vmem:[#allocation2 + $0x240] sm:$0xf]
    %v246 = vld [vmem:[#allocation2 + $0x244] sm:$0xf]
    %v247 = vld [vmem:[#allocation2 + $0x248] sm:$0xf]
    %v248 = vld [vmem:[#allocation2 + $0x24c] sm:$0xf]
    %v249 = vld [vmem:[#allocation2 + $0x250] sm:$0xf]
    %v250 = vld [vmem:[#allocation2 + $0x254] sm:$0xf]
    %v251 = vld [vmem:[#allocation2 + $0x258] sm:$0xf]
    %v252 = vld [vmem:[#allocation2 + $0x25c] sm:$0xf]
    %v253 = vld [vmem:[#allocation2 + $0x260] sm:$0xf]
    %v254 = vld [vmem:[#allocation2 + $0x264] sm:$0xf]
    %v255 = vld [vmem:[#allocation2 + $0x268] sm:$0xf]
    %v256 = vld [vmem:[#allocation2 + $0x26c] sm:$0xf]
    %v257 = vld [vmem:[#allocation2 + $0x270] sm:$0xf]
    %v258 = vld [vmem:[#allocation2 + $0x274] sm:$0xf]
    %v259 = vld [vmem:[#allocation2 + $0x278] sm:$0xf]
    %v260 = vld [vmem:[#allocation2 + $0x27c] sm:$0xf]
    %v261 = vld [vmem:[#allocation2 + $0x280] sm:$0xf]
    %v262 = vld [vmem:[#allocation2 + $0x284] sm:$0xf]
    %v263 = vld [vmem:[#allocation2 + $0x288] sm:$0xf]
    %v264 = vld [vmem:[#allocation2 + $0x28c] sm:$0xf]
    %v265 = vld [vmem:[#allocation2 + $0x290] sm:$0xf]
    %v266 = vld [vmem:[#allocation2 + $0x294] sm:$0xf]
    %v267 = vld [vmem:[#allocation2 + $0x298] sm:$0xf]
    %v268 = vld [vmem:[#allocation2 + $0x29c] sm:$0xf]
    %v269 = vld [vmem:[#allocation2 + $0x2a0] sm:$0xf]
    %v270 = vld [vmem:[#allocation2 + $0x2a4] sm:$0xf]
    %v271 = vld [vmem:[#allocation2 + $0x2a8] sm:$0xf]
    %v272 = vld [vmem:[#allocation2 + $0x2ac] sm:$0xf]
    %v273 = vld [vmem:[#allocation2 + $0x2b0] sm:$0xf]
    %v274 = vld [vmem:[#allocation2 + $0x2b4] sm:$0xf]
    %v275 = vld [vmem:[#allocation2 + $0x2b8] sm:$0xf]
    %v276 = vld [vmem:[#allocation2 + $0x2bc] sm:$0xf]
    %v277 = vld [vmem:[#allocation2 + $0x2c0] sm:$0xf]
    %v278 = vld [vmem:[#allocation2 + $0x2c4] sm:$0xf]
    %v279 = vld [vmem:[#allocation2 + $0x2c8] sm:$0xf]
    %v280 = vld [vmem:[#allocation2 + $0x2cc] sm:$0xf]
    %v281 = vld [vmem:[#allocation2 + $0x2d0] sm:$0xf]
    %v282 = vld [vmem:[#allocation2 + $0x2d4] sm:$0xf]
    %v283 = vld [vmem:[#allocation2 + $0x2d8] sm:$0xf]
    %v284 = vld [vmem:[#allocation2 + $0x2dc] sm:$0xf]
    %v285 = vld [vmem:[#allocation2 + $0x2e0] sm:$0xf]
    %v286 = vld [vmem:[#allocation2 + $0x2e4] sm:$0xf]
    %v287 = vld [vmem:[#allocation2 + $0x2e8] sm:$0xf]
    %v288 = vld [vmem:[#allocation2 + $0x2ec] sm:$0xf]
    %v289 = vld [vmem:[#allocation2 + $0x2f0] sm:$0xf]
    %v290 = vld [vmem:[#allocation2 + $0x2f4] sm:$0xf]
    %v291 = vld [vmem:[#allocation2 + $0x2f8] sm:$0xf]
    %v292 = vld [vmem:[#allocation2 + $0x2fc] sm:$0xf]
    %v293 = vld [vmem:[#allocation2 + $0x300] sm:$0xf]
    %v294 = vld [vmem:[#allocation2 + $0x304] sm:$0xf]
    %v295 = vld [vmem:[#allocation2 + $0x308] sm:$0xf]
    %v296 = vld [vmem:[#allocation2 + $0x30c] sm:$0xf]
    %v297 = vld [vmem:[#allocation2 + $0x310] sm:$0xf]
    %v298 = vld [vmem:[#allocation2 + $0x314] sm:$0xf]
    %v299 = vld [vmem:[#allocation2 + $0x318] sm:$0xf]
    %v300 = vld [vmem:[#allocation2 + $0x31c] sm:$0xf]
    %v301 = vld [vmem:[#allocation2 + $0x320] sm:$0xf]
    %v302 = vld [vmem:[#allocation2 + $0x324] sm:$0xf]
    %v303 = vld [vmem:[#allocation2 + $0x328] sm:$0xf]
    %v304 = vld [vmem:[#allocation2 + $0x32c] sm:$0xf]
    %v305 = vld [vmem:[#allocation2 + $0x330] sm:$0xf]
    %v306 = vld [vmem:[#allocation2 + $0x334] sm:$0xf]
    %v307 = vld [vmem:[#allocation2 + $0x338] sm:$0xf]
    %v308 = vld [vmem:[#allocation2 + $0x33c] sm:$0xf]
    %v309 = vld [vmem:[#allocation2 + $0x340] sm:$0xf]
    %v310 = vld [vmem:[#allocation2 + $0x344] sm:$0xf]
    %v311 = vld [vmem:[#allocation2 + $0x348] sm:$0xf]
    %v312 = vld [vmem:[#allocation2 + $0x34c] sm:$0xf]
    %v313 = vld [vmem:[#allocation2 + $0x350] sm:$0xf]
    %v314 = vld [vmem:[#allocation2 + $0x354] sm:$0xf]
    %v315 = vld [vmem:[#allocation2 + $0x358] sm:$0xf]
    %v316 = vld [vmem:[#allocation2 + $0x35c] sm:$0xf]
    %v317 = vld [vmem:[#allocation2 + $0x360] sm:$0xf]
    %v318 = vld [vmem:[#allocation2 + $0x364] sm:$0xf]
    %v319 = vld [vmem:[#allocation2 + $0x368] sm:$0xf]
    %v320 = vld [vmem:[#allocation2 + $0x36c] sm:$0xf]
    %v321 = vld [vmem:[#allocation2 + $0x370] sm:$0xf]
    %v322 = vld [vmem:[#allocation2 + $0x374] sm:$0xf]
    %v323 = vld [vmem:[#allocation2 + $0x378] sm:$0xf]
    %v324 = vld [vmem:[#allocation2 + $0x37c] sm:$0xf]
    %v325 = vld [vmem:[#allocation2 + $0x380] sm:$0xf]
    %v326 = vld [vmem:[#allocation2 + $0x384] sm:$0xf]
    %v327 = vld [vmem:[#allocation2 + $0x388] sm:$0xf]
    %v328 = vld [vmem:[#allocation2 + $0x38c] sm:$0xf]
    %v329 = vld [vmem:[#allocation2 + $0x390] sm:$0xf]
    %v330 = vld [vmem:[#allocation2 + $0x394] sm:$0xf]
    %v331 = vld [vmem:[#allocation2 + $0x398] sm:$0xf]
    %v332 = vld [vmem:[#allocation2 + $0x39c] sm:$0xf]
    %v333 = vld [vmem:[#allocation2 + $0x3a0] sm:$0xf]
    %v334 = vld [vmem:[#allocation2 + $0x3a4] sm:$0xf]
    %v335 = vld [vmem:[#allocation2 + $0x3a8] sm:$0xf]
    %v336 = vld [vmem:[#allocation2 + $0x3ac] sm:$0xf]
    %v337 = vld [vmem:[#allocation2 + $0x3b0] sm:$0xf]
    %v338 = vld [vmem:[#allocation2 + $0x3b4] sm:$0xf]
    %v339 = vld [vmem:[#allocation2 + $0x3b8] sm:$0xf]
    %v340 = vld [vmem:[#allocation2 + $0x3bc] sm:$0xf]
    %v341 = vld [vmem:[#allocation2 + $0x3c0] sm:$0xf]
    %v342 = vld [vmem:[#allocation2 + $0x3c4] sm:$0xf]
    %v343 = vld [vmem:[#allocation2 + $0x3c8] sm:$0xf]
    %v344 = vld [vmem:[#allocation2 + $0x3cc] sm:$0xf]
    %v345 = vld [vmem:[#allocation2 + $0x3d0] sm:$0xf]
    %v346 = vld [vmem:[#allocation2 + $0x3d4] sm:$0xf]
    %v347 = vld [vmem:[#allocation2 + $0x3d8] sm:$0xf]
    %v348 = vld [vmem:[#allocation2 + $0x3dc] sm:$0xf]
    %v349 = vld [vmem:[#allocation2 + $0x3e0] sm:$0xf]
    %v350 = vld [vmem:[#allocation2 + $0x3e4] sm:$0xf]
    %v351 = vld [vmem:[#allocation2 + $0x3e8] sm:$0xf]
    %v352 = vld [vmem:[#allocation2 + $0x3ec] sm:$0xf]
    %v353 = vld [vmem:[#allocation2 + $0x3f0] sm:$0xf]
    %v354 = vld [vmem:[#allocation2 + $0x3f4] sm:$0xf]
    %v355 = vld [vmem:[#allocation2 + $0x3f8] sm:$0xf]
    %v356 = vld [vmem:[#allocation2 + $0x3fc] sm:$0xf]
    %v357 = vld [vmem:[#allocation7] sm:$0x3]
    %v358 = vld [vmem:[#allocation7 + $0x2] sm:$0x3]
    %v359 = vld [vmem:[#allocation8] sm:$0x1]
    %v360 = vld [vmem:[#allocation8 + $0x1] sm:$0x1]
    %v361 = vlaneseq
    %v362 = vshrl.u32 %v361, 7
    %v363 = vsub.s32 0, %v362
    %v364 = vrot.slane %v359, %v363
    %v621 = vunpack.c.l.b16 %v101
    %v622 = vunpack.c.l.b16 %v102
    %v623 = vunpack.c.l.b16 %v103
    %v624 = vunpack.c.l.b16 %v104
    %v625 = vunpack.c.l.b16 %v105
    %v626 = vunpack.c.l.b16 %v106
    %v627 = vunpack.c.l.b16 %v107
    %v628 = vunpack.c.l.b16 %v108
    %v629 = vunpack.c.l.b16 %v109
    %v630 = vunpack.c.l.b16 %v110
    %v631 = vunpack.c.l.b16 %v111
    %v632 = vunpack.c.l.b16 %v112
    %v633 = vunpack.c.l.b16 %v113
    %v634 = vunpack.c.l.b16 %v114
    %v635 = vunpack.c.l.b16 %v115
    %v636 = vunpack.c.l.b16 %v116
    %v637 = vunpack.c.l.b16 %v117
    %v638 = vunpack.c.l.b16 %v118
    %v639 = vunpack.c.l.b16 %v119
    %v640 = vunpack.c.l.b16 %v120
    %v641 = vunpack.c.l.b16 %v121
    %v642 = vunpack.c.l.b16 %v122
    %v643 = vunpack.c.l.b16 %v123
    %v644 = vunpack.c.l.b16 %v124
    %v645 = vunpack.c.l.b16 %v125
    %v646 = vunpack.c.l.b16 %v126
    %v647 = vunpack.c.l.b16 %v127
    %v648 = vunpack.c.l.b16 %v128
    %v649 = vunpack.c.l.b16 %v129
    %v650 = vunpack.c.l.b16 %v130
    %v651 = vunpack.c.l.b16 %v131
    %v652 = vunpack.c.l.b16 %v132
    %v653 = vunpack.c.l.b16 %v133
    %v654 = vunpack.c.l.b16 %v134
    %v655 = vunpack.c.l.b16 %v135
    %v656 = vunpack.c.l.b16 %v136
    %v657 = vunpack.c.l.b16 %v137
    %v658 = vunpack.c.l.b16 %v138
    %v659 = vunpack.c.l.b16 %v139
    %v660 = vunpack.c.l.b16 %v140
    %v661 = vunpack.c.l.b16 %v141
    %v662 = vunpack.c.l.b16 %v142
    %v663 = vunpack.c.l.b16 %v143
    %v664 = vunpack.c.l.b16 %v144
    %v665 = vunpack.c.l.b16 %v145
    %v666 = vunpack.c.l.b16 %v146
    %v667 = vunpack.c.l.b16 %v147
    %v668 = vunpack.c.l.b16 %v148
    %v669 = vunpack.c.l.b16 %v149
    %v670 = vunpack.c.l.b16 %v150
    %v671 = vunpack.c.l.b16 %v151
    %v672 = vunpack.c.l.b16 %v152
    %v673 = vunpack.c.l.b16 %v153
    %v674 = vunpack.c.l.b16 %v154
    %v675 = vunpack.c.l.b16 %v155
    %v676 = vunpack.c.l.b16 %v156
    %v677 = vunpack.c.l.b16 %v157
    %v678 = vunpack.c.l.b16 %v158
    %v679 = vunpack.c.l.b16 %v159
    %v680 = vunpack.c.l.b16 %v160
    %v681 = vunpack.c.l.b16 %v161
    %v682 = vunpack.c.l.b16 %v162
    %v683 = vunpack.c.l.b16 %v163
    %v684 = vunpack.c.l.b16 %v164
    %v685 = vunpack.c.l.b16 %v165
    %v686 = vunpack.c.l.b16 %v166
    %v687 = vunpack.c.l.b16 %v167
    %v688 = vunpack.c.l.b16 %v168
    %v689 = vunpack.c.l.b16 %v169
    %v690 = vunpack.c.l.b16 %v170
    %v691 = vunpack.c.l.b16 %v171
    %v692 = vunpack.c.l.b16 %v172
    %v693 = vunpack.c.l.b16 %v173
    %v694 = vunpack.c.l.b16 %v174
    %v695 = vunpack.c.l.b16 %v175
    %v696 = vunpack.c.l.b16 %v176
    %v697 = vunpack.c.l.b16 %v177
    %v698 = vunpack.c.l.b16 %v178
    %v699 = vunpack.c.l.b16 %v179
    %v700 = vunpack.c.l.b16 %v180
    %v701 = vunpack.c.l.b16 %v181
    %v702 = vunpack.c.l.b16 %v182
    %v703 = vunpack.c.l.b16 %v183
    %v704 = vunpack.c.l.b16 %v184
    %v705 = vunpack.c.l.b16 %v185
    %v706 = vunpack.c.l.b16 %v186
    %v707 = vunpack.c.l.b16 %v187
    %v708 = vunpack.c.l.b16 %v188
    %v709 = vunpack.c.l.b16 %v189
    %v710 = vunpack.c.l.b16 %v190
    %v711 = vunpack.c.l.b16 %v191
    %v712 = vunpack.c.l.b16 %v192
    %v713 = vunpack.c.l.b16 %v193
    %v714 = vunpack.c.l.b16 %v194
    %v715 = vunpack.c.l.b16 %v195
    %v716 = vunpack.c.l.b16 %v196
    %v717 = vunpack.c.l.b16 %v197
    %v718 = vunpack.c.l.b16 %v198
    %v719 = vunpack.c.l.b16 %v199
    %v720 = vunpack.c.l.b16 %v200
    %v721 = vunpack.c.l.b16 %v201
    %v722 = vunpack.c.l.b16 %v202
    %v723 = vunpack.c.l.b16 %v203
    %v724 = vunpack.c.l.b16 %v204
    %v725 = vunpack.c.l.b16 %v205
    %v726 = vunpack.c.l.b16 %v206
    %v727 = vunpack.c.l.b16 %v207
    %v728 = vunpack.c.l.b16 %v208
    %v729 = vunpack.c.l.b16 %v209
    %v730 = vunpack.c.l.b16 %v210
    %v731 = vunpack.c.l.b16 %v211
    %v732 = vunpack.c.l.b16 %v212
    %v733 = vunpack.c.l.b16 %v213
    %v734 = vunpack.c.l.b16 %v214
    %v735 = vunpack.c.l.b16 %v215
    %v736 = vunpack.c.l.b16 %v216
    %v737 = vunpack.c.l.b16 %v217
    %v738 = vunpack.c.l.b16 %v218
    %v739 = vunpack.c.l.b16 %v219
    %v740 = vunpack.c.l.b16 %v220
    %v741 = vunpack.c.l.b16 %v221
    %v742 = vunpack.c.l.b16 %v222
    %v743 = vunpack.c.l.b16 %v223
    %v744 = vunpack.c.l.b16 %v224
    %v745 = vunpack.c.l.b16 %v225
    %v746 = vunpack.c.l.b16 %v226
    %v747 = vunpack.c.l.b16 %v227
    %v748 = vunpack.c.l.b16 %v228
    %v749 = vunpack.c.l.b16 %v229
    %v750 = vunpack.c.l.b16 %v230
    %v751 = vunpack.c.l.b16 %v231
    %v752 = vunpack.c.l.b16 %v232
    %v753 = vunpack.c.l.b16 %v233
    %v754 = vunpack.c.l.b16 %v234
    %v755 = vunpack.c.l.b16 %v235
    %v756 = vunpack.c.l.b16 %v236
    %v757 = vunpack.c.l.b16 %v237
    %v758 = vunpack.c.l.b16 %v238
    %v759 = vunpack.c.l.b16 %v239
    %v760 = vunpack.c.l.b16 %v240
    %v761 = vunpack.c.l.b16 %v241
    %v762 = vunpack.c.l.b16 %v242
    %v763 = vunpack.c.l.b16 %v243
    %v764 = vunpack.c.l.b16 %v244
    %v765 = vunpack.c.l.b16 %v245
    %v766 = vunpack.c.l.b16 %v246
    %v767 = vunpack.c.l.b16 %v247
    %v768 = vunpack.c.l.b16 %v248
    %v769 = vunpack.c.l.b16 %v249
    %v770 = vunpack.c.l.b16 %v250
    %v771 = vunpack.c.l.b16 %v251
    %v772 = vunpack.c.l.b16 %v252
    %v773 = vunpack.c.l.b16 %v253
    %v774 = vunpack.c.l.b16 %v254
    %v775 = vunpack.c.l.b16 %v255
    %v776 = vunpack.c.l.b16 %v256
    %v777 = vunpack.c.l.b16 %v257
    %v778 = vunpack.c.l.b16 %v258
    %v779 = vunpack.c.l.b16 %v259
    %v780 = vunpack.c.l.b16 %v260
    %v781 = vunpack.c.l.b16 %v261
    %v782 = vunpack.c.l.b16 %v262
    %v783 = vunpack.c.l.b16 %v263
    %v784 = vunpack.c.l.b16 %v264
    %v785 = vunpack.c.l.b16 %v265
    %v786 = vunpack.c.l.b16 %v266
    %v787 = vunpack.c.l.b16 %v267
    %v788 = vunpack.c.l.b16 %v268
    %v789 = vunpack.c.l.b16 %v269
    %v790 = vunpack.c.l.b16 %v270
    %v791 = vunpack.c.l.b16 %v271
    %v792 = vunpack.c.l.b16 %v272
    %v793 = vunpack.c.l.b16 %v273
    %v794 = vunpack.c.l.b16 %v274
    %v795 = vunpack.c.l.b16 %v275
    %v796 = vunpack.c.l.b16 %v276
    %v797 = vunpack.c.l.b16 %v277
    %v798 = vunpack.c.l.b16 %v278
    %v799 = vunpack.c.l.b16 %v279
    %v800 = vunpack.c.l.b16 %v280
    %v801 = vunpack.c.l.b16 %v281
    %v802 = vunpack.c.l.b16 %v282
    %v803 = vunpack.c.l.b16 %v283
    %v804 = vunpack.c.l.b16 %v284
    %v805 = vunpack.c.l.b16 %v285
    %v806 = vunpack.c.l.b16 %v286
    %v807 = vunpack.c.l.b16 %v287
    %v808 = vunpack.c.l.b16 %v288
    %v809 = vunpack.c.l.b16 %v289
    %v810 = vunpack.c.l.b16 %v290
    %v811 = vunpack.c.l.b16 %v291
    %v812 = vunpack.c.l.b16 %v292
    %v813 = vunpack.c.l.b16 %v293
    %v814 = vunpack.c.l.b16 %v294
    %v815 = vunpack.c.l.b16 %v295
    %v816 = vunpack.c.l.b16 %v296
    %v817 = vunpack.c.l.b16 %v297
    %v818 = vunpack.c.l.b16 %v298
    %v819 = vunpack.c.l.b16 %v299
    %v820 = vunpack.c.l.b16 %v300
    %v821 = vunpack.c.l.b16 %v301
    %v822 = vunpack.c.l.b16 %v302
    %v823 = vunpack.c.l.b16 %v303
    %v824 = vunpack.c.l.b16 %v304
    %v825 = vunpack.c.l.b16 %v305
    %v826 = vunpack.c.l.b16 %v306
    %v827 = vunpack.c.l.b16 %v307
    %v828 = vunpack.c.l.b16 %v308
    %v829 = vunpack.c.l.b16 %v309
    %v830 = vunpack.c.l.b16 %v310
    %v831 = vunpack.c.l.b16 %v311
    %v832 = vunpack.c.l.b16 %v312
    %v833 = vunpack.c.l.b16 %v313
    %v834 = vunpack.c.l.b16 %v314
    %v835 = vunpack.c.l.b16 %v315
    %v836 = vunpack.c.l.b16 %v316
    %v837 = vunpack.c.l.b16 %v317
    %v838 = vunpack.c.l.b16 %v318
    %v839 = vunpack.c.l.b16 %v319
    %v840 = vunpack.c.l.b16 %v320
    %v841 = vunpack.c.l.b16 %v321
    %v842 = vunpack.c.l.b16 %v322
    %v843 = vunpack.c.l.b16 %v323
    %v844 = vunpack.c.l.b16 %v324
    %v845 = vunpack.c.l.b16 %v325
    %v846 = vunpack.c.l.b16 %v326
    %v847 = vunpack.c.l.b16 %v327
    %v848 = vunpack.c.l.b16 %v328
    %v849 = vunpack.c.l.b16 %v329
    %v850 = vunpack.c.l.b16 %v330
    %v851 = vunpack.c.l.b16 %v331
    %v852 = vunpack.c.l.b16 %v332
    %v853 = vunpack.c.l.b16 %v333
    %v854 = vunpack.c.l.b16 %v334
    %v855 = vunpack.c.l.b16 %v335
    %v856 = vunpack.c.l.b16 %v336
    %v857 = vunpack.c.l.b16 %v337
    %v858 = vunpack.c.l.b16 %v338
    %v859 = vunpack.c.l.b16 %v339
    %v860 = vunpack.c.l.b16 %v340
    %v861 = vunpack.c.l.b16 %v341
    %v862 = vunpack.c.l.b16 %v342
    %v863 = vunpack.c.l.b16 %v343
    %v864 = vunpack.c.l.b16 %v344
    %v865 = vunpack.c.l.b16 %v345
    %v866 = vunpack.c.l.b16 %v346
    %v867 = vunpack.c.l.b16 %v347
    %v868 = vunpack.c.l.b16 %v348
    %v869 = vunpack.c.l.b16 %v349
    %v870 = vunpack.c.l.b16 %v350
    %v871 = vunpack.c.l.b16 %v351
    %v872 = vunpack.c.l.b16 %v352
    %v873 = vunpack.c.l.b16 %v353
    %v874 = vunpack.c.l.b16 %v354
    %v875 = vunpack.c.l.b16 %v355
    %v876 = vunpack.c.l.b16 %v356
    %v877 = vpack.c.b16 %v622, %v621
    %v878 = vpack.c.b16 %v624, %v623
    %v879 = vpack.c.b16 %v626, %v625
    %v880 = vpack.c.b16 %v628, %v627
    %v881 = vpack.c.b16 %v630, %v629
    %v882 = vpack.c.b16 %v632, %v631
    %v883 = vpack.c.b16 %v634, %v633
    %v884 = vpack.c.b16 %v636, %v635
    %v885 = vpack.c.b16 %v638, %v637
    %v886 = vpack.c.b16 %v640, %v639
    %v887 = vpack.c.b16 %v642, %v641
    %v888 = vpack.c.b16 %v644, %v643
    %v889 = vpack.c.b16 %v646, %v645
    %v890 = vpack.c.b16 %v648, %v647
    %v891 = vpack.c.b16 %v650, %v649
    %v892 = vpack.c.b16 %v652, %v651
    %v893 = vpack.c.b16 %v654, %v653
    %v894 = vpack.c.b16 %v656, %v655
    %v895 = vpack.c.b16 %v658, %v657
    %v896 = vpack.c.b16 %v660, %v659
    %v897 = vpack.c.b16 %v662, %v661
    %v898 = vpack.c.b16 %v664, %v663
    %v899 = vpack.c.b16 %v666, %v665
    %v900 = vpack.c.b16 %v668, %v667
    %v901 = vpack.c.b16 %v670, %v669
    %v902 = vpack.c.b16 %v672, %v671
    %v903 = vpack.c.b16 %v674, %v673
    %v904 = vpack.c.b16 %v676, %v675
    %v905 = vpack.c.b16 %v678, %v677
    %v906 = vpack.c.b16 %v680, %v679
    %v907 = vpack.c.b16 %v682, %v681
    %v908 = vpack.c.b16 %v684, %v683
    %v909 = vpack.c.b16 %v686, %v685
    %v910 = vpack.c.b16 %v688, %v687
    %v911 = vpack.c.b16 %v690, %v689
    %v912 = vpack.c.b16 %v692, %v691
    %v913 = vpack.c.b16 %v694, %v693
    %v914 = vpack.c.b16 %v696, %v695
    %v915 = vpack.c.b16 %v698, %v697
    %v916 = vpack.c.b16 %v700, %v699
    %v917 = vpack.c.b16 %v702, %v701
    %v918 = vpack.c.b16 %v704, %v703
    %v919 = vpack.c.b16 %v706, %v705
    %v920 = vpack.c.b16 %v708, %v707
    %v921 = vpack.c.b16 %v710, %v709
    %v922 = vpack.c.b16 %v712, %v711
    %v923 = vpack.c.b16 %v714, %v713
    %v924 = vpack.c.b16 %v716, %v715
    %v925 = vpack.c.b16 %v718, %v717
    %v926 = vpack.c.b16 %v720, %v719
    %v927 = vpack.c.b16 %v722, %v721
    %v928 = vpack.c.b16 %v724, %v723
    %v929 = vpack.c.b16 %v726, %v725
    %v930 = vpack.c.b16 %v728, %v727
    %v931 = vpack.c.b16 %v730, %v729
    %v932 = vpack.c.b16 %v732, %v731
    %v933 = vpack.c.b16 %v734, %v733
    %v934 = vpack.c.b16 %v736, %v735
    %v935 = vpack.c.b16 %v738, %v737
    %v936 = vpack.c.b16 %v740, %v739
    %v937 = vpack.c.b16 %v742, %v741
    %v938 = vpack.c.b16 %v744, %v743
    %v939 = vpack.c.b16 %v746, %v745
    %v940 = vpack.c.b16 %v748, %v747
    %v941 = vpack.c.b16 %v750, %v749
    %v942 = vpack.c.b16 %v752, %v751
    %v943 = vpack.c.b16 %v754, %v753
    %v944 = vpack.c.b16 %v756, %v755
    %v945 = vpack.c.b16 %v758, %v757
    %v946 = vpack.c.b16 %v760, %v759
    %v947 = vpack.c.b16 %v762, %v761
    %v948 = vpack.c.b16 %v764, %v763
    %v949 = vpack.c.b16 %v766, %v765
    %v950 = vpack.c.b16 %v768, %v767
    %v951 = vpack.c.b16 %v770, %v769
    %v952 = vpack.c.b16 %v772, %v771
    %v953 = vpack.c.b16 %v774, %v773
    %v954 = vpack.c.b16 %v776, %v775
    %v955 = vpack.c.b16 %v778, %v777
    %v956 = vpack.c.b16 %v780, %v779
    %v957 = vpack.c.b16 %v782, %v781
    %v958 = vpack.c.b16 %v784, %v783
    %v959 = vpack.c.b16 %v786, %v785
    %v960 = vpack.c.b16 %v788, %v787
    %v961 = vpack.c.b16 %v790, %v789
    %v962 = vpack.c.b16 %v792, %v791
    %v963 = vpack.c.b16 %v794, %v793
    %v964 = vpack.c.b16 %v796, %v795
    %v965 = vpack.c.b16 %v798, %v797
    %v966 = vpack.c.b16 %v800, %v799
    %v967 = vpack.c.b16 %v802, %v801
    %v968 = vpack.c.b16 %v804, %v803
    %v969 = vpack.c.b16 %v806, %v805
    %v970 = vpack.c.b16 %v808, %v807
    %v971 = vpack.c.b16 %v810, %v809
    %v972 = vpack.c.b16 %v812, %v811
    %v973 = vpack.c.b16 %v814, %v813
    %v974 = vpack.c.b16 %v816, %v815
    %v975 = vpack.c.b16 %v818, %v817
    %v976 = vpack.c.b16 %v820, %v819
    %v977 = vpack.c.b16 %v822, %v821
    %v978 = vpack.c.b16 %v824, %v823
    %v979 = vpack.c.b16 %v826, %v825
    %v980 = vpack.c.b16 %v828, %v827
    %v981 = vpack.c.b16 %v830, %v829
    %v982 = vpack.c.b16 %v832, %v831
    %v983 = vpack.c.b16 %v834, %v833
    %v984 = vpack.c.b16 %v836, %v835
    %v985 = vpack.c.b16 %v838, %v837
    %v986 = vpack.c.b16 %v840, %v839
    %v987 = vpack.c.b16 %v842, %v841
    %v988 = vpack.c.b16 %v844, %v843
    %v989 = vpack.c.b16 %v846, %v845
    %v990 = vpack.c.b16 %v848, %v847
    %v991 = vpack.c.b16 %v850, %v849
    %v992 = vpack.c.b16 %v852, %v851
    %v993 = vpack.c.b16 %v854, %v853
    %v994 = vpack.c.b16 %v856, %v855
    %v995 = vpack.c.b16 %v858, %v857
    %v996 = vpack.c.b16 %v860, %v859
    %v997 = vpack.c.b16 %v862, %v861
    %v998 = vpack.c.b16 %v864, %v863
    %v999 = vpack.c.b16 %v866, %v865
    %v1000 = vpack.c.b16 %v868, %v867
    %v1001 = vpack.c.b16 %v870, %v869
    %v1002 = vpack.c.b16 %v872, %v871
    %v1003 = vpack.c.b16 %v874, %v873
    %v1004 = vpack.c.b16 %v876, %v875
    %vm1005 = vcmask 31744
    %v1007 = vsel %vm1005, %v877, 0
    %v1010 = vsel %vm1005, %v878, 0
    %v1013 = vsel %vm1005, %v879, 0
    %v1016 = vsel %vm1005, %v880, 0
    %v1019 = vsel %vm1005, %v881, 0
    %v1022 = vsel %vm1005, %v882, 0
    %v1025 = vsel %vm1005, %v883, 0
    %v1028 = vsel %vm1005, %v884, 0
    %v1031 = vsel %vm1005, %v885, 0
    %v1034 = vsel %vm1005, %v886, 0
    %v1037 = vsel %vm1005, %v887, 0
    %v1040 = vsel %vm1005, %v888, 0
    %v1043 = vsel %vm1005, %v889, 0
    %v1046 = vsel %vm1005, %v890, 0
    %v1049 = vsel %vm1005, %v891, 0
    %v1052 = vsel %vm1005, %v892, 0
    %v1055 = vsel %vm1005, %v893, 0
    %v1058 = vsel %vm1005, %v894, 0
    %v1061 = vsel %vm1005, %v895, 0
    %v1064 = vsel %vm1005, %v896, 0
    %v1067 = vsel %vm1005, %v897, 0
    %v1070 = vsel %vm1005, %v898, 0
    %v1073 = vsel %vm1005, %v899, 0
    %v1076 = vsel %vm1005, %v900, 0
    %v1079 = vsel %vm1005, %v901, 0
    %v1082 = vsel %vm1005, %v902, 0
    %v1085 = vsel %vm1005, %v903, 0
    %v1088 = vsel %vm1005, %v904, 0
    %v1091 = vsel %vm1005, %v905, 0
    %v1094 = vsel %vm1005, %v906, 0
    %v1097 = vsel %vm1005, %v907, 0
    %v1100 = vsel %vm1005, %v908, 0
    %v1103 = vsel %vm1005, %v909, 0
    %v1106 = vsel %vm1005, %v910, 0
    %v1109 = vsel %vm1005, %v911, 0
    %v1112 = vsel %vm1005, %v912, 0
    %v1115 = vsel %vm1005, %v913, 0
    %v1118 = vsel %vm1005, %v914, 0
    %v1121 = vsel %vm1005, %v915, 0
    %v1124 = vsel %vm1005, %v916, 0
    %v1127 = vsel %vm1005, %v917, 0
    %v1130 = vsel %vm1005, %v918, 0
    %v1133 = vsel %vm1005, %v919, 0
    %v1136 = vsel %vm1005, %v920, 0
    %v1139 = vsel %vm1005, %v921, 0
    %v1142 = vsel %vm1005, %v922, 0
    %v1145 = vsel %vm1005, %v923, 0
    %v1148 = vsel %vm1005, %v924, 0
    %v1151 = vsel %vm1005, %v925, 0
    %v1154 = vsel %vm1005, %v926, 0
    %v1157 = vsel %vm1005, %v927, 0
    %v1160 = vsel %vm1005, %v928, 0
    %v1163 = vsel %vm1005, %v929, 0
    %v1166 = vsel %vm1005, %v930, 0
    %v1169 = vsel %vm1005, %v931, 0
    %v1172 = vsel %vm1005, %v932, 0
    %v1175 = vsel %vm1005, %v933, 0
    %v1178 = vsel %vm1005, %v934, 0
    %v1181 = vsel %vm1005, %v935, 0
    %v1184 = vsel %vm1005, %v936, 0
    %v1187 = vsel %vm1005, %v937, 0
    %v1190 = vsel %vm1005, %v938, 0
    %v1193 = vsel %vm1005, %v939, 0
    %v1196 = vsel %vm1005, %v940, 0
    %v1199 = vsel %vm1005, %v941, 0
    %v1202 = vsel %vm1005, %v942, 0
    %v1205 = vsel %vm1005, %v943, 0
    %v1208 = vsel %vm1005, %v944, 0
    %v1211 = vsel %vm1005, %v945, 0
    %v1214 = vsel %vm1005, %v946, 0
    %v1217 = vsel %vm1005, %v947, 0
    %v1220 = vsel %vm1005, %v948, 0
    %v1223 = vsel %vm1005, %v949, 0
    %v1226 = vsel %vm1005, %v950, 0
    %v1229 = vsel %vm1005, %v951, 0
    %v1232 = vsel %vm1005, %v952, 0
    %v1235 = vsel %vm1005, %v953, 0
    %v1238 = vsel %vm1005, %v954, 0
    %v1241 = vsel %vm1005, %v955, 0
    %v1244 = vsel %vm1005, %v956, 0
    %v1247 = vsel %vm1005, %v957, 0
    %v1250 = vsel %vm1005, %v958, 0
    %v1253 = vsel %vm1005, %v959, 0
    %v1256 = vsel %vm1005, %v960, 0
    %v1259 = vsel %vm1005, %v961, 0
    %v1262 = vsel %vm1005, %v962, 0
    %v1265 = vsel %vm1005, %v963, 0
    %v1268 = vsel %vm1005, %v964, 0
    %v1271 = vsel %vm1005, %v965, 0
    %v1274 = vsel %vm1005, %v966, 0
    %v1277 = vsel %vm1005, %v967, 0
    %v1280 = vsel %vm1005, %v968, 0
    %v1283 = vsel %vm1005, %v969, 0
    %v1286 = vsel %vm1005, %v970, 0
    %v1289 = vsel %vm1005, %v971, 0
    %v1292 = vsel %vm1005, %v972, 0
    %v1295 = vsel %vm1005, %v973, 0
    %v1298 = vsel %vm1005, %v974, 0
    %v1301 = vsel %vm1005, %v975, 0
    %v1304 = vsel %vm1005, %v976, 0
    %v1307 = vsel %vm1005, %v977, 0
    %v1310 = vsel %vm1005, %v978, 0
    %v1313 = vsel %vm1005, %v979, 0
    %v1316 = vsel %vm1005, %v980, 0
    %v1319 = vsel %vm1005, %v981, 0
    %v1322 = vsel %vm1005, %v982, 0
    %v1325 = vsel %vm1005, %v983, 0
    %v1328 = vsel %vm1005, %v984, 0
    %v1331 = vsel %vm1005, %v985, 0
    %v1334 = vsel %vm1005, %v986, 0
    %v1337 = vsel %vm1005, %v987, 0
    %v1340 = vsel %vm1005, %v988, 0
    %v1343 = vsel %vm1005, %v989, 0
    %v1346 = vsel %vm1005, %v990, 0
    %v1349 = vsel %vm1005, %v991, 0
    %v1352 = vsel %vm1005, %v992, 0
    %v1355 = vsel %vm1005, %v993, 0
    %v1358 = vsel %vm1005, %v994, 0
    %v1361 = vsel %vm1005, %v995, 0
    %v1364 = vsel %vm1005, %v996, 0
    %v1367 = vsel %vm1005, %v997, 0
    %v1370 = vsel %vm1005, %v998, 0
    %v1373 = vsel %vm1005, %v999, 0
    %v1376 = vsel %vm1005, %v1000, 0
    %v1379 = vsel %vm1005, %v1001, 0
    %v1382 = vsel %vm1005, %v1002, 0
    %v1385 = vsel %vm1005, %v1003, 0
    %v1388 = vsel %vm1005, %v1004, 0
    %vm1390 = vcmask 1041408
    %v1392 = vsel %vm1390, %v357, 0
    %1394 = vmatprep.subr.bf16.mxu0 0
    %1395 = vmatpush1.bf16.msra.mxu0 %v1392
    %1396 = vmatprep.subr.bf16.mxu0 0
    %1397 = vmatpush1.bf16.msra.mxu0 0
    %1398 = vmatprep.subr.bf16.mxu0 0
    %1399 = vmatpush1.bf16.msra.mxu0 0
    %1400 = vmatprep.subr.bf16.mxu0 0
    %1401 = vmatpush1.bf16.msra.mxu0 0
    %1402 = vmatprep.subr.bf16.mxu0 0
    %1403 = vmatpush1.bf16.msra.mxu0 0
    %1404 = vmatprep.subr.bf16.mxu0 0
    %1405 = vmatpush1.bf16.msra.mxu0 0
    %1406 = vmatprep.subr.bf16.mxu0 0
    %1407 = vmatpush1.bf16.msra.mxu0 0
    %1408 = vmatprep.subr.bf16.mxu0 0
    %1409 = vmatpush1.bf16.msra.mxu0 0
    %1410 = vmatprep.subr.bf16.mxu0 0
    %1411 = vmatpush1.bf16.msra.mxu0 0
    %1412 = vmatprep.subr.bf16.mxu0 0
    %1413 = vmatpush1.bf16.msra.mxu0 0
    %1414 = vmatprep.subr.bf16.mxu0 0
    %1415 = vmatpush1.bf16.msra.mxu0 0
    %1416 = vmatprep.subr.bf16.mxu0 0
    %1417 = vmatpush1.bf16.msra.mxu0 0
    %1418 = vmatprep.subr.bf16.mxu0 0
    %1419 = vmatpush1.bf16.msra.mxu0 0
    %1420 = vmatprep.subr.bf16.mxu0 0
    %1421 = vmatpush1.bf16.msra.mxu0 0
    %1422 = vmatprep.subr.bf16.mxu0 0
    %1423 = vmatpush1.bf16.msra.mxu0 0
    %1424 = vmatprep.subr.bf16.mxu0 0
    %1425 = vmatpush1.bf16.msra.mxu0 0
    %1426 = vmatprep.mubr.bf16.mxu0 0
    %1427 = vmatmul.mubr.bf16.gmra.mrb[0].mxu0 %v1007
    %v1428 = vpop.f32.mrb[0].mxu0
    %v1429 = vadd.f32 %v364, %v1428
    %v1430 = vpop.f32.mrb[0].mxu0
    %v1431 = vpop.f32.mrb[0].mxu0
    %v1432 = vadd.f32 %v364, %v1431
    %v1433 = vpop.f32.mrb[0].mxu0
    %1434 = vmatprep.mubr.bf16.mxu0 0
    %1435 = vmatmul.mubr.bf16.gmra.mrb[0].mxu0 %v1010
    %v1436 = vpop.f32.mrb[0].mxu0
    %v1437 = vadd.f32 %v364, %v1436
    %v1438 = vpop.f32.mrb[0].mxu0
    %v1439 = vpop.f32.mrb[0].mxu0
    %v1440 = vadd.f32 %v364, %v1439
    %v1441 = vpop.f32.mrb[0].mxu0
    %1442 = vmatprep.mubr.bf16.mxu0 0
    %1443 = vmatmul.mubr.bf16.gmra.mrb[0].mxu0 %v1013
    %v1444 = vpop.f32.mrb[0].mxu0
    %v1445 = vadd.f32 %v364, %v1444
    %v1446 = vpop.f32.mrb[0].mxu0
    %v1447 = vpop.f32.mrb[0].mxu0
    %v1448 = vadd.f32 %v364, %v1447
    %v1449 = vpop.f32.mrb[0].mxu0
    %1450 = vmatprep.mubr.bf16.mxu0 0
    %1451 = vmatmul.mubr.bf16.gmra.mrb[0].mxu0 %v1016
    %v1452 = vpop.f32.mrb[0].mxu0
    %v1453 = vadd.f32 %v364, %v1452
    %v1454 = vpop.f32.mrb[0].mxu0
    %v1455 = vpop.f32.mrb[0].mxu0
    %v1456 = vadd.f32 %v364, %v1455
    %v1457 = vpop.f32.mrb[0].mxu0
    %1458 = vmatprep.mubr.bf16.mxu0 0
    %1459 = vmatmul.mubr.bf16.gmra.mrb[0].mxu0 %v1019
    %v1460 = vpop.f32.mrb[0].mxu0
    %v1461 = vadd.f32 %v364, %v1460
    %v1462 = vpop.f32.mrb[0].mxu0
    %v1463 = vpop.f32.mrb[0].mxu0
    %v1464 = vadd.f32 %v364, %v1463
    %v1465 = vpop.f32.mrb[0].mxu0
    %1466 = vmatprep.mubr.bf16.mxu0 0
    %1467 = vmatmul.mubr.bf16.gmra.mrb[0].mxu0 %v1022
    %v1468 = vpop.f32.mrb[0].mxu0
    %v1469 = vadd.f32 %v364, %v1468
    %v1470 = vpop.f32.mrb[0].mxu0
    %v1471 = vpop.f32.mrb[0].mxu0
    %v1472 = vadd.f32 %v364, %v1471
    %v1473 = vpop.f32.mrb[0].mxu0
    %1474 = vmatprep.mubr.bf16.mxu0 0
    %1475 = vmatmul.mubr.bf16.gmra.mrb[0].mxu0 %v1025
    %v1476 = vpop.f32.mrb[0].mxu0
    %v1477 = vadd.f32 %v364, %v1476
    %v1478 = vpop.f32.mrb[0].mxu0
    %v1479 = vpop.f32.mrb[0].mxu0
    %v1480 = vadd.f32 %v364, %v1479
    %v1481 = vpop.f32.mrb[0].mxu0
    %1482 = vmatprep.mubr.bf16.mxu0 0
    %1483 = vmatmul.mubr.bf16.gmra.mrb[0].mxu0 %v1028
    %v1484 = vpop.f32.mrb[0].mxu0
    %v1485 = vadd.f32 %v364, %v1484
    %v1486 = vpop.f32.mrb[0].mxu0
    %v1487 = vpop.f32.mrb[0].mxu0
    %v1488 = vadd.f32 %v364, %v1487
    %v1489 = vpop.f32.mrb[0].mxu0
    %1490 = vmatprep.mubr.bf16.mxu0 0
    %1491 = vmatmul.mubr.bf16.gmra.mrb[0].mxu0 %v1031
    %v1492 = vpop.f32.mrb[0].mxu0
    %v1493 = vadd.f32 %v364, %v1492
    %v1494 = vpop.f32.mrb[0].mxu0
    %v1495 = vpop.f32.mrb[0].mxu0
    %v1496 = vadd.f32 %v364, %v1495
    %v1497 = vpop.f32.mrb[0].mxu0
    %1498 = vmatprep.mubr.bf16.mxu0 0
    %1499 = vmatmul.mubr.bf16.gmra.mrb[0].mxu0 %v1034
    %v1500 = vpop.f32.mrb[0].mxu0
    %v1501 = vadd.f32 %v364, %v1500
    %v1502 = vpop.f32.mrb[0].mxu0
    %v1503 = vpop.f32.mrb[0].mxu0
    %v1504 = vadd.f32 %v364, %v1503
    %v1505 = vpop.f32.mrb[0].mxu0
    %1506 = vmatprep.mubr.bf16.mxu0 0
    %1507 = vmatmul.mubr.bf16.gmra.mrb[0].mxu0 %v1037
    %v1508 = vpop.f32.mrb[0].mxu0
    %v1509 = vadd.f32 %v364, %v1508
    %v1510 = vpop.f32.mrb[0].mxu0
    %v1511 = vpop.f32.mrb[0].mxu0
    %v1512 = vadd.f32 %v364, %v1511
    %v1513 = vpop.f32.mrb[0].mxu0
    %1514 = vmatprep.mubr.bf16.mxu0 0
    %1515 = vmatmul.mubr.bf16.gmra.mrb[0].mxu0 %v1040
    %v1516 = vpop.f32.mrb[0].mxu0
    %v1517 = vadd.f32 %v364, %v1516
    %v1518 = vpop.f32.mrb[0].mxu0
    %v1519 = vpop.f32.mrb[0].mxu0
    %v1520 = vadd.f32 %v364, %v1519
    %v1521 = vpop.f32.mrb[0].mxu0
    %1522 = vmatprep.mubr.bf16.mxu0 0
    %1523 = vmatmul.mubr.bf16.gmra.mrb[0].mxu0 %v1043
    %v1524 = vpop.f32.mrb[0].mxu0
    %v1525 = vadd.f32 %v364, %v1524
    %v1526 = vpop.f32.mrb[0].mxu0
    %v1527 = vpop.f32.mrb[0].mxu0
    %v1528 = vadd.f32 %v364, %v1527
    %v1529 = vpop.f32.mrb[0].mxu0
    %1530 = vmatprep.mubr.bf16.mxu0 0
    %1531 = vmatmul.mubr.bf16.gmra.mrb[0].mxu0 %v1046
    %v1532 = vpop.f32.mrb[0].mxu0
    %v1533 = vadd.f32 %v364, %v1532
    %v1534 = vpop.f32.mrb[0].mxu0
    %v1535 = vpop.f32.mrb[0].mxu0
    %v1536 = vadd.f32 %v364, %v1535
    %v1537 = vpop.f32.mrb[0].mxu0
    %1538 = vmatprep.mubr.bf16.mxu0 0
    %1539 = vmatmul.mubr.bf16.gmra.mrb[0].mxu0 %v1049
    %v1540 = vpop.f32.mrb[0].mxu0
    %v1541 = vadd.f32 %v364, %v1540
    %v1542 = vpop.f32.mrb[0].mxu0
    %v1543 = vpop.f32.mrb[0].mxu0
    %v1544 = vadd.f32 %v364, %v1543
    %v1545 = vpop.f32.mrb[0].mxu0
    %1546 = vmatprep.mubr.bf16.mxu0 0
    %1547 = vmatmul.mubr.bf16.gmra.mrb[0].mxu0 %v1052
    %v1548 = vpop.f32.mrb[0].mxu0
    %v1549 = vadd.f32 %v364, %v1548
    %v1550 = vpop.f32.mrb[0].mxu0
    %v1551 = vpop.f32.mrb[0].mxu0
    %v1552 = vadd.f32 %v364, %v1551
    %v1553 = vpop.f32.mrb[0].mxu0
    %1554 = vmatprep.mubr.bf16.mxu0 0
    %1555 = vmatmul.mubr.bf16.gmra.mrb[0].mxu0 %v1055
    %v1556 = vpop.f32.mrb[0].mxu0
    %v1557 = vadd.f32 %v364, %v1556
    %v1558 = vpop.f32.mrb[0].mxu0
    %v1559 = vpop.f32.mrb[0].mxu0
    %v1560 = vadd.f32 %v364, %v1559
    %v1561 = vpop.f32.mrb[0].mxu0
    %1562 = vmatprep.mubr.bf16.mxu0 0
    %1563 = vmatmul.mubr.bf16.gmra.mrb[0].mxu0 %v1058
    %v1564 = vpop.f32.mrb[0].mxu0
    %v1565 = vadd.f32 %v364, %v1564
    %v1566 = vpop.f32.mrb[0].mxu0
    %v1567 = vpop.f32.mrb[0].mxu0
    %v1568 = vadd.f32 %v364, %v1567
    %v1569 = vpop.f32.mrb[0].mxu0
    %1570 = vmatprep.mubr.bf16.mxu0 0
    %1571 = vmatmul.mubr.bf16.gmra.mrb[0].mxu0 %v1061
    %v1572 = vpop.f32.mrb[0].mxu0
    %v1573 = vadd.f32 %v364, %v1572
    %v1574 = vpop.f32.mrb[0].mxu0
    %v1575 = vpop.f32.mrb[0].mxu0
    %v1576 = vadd.f32 %v364, %v1575
    %v1577 = vpop.f32.mrb[0].mxu0
    %1578 = vmatprep.mubr.bf16.mxu0 0
    %1579 = vmatmul.mubr.bf16.gmra.mrb[0].mxu0 %v1064
    %v1580 = vpop.f32.mrb[0].mxu0
    %v1581 = vadd.f32 %v364, %v1580
    %v1582 = vpop.f32.mrb[0].mxu0
    %v1583 = vpop.f32.mrb[0].mxu0
    %v1584 = vadd.f32 %v364, %v1583
    %v1585 = vpop.f32.mrb[0].mxu0
    %1586 = vmatprep.mubr.bf16.mxu0 0
    %1587 = vmatmul.mubr.bf16.gmra.mrb[0].mxu0 %v1067
    %v1588 = vpop.f32.mrb[0].mxu0
    %v1589 = vadd.f32 %v364, %v1588
    %v1590 = vpop.f32.mrb[0].mxu0
    %v1591 = vpop.f32.mrb[0].mxu0
    %v1592 = vadd.f32 %v364, %v1591
    %v1593 = vpop.f32.mrb[0].mxu0
    %1594 = vmatprep.mubr.bf16.mxu0 0
    %1595 = vmatmul.mubr.bf16.gmra.mrb[0].mxu0 %v1070
    %v1596 = vpop.f32.mrb[0].mxu0
    %v1597 = vadd.f32 %v364, %v1596
    %v1598 = vpop.f32.mrb[0].mxu0
    %v1599 = vpop.f32.mrb[0].mxu0
    %v1600 = vadd.f32 %v364, %v1599
    %v1601 = vpop.f32.mrb[0].mxu0
    %1602 = vmatprep.mubr.bf16.mxu0 0
    %1603 = vmatmul.mubr.bf16.gmra.mrb[0].mxu0 %v1073
    %v1604 = vpop.f32.mrb[0].mxu0
    %v1605 = vadd.f32 %v364, %v1604
    %v1606 = vpop.f32.mrb[0].mxu0
    %v1607 = vpop.f32.mrb[0].mxu0
    %v1608 = vadd.f32 %v364, %v1607
    %v1609 = vpop.f32.mrb[0].mxu0
    %1610 = vmatprep.mubr.bf16.mxu0 0
    %1611 = vmatmul.mubr.bf16.gmra.mrb[0].mxu0 %v1076
    %v1612 = vpop.f32.mrb[0].mxu0
    %v1613 = vadd.f32 %v364, %v1612
    %v1614 = vpop.f32.mrb[0].mxu0
    %v1615 = vpop.f32.mrb[0].mxu0
    %v1616 = vadd.f32 %v364, %v1615
    %v1617 = vpop.f32.mrb[0].mxu0
    %1618 = vmatprep.mubr.bf16.mxu0 0
    %1619 = vmatmul.mubr.bf16.gmra.mrb[0].mxu0 %v1079
    %v1620 = vpop.f32.mrb[0].mxu0
    %v1621 = vadd.f32 %v364, %v1620
    %v1622 = vpop.f32.mrb[0].mxu0
    %v1623 = vpop.f32.mrb[0].mxu0
    %v1624 = vadd.f32 %v364, %v1623
    %v1625 = vpop.f32.mrb[0].mxu0
    %1626 = vmatprep.mubr.bf16.mxu0 0
    %1627 = vmatmul.mubr.bf16.gmra.mrb[0].mxu0 %v1082
    %v1628 = vpop.f32.mrb[0].mxu0
    %v1629 = vadd.f32 %v364, %v1628
    %v1630 = vpop.f32.mrb[0].mxu0
    %v1631 = vpop.f32.mrb[0].mxu0
    %v1632 = vadd.f32 %v364, %v1631
    %v1633 = vpop.f32.mrb[0].mxu0
    %1634 = vmatprep.mubr.bf16.mxu0 0
    %1635 = vmatmul.mubr.bf16.gmra.mrb[0].mxu0 %v1085
    %v1636 = vpop.f32.mrb[0].mxu0
    %v1637 = vadd.f32 %v364, %v1636
    %v1638 = vpop.f32.mrb[0].mxu0
    %v1639 = vpop.f32.mrb[0].mxu0
    %v1640 = vadd.f32 %v364, %v1639
    %v1641 = vpop.f32.mrb[0].mxu0
    %1642 = vmatprep.mubr.bf16.mxu0 0
    %1643 = vmatmul.mubr.bf16.gmra.mrb[0].mxu0 %v1088
    %v1644 = vpop.f32.mrb[0].mxu0
    %v1645 = vadd.f32 %v364, %v1644
    %v1646 = vpop.f32.mrb[0].mxu0
    %v1647 = vpop.f32.mrb[0].mxu0
    %v1648 = vadd.f32 %v364, %v1647
    %v1649 = vpop.f32.mrb[0].mxu0
    %1650 = vmatprep.mubr.bf16.mxu0 0
    %1651 = vmatmul.mubr.bf16.gmra.mrb[0].mxu0 %v1091
    %v1652 = vpop.f32.mrb[0].mxu0
    %v1653 = vadd.f32 %v364, %v1652
    %v1654 = vpop.f32.mrb[0].mxu0
    %v1655 = vpop.f32.mrb[0].mxu0
    %v1656 = vadd.f32 %v364, %v1655
    %v1657 = vpop.f32.mrb[0].mxu0
    %1658 = vmatprep.mubr.bf16.mxu0 0
    %1659 = vmatmul.mubr.bf16.gmra.mrb[0].mxu0 %v1094
    %v1660 = vpop.f32.mrb[0].mxu0
    %v1661 = vadd.f32 %v364, %v1660
    %v1662 = vpop.f32.mrb[0].mxu0
    %v1663 = vpop.f32.mrb[0].mxu0
    %v1664 = vadd.f32 %v364, %v1663
    %v1665 = vpop.f32.mrb[0].mxu0
    %1666 = vmatprep.mubr.bf16.mxu0 0
    %1667 = vmatmul.mubr.bf16.gmra.mrb[0].mxu0 %v1097
    %v1668 = vpop.f32.mrb[0].mxu0
    %v1669 = vadd.f32 %v364, %v1668
    %v1670 = vpop.f32.mrb[0].mxu0
    %v1671 = vpop.f32.mrb[0].mxu0
    %v1672 = vadd.f32 %v364, %v1671
    %v1673 = vpop.f32.mrb[0].mxu0
    %1674 = vmatprep.mubr.bf16.mxu0 0
    %1675 = vmatmul.mubr.bf16.gmra.mrb[0].mxu0 %v1100
    %v1676 = vpop.f32.mrb[0].mxu0
    %v1677 = vadd.f32 %v364, %v1676
    %v1678 = vpop.f32.mrb[0].mxu0
    %v1679 = vpop.f32.mrb[0].mxu0
    %v1680 = vadd.f32 %v364, %v1679
    %v1681 = vpop.f32.mrb[0].mxu0
    %1682 = vmatprep.mubr.bf16.mxu0 0
    %1683 = vmatmul.mubr.bf16.gmra.mrb[0].mxu0 %v1103
    %v1684 = vpop.f32.mrb[0].mxu0
    %v1685 = vadd.f32 %v364, %v1684
    %v1686 = vpop.f32.mrb[0].mxu0
    %v1687 = vpop.f32.mrb[0].mxu0
    %v1688 = vadd.f32 %v364, %v1687
    %v1689 = vpop.f32.mrb[0].mxu0
    %1690 = vmatprep.mubr.bf16.mxu0 0
    %1691 = vmatmul.mubr.bf16.gmra.mrb[0].mxu0 %v1106
    %v1692 = vpop.f32.mrb[0].mxu0
    %v1693 = vadd.f32 %v364, %v1692
    %v1694 = vpop.f32.mrb[0].mxu0
    %v1695 = vpop.f32.mrb[0].mxu0
    %v1696 = vadd.f32 %v364, %v1695
    %v1697 = vpop.f32.mrb[0].mxu0
    %1698 = vmatprep.mubr.bf16.mxu0 0
    %1699 = vmatmul.mubr.bf16.gmra.mrb[0].mxu0 %v1109
    %v1700 = vpop.f32.mrb[0].mxu0
    %v1701 = vadd.f32 %v364, %v1700
    %v1702 = vpop.f32.mrb[0].mxu0
    %v1703 = vpop.f32.mrb[0].mxu0
    %v1704 = vadd.f32 %v364, %v1703
    %v1705 = vpop.f32.mrb[0].mxu0
    %1706 = vmatprep.mubr.bf16.mxu0 0
    %1707 = vmatmul.mubr.bf16.gmra.mrb[0].mxu0 %v1112
    %v1708 = vpop.f32.mrb[0].mxu0
    %v1709 = vadd.f32 %v364, %v1708
    %v1710 = vpop.f32.mrb[0].mxu0
    %v1711 = vpop.f32.mrb[0].mxu0
    %v1712 = vadd.f32 %v364, %v1711
    %v1713 = vpop.f32.mrb[0].mxu0
    %1714 = vmatprep.mubr.bf16.mxu0 0
    %1715 = vmatmul.mubr.bf16.gmra.mrb[0].mxu0 %v1115
    %v1716 = vpop.f32.mrb[0].mxu0
    %v1717 = vadd.f32 %v364, %v1716
    %v1718 = vpop.f32.mrb[0].mxu0
    %v1719 = vpop.f32.mrb[0].mxu0
    %v1720 = vadd.f32 %v364, %v1719
    %v1721 = vpop.f32.mrb[0].mxu0
    %1722 = vmatprep.mubr.bf16.mxu0 0
    %1723 = vmatmul.mubr.bf16.gmra.mrb[0].mxu0 %v1118
    %v1724 = vpop.f32.mrb[0].mxu0
    %v1725 = vadd.f32 %v364, %v1724
    %v1726 = vpop.f32.mrb[0].mxu0
    %v1727 = vpop.f32.mrb[0].mxu0
    %v1728 = vadd.f32 %v364, %v1727
    %v1729 = vpop.f32.mrb[0].mxu0
    %1730 = vmatprep.mubr.bf16.mxu0 0
    %1731 = vmatmul.mubr.bf16.gmra.mrb[0].mxu0 %v1121
    %v1732 = vpop.f32.mrb[0].mxu0
    %v1733 = vadd.f32 %v364, %v1732
    %v1734 = vpop.f32.mrb[0].mxu0
    %v1735 = vpop.f32.mrb[0].mxu0
    %v1736 = vadd.f32 %v364, %v1735
    %v1737 = vpop.f32.mrb[0].mxu0
    %1738 = vmatprep.mubr.bf16.mxu0 0
    %1739 = vmatmul.mubr.bf16.gmra.mrb[0].mxu0 %v1124
    %v1740 = vpop.f32.mrb[0].mxu0
    %v1741 = vadd.f32 %v364, %v1740
    %v1742 = vpop.f32.mrb[0].mxu0
    %v1743 = vpop.f32.mrb[0].mxu0
    %v1744 = vadd.f32 %v364, %v1743
    %v1745 = vpop.f32.mrb[0].mxu0
    %1746 = vmatprep.mubr.bf16.mxu0 0
    %1747 = vmatmul.mubr.bf16.gmra.mrb[0].mxu0 %v1127
    %v1748 = vpop.f32.mrb[0].mxu0
    %v1749 = vadd.f32 %v364, %v1748
    %v1750 = vpop.f32.mrb[0].mxu0
    %v1751 = vpop.f32.mrb[0].mxu0
    %v1752 = vadd.f32 %v364, %v1751
    %v1753 = vpop.f32.mrb[0].mxu0
    %1754 = vmatprep.mubr.bf16.mxu0 0
    %1755 = vmatmul.mubr.bf16.gmra.mrb[0].mxu0 %v1130
    %v1756 = vpop.f32.mrb[0].mxu0
    %v1757 = vadd.f32 %v364, %v1756
    %v1758 = vpop.f32.mrb[0].mxu0
    %v1759 = vpop.f32.mrb[0].mxu0
    %v1760 = vadd.f32 %v364, %v1759
    %v1761 = vpop.f32.mrb[0].mxu0
    %1762 = vmatprep.mubr.bf16.mxu0 0
    %1763 = vmatmul.mubr.bf16.gmra.mrb[0].mxu0 %v1133
    %v1764 = vpop.f32.mrb[0].mxu0
    %v1765 = vadd.f32 %v364, %v1764
    %v1766 = vpop.f32.mrb[0].mxu0
    %v1767 = vpop.f32.mrb[0].mxu0
    %v1768 = vadd.f32 %v364, %v1767
    %v1769 = vpop.f32.mrb[0].mxu0
    %1770 = vmatprep.mubr.bf16.mxu0 0
    %1771 = vmatmul.mubr.bf16.gmra.mrb[0].mxu0 %v1136
    %v1772 = vpop.f32.mrb[0].mxu0
    %v1773 = vadd.f32 %v364, %v1772
    %v1774 = vpop.f32.mrb[0].mxu0
    %v1775 = vpop.f32.mrb[0].mxu0
    %v1776 = vadd.f32 %v364, %v1775
    %v1777 = vpop.f32.mrb[0].mxu0
    %1778 = vmatprep.mubr.bf16.mxu0 0
    %1779 = vmatmul.mubr.bf16.gmra.mrb[0].mxu0 %v1139
    %v1780 = vpop.f32.mrb[0].mxu0
    %v1781 = vadd.f32 %v364, %v1780
    %v1782 = vpop.f32.mrb[0].mxu0
    %v1783 = vpop.f32.mrb[0].mxu0
    %v1784 = vadd.f32 %v364, %v1783
    %v1785 = vpop.f32.mrb[0].mxu0
    %1786 = vmatprep.mubr.bf16.mxu0 0
    %1787 = vmatmul.mubr.bf16.gmra.mrb[0].mxu0 %v1142
    %v1788 = vpop.f32.mrb[0].mxu0
    %v1789 = vadd.f32 %v364, %v1788
    %v1790 = vpop.f32.mrb[0].mxu0
    %v1791 = vpop.f32.mrb[0].mxu0
    %v1792 = vadd.f32 %v364, %v1791
    %v1793 = vpop.f32.mrb[0].mxu0
    %1794 = vmatprep.mubr.bf16.mxu0 0
    %1795 = vmatmul.mubr.bf16.gmra.mrb[0].mxu0 %v1145
    %v1796 = vpop.f32.mrb[0].mxu0
    %v1797 = vadd.f32 %v364, %v1796
    %v1798 = vpop.f32.mrb[0].mxu0
    %v1799 = vpop.f32.mrb[0].mxu0
    %v1800 = vadd.f32 %v364, %v1799
    %v1801 = vpop.f32.mrb[0].mxu0
    %1802 = vmatprep.mubr.bf16.mxu0 0
    %1803 = vmatmul.mubr.bf16.gmra.mrb[0].mxu0 %v1148
    %v1804 = vpop.f32.mrb[0].mxu0
    %v1805 = vadd.f32 %v364, %v1804
    %v1806 = vpop.f32.mrb[0].mxu0
    %v1807 = vpop.f32.mrb[0].mxu0
    %v1808 = vadd.f32 %v364, %v1807
    %v1809 = vpop.f32.mrb[0].mxu0
    %1810 = vmatprep.mubr.bf16.mxu0 0
    %1811 = vmatmul.mubr.bf16.gmra.mrb[0].mxu0 %v1151
    %v1812 = vpop.f32.mrb[0].mxu0
    %v1813 = vadd.f32 %v364, %v1812
    %v1814 = vpop.f32.mrb[0].mxu0
    %v1815 = vpop.f32.mrb[0].mxu0
    %v1816 = vadd.f32 %v364, %v1815
    %v1817 = vpop.f32.mrb[0].mxu0
    %1818 = vmatprep.mubr.bf16.mxu0 0
    %1819 = vmatmul.mubr.bf16.gmra.mrb[0].mxu0 %v1154
    %v1820 = vpop.f32.mrb[0].mxu0
    %v1821 = vadd.f32 %v364, %v1820
    %v1822 = vpop.f32.mrb[0].mxu0
    %v1823 = vpop.f32.mrb[0].mxu0
    %v1824 = vadd.f32 %v364, %v1823
    %v1825 = vpop.f32.mrb[0].mxu0
    %1826 = vmatprep.mubr.bf16.mxu0 0
    %1827 = vmatmul.mubr.bf16.gmra.mrb[0].mxu0 %v1157
    %v1828 = vpop.f32.mrb[0].mxu0
    %v1829 = vadd.f32 %v364, %v1828
    %v1830 = vpop.f32.mrb[0].mxu0
    %v1831 = vpop.f32.mrb[0].mxu0
    %v1832 = vadd.f32 %v364, %v1831
    %v1833 = vpop.f32.mrb[0].mxu0
    %1834 = vmatprep.mubr.bf16.mxu0 0
    %1835 = vmatmul.mubr.bf16.gmra.mrb[0].mxu0 %v1160
    %v1836 = vpop.f32.mrb[0].mxu0
    %v1837 = vadd.f32 %v364, %v1836
    %v1838 = vpop.f32.mrb[0].mxu0
    %v1839 = vpop.f32.mrb[0].mxu0
    %v1840 = vadd.f32 %v364, %v1839
    %v1841 = vpop.f32.mrb[0].mxu0
    %1842 = vmatprep.mubr.bf16.mxu0 0
    %1843 = vmatmul.mubr.bf16.gmra.mrb[0].mxu0 %v1163
    %v1844 = vpop.f32.mrb[0].mxu0
    %v1845 = vadd.f32 %v364, %v1844
    %v1846 = vpop.f32.mrb[0].mxu0
    %v1847 = vpop.f32.mrb[0].mxu0
    %v1848 = vadd.f32 %v364, %v1847
    %v1849 = vpop.f32.mrb[0].mxu0
    %1850 = vmatprep.mubr.bf16.mxu0 0
    %1851 = vmatmul.mubr.bf16.gmra.mrb[0].mxu0 %v1166
    %v1852 = vpop.f32.mrb[0].mxu0
    %v1853 = vadd.f32 %v364, %v1852
    %v1854 = vpop.f32.mrb[0].mxu0
    %v1855 = vpop.f32.mrb[0].mxu0
    %v1856 = vadd.f32 %v364, %v1855
    %v1857 = vpop.f32.mrb[0].mxu0
    %1858 = vmatprep.mubr.bf16.mxu0 0
    %1859 = vmatmul.mubr.bf16.gmra.mrb[0].mxu0 %v1169
    %v1860 = vpop.f32.mrb[0].mxu0
    %v1861 = vadd.f32 %v364, %v1860
    %v1862 = vpop.f32.mrb[0].mxu0
    %v1863 = vpop.f32.mrb[0].mxu0
    %v1864 = vadd.f32 %v364, %v1863
    %v1865 = vpop.f32.mrb[0].mxu0
    %1866 = vmatprep.mubr.bf16.mxu0 0
    %1867 = vmatmul.mubr.bf16.gmra.mrb[0].mxu0 %v1172
    %v1868 = vpop.f32.mrb[0].mxu0
    %v1869 = vadd.f32 %v364, %v1868
    %v1870 = vpop.f32.mrb[0].mxu0
    %v1871 = vpop.f32.mrb[0].mxu0
    %v1872 = vadd.f32 %v364, %v1871
    %v1873 = vpop.f32.mrb[0].mxu0
    %1874 = vmatprep.mubr.bf16.mxu0 0
    %1875 = vmatmul.mubr.bf16.gmra.mrb[0].mxu0 %v1175
    %v1876 = vpop.f32.mrb[0].mxu0
    %v1877 = vadd.f32 %v364, %v1876
    %v1878 = vpop.f32.mrb[0].mxu0
    %v1879 = vpop.f32.mrb[0].mxu0
    %v1880 = vadd.f32 %v364, %v1879
    %v1881 = vpop.f32.mrb[0].mxu0
    %1882 = vmatprep.mubr.bf16.mxu0 0
    %1883 = vmatmul.mubr.bf16.gmra.mrb[0].mxu0 %v1178
    %v1884 = vpop.f32.mrb[0].mxu0
    %v1885 = vadd.f32 %v364, %v1884
    %v1886 = vpop.f32.mrb[0].mxu0
    %v1887 = vpop.f32.mrb[0].mxu0
    %v1888 = vadd.f32 %v364, %v1887
    %v1889 = vpop.f32.mrb[0].mxu0
    %1890 = vmatprep.mubr.bf16.mxu0 0
    %1891 = vmatmul.mubr.bf16.gmra.mrb[0].mxu0 %v1181
    %v1892 = vpop.f32.mrb[0].mxu0
    %v1893 = vadd.f32 %v364, %v1892
    %v1894 = vpop.f32.mrb[0].mxu0
    %v1895 = vpop.f32.mrb[0].mxu0
    %v1896 = vadd.f32 %v364, %v1895
    %v1897 = vpop.f32.mrb[0].mxu0
    %1898 = vmatprep.mubr.bf16.mxu0 0
    %1899 = vmatmul.mubr.bf16.gmra.mrb[0].mxu0 %v1184
    %v1900 = vpop.f32.mrb[0].mxu0
    %v1901 = vadd.f32 %v364, %v1900
    %v1902 = vpop.f32.mrb[0].mxu0
    %v1903 = vpop.f32.mrb[0].mxu0
    %v1904 = vadd.f32 %v364, %v1903
    %v1905 = vpop.f32.mrb[0].mxu0
    %1906 = vmatprep.mubr.bf16.mxu0 0
    %1907 = vmatmul.mubr.bf16.gmra.mrb[0].mxu0 %v1187
    %v1908 = vpop.f32.mrb[0].mxu0
    %v1909 = vadd.f32 %v364, %v1908
    %v1910 = vpop.f32.mrb[0].mxu0
    %v1911 = vpop.f32.mrb[0].mxu0
    %v1912 = vadd.f32 %v364, %v1911
    %v1913 = vpop.f32.mrb[0].mxu0
    %1914 = vmatprep.mubr.bf16.mxu0 0
    %1915 = vmatmul.mubr.bf16.gmra.mrb[0].mxu0 %v1190
    %v1916 = vpop.f32.mrb[0].mxu0
    %v1917 = vadd.f32 %v364, %v1916
    %v1918 = vpop.f32.mrb[0].mxu0
    %v1919 = vpop.f32.mrb[0].mxu0
    %v1920 = vadd.f32 %v364, %v1919
    %v1921 = vpop.f32.mrb[0].mxu0
    %1922 = vmatprep.mubr.bf16.mxu0 0
    %1923 = vmatmul.mubr.bf16.gmra.mrb[0].mxu0 %v1193
    %v1924 = vpop.f32.mrb[0].mxu0
    %v1925 = vadd.f32 %v364, %v1924
    %v1926 = vpop.f32.mrb[0].mxu0
    %v1927 = vpop.f32.mrb[0].mxu0
    %v1928 = vadd.f32 %v364, %v1927
    %v1929 = vpop.f32.mrb[0].mxu0
    %1930 = vmatprep.mubr.bf16.mxu0 0
    %1931 = vmatmul.mubr.bf16.gmra.mrb[0].mxu0 %v1196
    %v1932 = vpop.f32.mrb[0].mxu0
    %v1933 = vadd.f32 %v364, %v1932
    %v1934 = vpop.f32.mrb[0].mxu0
    %v1935 = vpop.f32.mrb[0].mxu0
    %v1936 = vadd.f32 %v364, %v1935
    %v1937 = vpop.f32.mrb[0].mxu0
    %1938 = vmatprep.mubr.bf16.mxu0 0
    %1939 = vmatmul.mubr.bf16.gmra.mrb[0].mxu0 %v1199
    %v1940 = vpop.f32.mrb[0].mxu0
    %v1941 = vadd.f32 %v364, %v1940
    %v1942 = vpop.f32.mrb[0].mxu0
    %v1943 = vpop.f32.mrb[0].mxu0
    %v1944 = vadd.f32 %v364, %v1943
    %v1945 = vpop.f32.mrb[0].mxu0
    %1946 = vmatprep.mubr.bf16.mxu0 0
    %1947 = vmatmul.mubr.bf16.gmra.mrb[0].mxu0 %v1202
    %v1948 = vpop.f32.mrb[0].mxu0
    %v1949 = vadd.f32 %v364, %v1948
    %v1950 = vpop.f32.mrb[0].mxu0
    %v1951 = vpop.f32.mrb[0].mxu0
    %v1952 = vadd.f32 %v364, %v1951
    %v1953 = vpop.f32.mrb[0].mxu0
    %1954 = vmatprep.mubr.bf16.mxu0 0
    %1955 = vmatmul.mubr.bf16.gmra.mrb[0].mxu0 %v1205
    %v1956 = vpop.f32.mrb[0].mxu0
    %v1957 = vadd.f32 %v364, %v1956
    %v1958 = vpop.f32.mrb[0].mxu0
    %v1959 = vpop.f32.mrb[0].mxu0
    %v1960 = vadd.f32 %v364, %v1959
    %v1961 = vpop.f32.mrb[0].mxu0
    %1962 = vmatprep.mubr.bf16.mxu0 0
    %1963 = vmatmul.mubr.bf16.gmra.mrb[0].mxu0 %v1208
    %v1964 = vpop.f32.mrb[0].mxu0
    %v1965 = vadd.f32 %v364, %v1964
    %v1966 = vpop.f32.mrb[0].mxu0
    %v1967 = vpop.f32.mrb[0].mxu0
    %v1968 = vadd.f32 %v364, %v1967
    %v1969 = vpop.f32.mrb[0].mxu0
    %1970 = vmatprep.mubr.bf16.mxu0 0
    %1971 = vmatmul.mubr.bf16.gmra.mrb[0].mxu0 %v1211
    %v1972 = vpop.f32.mrb[0].mxu0
    %v1973 = vadd.f32 %v364, %v1972
    %v1974 = vpop.f32.mrb[0].mxu0
    %v1975 = vpop.f32.mrb[0].mxu0
    %v1976 = vadd.f32 %v364, %v1975
    %v1977 = vpop.f32.mrb[0].mxu0
    %1978 = vmatprep.mubr.bf16.mxu0 0
    %1979 = vmatmul.mubr.bf16.gmra.mrb[0].mxu0 %v1214
    %v1980 = vpop.f32.mrb[0].mxu0
    %v1981 = vadd.f32 %v364, %v1980
    %v1982 = vpop.f32.mrb[0].mxu0
    %v1983 = vpop.f32.mrb[0].mxu0
    %v1984 = vadd.f32 %v364, %v1983
    %v1985 = vpop.f32.mrb[0].mxu0
    %1986 = vmatprep.mubr.bf16.mxu0 0
    %1987 = vmatmul.mubr.bf16.gmra.mrb[0].mxu0 %v1217
    %v1988 = vpop.f32.mrb[0].mxu0
    %v1989 = vadd.f32 %v364, %v1988
    %v1990 = vpop.f32.mrb[0].mxu0
    %v1991 = vpop.f32.mrb[0].mxu0
    %v1992 = vadd.f32 %v364, %v1991
    %v1993 = vpop.f32.mrb[0].mxu0
    %1994 = vmatprep.mubr.bf16.mxu0 0
    %1995 = vmatmul.mubr.bf16.gmra.mrb[0].mxu0 %v1220
    %v1996 = vpop.f32.mrb[0].mxu0
    %v1997 = vadd.f32 %v364, %v1996
    %v1998 = vpop.f32.mrb[0].mxu0
    %v1999 = vpop.f32.mrb[0].mxu0
    %v2000 = vadd.f32 %v364, %v1999
    %v2001 = vpop.f32.mrb[0].mxu0
    %2002 = vmatprep.mubr.bf16.mxu0 0
    %2003 = vmatmul.mubr.bf16.gmra.mrb[0].mxu0 %v1223
    %v2004 = vpop.f32.mrb[0].mxu0
    %v2005 = vadd.f32 %v364, %v2004
    %v2006 = vpop.f32.mrb[0].mxu0
    %v2007 = vpop.f32.mrb[0].mxu0
    %v2008 = vadd.f32 %v364, %v2007
    %v2009 = vpop.f32.mrb[0].mxu0
    %2010 = vmatprep.mubr.bf16.mxu0 0
    %2011 = vmatmul.mubr.bf16.gmra.mrb[0].mxu0 %v1226
    %v2012 = vpop.f32.mrb[0].mxu0
    %v2013 = vadd.f32 %v364, %v2012
    %v2014 = vpop.f32.mrb[0].mxu0
    %v2015 = vpop.f32.mrb[0].mxu0
    %v2016 = vadd.f32 %v364, %v2015
    %v2017 = vpop.f32.mrb[0].mxu0
    %2018 = vmatprep.mubr.bf16.mxu0 0
    %2019 = vmatmul.mubr.bf16.gmra.mrb[0].mxu0 %v1229
    %v2020 = vpop.f32.mrb[0].mxu0
    %v2021 = vadd.f32 %v364, %v2020
    %v2022 = vpop.f32.mrb[0].mxu0
    %v2023 = vpop.f32.mrb[0].mxu0
    %v2024 = vadd.f32 %v364, %v2023
    %v2025 = vpop.f32.mrb[0].mxu0
    %2026 = vmatprep.mubr.bf16.mxu0 0
    %2027 = vmatmul.mubr.bf16.gmra.mrb[0].mxu0 %v1232
    %v2028 = vpop.f32.mrb[0].mxu0
    %v2029 = vadd.f32 %v364, %v2028
    %v2030 = vpop.f32.mrb[0].mxu0
    %v2031 = vpop.f32.mrb[0].mxu0
    %v2032 = vadd.f32 %v364, %v2031
    %v2033 = vpop.f32.mrb[0].mxu0
    %2034 = vmatprep.mubr.bf16.mxu0 0
    %2035 = vmatmul.mubr.bf16.gmra.mrb[0].mxu0 %v1235
    %v2036 = vpop.f32.mrb[0].mxu0
    %v2037 = vadd.f32 %v364, %v2036
    %v2038 = vpop.f32.mrb[0].mxu0
    %v2039 = vpop.f32.mrb[0].mxu0
    %v2040 = vadd.f32 %v364, %v2039
    %v2041 = vpop.f32.mrb[0].mxu0
    %2042 = vmatprep.mubr.bf16.mxu0 0
    %2043 = vmatmul.mubr.bf16.gmra.mrb[0].mxu0 %v1238
    %v2044 = vpop.f32.mrb[0].mxu0
    %v2045 = vadd.f32 %v364, %v2044
    %v2046 = vpop.f32.mrb[0].mxu0
    %v2047 = vpop.f32.mrb[0].mxu0
    %v2048 = vadd.f32 %v364, %v2047
    %v2049 = vpop.f32.mrb[0].mxu0
    %2050 = vmatprep.mubr.bf16.mxu0 0
    %2051 = vmatmul.mubr.bf16.gmra.mrb[0].mxu0 %v1241
    %v2052 = vpop.f32.mrb[0].mxu0
    %v2053 = vadd.f32 %v364, %v2052
    %v2054 = vpop.f32.mrb[0].mxu0
    %v2055 = vpop.f32.mrb[0].mxu0
    %v2056 = vadd.f32 %v364, %v2055
    %v2057 = vpop.f32.mrb[0].mxu0
    %2058 = vmatprep.mubr.bf16.mxu0 0
    %2059 = vmatmul.mubr.bf16.gmra.mrb[0].mxu0 %v1244
    %v2060 = vpop.f32.mrb[0].mxu0
    %v2061 = vadd.f32 %v364, %v2060
    %v2062 = vpop.f32.mrb[0].mxu0
    %v2063 = vpop.f32.mrb[0].mxu0
    %v2064 = vadd.f32 %v364, %v2063
    %v2065 = vpop.f32.mrb[0].mxu0
    %2066 = vmatprep.mubr.bf16.mxu0 0
    %2067 = vmatmul.mubr.bf16.gmra.mrb[0].mxu0 %v1247
    %v2068 = vpop.f32.mrb[0].mxu0
    %v2069 = vadd.f32 %v364, %v2068
    %v2070 = vpop.f32.mrb[0].mxu0
    %v2071 = vpop.f32.mrb[0].mxu0
    %v2072 = vadd.f32 %v364, %v2071
    %v2073 = vpop.f32.mrb[0].mxu0
    %2074 = vmatprep.mubr.bf16.mxu0 0
    %2075 = vmatmul.mubr.bf16.gmra.mrb[0].mxu0 %v1250
    %v2076 = vpop.f32.mrb[0].mxu0
    %v2077 = vadd.f32 %v364, %v2076
    %v2078 = vpop.f32.mrb[0].mxu0
    %v2079 = vpop.f32.mrb[0].mxu0
    %v2080 = vadd.f32 %v364, %v2079
    %v2081 = vpop.f32.mrb[0].mxu0
    %2082 = vmatprep.mubr.bf16.mxu0 0
    %2083 = vmatmul.mubr.bf16.gmra.mrb[0].mxu0 %v1253
    %v2084 = vpop.f32.mrb[0].mxu0
    %v2085 = vadd.f32 %v364, %v2084
    %v2086 = vpop.f32.mrb[0].mxu0
    %v2087 = vpop.f32.mrb[0].mxu0
    %v2088 = vadd.f32 %v364, %v2087
    %v2089 = vpop.f32.mrb[0].mxu0
    %2090 = vmatprep.mubr.bf16.mxu0 0
    %2091 = vmatmul.mubr.bf16.gmra.mrb[0].mxu0 %v1256
    %v2092 = vpop.f32.mrb[0].mxu0
    %v2093 = vadd.f32 %v364, %v2092
    %v2094 = vpop.f32.mrb[0].mxu0
    %v2095 = vpop.f32.mrb[0].mxu0
    %v2096 = vadd.f32 %v364, %v2095
    %v2097 = vpop.f32.mrb[0].mxu0
    %2098 = vmatprep.mubr.bf16.mxu0 0
    %2099 = vmatmul.mubr.bf16.gmra.mrb[0].mxu0 %v1259
    %v2100 = vpop.f32.mrb[0].mxu0
    %v2101 = vadd.f32 %v364, %v2100
    %v2102 = vpop.f32.mrb[0].mxu0
    %v2103 = vpop.f32.mrb[0].mxu0
    %v2104 = vadd.f32 %v364, %v2103
    %v2105 = vpop.f32.mrb[0].mxu0
    %2106 = vmatprep.mubr.bf16.mxu0 0
    %2107 = vmatmul.mubr.bf16.gmra.mrb[0].mxu0 %v1262
    %v2108 = vpop.f32.mrb[0].mxu0
    %v2109 = vadd.f32 %v364, %v2108
    %v2110 = vpop.f32.mrb[0].mxu0
    %v2111 = vpop.f32.mrb[0].mxu0
    %v2112 = vadd.f32 %v364, %v2111
    %v2113 = vpop.f32.mrb[0].mxu0
    %2114 = vmatprep.mubr.bf16.mxu0 0
    %2115 = vmatmul.mubr.bf16.gmra.mrb[0].mxu0 %v1265
    %v2116 = vpop.f32.mrb[0].mxu0
    %v2117 = vadd.f32 %v364, %v2116
    %v2118 = vpop.f32.mrb[0].mxu0
    %v2119 = vpop.f32.mrb[0].mxu0
    %v2120 = vadd.f32 %v364, %v2119
    %v2121 = vpop.f32.mrb[0].mxu0
    %2122 = vmatprep.mubr.bf16.mxu0 0
    %2123 = vmatmul.mubr.bf16.gmra.mrb[0].mxu0 %v1268
    %v2124 = vpop.f32.mrb[0].mxu0
    %v2125 = vadd.f32 %v364, %v2124
    %v2126 = vpop.f32.mrb[0].mxu0
    %v2127 = vpop.f32.mrb[0].mxu0
    %v2128 = vadd.f32 %v364, %v2127
    %v2129 = vpop.f32.mrb[0].mxu0
    %2130 = vmatprep.mubr.bf16.mxu0 0
    %2131 = vmatmul.mubr.bf16.gmra.mrb[0].mxu0 %v1271
    %v2132 = vpop.f32.mrb[0].mxu0
    %v2133 = vadd.f32 %v364, %v2132
    %v2134 = vpop.f32.mrb[0].mxu0
    %v2135 = vpop.f32.mrb[0].mxu0
    %v2136 = vadd.f32 %v364, %v2135
    %v2137 = vpop.f32.mrb[0].mxu0
    %2138 = vmatprep.mubr.bf16.mxu0 0
    %2139 = vmatmul.mubr.bf16.gmra.mrb[0].mxu0 %v1274
    %v2140 = vpop.f32.mrb[0].mxu0
    %v2141 = vadd.f32 %v364, %v2140
    %v2142 = vpop.f32.mrb[0].mxu0
    %v2143 = vpop.f32.mrb[0].mxu0
    %v2144 = vadd.f32 %v364, %v2143
    %v2145 = vpop.f32.mrb[0].mxu0
    %2146 = vmatprep.mubr.bf16.mxu0 0
    %2147 = vmatmul.mubr.bf16.gmra.mrb[0].mxu0 %v1277
    %v2148 = vpop.f32.mrb[0].mxu0
    %v2149 = vadd.f32 %v364, %v2148
    %v2150 = vpop.f32.mrb[0].mxu0
    %v2151 = vpop.f32.mrb[0].mxu0
    %v2152 = vadd.f32 %v364, %v2151
    %v2153 = vpop.f32.mrb[0].mxu0
    %2154 = vmatprep.mubr.bf16.mxu0 0
    %2155 = vmatmul.mubr.bf16.gmra.mrb[0].mxu0 %v1280
    %v2156 = vpop.f32.mrb[0].mxu0
    %v2157 = vadd.f32 %v364, %v2156
    %v2158 = vpop.f32.mrb[0].mxu0
    %v2159 = vpop.f32.mrb[0].mxu0
    %v2160 = vadd.f32 %v364, %v2159
    %v2161 = vpop.f32.mrb[0].mxu0
    %2162 = vmatprep.mubr.bf16.mxu0 0
    %2163 = vmatmul.mubr.bf16.gmra.mrb[0].mxu0 %v1283
    %v2164 = vpop.f32.mrb[0].mxu0
    %v2165 = vadd.f32 %v364, %v2164
    %v2166 = vpop.f32.mrb[0].mxu0
    %v2167 = vpop.f32.mrb[0].mxu0
    %v2168 = vadd.f32 %v364, %v2167
    %v2169 = vpop.f32.mrb[0].mxu0
    %2170 = vmatprep.mubr.bf16.mxu0 0
    %2171 = vmatmul.mubr.bf16.gmra.mrb[0].mxu0 %v1286
    %v2172 = vpop.f32.mrb[0].mxu0
    %v2173 = vadd.f32 %v364, %v2172
    %v2174 = vpop.f32.mrb[0].mxu0
    %v2175 = vpop.f32.mrb[0].mxu0
    %v2176 = vadd.f32 %v364, %v2175
    %v2177 = vpop.f32.mrb[0].mxu0
    %2178 = vmatprep.mubr.bf16.mxu0 0
    %2179 = vmatmul.mubr.bf16.gmra.mrb[0].mxu0 %v1289
    %v2180 = vpop.f32.mrb[0].mxu0
    %v2181 = vadd.f32 %v364, %v2180
    %v2182 = vpop.f32.mrb[0].mxu0
    %v2183 = vpop.f32.mrb[0].mxu0
    %v2184 = vadd.f32 %v364, %v2183
    %v2185 = vpop.f32.mrb[0].mxu0
    %2186 = vmatprep.mubr.bf16.mxu0 0
    %2187 = vmatmul.mubr.bf16.gmra.mrb[0].mxu0 %v1292
    %v2188 = vpop.f32.mrb[0].mxu0
    %v2189 = vadd.f32 %v364, %v2188
    %v2190 = vpop.f32.mrb[0].mxu0
    %v2191 = vpop.f32.mrb[0].mxu0
    %v2192 = vadd.f32 %v364, %v2191
    %v2193 = vpop.f32.mrb[0].mxu0
    %2194 = vmatprep.mubr.bf16.mxu0 0
    %2195 = vmatmul.mubr.bf16.gmra.mrb[0].mxu0 %v1295
    %v2196 = vpop.f32.mrb[0].mxu0
    %v2197 = vadd.f32 %v364, %v2196
    %v2198 = vpop.f32.mrb[0].mxu0
    %v2199 = vpop.f32.mrb[0].mxu0
    %v2200 = vadd.f32 %v364, %v2199
    %v2201 = vpop.f32.mrb[0].mxu0
    %2202 = vmatprep.mubr.bf16.mxu0 0
    %2203 = vmatmul.mubr.bf16.gmra.mrb[0].mxu0 %v1298
    %v2204 = vpop.f32.mrb[0].mxu0
    %v2205 = vadd.f32 %v364, %v2204
    %v2206 = vpop.f32.mrb[0].mxu0
    %v2207 = vpop.f32.mrb[0].mxu0
    %v2208 = vadd.f32 %v364, %v2207
    %v2209 = vpop.f32.mrb[0].mxu0
    %2210 = vmatprep.mubr.bf16.mxu0 0
    %2211 = vmatmul.mubr.bf16.gmra.mrb[0].mxu0 %v1301
    %v2212 = vpop.f32.mrb[0].mxu0
    %v2213 = vadd.f32 %v364, %v2212
    %v2214 = vpop.f32.mrb[0].mxu0
    %v2215 = vpop.f32.mrb[0].mxu0
    %v2216 = vadd.f32 %v364, %v2215
    %v2217 = vpop.f32.mrb[0].mxu0
    %2218 = vmatprep.mubr.bf16.mxu0 0
    %2219 = vmatmul.mubr.bf16.gmra.mrb[0].mxu0 %v1304
    %v2220 = vpop.f32.mrb[0].mxu0
    %v2221 = vadd.f32 %v364, %v2220
    %v2222 = vpop.f32.mrb[0].mxu0
    %v2223 = vpop.f32.mrb[0].mxu0
    %v2224 = vadd.f32 %v364, %v2223
    %v2225 = vpop.f32.mrb[0].mxu0
    %2226 = vmatprep.mubr.bf16.mxu0 0
    %2227 = vmatmul.mubr.bf16.gmra.mrb[0].mxu0 %v1307
    %v2228 = vpop.f32.mrb[0].mxu0
    %v2229 = vadd.f32 %v364, %v2228
    %v2230 = vpop.f32.mrb[0].mxu0
    %v2231 = vpop.f32.mrb[0].mxu0
    %v2232 = vadd.f32 %v364, %v2231
    %v2233 = vpop.f32.mrb[0].mxu0
    %2234 = vmatprep.mubr.bf16.mxu0 0
    %2235 = vmatmul.mubr.bf16.gmra.mrb[0].mxu0 %v1310
    %v2236 = vpop.f32.mrb[0].mxu0
    %v2237 = vadd.f32 %v364, %v2236
    %v2238 = vpop.f32.mrb[0].mxu0
    %v2239 = vpop.f32.mrb[0].mxu0
    %v2240 = vadd.f32 %v364, %v2239
    %v2241 = vpop.f32.mrb[0].mxu0
    %2242 = vmatprep.mubr.bf16.mxu0 0
    %2243 = vmatmul.mubr.bf16.gmra.mrb[0].mxu0 %v1313
    %v2244 = vpop.f32.mrb[0].mxu0
    %v2245 = vadd.f32 %v364, %v2244
    %v2246 = vpop.f32.mrb[0].mxu0
    %v2247 = vpop.f32.mrb[0].mxu0
    %v2248 = vadd.f32 %v364, %v2247
    %v2249 = vpop.f32.mrb[0].mxu0
    %2250 = vmatprep.mubr.bf16.mxu0 0
    %2251 = vmatmul.mubr.bf16.gmra.mrb[0].mxu0 %v1316
    %v2252 = vpop.f32.mrb[0].mxu0
    %v2253 = vadd.f32 %v364, %v2252
    %v2254 = vpop.f32.mrb[0].mxu0
    %v2255 = vpop.f32.mrb[0].mxu0
    %v2256 = vadd.f32 %v364, %v2255
    %v2257 = vpop.f32.mrb[0].mxu0
    %2258 = vmatprep.mubr.bf16.mxu0 0
    %2259 = vmatmul.mubr.bf16.gmra.mrb[0].mxu0 %v1319
    %v2260 = vpop.f32.mrb[0].mxu0
    %v2261 = vadd.f32 %v364, %v2260
    %v2262 = vpop.f32.mrb[0].mxu0
    %v2263 = vpop.f32.mrb[0].mxu0
    %v2264 = vadd.f32 %v364, %v2263
    %v2265 = vpop.f32.mrb[0].mxu0
    %2266 = vmatprep.mubr.bf16.mxu0 0
    %2267 = vmatmul.mubr.bf16.gmra.mrb[0].mxu0 %v1322
    %v2268 = vpop.f32.mrb[0].mxu0
    %v2269 = vadd.f32 %v364, %v2268
    %v2270 = vpop.f32.mrb[0].mxu0
    %v2271 = vpop.f32.mrb[0].mxu0
    %v2272 = vadd.f32 %v364, %v2271
    %v2273 = vpop.f32.mrb[0].mxu0
    %2274 = vmatprep.mubr.bf16.mxu0 0
    %2275 = vmatmul.mubr.bf16.gmra.mrb[0].mxu0 %v1325
    %v2276 = vpop.f32.mrb[0].mxu0
    %v2277 = vadd.f32 %v364, %v2276
    %v2278 = vpop.f32.mrb[0].mxu0
    %v2279 = vpop.f32.mrb[0].mxu0
    %v2280 = vadd.f32 %v364, %v2279
    %v2281 = vpop.f32.mrb[0].mxu0
    %2282 = vmatprep.mubr.bf16.mxu0 0
    %2283 = vmatmul.mubr.bf16.gmra.mrb[0].mxu0 %v1328
    %v2284 = vpop.f32.mrb[0].mxu0
    %v2285 = vadd.f32 %v364, %v2284
    %v2286 = vpop.f32.mrb[0].mxu0
    %v2287 = vpop.f32.mrb[0].mxu0
    %v2288 = vadd.f32 %v364, %v2287
    %v2289 = vpop.f32.mrb[0].mxu0
    %2290 = vmatprep.mubr.bf16.mxu0 0
    %2291 = vmatmul.mubr.bf16.gmra.mrb[0].mxu0 %v1331
    %v2292 = vpop.f32.mrb[0].mxu0
    %v2293 = vadd.f32 %v364, %v2292
    %v2294 = vpop.f32.mrb[0].mxu0
    %v2295 = vpop.f32.mrb[0].mxu0
    %v2296 = vadd.f32 %v364, %v2295
    %v2297 = vpop.f32.mrb[0].mxu0
    %2298 = vmatprep.mubr.bf16.mxu0 0
    %2299 = vmatmul.mubr.bf16.gmra.mrb[0].mxu0 %v1334
    %v2300 = vpop.f32.mrb[0].mxu0
    %v2301 = vadd.f32 %v364, %v2300
    %v2302 = vpop.f32.mrb[0].mxu0
    %v2303 = vpop.f32.mrb[0].mxu0
    %v2304 = vadd.f32 %v364, %v2303
    %v2305 = vpop.f32.mrb[0].mxu0
    %2306 = vmatprep.mubr.bf16.mxu0 0
    %2307 = vmatmul.mubr.bf16.gmra.mrb[0].mxu0 %v1337
    %v2308 = vpop.f32.mrb[0].mxu0
    %v2309 = vadd.f32 %v364, %v2308
    %v2310 = vpop.f32.mrb[0].mxu0
    %v2311 = vpop.f32.mrb[0].mxu0
    %v2312 = vadd.f32 %v364, %v2311
    %v2313 = vpop.f32.mrb[0].mxu0
    %2314 = vmatprep.mubr.bf16.mxu0 0
    %2315 = vmatmul.mubr.bf16.gmra.mrb[0].mxu0 %v1340
    %v2316 = vpop.f32.mrb[0].mxu0
    %v2317 = vadd.f32 %v364, %v2316
    %v2318 = vpop.f32.mrb[0].mxu0
    %v2319 = vpop.f32.mrb[0].mxu0
    %v2320 = vadd.f32 %v364, %v2319
    %v2321 = vpop.f32.mrb[0].mxu0
    %2322 = vmatprep.mubr.bf16.mxu0 0
    %2323 = vmatmul.mubr.bf16.gmra.mrb[0].mxu0 %v1343
    %v2324 = vpop.f32.mrb[0].mxu0
    %v2325 = vadd.f32 %v364, %v2324
    %v2326 = vpop.f32.mrb[0].mxu0
    %v2327 = vpop.f32.mrb[0].mxu0
    %v2328 = vadd.f32 %v364, %v2327
    %v2329 = vpop.f32.mrb[0].mxu0
    %2330 = vmatprep.mubr.bf16.mxu0 0
    %2331 = vmatmul.mubr.bf16.gmra.mrb[0].mxu0 %v1346
    %v2332 = vpop.f32.mrb[0].mxu0
    %v2333 = vadd.f32 %v364, %v2332
    %v2334 = vpop.f32.mrb[0].mxu0
    %v2335 = vpop.f32.mrb[0].mxu0
    %v2336 = vadd.f32 %v364, %v2335
    %v2337 = vpop.f32.mrb[0].mxu0
    %2338 = vmatprep.mubr.bf16.mxu0 0
    %2339 = vmatmul.mubr.bf16.gmra.mrb[0].mxu0 %v1349
    %v2340 = vpop.f32.mrb[0].mxu0
    %v2341 = vadd.f32 %v364, %v2340
    %v2342 = vpop.f32.mrb[0].mxu0
    %v2343 = vpop.f32.mrb[0].mxu0
    %v2344 = vadd.f32 %v364, %v2343
    %v2345 = vpop.f32.mrb[0].mxu0
    %2346 = vmatprep.mubr.bf16.mxu0 0
    %2347 = vmatmul.mubr.bf16.gmra.mrb[0].mxu0 %v1352
    %v2348 = vpop.f32.mrb[0].mxu0
    %v2349 = vadd.f32 %v364, %v2348
    %v2350 = vpop.f32.mrb[0].mxu0
    %v2351 = vpop.f32.mrb[0].mxu0
    %v2352 = vadd.f32 %v364, %v2351
    %v2353 = vpop.f32.mrb[0].mxu0
    %2354 = vmatprep.mubr.bf16.mxu0 0
    %2355 = vmatmul.mubr.bf16.gmra.mrb[0].mxu0 %v1355
    %v2356 = vpop.f32.mrb[0].mxu0
    %v2357 = vadd.f32 %v364, %v2356
    %v2358 = vpop.f32.mrb[0].mxu0
    %v2359 = vpop.f32.mrb[0].mxu0
    %v2360 = vadd.f32 %v364, %v2359
    %v2361 = vpop.f32.mrb[0].mxu0
    %2362 = vmatprep.mubr.bf16.mxu0 0
    %2363 = vmatmul.mubr.bf16.gmra.mrb[0].mxu0 %v1358
    %v2364 = vpop.f32.mrb[0].mxu0
    %v2365 = vadd.f32 %v364, %v2364
    %v2366 = vpop.f32.mrb[0].mxu0
    %v2367 = vpop.f32.mrb[0].mxu0
    %v2368 = vadd.f32 %v364, %v2367
    %v2369 = vpop.f32.mrb[0].mxu0
    %2370 = vmatprep.mubr.bf16.mxu0 0
    %2371 = vmatmul.mubr.bf16.gmra.mrb[0].mxu0 %v1361
    %v2372 = vpop.f32.mrb[0].mxu0
    %v2373 = vadd.f32 %v364, %v2372
    %v2374 = vpop.f32.mrb[0].mxu0
    %v2375 = vpop.f32.mrb[0].mxu0
    %v2376 = vadd.f32 %v364, %v2375
    %v2377 = vpop.f32.mrb[0].mxu0
    %2378 = vmatprep.mubr.bf16.mxu0 0
    %2379 = vmatmul.mubr.bf16.gmra.mrb[0].mxu0 %v1364
    %v2380 = vpop.f32.mrb[0].mxu0
    %v2381 = vadd.f32 %v364, %v2380
    %v2382 = vpop.f32.mrb[0].mxu0
    %v2383 = vpop.f32.mrb[0].mxu0
    %v2384 = vadd.f32 %v364, %v2383
    %v2385 = vpop.f32.mrb[0].mxu0
    %2386 = vmatprep.mubr.bf16.mxu0 0
    %2387 = vmatmul.mubr.bf16.gmra.mrb[0].mxu0 %v1367
    %v2388 = vpop.f32.mrb[0].mxu0
    %v2389 = vadd.f32 %v364, %v2388
    %v2390 = vpop.f32.mrb[0].mxu0
    %v2391 = vpop.f32.mrb[0].mxu0
    %v2392 = vadd.f32 %v364, %v2391
    %v2393 = vpop.f32.mrb[0].mxu0
    %2394 = vmatprep.mubr.bf16.mxu0 0
    %2395 = vmatmul.mubr.bf16.gmra.mrb[0].mxu0 %v1370
    %v2396 = vpop.f32.mrb[0].mxu0
    %v2397 = vadd.f32 %v364, %v2396
    %v2398 = vpop.f32.mrb[0].mxu0
    %v2399 = vpop.f32.mrb[0].mxu0
    %v2400 = vadd.f32 %v364, %v2399
    %v2401 = vpop.f32.mrb[0].mxu0
    %2402 = vmatprep.mubr.bf16.mxu0 0
    %2403 = vmatmul.mubr.bf16.gmra.mrb[0].mxu0 %v1373
    %v2404 = vpop.f32.mrb[0].mxu0
    %v2405 = vadd.f32 %v364, %v2404
    %v2406 = vpop.f32.mrb[0].mxu0
    %v2407 = vpop.f32.mrb[0].mxu0
    %v2408 = vadd.f32 %v364, %v2407
    %v2409 = vpop.f32.mrb[0].mxu0
    %2410 = vmatprep.mubr.bf16.mxu0 0
    %2411 = vmatmul.mubr.bf16.gmra.mrb[0].mxu0 %v1376
    %v2412 = vpop.f32.mrb[0].mxu0
    %v2413 = vadd.f32 %v364, %v2412
    %v2414 = vpop.f32.mrb[0].mxu0
    %v2415 = vpop.f32.mrb[0].mxu0
    %v2416 = vadd.f32 %v364, %v2415
    %v2417 = vpop.f32.mrb[0].mxu0
    %2418 = vmatprep.mubr.bf16.mxu0 0
    %2419 = vmatmul.mubr.bf16.gmra.mrb[0].mxu0 %v1379
    %v2420 = vpop.f32.mrb[0].mxu0
    %v2421 = vadd.f32 %v364, %v2420
    %v2422 = vpop.f32.mrb[0].mxu0
    %v2423 = vpop.f32.mrb[0].mxu0
    %v2424 = vadd.f32 %v364, %v2423
    %v2425 = vpop.f32.mrb[0].mxu0
    %2426 = vmatprep.mubr.bf16.mxu0 0
    %2427 = vmatmul.mubr.bf16.gmra.mrb[0].mxu0 %v1382
    %v2428 = vpop.f32.mrb[0].mxu0
    %v2429 = vadd.f32 %v364, %v2428
    %v2430 = vpop.f32.mrb[0].mxu0
    %v2431 = vpop.f32.mrb[0].mxu0
    %v2432 = vadd.f32 %v364, %v2431
    %v2433 = vpop.f32.mrb[0].mxu0
    %2434 = vmatprep.mubr.bf16.mxu0 0
    %2435 = vmatmul.mubr.bf16.gmra.mrb[0].mxu0 %v1385
    %v2436 = vpop.f32.mrb[0].mxu0
    %v2437 = vadd.f32 %v364, %v2436
    %v2438 = vpop.f32.mrb[0].mxu0
    %v2439 = vpop.f32.mrb[0].mxu0
    %v2440 = vadd.f32 %v364, %v2439
    %v2441 = vpop.f32.mrb[0].mxu0
    %2442 = vmatprep.mubr.bf16.mxu0 0
    %2443 = vmatmul.mubr.bf16.gmra.mrb[0].mxu0 %v1388
    %v2444 = vpop.f32.mrb[0].mxu0
    %v2445 = vadd.f32 %v364, %v2444
    %v2446 = vpop.f32.mrb[0].mxu0
    %v2447 = vpop.f32.mrb[0].mxu0
    %v2448 = vadd.f32 %v364, %v2447
    %v2449 = vpop.f32.mrb[0].mxu0
    %2450 = vdwg.mxu0
    %v2451 = vmul.f32 %v1429, 0.2
    %v2452 = vmul.f32 %v1432, 0.2
    %v2453 = vmul.f32 %v1437, 0.2
    %v2454 = vmul.f32 %v1440, 0.2
    %v2455 = vmul.f32 %v1445, 0.2
    %v2456 = vmul.f32 %v1448, 0.2
    %v2457 = vmul.f32 %v1453, 0.2
    %v2458 = vmul.f32 %v1456, 0.2
    %v2459 = vmul.f32 %v1461, 0.2
    %v2460 = vmul.f32 %v1464, 0.2
    %v2461 = vmul.f32 %v1469, 0.2
    %v2462 = vmul.f32 %v1472, 0.2
    %v2463 = vmul.f32 %v1477, 0.2
    %v2464 = vmul.f32 %v1480, 0.2
    %v2465 = vmul.f32 %v1485, 0.2
    %v2466 = vmul.f32 %v1488, 0.2
    %v2467 = vmul.f32 %v1493, 0.2
    %v2468 = vmul.f32 %v1496, 0.2
    %v2469 = vmul.f32 %v1501, 0.2
    %v2470 = vmul.f32 %v1504, 0.2
    %v2471 = vmul.f32 %v1509, 0.2
    %v2472 = vmul.f32 %v1512, 0.2
    %v2473 = vmul.f32 %v1517, 0.2
    %v2474 = vmul.f32 %v1520, 0.2
    %v2475 = vmul.f32 %v1525, 0.2
    %v2476 = vmul.f32 %v1528, 0.2
    %v2477 = vmul.f32 %v1533, 0.2
    %v2478 = vmul.f32 %v1536, 0.2
    %v2479 = vmul.f32 %v1541, 0.2
    %v2480 = vmul.f32 %v1544, 0.2
    %v2481 = vmul.f32 %v1549, 0.2
    %v2482 = vmul.f32 %v1552, 0.2
    %v2483 = vmul.f32 %v1557, 0.2
    %v2484 = vmul.f32 %v1560, 0.2
    %v2485 = vmul.f32 %v1565, 0.2
    %v2486 = vmul.f32 %v1568, 0.2
    %v2487 = vmul.f32 %v1573, 0.2
    %v2488 = vmul.f32 %v1576, 0.2
    %v2489 = vmul.f32 %v1581, 0.2
    %v2490 = vmul.f32 %v1584, 0.2
    %v2491 = vmul.f32 %v1589, 0.2
    %v2492 = vmul.f32 %v1592, 0.2
    %v2493 = vmul.f32 %v1597, 0.2
    %v2494 = vmul.f32 %v1600, 0.2
    %v2495 = vmul.f32 %v1605, 0.2
    %v2496 = vmul.f32 %v1608, 0.2
    %v2497 = vmul.f32 %v1613, 0.2
    %v2498 = vmul.f32 %v1616, 0.2
    %v2499 = vmul.f32 %v1621, 0.2
    %v2500 = vmul.f32 %v1624, 0.2
    %v2501 = vmul.f32 %v1629, 0.2
    %v2502 = vmul.f32 %v1632, 0.2
    %v2503 = vmul.f32 %v1637, 0.2
    %v2504 = vmul.f32 %v1640, 0.2
    %v2505 = vmul.f32 %v1645, 0.2
    %v2506 = vmul.f32 %v1648, 0.2
    %v2507 = vmul.f32 %v1653, 0.2
    %v2508 = vmul.f32 %v1656, 0.2
    %v2509 = vmul.f32 %v1661, 0.2
    %v2510 = vmul.f32 %v1664, 0.2
    %v2511 = vmul.f32 %v1669, 0.2
    %v2512 = vmul.f32 %v1672, 0.2
    %v2513 = vmul.f32 %v1677, 0.2
    %v2514 = vmul.f32 %v1680, 0.2
    %v2515 = vmul.f32 %v1685, 0.2
    %v2516 = vmul.f32 %v1688, 0.2
    %v2517 = vmul.f32 %v1693, 0.2
    %v2518 = vmul.f32 %v1696, 0.2
    %v2519 = vmul.f32 %v1701, 0.2
    %v2520 = vmul.f32 %v1704, 0.2
    %v2521 = vmul.f32 %v1709, 0.2
    %v2522 = vmul.f32 %v1712, 0.2
    %v2523 = vmul.f32 %v1717, 0.2
    %v2524 = vmul.f32 %v1720, 0.2
    %v2525 = vmul.f32 %v1725, 0.2
    %v2526 = vmul.f32 %v1728, 0.2
    %v2527 = vmul.f32 %v1733, 0.2
    %v2528 = vmul.f32 %v1736, 0.2
    %v2529 = vmul.f32 %v1741, 0.2
    %v2530 = vmul.f32 %v1744, 0.2
    %v2531 = vmul.f32 %v1749, 0.2
    %v2532 = vmul.f32 %v1752, 0.2
    %v2533 = vmul.f32 %v1757, 0.2
    %v2534 = vmul.f32 %v1760, 0.2
    %v2535 = vmul.f32 %v1765, 0.2
    %v2536 = vmul.f32 %v1768, 0.2
    %v2537 = vmul.f32 %v1773, 0.2
    %v2538 = vmul.f32 %v1776, 0.2
    %v2539 = vmul.f32 %v1781, 0.2
    %v2540 = vmul.f32 %v1784, 0.2
    %v2541 = vmul.f32 %v1789, 0.2
    %v2542 = vmul.f32 %v1792, 0.2
    %v2543 = vmul.f32 %v1797, 0.2
    %v2544 = vmul.f32 %v1800, 0.2
    %v2545 = vmul.f32 %v1805, 0.2
    %v2546 = vmul.f32 %v1808, 0.2
    %v2547 = vmul.f32 %v1813, 0.2
    %v2548 = vmul.f32 %v1816, 0.2
    %v2549 = vmul.f32 %v1821, 0.2
    %v2550 = vmul.f32 %v1824, 0.2
    %v2551 = vmul.f32 %v1829, 0.2
    %v2552 = vmul.f32 %v1832, 0.2
    %v2553 = vmul.f32 %v1837, 0.2
    %v2554 = vmul.f32 %v1840, 0.2
    %v2555 = vmul.f32 %v1845, 0.2
    %v2556 = vmul.f32 %v1848, 0.2
    %v2557 = vmul.f32 %v1853, 0.2
    %v2558 = vmul.f32 %v1856, 0.2
    %v2559 = vmul.f32 %v1861, 0.2
    %v2560 = vmul.f32 %v1864, 0.2
    %v2561 = vmul.f32 %v1869, 0.2
    %v2562 = vmul.f32 %v1872, 0.2
    %v2563 = vmul.f32 %v1877, 0.2
    %v2564 = vmul.f32 %v1880, 0.2
    %v2565 = vmul.f32 %v1885, 0.2
    %v2566 = vmul.f32 %v1888, 0.2
    %v2567 = vmul.f32 %v1893, 0.2
    %v2568 = vmul.f32 %v1896, 0.2
    %v2569 = vmul.f32 %v1901, 0.2
    %v2570 = vmul.f32 %v1904, 0.2
    %v2571 = vmul.f32 %v1909, 0.2
    %v2572 = vmul.f32 %v1912, 0.2
    %v2573 = vmul.f32 %v1917, 0.2
    %v2574 = vmul.f32 %v1920, 0.2
    %v2575 = vmul.f32 %v1925, 0.2
    %v2576 = vmul.f32 %v1928, 0.2
    %v2577 = vmul.f32 %v1933, 0.2
    %v2578 = vmul.f32 %v1936, 0.2
    %v2579 = vmul.f32 %v1941, 0.2
    %v2580 = vmul.f32 %v1944, 0.2
    %v2581 = vmul.f32 %v1949, 0.2
    %v2582 = vmul.f32 %v1952, 0.2
    %v2583 = vmul.f32 %v1957, 0.2
    %v2584 = vmul.f32 %v1960, 0.2
    %v2585 = vmul.f32 %v1965, 0.2
    %v2586 = vmul.f32 %v1968, 0.2
    %v2587 = vmul.f32 %v1973, 0.2
    %v2588 = vmul.f32 %v1976, 0.2
    %v2589 = vmul.f32 %v1981, 0.2
    %v2590 = vmul.f32 %v1984, 0.2
    %v2591 = vmul.f32 %v1989, 0.2
    %v2592 = vmul.f32 %v1992, 0.2
    %v2593 = vmul.f32 %v1997, 0.2
    %v2594 = vmul.f32 %v2000, 0.2
    %v2595 = vmul.f32 %v2005, 0.2
    %v2596 = vmul.f32 %v2008, 0.2
    %v2597 = vmul.f32 %v2013, 0.2
    %v2598 = vmul.f32 %v2016, 0.2
    %v2599 = vmul.f32 %v2021, 0.2
    %v2600 = vmul.f32 %v2024, 0.2
    %v2601 = vmul.f32 %v2029, 0.2
    %v2602 = vmul.f32 %v2032, 0.2
    %v2603 = vmul.f32 %v2037, 0.2
    %v2604 = vmul.f32 %v2040, 0.2
    %v2605 = vmul.f32 %v2045, 0.2
    %v2606 = vmul.f32 %v2048, 0.2
    %v2607 = vmul.f32 %v2053, 0.2
    %v2608 = vmul.f32 %v2056, 0.2
    %v2609 = vmul.f32 %v2061, 0.2
    %v2610 = vmul.f32 %v2064, 0.2
    %v2611 = vmul.f32 %v2069, 0.2
    %v2612 = vmul.f32 %v2072, 0.2
    %v2613 = vmul.f32 %v2077, 0.2
    %v2614 = vmul.f32 %v2080, 0.2
    %v2615 = vmul.f32 %v2085, 0.2
    %v2616 = vmul.f32 %v2088, 0.2
    %v2617 = vmul.f32 %v2093, 0.2
    %v2618 = vmul.f32 %v2096, 0.2
    %v2619 = vmul.f32 %v2101, 0.2
    %v2620 = vmul.f32 %v2104, 0.2
    %v2621 = vmul.f32 %v2109, 0.2
    %v2622 = vmul.f32 %v2112, 0.2
    %v2623 = vmul.f32 %v2117, 0.2
    %v2624 = vmul.f32 %v2120, 0.2
    %v2625 = vmul.f32 %v2125, 0.2
    %v2626 = vmul.f32 %v2128, 0.2
    %v2627 = vmul.f32 %v2133, 0.2
    %v2628 = vmul.f32 %v2136, 0.2
    %v2629 = vmul.f32 %v2141, 0.2
    %v2630 = vmul.f32 %v2144, 0.2
    %v2631 = vmul.f32 %v2149, 0.2
    %v2632 = vmul.f32 %v2152, 0.2
    %v2633 = vmul.f32 %v2157, 0.2
    %v2634 = vmul.f32 %v2160, 0.2
    %v2635 = vmul.f32 %v2165, 0.2
    %v2636 = vmul.f32 %v2168, 0.2
    %v2637 = vmul.f32 %v2173, 0.2
    %v2638 = vmul.f32 %v2176, 0.2
    %v2639 = vmul.f32 %v2181, 0.2
    %v2640 = vmul.f32 %v2184, 0.2
    %v2641 = vmul.f32 %v2189, 0.2
    %v2642 = vmul.f32 %v2192, 0.2
    %v2643 = vmul.f32 %v2197, 0.2
    %v2644 = vmul.f32 %v2200, 0.2
    %v2645 = vmul.f32 %v2205, 0.2
    %v2646 = vmul.f32 %v2208, 0.2
    %v2647 = vmul.f32 %v2213, 0.2
    %v2648 = vmul.f32 %v2216, 0.2
    %v2649 = vmul.f32 %v2221, 0.2
    %v2650 = vmul.f32 %v2224, 0.2
    %v2651 = vmul.f32 %v2229, 0.2
    %v2652 = vmul.f32 %v2232, 0.2
    %v2653 = vmul.f32 %v2237, 0.2
    %v2654 = vmul.f32 %v2240, 0.2
    %v2655 = vmul.f32 %v2245, 0.2
    %v2656 = vmul.f32 %v2248, 0.2
    %v2657 = vmul.f32 %v2253, 0.2
    %v2658 = vmul.f32 %v2256, 0.2
    %v2659 = vmul.f32 %v2261, 0.2
    %v2660 = vmul.f32 %v2264, 0.2
    %v2661 = vmul.f32 %v2269, 0.2
    %v2662 = vmul.f32 %v2272, 0.2
    %v2663 = vmul.f32 %v2277, 0.2
    %v2664 = vmul.f32 %v2280, 0.2
    %v2665 = vmul.f32 %v2285, 0.2
    %v2666 = vmul.f32 %v2288, 0.2
    %v2667 = vmul.f32 %v2293, 0.2
    %v2668 = vmul.f32 %v2296, 0.2
    %v2669 = vmul.f32 %v2301, 0.2
    %v2670 = vmul.f32 %v2304, 0.2
    %v2671 = vmul.f32 %v2309, 0.2
    %v2672 = vmul.f32 %v2312, 0.2
    %v2673 = vmul.f32 %v2317, 0.2
    %v2674 = vmul.f32 %v2320, 0.2
    %v2675 = vmul.f32 %v2325, 0.2
    %v2676 = vmul.f32 %v2328, 0.2
    %v2677 = vmul.f32 %v2333, 0.2
    %v2678 = vmul.f32 %v2336, 0.2
    %v2679 = vmul.f32 %v2341, 0.2
    %v2680 = vmul.f32 %v2344, 0.2
    %v2681 = vmul.f32 %v2349, 0.2
    %v2682 = vmul.f32 %v2352, 0.2
    %v2683 = vmul.f32 %v2357, 0.2
    %v2684 = vmul.f32 %v2360, 0.2
    %v2685 = vmul.f32 %v2365, 0.2
    %v2686 = vmul.f32 %v2368, 0.2
    %v2687 = vmul.f32 %v2373, 0.2
    %v2688 = vmul.f32 %v2376, 0.2
    %v2689 = vmul.f32 %v2381, 0.2
    %v2690 = vmul.f32 %v2384, 0.2
    %v2691 = vmul.f32 %v2389, 0.2
    %v2692 = vmul.f32 %v2392, 0.2
    %v2693 = vmul.f32 %v2397, 0.2
    %v2694 = vmul.f32 %v2400, 0.2
    %v2695 = vmul.f32 %v2405, 0.2
    %v2696 = vmul.f32 %v2408, 0.2
    %v2697 = vmul.f32 %v2413, 0.2
    %v2698 = vmul.f32 %v2416, 0.2
    %v2699 = vmul.f32 %v2421, 0.2
    %v2700 = vmul.f32 %v2424, 0.2
    %v2701 = vmul.f32 %v2429, 0.2
    %v2702 = vmul.f32 %v2432, 0.2
    %v2703 = vmul.f32 %v2437, 0.2
    %v2704 = vmul.f32 %v2440, 0.2
    %v2705 = vmul.f32 %v2445, 0.2
    %v2706 = vmul.f32 %v2448, 0.2
    %v2707 = vmax.f32 %v1429, %v2451
    %v2708 = vmax.f32 %v1432, %v2452
    %v2709 = vmax.f32 %v1437, %v2453
    %v2710 = vmax.f32 %v1440, %v2454
    %v2711 = vmax.f32 %v1445, %v2455
    %v2712 = vmax.f32 %v1448, %v2456
    %v2713 = vmax.f32 %v1453, %v2457
    %v2714 = vmax.f32 %v1456, %v2458
    %v2715 = vmax.f32 %v1461, %v2459
    %v2716 = vmax.f32 %v1464, %v2460
    %v2717 = vmax.f32 %v1469, %v2461
    %v2718 = vmax.f32 %v1472, %v2462
    %v2719 = vmax.f32 %v1477, %v2463
    %v2720 = vmax.f32 %v1480, %v2464
    %v2721 = vmax.f32 %v1485, %v2465
    %v2722 = vmax.f32 %v1488, %v2466
    %v2723 = vmax.f32 %v1493, %v2467
    %v2724 = vmax.f32 %v1496, %v2468
    %v2725 = vmax.f32 %v1501, %v2469
    %v2726 = vmax.f32 %v1504, %v2470
    %v2727 = vmax.f32 %v1509, %v2471
    %v2728 = vmax.f32 %v1512, %v2472
    %v2729 = vmax.f32 %v1517, %v2473
    %v2730 = vmax.f32 %v1520, %v2474
    %v2731 = vmax.f32 %v1525, %v2475
    %v2732 = vmax.f32 %v1528, %v2476
    %v2733 = vmax.f32 %v1533, %v2477
    %v2734 = vmax.f32 %v1536, %v2478
    %v2735 = vmax.f32 %v1541, %v2479
    %v2736 = vmax.f32 %v1544, %v2480
    %v2737 = vmax.f32 %v1549, %v2481
    %v2738 = vmax.f32 %v1552, %v2482
    %v2739 = vmax.f32 %v1557, %v2483
    %v2740 = vmax.f32 %v1560, %v2484
    %v2741 = vmax.f32 %v1565, %v2485
    %v2742 = vmax.f32 %v1568, %v2486
    %v2743 = vmax.f32 %v1573, %v2487
    %v2744 = vmax.f32 %v1576, %v2488
    %v2745 = vmax.f32 %v1581, %v2489
    %v2746 = vmax.f32 %v1584, %v2490
    %v2747 = vmax.f32 %v1589, %v2491
    %v2748 = vmax.f32 %v1592, %v2492
    %v2749 = vmax.f32 %v1597, %v2493
    %v2750 = vmax.f32 %v1600, %v2494
    %v2751 = vmax.f32 %v1605, %v2495
    %v2752 = vmax.f32 %v1608, %v2496
    %v2753 = vmax.f32 %v1613, %v2497
    %v2754 = vmax.f32 %v1616, %v2498
    %v2755 = vmax.f32 %v1621, %v2499
    %v2756 = vmax.f32 %v1624, %v2500
    %v2757 = vmax.f32 %v1629, %v2501
    %v2758 = vmax.f32 %v1632, %v2502
    %v2759 = vmax.f32 %v1637, %v2503
    %v2760 = vmax.f32 %v1640, %v2504
    %v2761 = vmax.f32 %v1645, %v2505
    %v2762 = vmax.f32 %v1648, %v2506
    %v2763 = vmax.f32 %v1653, %v2507
    %v2764 = vmax.f32 %v1656, %v2508
    %v2765 = vmax.f32 %v1661, %v2509
    %v2766 = vmax.f32 %v1664, %v2510
    %v2767 = vmax.f32 %v1669, %v2511
    %v2768 = vmax.f32 %v1672, %v2512
    %v2769 = vmax.f32 %v1677, %v2513
    %v2770 = vmax.f32 %v1680, %v2514
    %v2771 = vmax.f32 %v1685, %v2515
    %v2772 = vmax.f32 %v1688, %v2516
    %v2773 = vmax.f32 %v1693, %v2517
    %v2774 = vmax.f32 %v1696, %v2518
    %v2775 = vmax.f32 %v1701, %v2519
    %v2776 = vmax.f32 %v1704, %v2520
    %v2777 = vmax.f32 %v1709, %v2521
    %v2778 = vmax.f32 %v1712, %v2522
    %v2779 = vmax.f32 %v1717, %v2523
    %v2780 = vmax.f32 %v1720, %v2524
    %v2781 = vmax.f32 %v1725, %v2525
    %v2782 = vmax.f32 %v1728, %v2526
    %v2783 = vmax.f32 %v1733, %v2527
    %v2784 = vmax.f32 %v1736, %v2528
    %v2785 = vmax.f32 %v1741, %v2529
    %v2786 = vmax.f32 %v1744, %v2530
    %v2787 = vmax.f32 %v1749, %v2531
    %v2788 = vmax.f32 %v1752, %v2532
    %v2789 = vmax.f32 %v1757, %v2533
    %v2790 = vmax.f32 %v1760, %v2534
    %v2791 = vmax.f32 %v1765, %v2535
    %v2792 = vmax.f32 %v1768, %v2536
    %v2793 = vmax.f32 %v1773, %v2537
    %v2794 = vmax.f32 %v1776, %v2538
    %v2795 = vmax.f32 %v1781, %v2539
    %v2796 = vmax.f32 %v1784, %v2540
    %v2797 = vmax.f32 %v1789, %v2541
    %v2798 = vmax.f32 %v1792, %v2542
    %v2799 = vmax.f32 %v1797, %v2543
    %v2800 = vmax.f32 %v1800, %v2544
    %v2801 = vmax.f32 %v1805, %v2545
    %v2802 = vmax.f32 %v1808, %v2546
    %v2803 = vmax.f32 %v1813, %v2547
    %v2804 = vmax.f32 %v1816, %v2548
    %v2805 = vmax.f32 %v1821, %v2549
    %v2806 = vmax.f32 %v1824, %v2550
    %v2807 = vmax.f32 %v1829, %v2551
    %v2808 = vmax.f32 %v1832, %v2552
    %v2809 = vmax.f32 %v1837, %v2553
    %v2810 = vmax.f32 %v1840, %v2554
    %v2811 = vmax.f32 %v1845, %v2555
    %v2812 = vmax.f32 %v1848, %v2556
    %v2813 = vmax.f32 %v1853, %v2557
    %v2814 = vmax.f32 %v1856, %v2558
    %v2815 = vmax.f32 %v1861, %v2559
    %v2816 = vmax.f32 %v1864, %v2560
    %v2817 = vmax.f32 %v1869, %v2561
    %v2818 = vmax.f32 %v1872, %v2562
    %v2819 = vmax.f32 %v1877, %v2563
    %v2820 = vmax.f32 %v1880, %v2564
    %v2821 = vmax.f32 %v1885, %v2565
    %v2822 = vmax.f32 %v1888, %v2566
    %v2823 = vmax.f32 %v1893, %v2567
    %v2824 = vmax.f32 %v1896, %v2568
    %v2825 = vmax.f32 %v1901, %v2569
    %v2826 = vmax.f32 %v1904, %v2570
    %v2827 = vmax.f32 %v1909, %v2571
    %v2828 = vmax.f32 %v1912, %v2572
    %v2829 = vmax.f32 %v1917, %v2573
    %v2830 = vmax.f32 %v1920, %v2574
    %v2831 = vmax.f32 %v1925, %v2575
    %v2832 = vmax.f32 %v1928, %v2576
    %v2833 = vmax.f32 %v1933, %v2577
    %v2834 = vmax.f32 %v1936, %v2578
    %v2835 = vmax.f32 %v1941, %v2579
    %v2836 = vmax.f32 %v1944, %v2580
    %v2837 = vmax.f32 %v1949, %v2581
    %v2838 = vmax.f32 %v1952, %v2582
    %v2839 = vmax.f32 %v1957, %v2583
    %v2840 = vmax.f32 %v1960, %v2584
    %v2841 = vmax.f32 %v1965, %v2585
    %v2842 = vmax.f32 %v1968, %v2586
    %v2843 = vmax.f32 %v1973, %v2587
    %v2844 = vmax.f32 %v1976, %v2588
    %v2845 = vmax.f32 %v1981, %v2589
    %v2846 = vmax.f32 %v1984, %v2590
    %v2847 = vmax.f32 %v1989, %v2591
    %v2848 = vmax.f32 %v1992, %v2592
    %v2849 = vmax.f32 %v1997, %v2593
    %v2850 = vmax.f32 %v2000, %v2594
    %v2851 = vmax.f32 %v2005, %v2595
    %v2852 = vmax.f32 %v2008, %v2596
    %v2853 = vmax.f32 %v2013, %v2597
    %v2854 = vmax.f32 %v2016, %v2598
    %v2855 = vmax.f32 %v2021, %v2599
    %v2856 = vmax.f32 %v2024, %v2600
    %v2857 = vmax.f32 %v2029, %v2601
    %v2858 = vmax.f32 %v2032, %v2602
    %v2859 = vmax.f32 %v2037, %v2603
    %v2860 = vmax.f32 %v2040, %v2604
    %v2861 = vmax.f32 %v2045, %v2605
    %v2862 = vmax.f32 %v2048, %v2606
    %v2863 = vmax.f32 %v2053, %v2607
    %v2864 = vmax.f32 %v2056, %v2608
    %v2865 = vmax.f32 %v2061, %v2609
    %v2866 = vmax.f32 %v2064, %v2610
    %v2867 = vmax.f32 %v2069, %v2611
    %v2868 = vmax.f32 %v2072, %v2612
    %v2869 = vmax.f32 %v2077, %v2613
    %v2870 = vmax.f32 %v2080, %v2614
    %v2871 = vmax.f32 %v2085, %v2615
    %v2872 = vmax.f32 %v2088, %v2616
    %v2873 = vmax.f32 %v2093, %v2617
    %v2874 = vmax.f32 %v2096, %v2618
    %v2875 = vmax.f32 %v2101, %v2619
    %v2876 = vmax.f32 %v2104, %v2620
    %v2877 = vmax.f32 %v2109, %v2621
    %v2878 = vmax.f32 %v2112, %v2622
    %v2879 = vmax.f32 %v2117, %v2623
    %v2880 = vmax.f32 %v2120, %v2624
    %v2881 = vmax.f32 %v2125, %v2625
    %v2882 = vmax.f32 %v2128, %v2626
    %v2883 = vmax.f32 %v2133, %v2627
    %v2884 = vmax.f32 %v2136, %v2628
    %v2885 = vmax.f32 %v2141, %v2629
    %v2886 = vmax.f32 %v2144, %v2630
    %v2887 = vmax.f32 %v2149, %v2631
    %v2888 = vmax.f32 %v2152, %v2632
    %v2889 = vmax.f32 %v2157, %v2633
    %v2890 = vmax.f32 %v2160, %v2634
    %v2891 = vmax.f32 %v2165, %v2635
    %v2892 = vmax.f32 %v2168, %v2636
    %v2893 = vmax.f32 %v2173, %v2637
    %v2894 = vmax.f32 %v2176, %v2638
    %v2895 = vmax.f32 %v2181, %v2639
    %v2896 = vmax.f32 %v2184, %v2640
    %v2897 = vmax.f32 %v2189, %v2641
    %v2898 = vmax.f32 %v2192, %v2642
    %v2899 = vmax.f32 %v2197, %v2643
    %v2900 = vmax.f32 %v2200, %v2644
    %v2901 = vmax.f32 %v2205, %v2645
    %v2902 = vmax.f32 %v2208, %v2646
    %v2903 = vmax.f32 %v2213, %v2647
    %v2904 = vmax.f32 %v2216, %v2648
    %v2905 = vmax.f32 %v2221, %v2649
    %v2906 = vmax.f32 %v2224, %v2650
    %v2907 = vmax.f32 %v2229, %v2651
    %v2908 = vmax.f32 %v2232, %v2652
    %v2909 = vmax.f32 %v2237, %v2653
    %v2910 = vmax.f32 %v2240, %v2654
    %v2911 = vmax.f32 %v2245, %v2655
    %v2912 = vmax.f32 %v2248, %v2656
    %v2913 = vmax.f32 %v2253, %v2657
    %v2914 = vmax.f32 %v2256, %v2658
    %v2915 = vmax.f32 %v2261, %v2659
    %v2916 = vmax.f32 %v2264, %v2660
    %v2917 = vmax.f32 %v2269, %v2661
    %v2918 = vmax.f32 %v2272, %v2662
    %v2919 = vmax.f32 %v2277, %v2663
    %v2920 = vmax.f32 %v2280, %v2664
    %v2921 = vmax.f32 %v2285, %v2665
    %v2922 = vmax.f32 %v2288, %v2666
    %v2923 = vmax.f32 %v2293, %v2667
    %v2924 = vmax.f32 %v2296, %v2668
    %v2925 = vmax.f32 %v2301, %v2669
    %v2926 = vmax.f32 %v2304, %v2670
    %v2927 = vmax.f32 %v2309, %v2671
    %v2928 = vmax.f32 %v2312, %v2672
    %v2929 = vmax.f32 %v2317, %v2673
    %v2930 = vmax.f32 %v2320, %v2674
    %v2931 = vmax.f32 %v2325, %v2675
    %v2932 = vmax.f32 %v2328, %v2676
    %v2933 = vmax.f32 %v2333, %v2677
    %v2934 = vmax.f32 %v2336, %v2678
    %v2935 = vmax.f32 %v2341, %v2679
    %v2936 = vmax.f32 %v2344, %v2680
    %v2937 = vmax.f32 %v2349, %v2681
    %v2938 = vmax.f32 %v2352, %v2682
    %v2939 = vmax.f32 %v2357, %v2683
    %v2940 = vmax.f32 %v2360, %v2684
    %v2941 = vmax.f32 %v2365, %v2685
    %v2942 = vmax.f32 %v2368, %v2686
    %v2943 = vmax.f32 %v2373, %v2687
    %v2944 = vmax.f32 %v2376, %v2688
    %v2945 = vmax.f32 %v2381, %v2689
    %v2946 = vmax.f32 %v2384, %v2690
    %v2947 = vmax.f32 %v2389, %v2691
    %v2948 = vmax.f32 %v2392, %v2692
    %v2949 = vmax.f32 %v2397, %v2693
    %v2950 = vmax.f32 %v2400, %v2694
    %v2951 = vmax.f32 %v2405, %v2695
    %v2952 = vmax.f32 %v2408, %v2696
    %v2953 = vmax.f32 %v2413, %v2697
    %v2954 = vmax.f32 %v2416, %v2698
    %v2955 = vmax.f32 %v2421, %v2699
    %v2956 = vmax.f32 %v2424, %v2700
    %v2957 = vmax.f32 %v2429, %v2701
    %v2958 = vmax.f32 %v2432, %v2702
    %v2959 = vmax.f32 %v2437, %v2703
    %v2960 = vmax.f32 %v2440, %v2704
    %v2961 = vmax.f32 %v2445, %v2705
    %v2962 = vmax.f32 %v2448, %v2706
    %v2963 = vpack.c.bf16 %v2708, %v2707
    %v2964 = vpack.c.bf16 %v2710, %v2709
    %v2965 = vpack.c.bf16 %v2712, %v2711
    %v2966 = vpack.c.bf16 %v2714, %v2713
    %v2967 = vpack.c.bf16 %v2716, %v2715
    %v2968 = vpack.c.bf16 %v2718, %v2717
    %v2969 = vpack.c.bf16 %v2720, %v2719
    %v2970 = vpack.c.bf16 %v2722, %v2721
    %v2971 = vpack.c.bf16 %v2724, %v2723
    %v2972 = vpack.c.bf16 %v2726, %v2725
    %v2973 = vpack.c.bf16 %v2728, %v2727
    %v2974 = vpack.c.bf16 %v2730, %v2729
    %v2975 = vpack.c.bf16 %v2732, %v2731
    %v2976 = vpack.c.bf16 %v2734, %v2733
    %v2977 = vpack.c.bf16 %v2736, %v2735
    %v2978 = vpack.c.bf16 %v2738, %v2737
    %v2979 = vpack.c.bf16 %v2740, %v2739
    %v2980 = vpack.c.bf16 %v2742, %v2741
    %v2981 = vpack.c.bf16 %v2744, %v2743
    %v2982 = vpack.c.bf16 %v2746, %v2745
    %v2983 = vpack.c.bf16 %v2748, %v2747
    %v2984 = vpack.c.bf16 %v2750, %v2749
    %v2985 = vpack.c.bf16 %v2752, %v2751
    %v2986 = vpack.c.bf16 %v2754, %v2753
    %v2987 = vpack.c.bf16 %v2756, %v2755
    %v2988 = vpack.c.bf16 %v2758, %v2757
    %v2989 = vpack.c.bf16 %v2760, %v2759
    %v2990 = vpack.c.bf16 %v2762, %v2761
    %v2991 = vpack.c.bf16 %v2764, %v2763
    %v2992 = vpack.c.bf16 %v2766, %v2765
    %v2993 = vpack.c.bf16 %v2768, %v2767
    %v2994 = vpack.c.bf16 %v2770, %v2769
    %v2995 = vpack.c.bf16 %v2772, %v2771
    %v2996 = vpack.c.bf16 %v2774, %v2773
    %v2997 = vpack.c.bf16 %v2776, %v2775
    %v2998 = vpack.c.bf16 %v2778, %v2777
    %v2999 = vpack.c.bf16 %v2780, %v2779
    %v3000 = vpack.c.bf16 %v2782, %v2781
    %v3001 = vpack.c.bf16 %v2784, %v2783
    %v3002 = vpack.c.bf16 %v2786, %v2785
    %v3003 = vpack.c.bf16 %v2788, %v2787
    %v3004 = vpack.c.bf16 %v2790, %v2789
    %v3005 = vpack.c.bf16 %v2792, %v2791
    %v3006 = vpack.c.bf16 %v2794, %v2793
    %v3007 = vpack.c.bf16 %v2796, %v2795
    %v3008 = vpack.c.bf16 %v2798, %v2797
    %v3009 = vpack.c.bf16 %v2800, %v2799
    %v3010 = vpack.c.bf16 %v2802, %v2801
    %v3011 = vpack.c.bf16 %v2804, %v2803
    %v3012 = vpack.c.bf16 %v2806, %v2805
    %v3013 = vpack.c.bf16 %v2808, %v2807
    %v3014 = vpack.c.bf16 %v2810, %v2809
    %v3015 = vpack.c.bf16 %v2812, %v2811
    %v3016 = vpack.c.bf16 %v2814, %v2813
    %v3017 = vpack.c.bf16 %v2816, %v2815
    %v3018 = vpack.c.bf16 %v2818, %v2817
    %v3019 = vpack.c.bf16 %v2820, %v2819
    %v3020 = vpack.c.bf16 %v2822, %v2821
    %v3021 = vpack.c.bf16 %v2824, %v2823
    %v3022 = vpack.c.bf16 %v2826, %v2825
    %v3023 = vpack.c.bf16 %v2828, %v2827
    %v3024 = vpack.c.bf16 %v2830, %v2829
    %v3025 = vpack.c.bf16 %v2832, %v2831
    %v3026 = vpack.c.bf16 %v2834, %v2833
    %v3027 = vpack.c.bf16 %v2836, %v2835
    %v3028 = vpack.c.bf16 %v2838, %v2837
    %v3029 = vpack.c.bf16 %v2840, %v2839
    %v3030 = vpack.c.bf16 %v2842, %v2841
    %v3031 = vpack.c.bf16 %v2844, %v2843
    %v3032 = vpack.c.bf16 %v2846, %v2845
    %v3033 = vpack.c.bf16 %v2848, %v2847
    %v3034 = vpack.c.bf16 %v2850, %v2849
    %v3035 = vpack.c.bf16 %v2852, %v2851
    %v3036 = vpack.c.bf16 %v2854, %v2853
    %v3037 = vpack.c.bf16 %v2856, %v2855
    %v3038 = vpack.c.bf16 %v2858, %v2857
    %v3039 = vpack.c.bf16 %v2860, %v2859
    %v3040 = vpack.c.bf16 %v2862, %v2861
    %v3041 = vpack.c.bf16 %v2864, %v2863
    %v3042 = vpack.c.bf16 %v2866, %v2865
    %v3043 = vpack.c.bf16 %v2868, %v2867
    %v3044 = vpack.c.bf16 %v2870, %v2869
    %v3045 = vpack.c.bf16 %v2872, %v2871
    %v3046 = vpack.c.bf16 %v2874, %v2873
    %v3047 = vpack.c.bf16 %v2876, %v2875
    %v3048 = vpack.c.bf16 %v2878, %v2877
    %v3049 = vpack.c.bf16 %v2880, %v2879
    %v3050 = vpack.c.bf16 %v2882, %v2881
    %v3051 = vpack.c.bf16 %v2884, %v2883
    %v3052 = vpack.c.bf16 %v2886, %v2885
    %v3053 = vpack.c.bf16 %v2888, %v2887
    %v3054 = vpack.c.bf16 %v2890, %v2889
    %v3055 = vpack.c.bf16 %v2892, %v2891
    %v3056 = vpack.c.bf16 %v2894, %v2893
    %v3057 = vpack.c.bf16 %v2896, %v2895
    %v3058 = vpack.c.bf16 %v2898, %v2897
    %v3059 = vpack.c.bf16 %v2900, %v2899
    %v3060 = vpack.c.bf16 %v2902, %v2901
    %v3061 = vpack.c.bf16 %v2904, %v2903
    %v3062 = vpack.c.bf16 %v2906, %v2905
    %v3063 = vpack.c.bf16 %v2908, %v2907
    %v3064 = vpack.c.bf16 %v2910, %v2909
    %v3065 = vpack.c.bf16 %v2912, %v2911
    %v3066 = vpack.c.bf16 %v2914, %v2913
    %v3067 = vpack.c.bf16 %v2916, %v2915
    %v3068 = vpack.c.bf16 %v2918, %v2917
    %v3069 = vpack.c.bf16 %v2920, %v2919
    %v3070 = vpack.c.bf16 %v2922, %v2921
    %v3071 = vpack.c.bf16 %v2924, %v2923
    %v3072 = vpack.c.bf16 %v2926, %v2925
    %v3073 = vpack.c.bf16 %v2928, %v2927
    %v3074 = vpack.c.bf16 %v2930, %v2929
    %v3075 = vpack.c.bf16 %v2932, %v2931
    %v3076 = vpack.c.bf16 %v2934, %v2933
    %v3077 = vpack.c.bf16 %v2936, %v2935
    %v3078 = vpack.c.bf16 %v2938, %v2937
    %v3079 = vpack.c.bf16 %v2940, %v2939
    %v3080 = vpack.c.bf16 %v2942, %v2941
    %v3081 = vpack.c.bf16 %v2944, %v2943
    %v3082 = vpack.c.bf16 %v2946, %v2945
    %v3083 = vpack.c.bf16 %v2948, %v2947
    %v3084 = vpack.c.bf16 %v2950, %v2949
    %v3085 = vpack.c.bf16 %v2952, %v2951
    %v3086 = vpack.c.bf16 %v2954, %v2953
    %v3087 = vpack.c.bf16 %v2956, %v2955
    %v3088 = vpack.c.bf16 %v2958, %v2957
    %v3089 = vpack.c.bf16 %v2960, %v2959
    %v3090 = vpack.c.bf16 %v2962, %v2961
    %v3091 = vlaneseq
    %v3092 = vshrl.u32 %v3091, 7
    %v3093 = vsub.s32 0, %v3092
    %v3094 = vrot.slane %v360, %v3093
    %v3096 = vsel %vm1005, %v2963, 0
    %v3099 = vsel %vm1005, %v2964, 0
    %v3102 = vsel %vm1005, %v2965, 0
    %v3105 = vsel %vm1005, %v2966, 0
    %v3108 = vsel %vm1005, %v2967, 0
    %v3111 = vsel %vm1005, %v2968, 0
    %v3114 = vsel %vm1005, %v2969, 0
    %v3117 = vsel %vm1005, %v2970, 0
    %v3120 = vsel %vm1005, %v2971, 0
    %v3123 = vsel %vm1005, %v2972, 0
    %v3126 = vsel %vm1005, %v2973, 0
    %v3129 = vsel %vm1005, %v2974, 0
    %v3132 = vsel %vm1005, %v2975, 0
    %v3135 = vsel %vm1005, %v2976, 0
    %v3138 = vsel %vm1005, %v2977, 0
    %v3141 = vsel %vm1005, %v2978, 0
    %v3144 = vsel %vm1005, %v2979, 0
    %v3147 = vsel %vm1005, %v2980, 0
    %v3150 = vsel %vm1005, %v2981, 0
    %v3153 = vsel %vm1005, %v2982, 0
    %v3156 = vsel %vm1005, %v2983, 0
    %v3159 = vsel %vm1005, %v2984, 0
    %v3162 = vsel %vm1005, %v2985, 0
    %v3165 = vsel %vm1005, %v2986, 0
    %v3168 = vsel %vm1005, %v2987, 0
    %v3171 = vsel %vm1005, %v2988, 0
    %v3174 = vsel %vm1005, %v2989, 0
    %v3177 = vsel %vm1005, %v2990, 0
    %v3180 = vsel %vm1005, %v2991, 0
    %v3183 = vsel %vm1005, %v2992, 0
    %v3186 = vsel %vm1005, %v2993, 0
    %v3189 = vsel %vm1005, %v2994, 0
    %v3192 = vsel %vm1005, %v2995, 0
    %v3195 = vsel %vm1005, %v2996, 0
    %v3198 = vsel %vm1005, %v2997, 0
    %v3201 = vsel %vm1005, %v2998, 0
    %v3204 = vsel %vm1005, %v2999, 0
    %v3207 = vsel %vm1005, %v3000, 0
    %v3210 = vsel %vm1005, %v3001, 0
    %v3213 = vsel %vm1005, %v3002, 0
    %v3216 = vsel %vm1005, %v3003, 0
    %v3219 = vsel %vm1005, %v3004, 0
    %v3222 = vsel %vm1005, %v3005, 0
    %v3225 = vsel %vm1005, %v3006, 0
    %v3228 = vsel %vm1005, %v3007, 0
    %v3231 = vsel %vm1005, %v3008, 0
    %v3234 = vsel %vm1005, %v3009, 0
    %v3237 = vsel %vm1005, %v3010, 0
    %v3240 = vsel %vm1005, %v3011, 0
    %v3243 = vsel %vm1005, %v3012, 0
    %v3246 = vsel %vm1005, %v3013, 0
    %v3249 = vsel %vm1005, %v3014, 0
    %v3252 = vsel %vm1005, %v3015, 0
    %v3255 = vsel %vm1005, %v3016, 0
    %v3258 = vsel %vm1005, %v3017, 0
    %v3261 = vsel %vm1005, %v3018, 0
    %v3264 = vsel %vm1005, %v3019, 0
    %v3267 = vsel %vm1005, %v3020, 0
    %v3270 = vsel %vm1005, %v3021, 0
    %v3273 = vsel %vm1005, %v3022, 0
    %v3276 = vsel %vm1005, %v3023, 0
    %v3279 = vsel %vm1005, %v3024, 0
    %v3282 = vsel %vm1005, %v3025, 0
    %v3285 = vsel %vm1005, %v3026, 0
    %v3288 = vsel %vm1005, %v3027, 0
    %v3291 = vsel %vm1005, %v3028, 0
    %v3294 = vsel %vm1005, %v3029, 0
    %v3297 = vsel %vm1005, %v3030, 0
    %v3300 = vsel %vm1005, %v3031, 0
    %v3303 = vsel %vm1005, %v3032, 0
    %v3306 = vsel %vm1005, %v3033, 0
    %v3309 = vsel %vm1005, %v3034, 0
    %v3312 = vsel %vm1005, %v3035, 0
    %v3315 = vsel %vm1005, %v3036, 0
    %v3318 = vsel %vm1005, %v3037, 0
    %v3321 = vsel %vm1005, %v3038, 0
    %v3324 = vsel %vm1005, %v3039, 0
    %v3327 = vsel %vm1005, %v3040, 0
    %v3330 = vsel %vm1005, %v3041, 0
    %v3333 = vsel %vm1005, %v3042, 0
    %v3336 = vsel %vm1005, %v3043, 0
    %v3339 = vsel %vm1005, %v3044, 0
    %v3342 = vsel %vm1005, %v3045, 0
    %v3345 = vsel %vm1005, %v3046, 0
    %v3348 = vsel %vm1005, %v3047, 0
    %v3351 = vsel %vm1005, %v3048, 0
    %v3354 = vsel %vm1005, %v3049, 0
    %v3357 = vsel %vm1005, %v3050, 0
    %v3360 = vsel %vm1005, %v3051, 0
    %v3363 = vsel %vm1005, %v3052, 0
    %v3366 = vsel %vm1005, %v3053, 0
    %v3369 = vsel %vm1005, %v3054, 0
    %v3372 = vsel %vm1005, %v3055, 0
    %v3375 = vsel %vm1005, %v3056, 0
    %v3378 = vsel %vm1005, %v3057, 0
    %v3381 = vsel %vm1005, %v3058, 0
    %v3384 = vsel %vm1005, %v3059, 0
    %v3387 = vsel %vm1005, %v3060, 0
    %v3390 = vsel %vm1005, %v3061, 0
    %v3393 = vsel %vm1005, %v3062, 0
    %v3396 = vsel %vm1005, %v3063, 0
    %v3399 = vsel %vm1005, %v3064, 0
    %v3402 = vsel %vm1005, %v3065, 0
    %v3405 = vsel %vm1005, %v3066, 0
    %v3408 = vsel %vm1005, %v3067, 0
    %v3411 = vsel %vm1005, %v3068, 0
    %v3414 = vsel %vm1005, %v3069, 0
    %v3417 = vsel %vm1005, %v3070, 0
    %v3420 = vsel %vm1005, %v3071, 0
    %v3423 = vsel %vm1005, %v3072, 0
    %v3426 = vsel %vm1005, %v3073, 0
    %v3429 = vsel %vm1005, %v3074, 0
    %v3432 = vsel %vm1005, %v3075, 0
    %v3435 = vsel %vm1005, %v3076, 0
    %v3438 = vsel %vm1005, %v3077, 0
    %v3441 = vsel %vm1005, %v3078, 0
    %v3444 = vsel %vm1005, %v3079, 0
    %v3447 = vsel %vm1005, %v3080, 0
    %v3450 = vsel %vm1005, %v3081, 0
    %v3453 = vsel %vm1005, %v3082, 0
    %v3456 = vsel %vm1005, %v3083, 0
    %v3459 = vsel %vm1005, %v3084, 0
    %v3462 = vsel %vm1005, %v3085, 0
    %v3465 = vsel %vm1005, %v3086, 0
    %v3468 = vsel %vm1005, %v3087, 0
    %v3471 = vsel %vm1005, %v3088, 0
    %v3474 = vsel %vm1005, %v3089, 0
    %v3477 = vsel %vm1005, %v3090, 0
    %v3480 = vsel %vm1390, %v358, 0
    %3482 = vmatprep.subr.bf16.mxu0 0
    %3483 = vmatpush1.bf16.msra.mxu0 %v3480
    %3484 = vmatprep.subr.bf16.mxu0 0
    %3485 = vmatpush1.bf16.msra.mxu0 0
    %3486 = vmatprep.subr.bf16.mxu0 0
    %3487 = vmatpush1.bf16.msra.mxu0 0
    %3488 = vmatprep.subr.bf16.mxu0 0
    %3489 = vmatpush1.bf16.msra.mxu0 0
    %3490 = vmatprep.subr.bf16.mxu0 0
    %3491 = vmatpush1.bf16.msra.mxu0 0
    %3492 = vmatprep.subr.bf16.mxu0 0
    %3493 = vmatpush1.bf16.msra.mxu0 0
    %3494 = vmatprep.subr.bf16.mxu0 0
    %3495 = vmatpush1.bf16.msra.mxu0 0
    %3496 = vmatprep.subr.bf16.mxu0 0
    %3497 = vmatpush1.bf16.msra.mxu0 0
    %3498 = vmatprep.subr.bf16.mxu0 0
    %3499 = vmatpush1.bf16.msra.mxu0 0
    %3500 = vmatprep.subr.bf16.mxu0 0
    %3501 = vmatpush1.bf16.msra.mxu0 0
    %3502 = vmatprep.subr.bf16.mxu0 0
    %3503 = vmatpush1.bf16.msra.mxu0 0
    %3504 = vmatprep.subr.bf16.mxu0 0
    %3505 = vmatpush1.bf16.msra.mxu0 0
    %3506 = vmatprep.subr.bf16.mxu0 0
    %3507 = vmatpush1.bf16.msra.mxu0 0
    %3508 = vmatprep.subr.bf16.mxu0 0
    %3509 = vmatpush1.bf16.msra.mxu0 0
    %3510 = vmatprep.subr.bf16.mxu0 0
    %3511 = vmatpush1.bf16.msra.mxu0 0
    %3512 = vmatprep.subr.bf16.mxu0 0
    %3513 = vmatpush1.bf16.msra.mxu0 0
    %3514 = vmatprep.mubr.bf16.mxu0 0
    %3515 = vmatmul.mubr.bf16.gmra.mrb[0].mxu0 %v3096
    %v3516 = vpop.f32.mrb[0].mxu0
    %v3517 = vadd.f32 %v3094, %v3516
    %v3518 = vpop.f32.mrb[0].mxu0
    %v3519 = vpop.f32.mrb[0].mxu0
    %v3520 = vadd.f32 %v3094, %v3519
    %v3521 = vpop.f32.mrb[0].mxu0
    %3522 = vmatprep.mubr.bf16.mxu0 0
    %3523 = vmatmul.mubr.bf16.gmra.mrb[0].mxu0 %v3099
    %v3524 = vpop.f32.mrb[0].mxu0
    %v3525 = vadd.f32 %v3094, %v3524
    %v3526 = vpop.f32.mrb[0].mxu0
    %v3527 = vpop.f32.mrb[0].mxu0
    %v3528 = vadd.f32 %v3094, %v3527
    %v3529 = vpop.f32.mrb[0].mxu0
    %3530 = vmatprep.mubr.bf16.mxu0 0
    %3531 = vmatmul.mubr.bf16.gmra.mrb[0].mxu0 %v3102
    %v3532 = vpop.f32.mrb[0].mxu0
    %v3533 = vadd.f32 %v3094, %v3532
    %v3534 = vpop.f32.mrb[0].mxu0
    %v3535 = vpop.f32.mrb[0].mxu0
    %v3536 = vadd.f32 %v3094, %v3535
    %v3537 = vpop.f32.mrb[0].mxu0
    %3538 = vmatprep.mubr.bf16.mxu0 0
    %3539 = vmatmul.mubr.bf16.gmra.mrb[0].mxu0 %v3105
    %v3540 = vpop.f32.mrb[0].mxu0
    %v3541 = vadd.f32 %v3094, %v3540
    %v3542 = vpop.f32.mrb[0].mxu0
    %v3543 = vpop.f32.mrb[0].mxu0
    %v3544 = vadd.f32 %v3094, %v3543
    %v3545 = vpop.f32.mrb[0].mxu0
    %3546 = vmatprep.mubr.bf16.mxu0 0
    %3547 = vmatmul.mubr.bf16.gmra.mrb[0].mxu0 %v3108
    %v3548 = vpop.f32.mrb[0].mxu0
    %v3549 = vadd.f32 %v3094, %v3548
    %v3550 = vpop.f32.mrb[0].mxu0
    %v3551 = vpop.f32.mrb[0].mxu0
    %v3552 = vadd.f32 %v3094, %v3551
    %v3553 = vpop.f32.mrb[0].mxu0
    %3554 = vmatprep.mubr.bf16.mxu0 0
    %3555 = vmatmul.mubr.bf16.gmra.mrb[0].mxu0 %v3111
    %v3556 = vpop.f32.mrb[0].mxu0
    %v3557 = vadd.f32 %v3094, %v3556
    %v3558 = vpop.f32.mrb[0].mxu0
    %v3559 = vpop.f32.mrb[0].mxu0
    %v3560 = vadd.f32 %v3094, %v3559
    %v3561 = vpop.f32.mrb[0].mxu0
    %3562 = vmatprep.mubr.bf16.mxu0 0
    %3563 = vmatmul.mubr.bf16.gmra.mrb[0].mxu0 %v3114
    %v3564 = vpop.f32.mrb[0].mxu0
    %v3565 = vadd.f32 %v3094, %v3564
    %v3566 = vpop.f32.mrb[0].mxu0
    %v3567 = vpop.f32.mrb[0].mxu0
    %v3568 = vadd.f32 %v3094, %v3567
    %v3569 = vpop.f32.mrb[0].mxu0
    %3570 = vmatprep.mubr.bf16.mxu0 0
    %3571 = vmatmul.mubr.bf16.gmra.mrb[0].mxu0 %v3117
    %v3572 = vpop.f32.mrb[0].mxu0
    %v3573 = vadd.f32 %v3094, %v3572
    %v3574 = vpop.f32.mrb[0].mxu0
    %v3575 = vpop.f32.mrb[0].mxu0
    %v3576 = vadd.f32 %v3094, %v3575
    %v3577 = vpop.f32.mrb[0].mxu0
    %3578 = vmatprep.mubr.bf16.mxu0 0
    %3579 = vmatmul.mubr.bf16.gmra.mrb[0].mxu0 %v3120
    %v3580 = vpop.f32.mrb[0].mxu0
    %v3581 = vadd.f32 %v3094, %v3580
    %v3582 = vpop.f32.mrb[0].mxu0
    %v3583 = vpop.f32.mrb[0].mxu0
    %v3584 = vadd.f32 %v3094, %v3583
    %v3585 = vpop.f32.mrb[0].mxu0
    %3586 = vmatprep.mubr.bf16.mxu0 0
    %3587 = vmatmul.mubr.bf16.gmra.mrb[0].mxu0 %v3123
    %v3588 = vpop.f32.mrb[0].mxu0
    %v3589 = vadd.f32 %v3094, %v3588
    %v3590 = vpop.f32.mrb[0].mxu0
    %v3591 = vpop.f32.mrb[0].mxu0
    %v3592 = vadd.f32 %v3094, %v3591
    %v3593 = vpop.f32.mrb[0].mxu0
    %3594 = vmatprep.mubr.bf16.mxu0 0
    %3595 = vmatmul.mubr.bf16.gmra.mrb[0].mxu0 %v3126
    %v3596 = vpop.f32.mrb[0].mxu0
    %v3597 = vadd.f32 %v3094, %v3596
    %v3598 = vpop.f32.mrb[0].mxu0
    %v3599 = vpop.f32.mrb[0].mxu0
    %v3600 = vadd.f32 %v3094, %v3599
    %v3601 = vpop.f32.mrb[0].mxu0
    %3602 = vmatprep.mubr.bf16.mxu0 0
    %3603 = vmatmul.mubr.bf16.gmra.mrb[0].mxu0 %v3129
    %v3604 = vpop.f32.mrb[0].mxu0
    %v3605 = vadd.f32 %v3094, %v3604
    %v3606 = vpop.f32.mrb[0].mxu0
    %v3607 = vpop.f32.mrb[0].mxu0
    %v3608 = vadd.f32 %v3094, %v3607
    %v3609 = vpop.f32.mrb[0].mxu0
    %3610 = vmatprep.mubr.bf16.mxu0 0
    %3611 = vmatmul.mubr.bf16.gmra.mrb[0].mxu0 %v3132
    %v3612 = vpop.f32.mrb[0].mxu0
    %v3613 = vadd.f32 %v3094, %v3612
    %v3614 = vpop.f32.mrb[0].mxu0
    %v3615 = vpop.f32.mrb[0].mxu0
    %v3616 = vadd.f32 %v3094, %v3615
    %v3617 = vpop.f32.mrb[0].mxu0
    %3618 = vmatprep.mubr.bf16.mxu0 0
    %3619 = vmatmul.mubr.bf16.gmra.mrb[0].mxu0 %v3135
    %v3620 = vpop.f32.mrb[0].mxu0
    %v3621 = vadd.f32 %v3094, %v3620
    %v3622 = vpop.f32.mrb[0].mxu0
    %v3623 = vpop.f32.mrb[0].mxu0
    %v3624 = vadd.f32 %v3094, %v3623
    %v3625 = vpop.f32.mrb[0].mxu0
    %3626 = vmatprep.mubr.bf16.mxu0 0
    %3627 = vmatmul.mubr.bf16.gmra.mrb[0].mxu0 %v3138
    %v3628 = vpop.f32.mrb[0].mxu0
    %v3629 = vadd.f32 %v3094, %v3628
    %v3630 = vpop.f32.mrb[0].mxu0
    %v3631 = vpop.f32.mrb[0].mxu0
    %v3632 = vadd.f32 %v3094, %v3631
    %v3633 = vpop.f32.mrb[0].mxu0
    %3634 = vmatprep.mubr.bf16.mxu0 0
    %3635 = vmatmul.mubr.bf16.gmra.mrb[0].mxu0 %v3141
    %v3636 = vpop.f32.mrb[0].mxu0
    %v3637 = vadd.f32 %v3094, %v3636
    %v3638 = vpop.f32.mrb[0].mxu0
    %v3639 = vpop.f32.mrb[0].mxu0
    %v3640 = vadd.f32 %v3094, %v3639
    %v3641 = vpop.f32.mrb[0].mxu0
    %3642 = vmatprep.mubr.bf16.mxu0 0
    %3643 = vmatmul.mubr.bf16.gmra.mrb[0].mxu0 %v3144
    %v3644 = vpop.f32.mrb[0].mxu0
    %v3645 = vadd.f32 %v3094, %v3644
    %v3646 = vpop.f32.mrb[0].mxu0
    %v3647 = vpop.f32.mrb[0].mxu0
    %v3648 = vadd.f32 %v3094, %v3647
    %v3649 = vpop.f32.mrb[0].mxu0
    %3650 = vmatprep.mubr.bf16.mxu0 0
    %3651 = vmatmul.mubr.bf16.gmra.mrb[0].mxu0 %v3147
    %v3652 = vpop.f32.mrb[0].mxu0
    %v3653 = vadd.f32 %v3094, %v3652
    %v3654 = vpop.f32.mrb[0].mxu0
    %v3655 = vpop.f32.mrb[0].mxu0
    %v3656 = vadd.f32 %v3094, %v3655
    %v3657 = vpop.f32.mrb[0].mxu0
    %3658 = vmatprep.mubr.bf16.mxu0 0
    %3659 = vmatmul.mubr.bf16.gmra.mrb[0].mxu0 %v3150
    %v3660 = vpop.f32.mrb[0].mxu0
    %v3661 = vadd.f32 %v3094, %v3660
    %v3662 = vpop.f32.mrb[0].mxu0
    %v3663 = vpop.f32.mrb[0].mxu0
    %v3664 = vadd.f32 %v3094, %v3663
    %v3665 = vpop.f32.mrb[0].mxu0
    %3666 = vmatprep.mubr.bf16.mxu0 0
    %3667 = vmatmul.mubr.bf16.gmra.mrb[0].mxu0 %v3153
    %v3668 = vpop.f32.mrb[0].mxu0
    %v3669 = vadd.f32 %v3094, %v3668
    %v3670 = vpop.f32.mrb[0].mxu0
    %v3671 = vpop.f32.mrb[0].mxu0
    %v3672 = vadd.f32 %v3094, %v3671
    %v3673 = vpop.f32.mrb[0].mxu0
    %3674 = vmatprep.mubr.bf16.mxu0 0
    %3675 = vmatmul.mubr.bf16.gmra.mrb[0].mxu0 %v3156
    %v3676 = vpop.f32.mrb[0].mxu0
    %v3677 = vadd.f32 %v3094, %v3676
    %v3678 = vpop.f32.mrb[0].mxu0
    %v3679 = vpop.f32.mrb[0].mxu0
    %v3680 = vadd.f32 %v3094, %v3679
    %v3681 = vpop.f32.mrb[0].mxu0
    %3682 = vmatprep.mubr.bf16.mxu0 0
    %3683 = vmatmul.mubr.bf16.gmra.mrb[0].mxu0 %v3159
    %v3684 = vpop.f32.mrb[0].mxu0
    %v3685 = vadd.f32 %v3094, %v3684
    %v3686 = vpop.f32.mrb[0].mxu0
    %v3687 = vpop.f32.mrb[0].mxu0
    %v3688 = vadd.f32 %v3094, %v3687
    %v3689 = vpop.f32.mrb[0].mxu0
    %3690 = vmatprep.mubr.bf16.mxu0 0
    %3691 = vmatmul.mubr.bf16.gmra.mrb[0].mxu0 %v3162
    %v3692 = vpop.f32.mrb[0].mxu0
    %v3693 = vadd.f32 %v3094, %v3692
    %v3694 = vpop.f32.mrb[0].mxu0
    %v3695 = vpop.f32.mrb[0].mxu0
    %v3696 = vadd.f32 %v3094, %v3695
    %v3697 = vpop.f32.mrb[0].mxu0
    %3698 = vmatprep.mubr.bf16.mxu0 0
    %3699 = vmatmul.mubr.bf16.gmra.mrb[0].mxu0 %v3165
    %v3700 = vpop.f32.mrb[0].mxu0
    %v3701 = vadd.f32 %v3094, %v3700
    %v3702 = vpop.f32.mrb[0].mxu0
    %v3703 = vpop.f32.mrb[0].mxu0
    %v3704 = vadd.f32 %v3094, %v3703
    %v3705 = vpop.f32.mrb[0].mxu0
    %3706 = vmatprep.mubr.bf16.mxu0 0
    %3707 = vmatmul.mubr.bf16.gmra.mrb[0].mxu0 %v3168
    %v3708 = vpop.f32.mrb[0].mxu0
    %v3709 = vadd.f32 %v3094, %v3708
    %v3710 = vpop.f32.mrb[0].mxu0
    %v3711 = vpop.f32.mrb[0].mxu0
    %v3712 = vadd.f32 %v3094, %v3711
    %v3713 = vpop.f32.mrb[0].mxu0
    %3714 = vmatprep.mubr.bf16.mxu0 0
    %3715 = vmatmul.mubr.bf16.gmra.mrb[0].mxu0 %v3171
    %v3716 = vpop.f32.mrb[0].mxu0
    %v3717 = vadd.f32 %v3094, %v3716
    %v3718 = vpop.f32.mrb[0].mxu0
    %v3719 = vpop.f32.mrb[0].mxu0
    %v3720 = vadd.f32 %v3094, %v3719
    %v3721 = vpop.f32.mrb[0].mxu0
    %3722 = vmatprep.mubr.bf16.mxu0 0
    %3723 = vmatmul.mubr.bf16.gmra.mrb[0].mxu0 %v3174
    %v3724 = vpop.f32.mrb[0].mxu0
    %v3725 = vadd.f32 %v3094, %v3724
    %v3726 = vpop.f32.mrb[0].mxu0
    %v3727 = vpop.f32.mrb[0].mxu0
    %v3728 = vadd.f32 %v3094, %v3727
    %v3729 = vpop.f32.mrb[0].mxu0
    %3730 = vmatprep.mubr.bf16.mxu0 0
    %3731 = vmatmul.mubr.bf16.gmra.mrb[0].mxu0 %v3177
    %v3732 = vpop.f32.mrb[0].mxu0
    %v3733 = vadd.f32 %v3094, %v3732
    %v3734 = vpop.f32.mrb[0].mxu0
    %v3735 = vpop.f32.mrb[0].mxu0
    %v3736 = vadd.f32 %v3094, %v3735
    %v3737 = vpop.f32.mrb[0].mxu0
    %3738 = vmatprep.mubr.bf16.mxu0 0
    %3739 = vmatmul.mubr.bf16.gmra.mrb[0].mxu0 %v3180
    %v3740 = vpop.f32.mrb[0].mxu0
    %v3741 = vadd.f32 %v3094, %v3740
    %v3742 = vpop.f32.mrb[0].mxu0
    %v3743 = vpop.f32.mrb[0].mxu0
    %v3744 = vadd.f32 %v3094, %v3743
    %v3745 = vpop.f32.mrb[0].mxu0
    %3746 = vmatprep.mubr.bf16.mxu0 0
    %3747 = vmatmul.mubr.bf16.gmra.mrb[0].mxu0 %v3183
    %v3748 = vpop.f32.mrb[0].mxu0
    %v3749 = vadd.f32 %v3094, %v3748
    %v3750 = vpop.f32.mrb[0].mxu0
    %v3751 = vpop.f32.mrb[0].mxu0
    %v3752 = vadd.f32 %v3094, %v3751
    %v3753 = vpop.f32.mrb[0].mxu0
    %3754 = vmatprep.mubr.bf16.mxu0 0
    %3755 = vmatmul.mubr.bf16.gmra.mrb[0].mxu0 %v3186
    %v3756 = vpop.f32.mrb[0].mxu0
    %v3757 = vadd.f32 %v3094, %v3756
    %v3758 = vpop.f32.mrb[0].mxu0
    %v3759 = vpop.f32.mrb[0].mxu0
    %v3760 = vadd.f32 %v3094, %v3759
    %v3761 = vpop.f32.mrb[0].mxu0
    %3762 = vmatprep.mubr.bf16.mxu0 0
    %3763 = vmatmul.mubr.bf16.gmra.mrb[0].mxu0 %v3189
    %v3764 = vpop.f32.mrb[0].mxu0
    %v3765 = vadd.f32 %v3094, %v3764
    %v3766 = vpop.f32.mrb[0].mxu0
    %v3767 = vpop.f32.mrb[0].mxu0
    %v3768 = vadd.f32 %v3094, %v3767
    %v3769 = vpop.f32.mrb[0].mxu0
    %3770 = vmatprep.mubr.bf16.mxu0 0
    %3771 = vmatmul.mubr.bf16.gmra.mrb[0].mxu0 %v3192
    %v3772 = vpop.f32.mrb[0].mxu0
    %v3773 = vadd.f32 %v3094, %v3772
    %v3774 = vpop.f32.mrb[0].mxu0
    %v3775 = vpop.f32.mrb[0].mxu0
    %v3776 = vadd.f32 %v3094, %v3775
    %v3777 = vpop.f32.mrb[0].mxu0
    %3778 = vmatprep.mubr.bf16.mxu0 0
    %3779 = vmatmul.mubr.bf16.gmra.mrb[0].mxu0 %v3195
    %v3780 = vpop.f32.mrb[0].mxu0
    %v3781 = vadd.f32 %v3094, %v3780
    %v3782 = vpop.f32.mrb[0].mxu0
    %v3783 = vpop.f32.mrb[0].mxu0
    %v3784 = vadd.f32 %v3094, %v3783
    %v3785 = vpop.f32.mrb[0].mxu0
    %3786 = vmatprep.mubr.bf16.mxu0 0
    %3787 = vmatmul.mubr.bf16.gmra.mrb[0].mxu0 %v3198
    %v3788 = vpop.f32.mrb[0].mxu0
    %v3789 = vadd.f32 %v3094, %v3788
    %v3790 = vpop.f32.mrb[0].mxu0
    %v3791 = vpop.f32.mrb[0].mxu0
    %v3792 = vadd.f32 %v3094, %v3791
    %v3793 = vpop.f32.mrb[0].mxu0
    %3794 = vmatprep.mubr.bf16.mxu0 0
    %3795 = vmatmul.mubr.bf16.gmra.mrb[0].mxu0 %v3201
    %v3796 = vpop.f32.mrb[0].mxu0
    %v3797 = vadd.f32 %v3094, %v3796
    %v3798 = vpop.f32.mrb[0].mxu0
    %v3799 = vpop.f32.mrb[0].mxu0
    %v3800 = vadd.f32 %v3094, %v3799
    %v3801 = vpop.f32.mrb[0].mxu0
    %3802 = vmatprep.mubr.bf16.mxu0 0
    %3803 = vmatmul.mubr.bf16.gmra.mrb[0].mxu0 %v3204
    %v3804 = vpop.f32.mrb[0].mxu0
    %v3805 = vadd.f32 %v3094, %v3804
    %v3806 = vpop.f32.mrb[0].mxu0
    %v3807 = vpop.f32.mrb[0].mxu0
    %v3808 = vadd.f32 %v3094, %v3807
    %v3809 = vpop.f32.mrb[0].mxu0
    %3810 = vmatprep.mubr.bf16.mxu0 0
    %3811 = vmatmul.mubr.bf16.gmra.mrb[0].mxu0 %v3207
    %v3812 = vpop.f32.mrb[0].mxu0
    %v3813 = vadd.f32 %v3094, %v3812
    %v3814 = vpop.f32.mrb[0].mxu0
    %v3815 = vpop.f32.mrb[0].mxu0
    %v3816 = vadd.f32 %v3094, %v3815
    %v3817 = vpop.f32.mrb[0].mxu0
    %3818 = vmatprep.mubr.bf16.mxu0 0
    %3819 = vmatmul.mubr.bf16.gmra.mrb[0].mxu0 %v3210
    %v3820 = vpop.f32.mrb[0].mxu0
    %v3821 = vadd.f32 %v3094, %v3820
    %v3822 = vpop.f32.mrb[0].mxu0
    %v3823 = vpop.f32.mrb[0].mxu0
    %v3824 = vadd.f32 %v3094, %v3823
    %v3825 = vpop.f32.mrb[0].mxu0
    %3826 = vmatprep.mubr.bf16.mxu0 0
    %3827 = vmatmul.mubr.bf16.gmra.mrb[0].mxu0 %v3213
    %v3828 = vpop.f32.mrb[0].mxu0
    %v3829 = vadd.f32 %v3094, %v3828
    %v3830 = vpop.f32.mrb[0].mxu0
    %v3831 = vpop.f32.mrb[0].mxu0
    %v3832 = vadd.f32 %v3094, %v3831
    %v3833 = vpop.f32.mrb[0].mxu0
    %3834 = vmatprep.mubr.bf16.mxu0 0
    %3835 = vmatmul.mubr.bf16.gmra.mrb[0].mxu0 %v3216
    %v3836 = vpop.f32.mrb[0].mxu0
    %v3837 = vadd.f32 %v3094, %v3836
    %v3838 = vpop.f32.mrb[0].mxu0
    %v3839 = vpop.f32.mrb[0].mxu0
    %v3840 = vadd.f32 %v3094, %v3839
    %v3841 = vpop.f32.mrb[0].mxu0
    %3842 = vmatprep.mubr.bf16.mxu0 0
    %3843 = vmatmul.mubr.bf16.gmra.mrb[0].mxu0 %v3219
    %v3844 = vpop.f32.mrb[0].mxu0
    %v3845 = vadd.f32 %v3094, %v3844
    %v3846 = vpop.f32.mrb[0].mxu0
    %v3847 = vpop.f32.mrb[0].mxu0
    %v3848 = vadd.f32 %v3094, %v3847
    %v3849 = vpop.f32.mrb[0].mxu0
    %3850 = vmatprep.mubr.bf16.mxu0 0
    %3851 = vmatmul.mubr.bf16.gmra.mrb[0].mxu0 %v3222
    %v3852 = vpop.f32.mrb[0].mxu0
    %v3853 = vadd.f32 %v3094, %v3852
    %v3854 = vpop.f32.mrb[0].mxu0
    %v3855 = vpop.f32.mrb[0].mxu0
    %v3856 = vadd.f32 %v3094, %v3855
    %v3857 = vpop.f32.mrb[0].mxu0
    %3858 = vmatprep.mubr.bf16.mxu0 0
    %3859 = vmatmul.mubr.bf16.gmra.mrb[0].mxu0 %v3225
    %v3860 = vpop.f32.mrb[0].mxu0
    %v3861 = vadd.f32 %v3094, %v3860
    %v3862 = vpop.f32.mrb[0].mxu0
    %v3863 = vpop.f32.mrb[0].mxu0
    %v3864 = vadd.f32 %v3094, %v3863
    %v3865 = vpop.f32.mrb[0].mxu0
    %3866 = vmatprep.mubr.bf16.mxu0 0
    %3867 = vmatmul.mubr.bf16.gmra.mrb[0].mxu0 %v3228
    %v3868 = vpop.f32.mrb[0].mxu0
    %v3869 = vadd.f32 %v3094, %v3868
    %v3870 = vpop.f32.mrb[0].mxu0
    %v3871 = vpop.f32.mrb[0].mxu0
    %v3872 = vadd.f32 %v3094, %v3871
    %v3873 = vpop.f32.mrb[0].mxu0
    %3874 = vmatprep.mubr.bf16.mxu0 0
    %3875 = vmatmul.mubr.bf16.gmra.mrb[0].mxu0 %v3231
    %v3876 = vpop.f32.mrb[0].mxu0
    %v3877 = vadd.f32 %v3094, %v3876
    %v3878 = vpop.f32.mrb[0].mxu0
    %v3879 = vpop.f32.mrb[0].mxu0
    %v3880 = vadd.f32 %v3094, %v3879
    %v3881 = vpop.f32.mrb[0].mxu0
    %3882 = vmatprep.mubr.bf16.mxu0 0
    %3883 = vmatmul.mubr.bf16.gmra.mrb[0].mxu0 %v3234
    %v3884 = vpop.f32.mrb[0].mxu0
    %v3885 = vadd.f32 %v3094, %v3884
    %v3886 = vpop.f32.mrb[0].mxu0
    %v3887 = vpop.f32.mrb[0].mxu0
    %v3888 = vadd.f32 %v3094, %v3887
    %v3889 = vpop.f32.mrb[0].mxu0
    %3890 = vmatprep.mubr.bf16.mxu0 0
    %3891 = vmatmul.mubr.bf16.gmra.mrb[0].mxu0 %v3237
    %v3892 = vpop.f32.mrb[0].mxu0
    %v3893 = vadd.f32 %v3094, %v3892
    %v3894 = vpop.f32.mrb[0].mxu0
    %v3895 = vpop.f32.mrb[0].mxu0
    %v3896 = vadd.f32 %v3094, %v3895
    %v3897 = vpop.f32.mrb[0].mxu0
    %3898 = vmatprep.mubr.bf16.mxu0 0
    %3899 = vmatmul.mubr.bf16.gmra.mrb[0].mxu0 %v3240
    %v3900 = vpop.f32.mrb[0].mxu0
    %v3901 = vadd.f32 %v3094, %v3900
    %v3902 = vpop.f32.mrb[0].mxu0
    %v3903 = vpop.f32.mrb[0].mxu0
    %v3904 = vadd.f32 %v3094, %v3903
    %v3905 = vpop.f32.mrb[0].mxu0
    %3906 = vmatprep.mubr.bf16.mxu0 0
    %3907 = vmatmul.mubr.bf16.gmra.mrb[0].mxu0 %v3243
    %v3908 = vpop.f32.mrb[0].mxu0
    %v3909 = vadd.f32 %v3094, %v3908
    %v3910 = vpop.f32.mrb[0].mxu0
    %v3911 = vpop.f32.mrb[0].mxu0
    %v3912 = vadd.f32 %v3094, %v3911
    %v3913 = vpop.f32.mrb[0].mxu0
    %3914 = vmatprep.mubr.bf16.mxu0 0
    %3915 = vmatmul.mubr.bf16.gmra.mrb[0].mxu0 %v3246
    %v3916 = vpop.f32.mrb[0].mxu0
    %v3917 = vadd.f32 %v3094, %v3916
    %v3918 = vpop.f32.mrb[0].mxu0
    %v3919 = vpop.f32.mrb[0].mxu0
    %v3920 = vadd.f32 %v3094, %v3919
    %v3921 = vpop.f32.mrb[0].mxu0
    %3922 = vmatprep.mubr.bf16.mxu0 0
    %3923 = vmatmul.mubr.bf16.gmra.mrb[0].mxu0 %v3249
    %v3924 = vpop.f32.mrb[0].mxu0
    %v3925 = vadd.f32 %v3094, %v3924
    %v3926 = vpop.f32.mrb[0].mxu0
    %v3927 = vpop.f32.mrb[0].mxu0
    %v3928 = vadd.f32 %v3094, %v3927
    %v3929 = vpop.f32.mrb[0].mxu0
    %3930 = vmatprep.mubr.bf16.mxu0 0
    %3931 = vmatmul.mubr.bf16.gmra.mrb[0].mxu0 %v3252
    %v3932 = vpop.f32.mrb[0].mxu0
    %v3933 = vadd.f32 %v3094, %v3932
    %v3934 = vpop.f32.mrb[0].mxu0
    %v3935 = vpop.f32.mrb[0].mxu0
    %v3936 = vadd.f32 %v3094, %v3935
    %v3937 = vpop.f32.mrb[0].mxu0
    %3938 = vmatprep.mubr.bf16.mxu0 0
    %3939 = vmatmul.mubr.bf16.gmra.mrb[0].mxu0 %v3255
    %v3940 = vpop.f32.mrb[0].mxu0
    %v3941 = vadd.f32 %v3094, %v3940
    %v3942 = vpop.f32.mrb[0].mxu0
    %v3943 = vpop.f32.mrb[0].mxu0
    %v3944 = vadd.f32 %v3094, %v3943
    %v3945 = vpop.f32.mrb[0].mxu0
    %3946 = vmatprep.mubr.bf16.mxu0 0
    %3947 = vmatmul.mubr.bf16.gmra.mrb[0].mxu0 %v3258
    %v3948 = vpop.f32.mrb[0].mxu0
    %v3949 = vadd.f32 %v3094, %v3948
    %v3950 = vpop.f32.mrb[0].mxu0
    %v3951 = vpop.f32.mrb[0].mxu0
    %v3952 = vadd.f32 %v3094, %v3951
    %v3953 = vpop.f32.mrb[0].mxu0
    %3954 = vmatprep.mubr.bf16.mxu0 0
    %3955 = vmatmul.mubr.bf16.gmra.mrb[0].mxu0 %v3261
    %v3956 = vpop.f32.mrb[0].mxu0
    %v3957 = vadd.f32 %v3094, %v3956
    %v3958 = vpop.f32.mrb[0].mxu0
    %v3959 = vpop.f32.mrb[0].mxu0
    %v3960 = vadd.f32 %v3094, %v3959
    %v3961 = vpop.f32.mrb[0].mxu0
    %3962 = vmatprep.mubr.bf16.mxu0 0
    %3963 = vmatmul.mubr.bf16.gmra.mrb[0].mxu0 %v3264
    %v3964 = vpop.f32.mrb[0].mxu0
    %v3965 = vadd.f32 %v3094, %v3964
    %v3966 = vpop.f32.mrb[0].mxu0
    %v3967 = vpop.f32.mrb[0].mxu0
    %v3968 = vadd.f32 %v3094, %v3967
    %v3969 = vpop.f32.mrb[0].mxu0
    %3970 = vmatprep.mubr.bf16.mxu0 0
    %3971 = vmatmul.mubr.bf16.gmra.mrb[0].mxu0 %v3267
    %v3972 = vpop.f32.mrb[0].mxu0
    %v3973 = vadd.f32 %v3094, %v3972
    %v3974 = vpop.f32.mrb[0].mxu0
    %v3975 = vpop.f32.mrb[0].mxu0
    %v3976 = vadd.f32 %v3094, %v3975
    %v3977 = vpop.f32.mrb[0].mxu0
    %3978 = vmatprep.mubr.bf16.mxu0 0
    %3979 = vmatmul.mubr.bf16.gmra.mrb[0].mxu0 %v3270
    %v3980 = vpop.f32.mrb[0].mxu0
    %v3981 = vadd.f32 %v3094, %v3980
    %v3982 = vpop.f32.mrb[0].mxu0
    %v3983 = vpop.f32.mrb[0].mxu0
    %v3984 = vadd.f32 %v3094, %v3983
    %v3985 = vpop.f32.mrb[0].mxu0
    %3986 = vmatprep.mubr.bf16.mxu0 0
    %3987 = vmatmul.mubr.bf16.gmra.mrb[0].mxu0 %v3273
    %v3988 = vpop.f32.mrb[0].mxu0
    %v3989 = vadd.f32 %v3094, %v3988
    %v3990 = vpop.f32.mrb[0].mxu0
    %v3991 = vpop.f32.mrb[0].mxu0
    %v3992 = vadd.f32 %v3094, %v3991
    %v3993 = vpop.f32.mrb[0].mxu0
    %3994 = vmatprep.mubr.bf16.mxu0 0
    %3995 = vmatmul.mubr.bf16.gmra.mrb[0].mxu0 %v3276
    %v3996 = vpop.f32.mrb[0].mxu0
    %v3997 = vadd.f32 %v3094, %v3996
    %v3998 = vpop.f32.mrb[0].mxu0
    %v3999 = vpop.f32.mrb[0].mxu0
    %v4000 = vadd.f32 %v3094, %v3999
    %v4001 = vpop.f32.mrb[0].mxu0
    %4002 = vmatprep.mubr.bf16.mxu0 0
    %4003 = vmatmul.mubr.bf16.gmra.mrb[0].mxu0 %v3279
    %v4004 = vpop.f32.mrb[0].mxu0
    %v4005 = vadd.f32 %v3094, %v4004
    %v4006 = vpop.f32.mrb[0].mxu0
    %v4007 = vpop.f32.mrb[0].mxu0
    %v4008 = vadd.f32 %v3094, %v4007
    %v4009 = vpop.f32.mrb[0].mxu0
    %4010 = vmatprep.mubr.bf16.mxu0 0
    %4011 = vmatmul.mubr.bf16.gmra.mrb[0].mxu0 %v3282
    %v4012 = vpop.f32.mrb[0].mxu0
    %v4013 = vadd.f32 %v3094, %v4012
    %v4014 = vpop.f32.mrb[0].mxu0
    %v4015 = vpop.f32.mrb[0].mxu0
    %v4016 = vadd.f32 %v3094, %v4015
    %v4017 = vpop.f32.mrb[0].mxu0
    %4018 = vmatprep.mubr.bf16.mxu0 0
    %4019 = vmatmul.mubr.bf16.gmra.mrb[0].mxu0 %v3285
    %v4020 = vpop.f32.mrb[0].mxu0
    %v4021 = vadd.f32 %v3094, %v4020
    %v4022 = vpop.f32.mrb[0].mxu0
    %v4023 = vpop.f32.mrb[0].mxu0
    %v4024 = vadd.f32 %v3094, %v4023
    %v4025 = vpop.f32.mrb[0].mxu0
    %4026 = vmatprep.mubr.bf16.mxu0 0
    %4027 = vmatmul.mubr.bf16.gmra.mrb[0].mxu0 %v3288
    %v4028 = vpop.f32.mrb[0].mxu0
    %v4029 = vadd.f32 %v3094, %v4028
    %v4030 = vpop.f32.mrb[0].mxu0
    %v4031 = vpop.f32.mrb[0].mxu0
    %v4032 = vadd.f32 %v3094, %v4031
    %v4033 = vpop.f32.mrb[0].mxu0
    %4034 = vmatprep.mubr.bf16.mxu0 0
    %4035 = vmatmul.mubr.bf16.gmra.mrb[0].mxu0 %v3291
    %v4036 = vpop.f32.mrb[0].mxu0
    %v4037 = vadd.f32 %v3094, %v4036
    %v4038 = vpop.f32.mrb[0].mxu0
    %v4039 = vpop.f32.mrb[0].mxu0
    %v4040 = vadd.f32 %v3094, %v4039
    %v4041 = vpop.f32.mrb[0].mxu0
    %4042 = vmatprep.mubr.bf16.mxu0 0
    %4043 = vmatmul.mubr.bf16.gmra.mrb[0].mxu0 %v3294
    %v4044 = vpop.f32.mrb[0].mxu0
    %v4045 = vadd.f32 %v3094, %v4044
    %v4046 = vpop.f32.mrb[0].mxu0
    %v4047 = vpop.f32.mrb[0].mxu0
    %v4048 = vadd.f32 %v3094, %v4047
    %v4049 = vpop.f32.mrb[0].mxu0
    %4050 = vmatprep.mubr.bf16.mxu0 0
    %4051 = vmatmul.mubr.bf16.gmra.mrb[0].mxu0 %v3297
    %v4052 = vpop.f32.mrb[0].mxu0
    %v4053 = vadd.f32 %v3094, %v4052
    %v4054 = vpop.f32.mrb[0].mxu0
    %v4055 = vpop.f32.mrb[0].mxu0
    %v4056 = vadd.f32 %v3094, %v4055
    %v4057 = vpop.f32.mrb[0].mxu0
    %4058 = vmatprep.mubr.bf16.mxu0 0
    %4059 = vmatmul.mubr.bf16.gmra.mrb[0].mxu0 %v3300
    %v4060 = vpop.f32.mrb[0].mxu0
    %v4061 = vadd.f32 %v3094, %v4060
    %v4062 = vpop.f32.mrb[0].mxu0
    %v4063 = vpop.f32.mrb[0].mxu0
    %v4064 = vadd.f32 %v3094, %v4063
    %v4065 = vpop.f32.mrb[0].mxu0
    %4066 = vmatprep.mubr.bf16.mxu0 0
    %4067 = vmatmul.mubr.bf16.gmra.mrb[0].mxu0 %v3303
    %v4068 = vpop.f32.mrb[0].mxu0
    %v4069 = vadd.f32 %v3094, %v4068
    %v4070 = vpop.f32.mrb[0].mxu0
    %v4071 = vpop.f32.mrb[0].mxu0
    %v4072 = vadd.f32 %v3094, %v4071
    %v4073 = vpop.f32.mrb[0].mxu0
    %4074 = vmatprep.mubr.bf16.mxu0 0
    %4075 = vmatmul.mubr.bf16.gmra.mrb[0].mxu0 %v3306
    %v4076 = vpop.f32.mrb[0].mxu0
    %v4077 = vadd.f32 %v3094, %v4076
    %v4078 = vpop.f32.mrb[0].mxu0
    %v4079 = vpop.f32.mrb[0].mxu0
    %v4080 = vadd.f32 %v3094, %v4079
    %v4081 = vpop.f32.mrb[0].mxu0
    %4082 = vmatprep.mubr.bf16.mxu0 0
    %4083 = vmatmul.mubr.bf16.gmra.mrb[0].mxu0 %v3309
    %v4084 = vpop.f32.mrb[0].mxu0
    %v4085 = vadd.f32 %v3094, %v4084
    %v4086 = vpop.f32.mrb[0].mxu0
    %v4087 = vpop.f32.mrb[0].mxu0
    %v4088 = vadd.f32 %v3094, %v4087
    %v4089 = vpop.f32.mrb[0].mxu0
    %4090 = vmatprep.mubr.bf16.mxu0 0
    %4091 = vmatmul.mubr.bf16.gmra.mrb[0].mxu0 %v3312
    %v4092 = vpop.f32.mrb[0].mxu0
    %v4093 = vadd.f32 %v3094, %v4092
    %v4094 = vpop.f32.mrb[0].mxu0
    %v4095 = vpop.f32.mrb[0].mxu0
    %v4096 = vadd.f32 %v3094, %v4095
    %v4097 = vpop.f32.mrb[0].mxu0
    %4098 = vmatprep.mubr.bf16.mxu0 0
    %4099 = vmatmul.mubr.bf16.gmra.mrb[0].mxu0 %v3315
    %v4100 = vpop.f32.mrb[0].mxu0
    %v4101 = vadd.f32 %v3094, %v4100
    %v4102 = vpop.f32.mrb[0].mxu0
    %v4103 = vpop.f32.mrb[0].mxu0
    %v4104 = vadd.f32 %v3094, %v4103
    %v4105 = vpop.f32.mrb[0].mxu0
    %4106 = vmatprep.mubr.bf16.mxu0 0
    %4107 = vmatmul.mubr.bf16.gmra.mrb[0].mxu0 %v3318
    %v4108 = vpop.f32.mrb[0].mxu0
    %v4109 = vadd.f32 %v3094, %v4108
    %v4110 = vpop.f32.mrb[0].mxu0
    %v4111 = vpop.f32.mrb[0].mxu0
    %v4112 = vadd.f32 %v3094, %v4111
    %v4113 = vpop.f32.mrb[0].mxu0
    %4114 = vmatprep.mubr.bf16.mxu0 0
    %4115 = vmatmul.mubr.bf16.gmra.mrb[0].mxu0 %v3321
    %v4116 = vpop.f32.mrb[0].mxu0
    %v4117 = vadd.f32 %v3094, %v4116
    %v4118 = vpop.f32.mrb[0].mxu0
    %v4119 = vpop.f32.mrb[0].mxu0
    %v4120 = vadd.f32 %v3094, %v4119
    %v4121 = vpop.f32.mrb[0].mxu0
    %4122 = vmatprep.mubr.bf16.mxu0 0
    %4123 = vmatmul.mubr.bf16.gmra.mrb[0].mxu0 %v3324
    %v4124 = vpop.f32.mrb[0].mxu0
    %v4125 = vadd.f32 %v3094, %v4124
    %v4126 = vpop.f32.mrb[0].mxu0
    %v4127 = vpop.f32.mrb[0].mxu0
    %v4128 = vadd.f32 %v3094, %v4127
    %v4129 = vpop.f32.mrb[0].mxu0
    %4130 = vmatprep.mubr.bf16.mxu0 0
    %4131 = vmatmul.mubr.bf16.gmra.mrb[0].mxu0 %v3327
    %v4132 = vpop.f32.mrb[0].mxu0
    %v4133 = vadd.f32 %v3094, %v4132
    %v4134 = vpop.f32.mrb[0].mxu0
    %v4135 = vpop.f32.mrb[0].mxu0
    %v4136 = vadd.f32 %v3094, %v4135
    %v4137 = vpop.f32.mrb[0].mxu0
    %4138 = vmatprep.mubr.bf16.mxu0 0
    %4139 = vmatmul.mubr.bf16.gmra.mrb[0].mxu0 %v3330
    %v4140 = vpop.f32.mrb[0].mxu0
    %v4141 = vadd.f32 %v3094, %v4140
    %v4142 = vpop.f32.mrb[0].mxu0
    %v4143 = vpop.f32.mrb[0].mxu0
    %v4144 = vadd.f32 %v3094, %v4143
    %v4145 = vpop.f32.mrb[0].mxu0
    %4146 = vmatprep.mubr.bf16.mxu0 0
    %4147 = vmatmul.mubr.bf16.gmra.mrb[0].mxu0 %v3333
    %v4148 = vpop.f32.mrb[0].mxu0
    %v4149 = vadd.f32 %v3094, %v4148
    %v4150 = vpop.f32.mrb[0].mxu0
    %v4151 = vpop.f32.mrb[0].mxu0
    %v4152 = vadd.f32 %v3094, %v4151
    %v4153 = vpop.f32.mrb[0].mxu0
    %4154 = vmatprep.mubr.bf16.mxu0 0
    %4155 = vmatmul.mubr.bf16.gmra.mrb[0].mxu0 %v3336
    %v4156 = vpop.f32.mrb[0].mxu0
    %v4157 = vadd.f32 %v3094, %v4156
    %v4158 = vpop.f32.mrb[0].mxu0
    %v4159 = vpop.f32.mrb[0].mxu0
    %v4160 = vadd.f32 %v3094, %v4159
    %v4161 = vpop.f32.mrb[0].mxu0
    %4162 = vmatprep.mubr.bf16.mxu0 0
    %4163 = vmatmul.mubr.bf16.gmra.mrb[0].mxu0 %v3339
    %v4164 = vpop.f32.mrb[0].mxu0
    %v4165 = vadd.f32 %v3094, %v4164
    %v4166 = vpop.f32.mrb[0].mxu0
    %v4167 = vpop.f32.mrb[0].mxu0
    %v4168 = vadd.f32 %v3094, %v4167
    %v4169 = vpop.f32.mrb[0].mxu0
    %4170 = vmatprep.mubr.bf16.mxu0 0
    %4171 = vmatmul.mubr.bf16.gmra.mrb[0].mxu0 %v3342
    %v4172 = vpop.f32.mrb[0].mxu0
    %v4173 = vadd.f32 %v3094, %v4172
    %v4174 = vpop.f32.mrb[0].mxu0
    %v4175 = vpop.f32.mrb[0].mxu0
    %v4176 = vadd.f32 %v3094, %v4175
    %v4177 = vpop.f32.mrb[0].mxu0
    %4178 = vmatprep.mubr.bf16.mxu0 0
    %4179 = vmatmul.mubr.bf16.gmra.mrb[0].mxu0 %v3345
    %v4180 = vpop.f32.mrb[0].mxu0
    %v4181 = vadd.f32 %v3094, %v4180
    %v4182 = vpop.f32.mrb[0].mxu0
    %v4183 = vpop.f32.mrb[0].mxu0
    %v4184 = vadd.f32 %v3094, %v4183
    %v4185 = vpop.f32.mrb[0].mxu0
    %4186 = vmatprep.mubr.bf16.mxu0 0
    %4187 = vmatmul.mubr.bf16.gmra.mrb[0].mxu0 %v3348
    %v4188 = vpop.f32.mrb[0].mxu0
    %v4189 = vadd.f32 %v3094, %v4188
    %v4190 = vpop.f32.mrb[0].mxu0
    %v4191 = vpop.f32.mrb[0].mxu0
    %v4192 = vadd.f32 %v3094, %v4191
    %v4193 = vpop.f32.mrb[0].mxu0
    %4194 = vmatprep.mubr.bf16.mxu0 0
    %4195 = vmatmul.mubr.bf16.gmra.mrb[0].mxu0 %v3351
    %v4196 = vpop.f32.mrb[0].mxu0
    %v4197 = vadd.f32 %v3094, %v4196
    %v4198 = vpop.f32.mrb[0].mxu0
    %v4199 = vpop.f32.mrb[0].mxu0
    %v4200 = vadd.f32 %v3094, %v4199
    %v4201 = vpop.f32.mrb[0].mxu0
    %4202 = vmatprep.mubr.bf16.mxu0 0
    %4203 = vmatmul.mubr.bf16.gmra.mrb[0].mxu0 %v3354
    %v4204 = vpop.f32.mrb[0].mxu0
    %v4205 = vadd.f32 %v3094, %v4204
    %v4206 = vpop.f32.mrb[0].mxu0
    %v4207 = vpop.f32.mrb[0].mxu0
    %v4208 = vadd.f32 %v3094, %v4207
    %v4209 = vpop.f32.mrb[0].mxu0
    %4210 = vmatprep.mubr.bf16.mxu0 0
    %4211 = vmatmul.mubr.bf16.gmra.mrb[0].mxu0 %v3357
    %v4212 = vpop.f32.mrb[0].mxu0
    %v4213 = vadd.f32 %v3094, %v4212
    %v4214 = vpop.f32.mrb[0].mxu0
    %v4215 = vpop.f32.mrb[0].mxu0
    %v4216 = vadd.f32 %v3094, %v4215
    %v4217 = vpop.f32.mrb[0].mxu0
    %4218 = vmatprep.mubr.bf16.mxu0 0
    %4219 = vmatmul.mubr.bf16.gmra.mrb[0].mxu0 %v3360
    %v4220 = vpop.f32.mrb[0].mxu0
    %v4221 = vadd.f32 %v3094, %v4220
    %v4222 = vpop.f32.mrb[0].mxu0
    %v4223 = vpop.f32.mrb[0].mxu0
    %v4224 = vadd.f32 %v3094, %v4223
    %v4225 = vpop.f32.mrb[0].mxu0
    %4226 = vmatprep.mubr.bf16.mxu0 0
    %4227 = vmatmul.mubr.bf16.gmra.mrb[0].mxu0 %v3363
    %v4228 = vpop.f32.mrb[0].mxu0
    %v4229 = vadd.f32 %v3094, %v4228
    %v4230 = vpop.f32.mrb[0].mxu0
    %v4231 = vpop.f32.mrb[0].mxu0
    %v4232 = vadd.f32 %v3094, %v4231
    %v4233 = vpop.f32.mrb[0].mxu0
    %4234 = vmatprep.mubr.bf16.mxu0 0
    %4235 = vmatmul.mubr.bf16.gmra.mrb[0].mxu0 %v3366
    %v4236 = vpop.f32.mrb[0].mxu0
    %v4237 = vadd.f32 %v3094, %v4236
    %v4238 = vpop.f32.mrb[0].mxu0
    %v4239 = vpop.f32.mrb[0].mxu0
    %v4240 = vadd.f32 %v3094, %v4239
    %v4241 = vpop.f32.mrb[0].mxu0
    %4242 = vmatprep.mubr.bf16.mxu0 0
    %4243 = vmatmul.mubr.bf16.gmra.mrb[0].mxu0 %v3369
    %v4244 = vpop.f32.mrb[0].mxu0
    %v4245 = vadd.f32 %v3094, %v4244
    %v4246 = vpop.f32.mrb[0].mxu0
    %v4247 = vpop.f32.mrb[0].mxu0
    %v4248 = vadd.f32 %v3094, %v4247
    %v4249 = vpop.f32.mrb[0].mxu0
    %4250 = vmatprep.mubr.bf16.mxu0 0
    %4251 = vmatmul.mubr.bf16.gmra.mrb[0].mxu0 %v3372
    %v4252 = vpop.f32.mrb[0].mxu0
    %v4253 = vadd.f32 %v3094, %v4252
    %v4254 = vpop.f32.mrb[0].mxu0
    %v4255 = vpop.f32.mrb[0].mxu0
    %v4256 = vadd.f32 %v3094, %v4255
    %v4257 = vpop.f32.mrb[0].mxu0
    %4258 = vmatprep.mubr.bf16.mxu0 0
    %4259 = vmatmul.mubr.bf16.gmra.mrb[0].mxu0 %v3375
    %v4260 = vpop.f32.mrb[0].mxu0
    %v4261 = vadd.f32 %v3094, %v4260
    %v4262 = vpop.f32.mrb[0].mxu0
    %v4263 = vpop.f32.mrb[0].mxu0
    %v4264 = vadd.f32 %v3094, %v4263
    %v4265 = vpop.f32.mrb[0].mxu0
    %4266 = vmatprep.mubr.bf16.mxu0 0
    %4267 = vmatmul.mubr.bf16.gmra.mrb[0].mxu0 %v3378
    %v4268 = vpop.f32.mrb[0].mxu0
    %v4269 = vadd.f32 %v3094, %v4268
    %v4270 = vpop.f32.mrb[0].mxu0
    %v4271 = vpop.f32.mrb[0].mxu0
    %v4272 = vadd.f32 %v3094, %v4271
    %v4273 = vpop.f32.mrb[0].mxu0
    %4274 = vmatprep.mubr.bf16.mxu0 0
    %4275 = vmatmul.mubr.bf16.gmra.mrb[0].mxu0 %v3381
    %v4276 = vpop.f32.mrb[0].mxu0
    %v4277 = vadd.f32 %v3094, %v4276
    %v4278 = vpop.f32.mrb[0].mxu0
    %v4279 = vpop.f32.mrb[0].mxu0
    %v4280 = vadd.f32 %v3094, %v4279
    %v4281 = vpop.f32.mrb[0].mxu0
    %4282 = vmatprep.mubr.bf16.mxu0 0
    %4283 = vmatmul.mubr.bf16.gmra.mrb[0].mxu0 %v3384
    %v4284 = vpop.f32.mrb[0].mxu0
    %v4285 = vadd.f32 %v3094, %v4284
    %v4286 = vpop.f32.mrb[0].mxu0
    %v4287 = vpop.f32.mrb[0].mxu0
    %v4288 = vadd.f32 %v3094, %v4287
    %v4289 = vpop.f32.mrb[0].mxu0
    %4290 = vmatprep.mubr.bf16.mxu0 0
    %4291 = vmatmul.mubr.bf16.gmra.mrb[0].mxu0 %v3387
    %v4292 = vpop.f32.mrb[0].mxu0
    %v4293 = vadd.f32 %v3094, %v4292
    %v4294 = vpop.f32.mrb[0].mxu0
    %v4295 = vpop.f32.mrb[0].mxu0
    %v4296 = vadd.f32 %v3094, %v4295
    %v4297 = vpop.f32.mrb[0].mxu0
    %4298 = vmatprep.mubr.bf16.mxu0 0
    %4299 = vmatmul.mubr.bf16.gmra.mrb[0].mxu0 %v3390
    %v4300 = vpop.f32.mrb[0].mxu0
    %v4301 = vadd.f32 %v3094, %v4300
    %v4302 = vpop.f32.mrb[0].mxu0
    %v4303 = vpop.f32.mrb[0].mxu0
    %v4304 = vadd.f32 %v3094, %v4303
    %v4305 = vpop.f32.mrb[0].mxu0
    %4306 = vmatprep.mubr.bf16.mxu0 0
    %4307 = vmatmul.mubr.bf16.gmra.mrb[0].mxu0 %v3393
    %v4308 = vpop.f32.mrb[0].mxu0
    %v4309 = vadd.f32 %v3094, %v4308
    %v4310 = vpop.f32.mrb[0].mxu0
    %v4311 = vpop.f32.mrb[0].mxu0
    %v4312 = vadd.f32 %v3094, %v4311
    %v4313 = vpop.f32.mrb[0].mxu0
    %4314 = vmatprep.mubr.bf16.mxu0 0
    %4315 = vmatmul.mubr.bf16.gmra.mrb[0].mxu0 %v3396
    %v4316 = vpop.f32.mrb[0].mxu0
    %v4317 = vadd.f32 %v3094, %v4316
    %v4318 = vpop.f32.mrb[0].mxu0
    %v4319 = vpop.f32.mrb[0].mxu0
    %v4320 = vadd.f32 %v3094, %v4319
    %v4321 = vpop.f32.mrb[0].mxu0
    %4322 = vmatprep.mubr.bf16.mxu0 0
    %4323 = vmatmul.mubr.bf16.gmra.mrb[0].mxu0 %v3399
    %v4324 = vpop.f32.mrb[0].mxu0
    %v4325 = vadd.f32 %v3094, %v4324
    %v4326 = vpop.f32.mrb[0].mxu0
    %v4327 = vpop.f32.mrb[0].mxu0
    %v4328 = vadd.f32 %v3094, %v4327
    %v4329 = vpop.f32.mrb[0].mxu0
    %4330 = vmatprep.mubr.bf16.mxu0 0
    %4331 = vmatmul.mubr.bf16.gmra.mrb[0].mxu0 %v3402
    %v4332 = vpop.f32.mrb[0].mxu0
    %v4333 = vadd.f32 %v3094, %v4332
    %v4334 = vpop.f32.mrb[0].mxu0
    %v4335 = vpop.f32.mrb[0].mxu0
    %v4336 = vadd.f32 %v3094, %v4335
    %v4337 = vpop.f32.mrb[0].mxu0
    %4338 = vmatprep.mubr.bf16.mxu0 0
    %4339 = vmatmul.mubr.bf16.gmra.mrb[0].mxu0 %v3405
    %v4340 = vpop.f32.mrb[0].mxu0
    %v4341 = vadd.f32 %v3094, %v4340
    %v4342 = vpop.f32.mrb[0].mxu0
    %v4343 = vpop.f32.mrb[0].mxu0
    %v4344 = vadd.f32 %v3094, %v4343
    %v4345 = vpop.f32.mrb[0].mxu0
    %4346 = vmatprep.mubr.bf16.mxu0 0
    %4347 = vmatmul.mubr.bf16.gmra.mrb[0].mxu0 %v3408
    %v4348 = vpop.f32.mrb[0].mxu0
    %v4349 = vadd.f32 %v3094, %v4348
    %v4350 = vpop.f32.mrb[0].mxu0
    %v4351 = vpop.f32.mrb[0].mxu0
    %v4352 = vadd.f32 %v3094, %v4351
    %v4353 = vpop.f32.mrb[0].mxu0
    %4354 = vmatprep.mubr.bf16.mxu0 0
    %4355 = vmatmul.mubr.bf16.gmra.mrb[0].mxu0 %v3411
    %v4356 = vpop.f32.mrb[0].mxu0
    %v4357 = vadd.f32 %v3094, %v4356
    %v4358 = vpop.f32.mrb[0].mxu0
    %v4359 = vpop.f32.mrb[0].mxu0
    %v4360 = vadd.f32 %v3094, %v4359
    %v4361 = vpop.f32.mrb[0].mxu0
    %4362 = vmatprep.mubr.bf16.mxu0 0
    %4363 = vmatmul.mubr.bf16.gmra.mrb[0].mxu0 %v3414
    %v4364 = vpop.f32.mrb[0].mxu0
    %v4365 = vadd.f32 %v3094, %v4364
    %v4366 = vpop.f32.mrb[0].mxu0
    %v4367 = vpop.f32.mrb[0].mxu0
    %v4368 = vadd.f32 %v3094, %v4367
    %v4369 = vpop.f32.mrb[0].mxu0
    %4370 = vmatprep.mubr.bf16.mxu0 0
    %4371 = vmatmul.mubr.bf16.gmra.mrb[0].mxu0 %v3417
    %v4372 = vpop.f32.mrb[0].mxu0
    %v4373 = vadd.f32 %v3094, %v4372
    %v4374 = vpop.f32.mrb[0].mxu0
    %v4375 = vpop.f32.mrb[0].mxu0
    %v4376 = vadd.f32 %v3094, %v4375
    %v4377 = vpop.f32.mrb[0].mxu0
    %4378 = vmatprep.mubr.bf16.mxu0 0
    %4379 = vmatmul.mubr.bf16.gmra.mrb[0].mxu0 %v3420
    %v4380 = vpop.f32.mrb[0].mxu0
    %v4381 = vadd.f32 %v3094, %v4380
    %v4382 = vpop.f32.mrb[0].mxu0
    %v4383 = vpop.f32.mrb[0].mxu0
    %v4384 = vadd.f32 %v3094, %v4383
    %v4385 = vpop.f32.mrb[0].mxu0
    %4386 = vmatprep.mubr.bf16.mxu0 0
    %4387 = vmatmul.mubr.bf16.gmra.mrb[0].mxu0 %v3423
    %v4388 = vpop.f32.mrb[0].mxu0
    %v4389 = vadd.f32 %v3094, %v4388
    %v4390 = vpop.f32.mrb[0].mxu0
    %v4391 = vpop.f32.mrb[0].mxu0
    %v4392 = vadd.f32 %v3094, %v4391
    %v4393 = vpop.f32.mrb[0].mxu0
    %4394 = vmatprep.mubr.bf16.mxu0 0
    %4395 = vmatmul.mubr.bf16.gmra.mrb[0].mxu0 %v3426
    %v4396 = vpop.f32.mrb[0].mxu0
    %v4397 = vadd.f32 %v3094, %v4396
    %v4398 = vpop.f32.mrb[0].mxu0
    %v4399 = vpop.f32.mrb[0].mxu0
    %v4400 = vadd.f32 %v3094, %v4399
    %v4401 = vpop.f32.mrb[0].mxu0
    %4402 = vmatprep.mubr.bf16.mxu0 0
    %4403 = vmatmul.mubr.bf16.gmra.mrb[0].mxu0 %v3429
    %v4404 = vpop.f32.mrb[0].mxu0
    %v4405 = vadd.f32 %v3094, %v4404
    %v4406 = vpop.f32.mrb[0].mxu0
    %v4407 = vpop.f32.mrb[0].mxu0
    %v4408 = vadd.f32 %v3094, %v4407
    %v4409 = vpop.f32.mrb[0].mxu0
    %4410 = vmatprep.mubr.bf16.mxu0 0
    %4411 = vmatmul.mubr.bf16.gmra.mrb[0].mxu0 %v3432
    %v4412 = vpop.f32.mrb[0].mxu0
    %v4413 = vadd.f32 %v3094, %v4412
    %v4414 = vpop.f32.mrb[0].mxu0
    %v4415 = vpop.f32.mrb[0].mxu0
    %v4416 = vadd.f32 %v3094, %v4415
    %v4417 = vpop.f32.mrb[0].mxu0
    %4418 = vmatprep.mubr.bf16.mxu0 0
    %4419 = vmatmul.mubr.bf16.gmra.mrb[0].mxu0 %v3435
    %v4420 = vpop.f32.mrb[0].mxu0
    %v4421 = vadd.f32 %v3094, %v4420
    %v4422 = vpop.f32.mrb[0].mxu0
    %v4423 = vpop.f32.mrb[0].mxu0
    %v4424 = vadd.f32 %v3094, %v4423
    %v4425 = vpop.f32.mrb[0].mxu0
    %4426 = vmatprep.mubr.bf16.mxu0 0
    %4427 = vmatmul.mubr.bf16.gmra.mrb[0].mxu0 %v3438
    %v4428 = vpop.f32.mrb[0].mxu0
    %v4429 = vadd.f32 %v3094, %v4428
    %v4430 = vpop.f32.mrb[0].mxu0
    %v4431 = vpop.f32.mrb[0].mxu0
    %v4432 = vadd.f32 %v3094, %v4431
    %v4433 = vpop.f32.mrb[0].mxu0
    %4434 = vmatprep.mubr.bf16.mxu0 0
    %4435 = vmatmul.mubr.bf16.gmra.mrb[0].mxu0 %v3441
    %v4436 = vpop.f32.mrb[0].mxu0
    %v4437 = vadd.f32 %v3094, %v4436
    %v4438 = vpop.f32.mrb[0].mxu0
    %v4439 = vpop.f32.mrb[0].mxu0
    %v4440 = vadd.f32 %v3094, %v4439
    %v4441 = vpop.f32.mrb[0].mxu0
    %4442 = vmatprep.mubr.bf16.mxu0 0
    %4443 = vmatmul.mubr.bf16.gmra.mrb[0].mxu0 %v3444
    %v4444 = vpop.f32.mrb[0].mxu0
    %v4445 = vadd.f32 %v3094, %v4444
    %v4446 = vpop.f32.mrb[0].mxu0
    %v4447 = vpop.f32.mrb[0].mxu0
    %v4448 = vadd.f32 %v3094, %v4447
    %v4449 = vpop.f32.mrb[0].mxu0
    %4450 = vmatprep.mubr.bf16.mxu0 0
    %4451 = vmatmul.mubr.bf16.gmra.mrb[0].mxu0 %v3447
    %v4452 = vpop.f32.mrb[0].mxu0
    %v4453 = vadd.f32 %v3094, %v4452
    %v4454 = vpop.f32.mrb[0].mxu0
    %v4455 = vpop.f32.mrb[0].mxu0
    %v4456 = vadd.f32 %v3094, %v4455
    %v4457 = vpop.f32.mrb[0].mxu0
    %4458 = vmatprep.mubr.bf16.mxu0 0
    %4459 = vmatmul.mubr.bf16.gmra.mrb[0].mxu0 %v3450
    %v4460 = vpop.f32.mrb[0].mxu0
    %v4461 = vadd.f32 %v3094, %v4460
    %v4462 = vpop.f32.mrb[0].mxu0
    %v4463 = vpop.f32.mrb[0].mxu0
    %v4464 = vadd.f32 %v3094, %v4463
    %v4465 = vpop.f32.mrb[0].mxu0
    %4466 = vmatprep.mubr.bf16.mxu0 0
    %4467 = vmatmul.mubr.bf16.gmra.mrb[0].mxu0 %v3453
    %v4468 = vpop.f32.mrb[0].mxu0
    %v4469 = vadd.f32 %v3094, %v4468
    %v4470 = vpop.f32.mrb[0].mxu0
    %v4471 = vpop.f32.mrb[0].mxu0
    %v4472 = vadd.f32 %v3094, %v4471
    %v4473 = vpop.f32.mrb[0].mxu0
    %4474 = vmatprep.mubr.bf16.mxu0 0
    %4475 = vmatmul.mubr.bf16.gmra.mrb[0].mxu0 %v3456
    %v4476 = vpop.f32.mrb[0].mxu0
    %v4477 = vadd.f32 %v3094, %v4476
    %v4478 = vpop.f32.mrb[0].mxu0
    %v4479 = vpop.f32.mrb[0].mxu0
    %v4480 = vadd.f32 %v3094, %v4479
    %v4481 = vpop.f32.mrb[0].mxu0
    %4482 = vmatprep.mubr.bf16.mxu0 0
    %4483 = vmatmul.mubr.bf16.gmra.mrb[0].mxu0 %v3459
    %v4484 = vpop.f32.mrb[0].mxu0
    %v4485 = vadd.f32 %v3094, %v4484
    %v4486 = vpop.f32.mrb[0].mxu0
    %v4487 = vpop.f32.mrb[0].mxu0
    %v4488 = vadd.f32 %v3094, %v4487
    %v4489 = vpop.f32.mrb[0].mxu0
    %4490 = vmatprep.mubr.bf16.mxu0 0
    %4491 = vmatmul.mubr.bf16.gmra.mrb[0].mxu0 %v3462
    %v4492 = vpop.f32.mrb[0].mxu0
    %v4493 = vadd.f32 %v3094, %v4492
    %v4494 = vpop.f32.mrb[0].mxu0
    %v4495 = vpop.f32.mrb[0].mxu0
    %v4496 = vadd.f32 %v3094, %v4495
    %v4497 = vpop.f32.mrb[0].mxu0
    %4498 = vmatprep.mubr.bf16.mxu0 0
    %4499 = vmatmul.mubr.bf16.gmra.mrb[0].mxu0 %v3465
    %v4500 = vpop.f32.mrb[0].mxu0
    %v4501 = vadd.f32 %v3094, %v4500
    %v4502 = vpop.f32.mrb[0].mxu0
    %v4503 = vpop.f32.mrb[0].mxu0
    %v4504 = vadd.f32 %v3094, %v4503
    %v4505 = vpop.f32.mrb[0].mxu0
    %4506 = vmatprep.mubr.bf16.mxu0 0
    %4507 = vmatmul.mubr.bf16.gmra.mrb[0].mxu0 %v3468
    %v4508 = vpop.f32.mrb[0].mxu0
    %v4509 = vadd.f32 %v3094, %v4508
    %v4510 = vpop.f32.mrb[0].mxu0
    %v4511 = vpop.f32.mrb[0].mxu0
    %v4512 = vadd.f32 %v3094, %v4511
    %v4513 = vpop.f32.mrb[0].mxu0
    %4514 = vmatprep.mubr.bf16.mxu0 0
    %4515 = vmatmul.mubr.bf16.gmra.mrb[0].mxu0 %v3471
    %v4516 = vpop.f32.mrb[0].mxu0
    %v4517 = vadd.f32 %v3094, %v4516
    %v4518 = vpop.f32.mrb[0].mxu0
    %v4519 = vpop.f32.mrb[0].mxu0
    %v4520 = vadd.f32 %v3094, %v4519
    %v4521 = vpop.f32.mrb[0].mxu0
    %4522 = vmatprep.mubr.bf16.mxu0 0
    %4523 = vmatmul.mubr.bf16.gmra.mrb[0].mxu0 %v3474
    %v4524 = vpop.f32.mrb[0].mxu0
    %v4525 = vadd.f32 %v3094, %v4524
    %v4526 = vpop.f32.mrb[0].mxu0
    %v4527 = vpop.f32.mrb[0].mxu0
    %v4528 = vadd.f32 %v3094, %v4527
    %v4529 = vpop.f32.mrb[0].mxu0
    %4530 = vmatprep.mubr.bf16.mxu0 0
    %4531 = vmatmul.mubr.bf16.gmra.mrb[0].mxu0 %v3477
    %v4532 = vpop.f32.mrb[0].mxu0
    %v4533 = vadd.f32 %v3094, %v4532
    %v4534 = vpop.f32.mrb[0].mxu0
    %v4535 = vpop.f32.mrb[0].mxu0
    %v4536 = vadd.f32 %v3094, %v4535
    %v4537 = vpop.f32.mrb[0].mxu0
    %4538 = vdwg.mxu0
    %v4539 = vmul.f32 %v3517, 0.2
    %v4540 = vmul.f32 %v3520, 0.2
    %v4541 = vmul.f32 %v3525, 0.2
    %v4542 = vmul.f32 %v3528, 0.2
    %v4543 = vmul.f32 %v3533, 0.2
    %v4544 = vmul.f32 %v3536, 0.2
    %v4545 = vmul.f32 %v3541, 0.2
    %v4546 = vmul.f32 %v3544, 0.2
    %v4547 = vmul.f32 %v3549, 0.2
    %v4548 = vmul.f32 %v3552, 0.2
    %v4549 = vmul.f32 %v3557, 0.2
    %v4550 = vmul.f32 %v3560, 0.2
    %v4551 = vmul.f32 %v3565, 0.2
    %v4552 = vmul.f32 %v3568, 0.2
    %v4553 = vmul.f32 %v3573, 0.2
    %v4554 = vmul.f32 %v3576, 0.2
    %v4555 = vmul.f32 %v3581, 0.2
    %v4556 = vmul.f32 %v3584, 0.2
    %v4557 = vmul.f32 %v3589, 0.2
    %v4558 = vmul.f32 %v3592, 0.2
    %v4559 = vmul.f32 %v3597, 0.2
    %v4560 = vmul.f32 %v3600, 0.2
    %v4561 = vmul.f32 %v3605, 0.2
    %v4562 = vmul.f32 %v3608, 0.2
    %v4563 = vmul.f32 %v3613, 0.2
    %v4564 = vmul.f32 %v3616, 0.2
    %v4565 = vmul.f32 %v3621, 0.2
    %v4566 = vmul.f32 %v3624, 0.2
    %v4567 = vmul.f32 %v3629, 0.2
    %v4568 = vmul.f32 %v3632, 0.2
    %v4569 = vmul.f32 %v3637, 0.2
    %v4570 = vmul.f32 %v3640, 0.2
    %v4571 = vmul.f32 %v3645, 0.2
    %v4572 = vmul.f32 %v3648, 0.2
    %v4573 = vmul.f32 %v3653, 0.2
    %v4574 = vmul.f32 %v3656, 0.2
    %v4575 = vmul.f32 %v3661, 0.2
    %v4576 = vmul.f32 %v3664, 0.2
    %v4577 = vmul.f32 %v3669, 0.2
    %v4578 = vmul.f32 %v3672, 0.2
    %v4579 = vmul.f32 %v3677, 0.2
    %v4580 = vmul.f32 %v3680, 0.2
    %v4581 = vmul.f32 %v3685, 0.2
    %v4582 = vmul.f32 %v3688, 0.2
    %v4583 = vmul.f32 %v3693, 0.2
    %v4584 = vmul.f32 %v3696, 0.2
    %v4585 = vmul.f32 %v3701, 0.2
    %v4586 = vmul.f32 %v3704, 0.2
    %v4587 = vmul.f32 %v3709, 0.2
    %v4588 = vmul.f32 %v3712, 0.2
    %v4589 = vmul.f32 %v3717, 0.2
    %v4590 = vmul.f32 %v3720, 0.2
    %v4591 = vmul.f32 %v3725, 0.2
    %v4592 = vmul.f32 %v3728, 0.2
    %v4593 = vmul.f32 %v3733, 0.2
    %v4594 = vmul.f32 %v3736, 0.2
    %v4595 = vmul.f32 %v3741, 0.2
    %v4596 = vmul.f32 %v3744, 0.2
    %v4597 = vmul.f32 %v3749, 0.2
    %v4598 = vmul.f32 %v3752, 0.2
    %v4599 = vmul.f32 %v3757, 0.2
    %v4600 = vmul.f32 %v3760, 0.2
    %v4601 = vmul.f32 %v3765, 0.2
    %v4602 = vmul.f32 %v3768, 0.2
    %v4603 = vmul.f32 %v3773, 0.2
    %v4604 = vmul.f32 %v3776, 0.2
    %v4605 = vmul.f32 %v3781, 0.2
    %v4606 = vmul.f32 %v3784, 0.2
    %v4607 = vmul.f32 %v3789, 0.2
    %v4608 = vmul.f32 %v3792, 0.2
    %v4609 = vmul.f32 %v3797, 0.2
    %v4610 = vmul.f32 %v3800, 0.2
    %v4611 = vmul.f32 %v3805, 0.2
    %v4612 = vmul.f32 %v3808, 0.2
    %v4613 = vmul.f32 %v3813, 0.2
    %v4614 = vmul.f32 %v3816, 0.2
    %v4615 = vmul.f32 %v3821, 0.2
    %v4616 = vmul.f32 %v3824, 0.2
    %v4617 = vmul.f32 %v3829, 0.2
    %v4618 = vmul.f32 %v3832, 0.2
    %v4619 = vmul.f32 %v3837, 0.2
    %v4620 = vmul.f32 %v3840, 0.2
    %v4621 = vmul.f32 %v3845, 0.2
    %v4622 = vmul.f32 %v3848, 0.2
    %v4623 = vmul.f32 %v3853, 0.2
    %v4624 = vmul.f32 %v3856, 0.2
    %v4625 = vmul.f32 %v3861, 0.2
    %v4626 = vmul.f32 %v3864, 0.2
    %v4627 = vmul.f32 %v3869, 0.2
    %v4628 = vmul.f32 %v3872, 0.2
    %v4629 = vmul.f32 %v3877, 0.2
    %v4630 = vmul.f32 %v3880, 0.2
    %v4631 = vmul.f32 %v3885, 0.2
    %v4632 = vmul.f32 %v3888, 0.2
    %v4633 = vmul.f32 %v3893, 0.2
    %v4634 = vmul.f32 %v3896, 0.2
    %v4635 = vmul.f32 %v3901, 0.2
    %v4636 = vmul.f32 %v3904, 0.2
    %v4637 = vmul.f32 %v3909, 0.2
    %v4638 = vmul.f32 %v3912, 0.2
    %v4639 = vmul.f32 %v3917, 0.2
    %v4640 = vmul.f32 %v3920, 0.2
    %v4641 = vmul.f32 %v3925, 0.2
    %v4642 = vmul.f32 %v3928, 0.2
    %v4643 = vmul.f32 %v3933, 0.2
    %v4644 = vmul.f32 %v3936, 0.2
    %v4645 = vmul.f32 %v3941, 0.2
    %v4646 = vmul.f32 %v3944, 0.2
    %v4647 = vmul.f32 %v3949, 0.2
    %v4648 = vmul.f32 %v3952, 0.2
    %v4649 = vmul.f32 %v3957, 0.2
    %v4650 = vmul.f32 %v3960, 0.2
    %v4651 = vmul.f32 %v3965, 0.2
    %v4652 = vmul.f32 %v3968, 0.2
    %v4653 = vmul.f32 %v3973, 0.2
    %v4654 = vmul.f32 %v3976, 0.2
    %v4655 = vmul.f32 %v3981, 0.2
    %v4656 = vmul.f32 %v3984, 0.2
    %v4657 = vmul.f32 %v3989, 0.2
    %v4658 = vmul.f32 %v3992, 0.2
    %v4659 = vmul.f32 %v3997, 0.2
    %v4660 = vmul.f32 %v4000, 0.2
    %v4661 = vmul.f32 %v4005, 0.2
    %v4662 = vmul.f32 %v4008, 0.2
    %v4663 = vmul.f32 %v4013, 0.2
    %v4664 = vmul.f32 %v4016, 0.2
    %v4665 = vmul.f32 %v4021, 0.2
    %v4666 = vmul.f32 %v4024, 0.2
    %v4667 = vmul.f32 %v4029, 0.2
    %v4668 = vmul.f32 %v4032, 0.2
    %v4669 = vmul.f32 %v4037, 0.2
    %v4670 = vmul.f32 %v4040, 0.2
    %v4671 = vmul.f32 %v4045, 0.2
    %v4672 = vmul.f32 %v4048, 0.2
    %v4673 = vmul.f32 %v4053, 0.2
    %v4674 = vmul.f32 %v4056, 0.2
    %v4675 = vmul.f32 %v4061, 0.2
    %v4676 = vmul.f32 %v4064, 0.2
    %v4677 = vmul.f32 %v4069, 0.2
    %v4678 = vmul.f32 %v4072, 0.2
    %v4679 = vmul.f32 %v4077, 0.2
    %v4680 = vmul.f32 %v4080, 0.2
    %v4681 = vmul.f32 %v4085, 0.2
    %v4682 = vmul.f32 %v4088, 0.2
    %v4683 = vmul.f32 %v4093, 0.2
    %v4684 = vmul.f32 %v4096, 0.2
    %v4685 = vmul.f32 %v4101, 0.2
    %v4686 = vmul.f32 %v4104, 0.2
    %v4687 = vmul.f32 %v4109, 0.2
    %v4688 = vmul.f32 %v4112, 0.2
    %v4689 = vmul.f32 %v4117, 0.2
    %v4690 = vmul.f32 %v4120, 0.2
    %v4691 = vmul.f32 %v4125, 0.2
    %v4692 = vmul.f32 %v4128, 0.2
    %v4693 = vmul.f32 %v4133, 0.2
    %v4694 = vmul.f32 %v4136, 0.2
    %v4695 = vmul.f32 %v4141, 0.2
    %v4696 = vmul.f32 %v4144, 0.2
    %v4697 = vmul.f32 %v4149, 0.2
    %v4698 = vmul.f32 %v4152, 0.2
    %v4699 = vmul.f32 %v4157, 0.2
    %v4700 = vmul.f32 %v4160, 0.2
    %v4701 = vmul.f32 %v4165, 0.2
    %v4702 = vmul.f32 %v4168, 0.2
    %v4703 = vmul.f32 %v4173, 0.2
    %v4704 = vmul.f32 %v4176, 0.2
    %v4705 = vmul.f32 %v4181, 0.2
    %v4706 = vmul.f32 %v4184, 0.2
    %v4707 = vmul.f32 %v4189, 0.2
    %v4708 = vmul.f32 %v4192, 0.2
    %v4709 = vmul.f32 %v4197, 0.2
    %v4710 = vmul.f32 %v4200, 0.2
    %v4711 = vmul.f32 %v4205, 0.2
    %v4712 = vmul.f32 %v4208, 0.2
    %v4713 = vmul.f32 %v4213, 0.2
    %v4714 = vmul.f32 %v4216, 0.2
    %v4715 = vmul.f32 %v4221, 0.2
    %v4716 = vmul.f32 %v4224, 0.2
    %v4717 = vmul.f32 %v4229, 0.2
    %v4718 = vmul.f32 %v4232, 0.2
    %v4719 = vmul.f32 %v4237, 0.2
    %v4720 = vmul.f32 %v4240, 0.2
    %v4721 = vmul.f32 %v4245, 0.2
    %v4722 = vmul.f32 %v4248, 0.2
    %v4723 = vmul.f32 %v4253, 0.2
    %v4724 = vmul.f32 %v4256, 0.2
    %v4725 = vmul.f32 %v4261, 0.2
    %v4726 = vmul.f32 %v4264, 0.2
    %v4727 = vmul.f32 %v4269, 0.2
    %v4728 = vmul.f32 %v4272, 0.2
    %v4729 = vmul.f32 %v4277, 0.2
    %v4730 = vmul.f32 %v4280, 0.2
    %v4731 = vmul.f32 %v4285, 0.2
    %v4732 = vmul.f32 %v4288, 0.2
    %v4733 = vmul.f32 %v4293, 0.2
    %v4734 = vmul.f32 %v4296, 0.2
    %v4735 = vmul.f32 %v4301, 0.2
    %v4736 = vmul.f32 %v4304, 0.2
    %v4737 = vmul.f32 %v4309, 0.2
    %v4738 = vmul.f32 %v4312, 0.2
    %v4739 = vmul.f32 %v4317, 0.2
    %v4740 = vmul.f32 %v4320, 0.2
    %v4741 = vmul.f32 %v4325, 0.2
    %v4742 = vmul.f32 %v4328, 0.2
    %v4743 = vmul.f32 %v4333, 0.2
    %v4744 = vmul.f32 %v4336, 0.2
    %v4745 = vmul.f32 %v4341, 0.2
    %v4746 = vmul.f32 %v4344, 0.2
    %v4747 = vmul.f32 %v4349, 0.2
    %v4748 = vmul.f32 %v4352, 0.2
    %v4749 = vmul.f32 %v4357, 0.2
    %v4750 = vmul.f32 %v4360, 0.2
    %v4751 = vmul.f32 %v4365, 0.2
    %v4752 = vmul.f32 %v4368, 0.2
    %v4753 = vmul.f32 %v4373, 0.2
    %v4754 = vmul.f32 %v4376, 0.2
    %v4755 = vmul.f32 %v4381, 0.2
    %v4756 = vmul.f32 %v4384, 0.2
    %v4757 = vmul.f32 %v4389, 0.2
    %v4758 = vmul.f32 %v4392, 0.2
    %v4759 = vmul.f32 %v4397, 0.2
    %v4760 = vmul.f32 %v4400, 0.2
    %v4761 = vmul.f32 %v4405, 0.2
    %v4762 = vmul.f32 %v4408, 0.2
    %v4763 = vmul.f32 %v4413, 0.2
    %v4764 = vmul.f32 %v4416, 0.2
    %v4765 = vmul.f32 %v4421, 0.2
    %v4766 = vmul.f32 %v4424, 0.2
    %v4767 = vmul.f32 %v4429, 0.2
    %v4768 = vmul.f32 %v4432, 0.2
    %v4769 = vmul.f32 %v4437, 0.2
    %v4770 = vmul.f32 %v4440, 0.2
    %v4771 = vmul.f32 %v4445, 0.2
    %v4772 = vmul.f32 %v4448, 0.2
    %v4773 = vmul.f32 %v4453, 0.2
    %v4774 = vmul.f32 %v4456, 0.2
    %v4775 = vmul.f32 %v4461, 0.2
    %v4776 = vmul.f32 %v4464, 0.2
    %v4777 = vmul.f32 %v4469, 0.2
    %v4778 = vmul.f32 %v4472, 0.2
    %v4779 = vmul.f32 %v4477, 0.2
    %v4780 = vmul.f32 %v4480, 0.2
    %v4781 = vmul.f32 %v4485, 0.2
    %v4782 = vmul.f32 %v4488, 0.2
    %v4783 = vmul.f32 %v4493, 0.2
    %v4784 = vmul.f32 %v4496, 0.2
    %v4785 = vmul.f32 %v4501, 0.2
    %v4786 = vmul.f32 %v4504, 0.2
    %v4787 = vmul.f32 %v4509, 0.2
    %v4788 = vmul.f32 %v4512, 0.2
    %v4789 = vmul.f32 %v4517, 0.2
    %v4790 = vmul.f32 %v4520, 0.2
    %v4791 = vmul.f32 %v4525, 0.2
    %v4792 = vmul.f32 %v4528, 0.2
    %v4793 = vmul.f32 %v4533, 0.2
    %v4794 = vmul.f32 %v4536, 0.2
    %v4795 = vmax.f32 %v3517, %v4539
    %v4796 = vmax.f32 %v3520, %v4540
    %v4797 = vmax.f32 %v3525, %v4541
    %v4798 = vmax.f32 %v3528, %v4542
    %v4799 = vmax.f32 %v3533, %v4543
    %v4800 = vmax.f32 %v3536, %v4544
    %v4801 = vmax.f32 %v3541, %v4545
    %v4802 = vmax.f32 %v3544, %v4546
    %v4803 = vmax.f32 %v3549, %v4547
    %v4804 = vmax.f32 %v3552, %v4548
    %v4805 = vmax.f32 %v3557, %v4549
    %v4806 = vmax.f32 %v3560, %v4550
    %v4807 = vmax.f32 %v3565, %v4551
    %v4808 = vmax.f32 %v3568, %v4552
    %v4809 = vmax.f32 %v3573, %v4553
    %v4810 = vmax.f32 %v3576, %v4554
    %v4811 = vmax.f32 %v3581, %v4555
    %v4812 = vmax.f32 %v3584, %v4556
    %v4813 = vmax.f32 %v3589, %v4557
    %v4814 = vmax.f32 %v3592, %v4558
    %v4815 = vmax.f32 %v3597, %v4559
    %v4816 = vmax.f32 %v3600, %v4560
    %v4817 = vmax.f32 %v3605, %v4561
    %v4818 = vmax.f32 %v3608, %v4562
    %v4819 = vmax.f32 %v3613, %v4563
    %v4820 = vmax.f32 %v3616, %v4564
    %v4821 = vmax.f32 %v3621, %v4565
    %v4822 = vmax.f32 %v3624, %v4566
    %v4823 = vmax.f32 %v3629, %v4567
    %v4824 = vmax.f32 %v3632, %v4568
    %v4825 = vmax.f32 %v3637, %v4569
    %v4826 = vmax.f32 %v3640, %v4570
    %v4827 = vmax.f32 %v3645, %v4571
    %v4828 = vmax.f32 %v3648, %v4572
    %v4829 = vmax.f32 %v3653, %v4573
    %v4830 = vmax.f32 %v3656, %v4574
    %v4831 = vmax.f32 %v3661, %v4575
    %v4832 = vmax.f32 %v3664, %v4576
    %v4833 = vmax.f32 %v3669, %v4577
    %v4834 = vmax.f32 %v3672, %v4578
    %v4835 = vmax.f32 %v3677, %v4579
    %v4836 = vmax.f32 %v3680, %v4580
    %v4837 = vmax.f32 %v3685, %v4581
    %v4838 = vmax.f32 %v3688, %v4582
    %v4839 = vmax.f32 %v3693, %v4583
    %v4840 = vmax.f32 %v3696, %v4584
    %v4841 = vmax.f32 %v3701, %v4585
    %v4842 = vmax.f32 %v3704, %v4586
    %v4843 = vmax.f32 %v3709, %v4587
    %v4844 = vmax.f32 %v3712, %v4588
    %v4845 = vmax.f32 %v3717, %v4589
    %v4846 = vmax.f32 %v3720, %v4590
    %v4847 = vmax.f32 %v3725, %v4591
    %v4848 = vmax.f32 %v3728, %v4592
    %v4849 = vmax.f32 %v3733, %v4593
    %v4850 = vmax.f32 %v3736, %v4594
    %v4851 = vmax.f32 %v3741, %v4595
    %v4852 = vmax.f32 %v3744, %v4596
    %v4853 = vmax.f32 %v3749, %v4597
    %v4854 = vmax.f32 %v3752, %v4598
    %v4855 = vmax.f32 %v3757, %v4599
    %v4856 = vmax.f32 %v3760, %v4600
    %v4857 = vmax.f32 %v3765, %v4601
    %v4858 = vmax.f32 %v3768, %v4602
    %v4859 = vmax.f32 %v3773, %v4603
    %v4860 = vmax.f32 %v3776, %v4604
    %v4861 = vmax.f32 %v3781, %v4605
    %v4862 = vmax.f32 %v3784, %v4606
    %v4863 = vmax.f32 %v3789, %v4607
    %v4864 = vmax.f32 %v3792, %v4608
    %v4865 = vmax.f32 %v3797, %v4609
    %v4866 = vmax.f32 %v3800, %v4610
    %v4867 = vmax.f32 %v3805, %v4611
    %v4868 = vmax.f32 %v3808, %v4612
    %v4869 = vmax.f32 %v3813, %v4613
    %v4870 = vmax.f32 %v3816, %v4614
    %v4871 = vmax.f32 %v3821, %v4615
    %v4872 = vmax.f32 %v3824, %v4616
    %v4873 = vmax.f32 %v3829, %v4617
    %v4874 = vmax.f32 %v3832, %v4618
    %v4875 = vmax.f32 %v3837, %v4619
    %v4876 = vmax.f32 %v3840, %v4620
    %v4877 = vmax.f32 %v3845, %v4621
    %v4878 = vmax.f32 %v3848, %v4622
    %v4879 = vmax.f32 %v3853, %v4623
    %v4880 = vmax.f32 %v3856, %v4624
    %v4881 = vmax.f32 %v3861, %v4625
    %v4882 = vmax.f32 %v3864, %v4626
    %v4883 = vmax.f32 %v3869, %v4627
    %v4884 = vmax.f32 %v3872, %v4628
    %v4885 = vmax.f32 %v3877, %v4629
    %v4886 = vmax.f32 %v3880, %v4630
    %v4887 = vmax.f32 %v3885, %v4631
    %v4888 = vmax.f32 %v3888, %v4632
    %v4889 = vmax.f32 %v3893, %v4633
    %v4890 = vmax.f32 %v3896, %v4634
    %v4891 = vmax.f32 %v3901, %v4635
    %v4892 = vmax.f32 %v3904, %v4636
    %v4893 = vmax.f32 %v3909, %v4637
    %v4894 = vmax.f32 %v3912, %v4638
    %v4895 = vmax.f32 %v3917, %v4639
    %v4896 = vmax.f32 %v3920, %v4640
    %v4897 = vmax.f32 %v3925, %v4641
    %v4898 = vmax.f32 %v3928, %v4642
    %v4899 = vmax.f32 %v3933, %v4643
    %v4900 = vmax.f32 %v3936, %v4644
    %v4901 = vmax.f32 %v3941, %v4645
    %v4902 = vmax.f32 %v3944, %v4646
    %v4903 = vmax.f32 %v3949, %v4647
    %v4904 = vmax.f32 %v3952, %v4648
    %v4905 = vmax.f32 %v3957, %v4649
    %v4906 = vmax.f32 %v3960, %v4650
    %v4907 = vmax.f32 %v3965, %v4651
    %v4908 = vmax.f32 %v3968, %v4652
    %v4909 = vmax.f32 %v3973, %v4653
    %v4910 = vmax.f32 %v3976, %v4654
    %v4911 = vmax.f32 %v3981, %v4655
    %v4912 = vmax.f32 %v3984, %v4656
    %v4913 = vmax.f32 %v3989, %v4657
    %v4914 = vmax.f32 %v3992, %v4658
    %v4915 = vmax.f32 %v3997, %v4659
    %v4916 = vmax.f32 %v4000, %v4660
    %v4917 = vmax.f32 %v4005, %v4661
    %v4918 = vmax.f32 %v4008, %v4662
    %v4919 = vmax.f32 %v4013, %v4663
    %v4920 = vmax.f32 %v4016, %v4664
    %v4921 = vmax.f32 %v4021, %v4665
    %v4922 = vmax.f32 %v4024, %v4666
    %v4923 = vmax.f32 %v4029, %v4667
    %v4924 = vmax.f32 %v4032, %v4668
    %v4925 = vmax.f32 %v4037, %v4669
    %v4926 = vmax.f32 %v4040, %v4670
    %v4927 = vmax.f32 %v4045, %v4671
    %v4928 = vmax.f32 %v4048, %v4672
    %v4929 = vmax.f32 %v4053, %v4673
    %v4930 = vmax.f32 %v4056, %v4674
    %v4931 = vmax.f32 %v4061, %v4675
    %v4932 = vmax.f32 %v4064, %v4676
    %v4933 = vmax.f32 %v4069, %v4677
    %v4934 = vmax.f32 %v4072, %v4678
    %v4935 = vmax.f32 %v4077, %v4679
    %v4936 = vmax.f32 %v4080, %v4680
    %v4937 = vmax.f32 %v4085, %v4681
    %v4938 = vmax.f32 %v4088, %v4682
    %v4939 = vmax.f32 %v4093, %v4683
    %v4940 = vmax.f32 %v4096, %v4684
    %v4941 = vmax.f32 %v4101, %v4685
    %v4942 = vmax.f32 %v4104, %v4686
    %v4943 = vmax.f32 %v4109, %v4687
    %v4944 = vmax.f32 %v4112, %v4688
    %v4945 = vmax.f32 %v4117, %v4689
    %v4946 = vmax.f32 %v4120, %v4690
    %v4947 = vmax.f32 %v4125, %v4691
    %v4948 = vmax.f32 %v4128, %v4692
    %v4949 = vmax.f32 %v4133, %v4693
    %v4950 = vmax.f32 %v4136, %v4694
    %v4951 = vmax.f32 %v4141, %v4695
    %v4952 = vmax.f32 %v4144, %v4696
    %v4953 = vmax.f32 %v4149, %v4697
    %v4954 = vmax.f32 %v4152, %v4698
    %v4955 = vmax.f32 %v4157, %v4699
    %v4956 = vmax.f32 %v4160, %v4700
    %v4957 = vmax.f32 %v4165, %v4701
    %v4958 = vmax.f32 %v4168, %v4702
    %v4959 = vmax.f32 %v4173, %v4703
    %v4960 = vmax.f32 %v4176, %v4704
    %v4961 = vmax.f32 %v4181, %v4705
    %v4962 = vmax.f32 %v4184, %v4706
    %v4963 = vmax.f32 %v4189, %v4707
    %v4964 = vmax.f32 %v4192, %v4708
    %v4965 = vmax.f32 %v4197, %v4709
    %v4966 = vmax.f32 %v4200, %v4710
    %v4967 = vmax.f32 %v4205, %v4711
    %v4968 = vmax.f32 %v4208, %v4712
    %v4969 = vmax.f32 %v4213, %v4713
    %v4970 = vmax.f32 %v4216, %v4714
    %v4971 = vmax.f32 %v4221, %v4715
    %v4972 = vmax.f32 %v4224, %v4716
    %v4973 = vmax.f32 %v4229, %v4717
    %v4974 = vmax.f32 %v4232, %v4718
    %v4975 = vmax.f32 %v4237, %v4719
    %v4976 = vmax.f32 %v4240, %v4720
    %v4977 = vmax.f32 %v4245, %v4721
    %v4978 = vmax.f32 %v4248, %v4722
    %v4979 = vmax.f32 %v4253, %v4723
    %v4980 = vmax.f32 %v4256, %v4724
    %v4981 = vmax.f32 %v4261, %v4725
    %v4982 = vmax.f32 %v4264, %v4726
    %v4983 = vmax.f32 %v4269, %v4727
    %v4984 = vmax.f32 %v4272, %v4728
    %v4985 = vmax.f32 %v4277, %v4729
    %v4986 = vmax.f32 %v4280, %v4730
    %v4987 = vmax.f32 %v4285, %v4731
    %v4988 = vmax.f32 %v4288, %v4732
    %v4989 = vmax.f32 %v4293, %v4733
    %v4990 = vmax.f32 %v4296, %v4734
    %v4991 = vmax.f32 %v4301, %v4735
    %v4992 = vmax.f32 %v4304, %v4736
    %v4993 = vmax.f32 %v4309, %v4737
    %v4994 = vmax.f32 %v4312, %v4738
    %v4995 = vmax.f32 %v4317, %v4739
    %v4996 = vmax.f32 %v4320, %v4740
    %v4997 = vmax.f32 %v4325, %v4741
    %v4998 = vmax.f32 %v4328, %v4742
    %v4999 = vmax.f32 %v4333, %v4743
    %v5000 = vmax.f32 %v4336, %v4744
    %v5001 = vmax.f32 %v4341, %v4745
    %v5002 = vmax.f32 %v4344, %v4746
    %v5003 = vmax.f32 %v4349, %v4747
    %v5004 = vmax.f32 %v4352, %v4748
    %v5005 = vmax.f32 %v4357, %v4749
    %v5006 = vmax.f32 %v4360, %v4750
    %v5007 = vmax.f32 %v4365, %v4751
    %v5008 = vmax.f32 %v4368, %v4752
    %v5009 = vmax.f32 %v4373, %v4753
    %v5010 = vmax.f32 %v4376, %v4754
    %v5011 = vmax.f32 %v4381, %v4755
    %v5012 = vmax.f32 %v4384, %v4756
    %v5013 = vmax.f32 %v4389, %v4757
    %v5014 = vmax.f32 %v4392, %v4758
    %v5015 = vmax.f32 %v4397, %v4759
    %v5016 = vmax.f32 %v4400, %v4760
    %v5017 = vmax.f32 %v4405, %v4761
    %v5018 = vmax.f32 %v4408, %v4762
    %v5019 = vmax.f32 %v4413, %v4763
    %v5020 = vmax.f32 %v4416, %v4764
    %v5021 = vmax.f32 %v4421, %v4765
    %v5022 = vmax.f32 %v4424, %v4766
    %v5023 = vmax.f32 %v4429, %v4767
    %v5024 = vmax.f32 %v4432, %v4768
    %v5025 = vmax.f32 %v4437, %v4769
    %v5026 = vmax.f32 %v4440, %v4770
    %v5027 = vmax.f32 %v4445, %v4771
    %v5028 = vmax.f32 %v4448, %v4772
    %v5029 = vmax.f32 %v4453, %v4773
    %v5030 = vmax.f32 %v4456, %v4774
    %v5031 = vmax.f32 %v4461, %v4775
    %v5032 = vmax.f32 %v4464, %v4776
    %v5033 = vmax.f32 %v4469, %v4777
    %v5034 = vmax.f32 %v4472, %v4778
    %v5035 = vmax.f32 %v4477, %v4779
    %v5036 = vmax.f32 %v4480, %v4780
    %v5037 = vmax.f32 %v4485, %v4781
    %v5038 = vmax.f32 %v4488, %v4782
    %v5039 = vmax.f32 %v4493, %v4783
    %v5040 = vmax.f32 %v4496, %v4784
    %v5041 = vmax.f32 %v4501, %v4785
    %v5042 = vmax.f32 %v4504, %v4786
    %v5043 = vmax.f32 %v4509, %v4787
    %v5044 = vmax.f32 %v4512, %v4788
    %v5045 = vmax.f32 %v4517, %v4789
    %v5046 = vmax.f32 %v4520, %v4790
    %v5047 = vmax.f32 %v4525, %v4791
    %v5048 = vmax.f32 %v4528, %v4792
    %v5049 = vmax.f32 %v4533, %v4793
    %v5050 = vmax.f32 %v4536, %v4794
    %v5051 = vrot.slane %v4795, 4
    %v5052 = vmax.f32 %v4795, %v5051
    %v5053 = vrot.slane %v5052, 2
    %v5054 = vmax.f32 %v5052, %v5053
    %v5055 = vrot.slane %v5054, 1
    %v5056 = vmax.f32 %v5054, %v5055
    %v5057 = vrot.slane %v4796, 4
    %v5058 = vmax.f32 %v4796, %v5057
    %v5059 = vrot.slane %v5058, 2
    %v5060 = vmax.f32 %v5058, %v5059
    %v5061 = vrot.slane %v5060, 1
    %v5062 = vmax.f32 %v5060, %v5061
    %v5063 = vrot.slane %v4797, 4
    %v5064 = vmax.f32 %v4797, %v5063
    %v5065 = vrot.slane %v5064, 2
    %v5066 = vmax.f32 %v5064, %v5065
    %v5067 = vrot.slane %v5066, 1
    %v5068 = vmax.f32 %v5066, %v5067
    %v5069 = vrot.slane %v4798, 4
    %v5070 = vmax.f32 %v4798, %v5069
    %v5071 = vrot.slane %v5070, 2
    %v5072 = vmax.f32 %v5070, %v5071
    %v5073 = vrot.slane %v5072, 1
    %v5074 = vmax.f32 %v5072, %v5073
    %v5075 = vrot.slane %v4799, 4
    %v5076 = vmax.f32 %v4799, %v5075
    %v5077 = vrot.slane %v5076, 2
    %v5078 = vmax.f32 %v5076, %v5077
    %v5079 = vrot.slane %v5078, 1
    %v5080 = vmax.f32 %v5078, %v5079
    %v5081 = vrot.slane %v4800, 4
    %v5082 = vmax.f32 %v4800, %v5081
    %v5083 = vrot.slane %v5082, 2
    %v5084 = vmax.f32 %v5082, %v5083
    %v5085 = vrot.slane %v5084, 1
    %v5086 = vmax.f32 %v5084, %v5085
    %v5087 = vrot.slane %v4801, 4
    %v5088 = vmax.f32 %v4801, %v5087
    %v5089 = vrot.slane %v5088, 2
    %v5090 = vmax.f32 %v5088, %v5089
    %v5091 = vrot.slane %v5090, 1
    %v5092 = vmax.f32 %v5090, %v5091
    %v5093 = vrot.slane %v4802, 4
    %v5094 = vmax.f32 %v4802, %v5093
    %v5095 = vrot.slane %v5094, 2
    %v5096 = vmax.f32 %v5094, %v5095
    %v5097 = vrot.slane %v5096, 1
    %v5098 = vmax.f32 %v5096, %v5097
    %v5099 = vrot.slane %v4803, 4
    %v5100 = vmax.f32 %v4803, %v5099
    %v5101 = vrot.slane %v5100, 2
    %v5102 = vmax.f32 %v5100, %v5101
    %v5103 = vrot.slane %v5102, 1
    %v5104 = vmax.f32 %v5102, %v5103
    %v5105 = vrot.slane %v4804, 4
    %v5106 = vmax.f32 %v4804, %v5105
    %v5107 = vrot.slane %v5106, 2
    %v5108 = vmax.f32 %v5106, %v5107
    %v5109 = vrot.slane %v5108, 1
    %v5110 = vmax.f32 %v5108, %v5109
    %v5111 = vrot.slane %v4805, 4
    %v5112 = vmax.f32 %v4805, %v5111
    %v5113 = vrot.slane %v5112, 2
    %v5114 = vmax.f32 %v5112, %v5113
    %v5115 = vrot.slane %v5114, 1
    %v5116 = vmax.f32 %v5114, %v5115
    %v5117 = vrot.slane %v4806, 4
    %v5118 = vmax.f32 %v4806, %v5117
    %v5119 = vrot.slane %v5118, 2
    %v5120 = vmax.f32 %v5118, %v5119
    %v5121 = vrot.slane %v5120, 1
    %v5122 = vmax.f32 %v5120, %v5121
    %v5123 = vrot.slane %v4807, 4
    %v5124 = vmax.f32 %v4807, %v5123
    %v5125 = vrot.slane %v5124, 2
    %v5126 = vmax.f32 %v5124, %v5125
    %v5127 = vrot.slane %v5126, 1
    %v5128 = vmax.f32 %v5126, %v5127
    %v5129 = vrot.slane %v4808, 4
    %v5130 = vmax.f32 %v4808, %v5129
    %v5131 = vrot.slane %v5130, 2
    %v5132 = vmax.f32 %v5130, %v5131
    %v5133 = vrot.slane %v5132, 1
    %v5134 = vmax.f32 %v5132, %v5133
    %v5135 = vrot.slane %v4809, 4
    %v5136 = vmax.f32 %v4809, %v5135
    %v5137 = vrot.slane %v5136, 2
    %v5138 = vmax.f32 %v5136, %v5137
    %v5139 = vrot.slane %v5138, 1
    %v5140 = vmax.f32 %v5138, %v5139
    %v5141 = vrot.slane %v4810, 4
    %v5142 = vmax.f32 %v4810, %v5141
    %v5143 = vrot.slane %v5142, 2
    %v5144 = vmax.f32 %v5142, %v5143
    %v5145 = vrot.slane %v5144, 1
    %v5146 = vmax.f32 %v5144, %v5145
    %v5147 = vrot.slane %v4811, 4
    %v5148 = vmax.f32 %v4811, %v5147
    %v5149 = vrot.slane %v5148, 2
    %v5150 = vmax.f32 %v5148, %v5149
    %v5151 = vrot.slane %v5150, 1
    %v5152 = vmax.f32 %v5150, %v5151
    %v5153 = vrot.slane %v4812, 4
    %v5154 = vmax.f32 %v4812, %v5153
    %v5155 = vrot.slane %v5154, 2
    %v5156 = vmax.f32 %v5154, %v5155
    %v5157 = vrot.slane %v5156, 1
    %v5158 = vmax.f32 %v5156, %v5157
    %v5159 = vrot.slane %v4813, 4
    %v5160 = vmax.f32 %v4813, %v5159
    %v5161 = vrot.slane %v5160, 2
    %v5162 = vmax.f32 %v5160, %v5161
    %v5163 = vrot.slane %v5162, 1
    %v5164 = vmax.f32 %v5162, %v5163
    %v5165 = vrot.slane %v4814, 4
    %v5166 = vmax.f32 %v4814, %v5165
    %v5167 = vrot.slane %v5166, 2
    %v5168 = vmax.f32 %v5166, %v5167
    %v5169 = vrot.slane %v5168, 1
    %v5170 = vmax.f32 %v5168, %v5169
    %v5171 = vrot.slane %v4815, 4
    %v5172 = vmax.f32 %v4815, %v5171
    %v5173 = vrot.slane %v5172, 2
    %v5174 = vmax.f32 %v5172, %v5173
    %v5175 = vrot.slane %v5174, 1
    %v5176 = vmax.f32 %v5174, %v5175
    %v5177 = vrot.slane %v4816, 4
    %v5178 = vmax.f32 %v4816, %v5177
    %v5179 = vrot.slane %v5178, 2
    %v5180 = vmax.f32 %v5178, %v5179
    %v5181 = vrot.slane %v5180, 1
    %v5182 = vmax.f32 %v5180, %v5181
    %v5183 = vrot.slane %v4817, 4
    %v5184 = vmax.f32 %v4817, %v5183
    %v5185 = vrot.slane %v5184, 2
    %v5186 = vmax.f32 %v5184, %v5185
    %v5187 = vrot.slane %v5186, 1
    %v5188 = vmax.f32 %v5186, %v5187
    %v5189 = vrot.slane %v4818, 4
    %v5190 = vmax.f32 %v4818, %v5189
    %v5191 = vrot.slane %v5190, 2
    %v5192 = vmax.f32 %v5190, %v5191
    %v5193 = vrot.slane %v5192, 1
    %v5194 = vmax.f32 %v5192, %v5193
    %v5195 = vrot.slane %v4819, 4
    %v5196 = vmax.f32 %v4819, %v5195
    %v5197 = vrot.slane %v5196, 2
    %v5198 = vmax.f32 %v5196, %v5197
    %v5199 = vrot.slane %v5198, 1
    %v5200 = vmax.f32 %v5198, %v5199
    %v5201 = vrot.slane %v4820, 4
    %v5202 = vmax.f32 %v4820, %v5201
    %v5203 = vrot.slane %v5202, 2
    %v5204 = vmax.f32 %v5202, %v5203
    %v5205 = vrot.slane %v5204, 1
    %v5206 = vmax.f32 %v5204, %v5205
    %v5207 = vrot.slane %v4821, 4
    %v5208 = vmax.f32 %v4821, %v5207
    %v5209 = vrot.slane %v5208, 2
    %v5210 = vmax.f32 %v5208, %v5209
    %v5211 = vrot.slane %v5210, 1
    %v5212 = vmax.f32 %v5210, %v5211
    %v5213 = vrot.slane %v4822, 4
    %v5214 = vmax.f32 %v4822, %v5213
    %v5215 = vrot.slane %v5214, 2
    %v5216 = vmax.f32 %v5214, %v5215
    %v5217 = vrot.slane %v5216, 1
    %v5218 = vmax.f32 %v5216, %v5217
    %v5219 = vrot.slane %v4823, 4
    %v5220 = vmax.f32 %v4823, %v5219
    %v5221 = vrot.slane %v5220, 2
    %v5222 = vmax.f32 %v5220, %v5221
    %v5223 = vrot.slane %v5222, 1
    %v5224 = vmax.f32 %v5222, %v5223
    %v5225 = vrot.slane %v4824, 4
    %v5226 = vmax.f32 %v4824, %v5225
    %v5227 = vrot.slane %v5226, 2
    %v5228 = vmax.f32 %v5226, %v5227
    %v5229 = vrot.slane %v5228, 1
    %v5230 = vmax.f32 %v5228, %v5229
    %v5231 = vrot.slane %v4825, 4
    %v5232 = vmax.f32 %v4825, %v5231
    %v5233 = vrot.slane %v5232, 2
    %v5234 = vmax.f32 %v5232, %v5233
    %v5235 = vrot.slane %v5234, 1
    %v5236 = vmax.f32 %v5234, %v5235
    %v5237 = vrot.slane %v4826, 4
    %v5238 = vmax.f32 %v4826, %v5237
    %v5239 = vrot.slane %v5238, 2
    %v5240 = vmax.f32 %v5238, %v5239
    %v5241 = vrot.slane %v5240, 1
    %v5242 = vmax.f32 %v5240, %v5241
    %v5243 = vrot.slane %v4827, 4
    %v5244 = vmax.f32 %v4827, %v5243
    %v5245 = vrot.slane %v5244, 2
    %v5246 = vmax.f32 %v5244, %v5245
    %v5247 = vrot.slane %v5246, 1
    %v5248 = vmax.f32 %v5246, %v5247
    %v5249 = vrot.slane %v4828, 4
    %v5250 = vmax.f32 %v4828, %v5249
    %v5251 = vrot.slane %v5250, 2
    %v5252 = vmax.f32 %v5250, %v5251
    %v5253 = vrot.slane %v5252, 1
    %v5254 = vmax.f32 %v5252, %v5253
    %v5255 = vrot.slane %v4829, 4
    %v5256 = vmax.f32 %v4829, %v5255
    %v5257 = vrot.slane %v5256, 2
    %v5258 = vmax.f32 %v5256, %v5257
    %v5259 = vrot.slane %v5258, 1
    %v5260 = vmax.f32 %v5258, %v5259
    %v5261 = vrot.slane %v4830, 4
    %v5262 = vmax.f32 %v4830, %v5261
    %v5263 = vrot.slane %v5262, 2
    %v5264 = vmax.f32 %v5262, %v5263
    %v5265 = vrot.slane %v5264, 1
    %v5266 = vmax.f32 %v5264, %v5265
    %v5267 = vrot.slane %v4831, 4
    %v5268 = vmax.f32 %v4831, %v5267
    %v5269 = vrot.slane %v5268, 2
    %v5270 = vmax.f32 %v5268, %v5269
    %v5271 = vrot.slane %v5270, 1
    %v5272 = vmax.f32 %v5270, %v5271
    %v5273 = vrot.slane %v4832, 4
    %v5274 = vmax.f32 %v4832, %v5273
    %v5275 = vrot.slane %v5274, 2
    %v5276 = vmax.f32 %v5274, %v5275
    %v5277 = vrot.slane %v5276, 1
    %v5278 = vmax.f32 %v5276, %v5277
    %v5279 = vrot.slane %v4833, 4
    %v5280 = vmax.f32 %v4833, %v5279
    %v5281 = vrot.slane %v5280, 2
    %v5282 = vmax.f32 %v5280, %v5281
    %v5283 = vrot.slane %v5282, 1
    %v5284 = vmax.f32 %v5282, %v5283
    %v5285 = vrot.slane %v4834, 4
    %v5286 = vmax.f32 %v4834, %v5285
    %v5287 = vrot.slane %v5286, 2
    %v5288 = vmax.f32 %v5286, %v5287
    %v5289 = vrot.slane %v5288, 1
    %v5290 = vmax.f32 %v5288, %v5289
    %v5291 = vrot.slane %v4835, 4
    %v5292 = vmax.f32 %v4835, %v5291
    %v5293 = vrot.slane %v5292, 2
    %v5294 = vmax.f32 %v5292, %v5293
    %v5295 = vrot.slane %v5294, 1
    %v5296 = vmax.f32 %v5294, %v5295
    %v5297 = vrot.slane %v4836, 4
    %v5298 = vmax.f32 %v4836, %v5297
    %v5299 = vrot.slane %v5298, 2
    %v5300 = vmax.f32 %v5298, %v5299
    %v5301 = vrot.slane %v5300, 1
    %v5302 = vmax.f32 %v5300, %v5301
    %v5303 = vrot.slane %v4837, 4
    %v5304 = vmax.f32 %v4837, %v5303
    %v5305 = vrot.slane %v5304, 2
    %v5306 = vmax.f32 %v5304, %v5305
    %v5307 = vrot.slane %v5306, 1
    %v5308 = vmax.f32 %v5306, %v5307
    %v5309 = vrot.slane %v4838, 4
    %v5310 = vmax.f32 %v4838, %v5309
    %v5311 = vrot.slane %v5310, 2
    %v5312 = vmax.f32 %v5310, %v5311
    %v5313 = vrot.slane %v5312, 1
    %v5314 = vmax.f32 %v5312, %v5313
    %v5315 = vrot.slane %v4839, 4
    %v5316 = vmax.f32 %v4839, %v5315
    %v5317 = vrot.slane %v5316, 2
    %v5318 = vmax.f32 %v5316, %v5317
    %v5319 = vrot.slane %v5318, 1
    %v5320 = vmax.f32 %v5318, %v5319
    %v5321 = vrot.slane %v4840, 4
    %v5322 = vmax.f32 %v4840, %v5321
    %v5323 = vrot.slane %v5322, 2
    %v5324 = vmax.f32 %v5322, %v5323
    %v5325 = vrot.slane %v5324, 1
    %v5326 = vmax.f32 %v5324, %v5325
    %v5327 = vrot.slane %v4841, 4
    %v5328 = vmax.f32 %v4841, %v5327
    %v5329 = vrot.slane %v5328, 2
    %v5330 = vmax.f32 %v5328, %v5329
    %v5331 = vrot.slane %v5330, 1
    %v5332 = vmax.f32 %v5330, %v5331
    %v5333 = vrot.slane %v4842, 4
    %v5334 = vmax.f32 %v4842, %v5333
    %v5335 = vrot.slane %v5334, 2
    %v5336 = vmax.f32 %v5334, %v5335
    %v5337 = vrot.slane %v5336, 1
    %v5338 = vmax.f32 %v5336, %v5337
    %v5339 = vrot.slane %v4843, 4
    %v5340 = vmax.f32 %v4843, %v5339
    %v5341 = vrot.slane %v5340, 2
    %v5342 = vmax.f32 %v5340, %v5341
    %v5343 = vrot.slane %v5342, 1
    %v5344 = vmax.f32 %v5342, %v5343
    %v5345 = vrot.slane %v4844, 4
    %v5346 = vmax.f32 %v4844, %v5345
    %v5347 = vrot.slane %v5346, 2
    %v5348 = vmax.f32 %v5346, %v5347
    %v5349 = vrot.slane %v5348, 1
    %v5350 = vmax.f32 %v5348, %v5349
    %v5351 = vrot.slane %v4845, 4
    %v5352 = vmax.f32 %v4845, %v5351
    %v5353 = vrot.slane %v5352, 2
    %v5354 = vmax.f32 %v5352, %v5353
    %v5355 = vrot.slane %v5354, 1
    %v5356 = vmax.f32 %v5354, %v5355
    %v5357 = vrot.slane %v4846, 4
    %v5358 = vmax.f32 %v4846, %v5357
    %v5359 = vrot.slane %v5358, 2
    %v5360 = vmax.f32 %v5358, %v5359
    %v5361 = vrot.slane %v5360, 1
    %v5362 = vmax.f32 %v5360, %v5361
    %v5363 = vrot.slane %v4847, 4
    %v5364 = vmax.f32 %v4847, %v5363
    %v5365 = vrot.slane %v5364, 2
    %v5366 = vmax.f32 %v5364, %v5365
    %v5367 = vrot.slane %v5366, 1
    %v5368 = vmax.f32 %v5366, %v5367
    %v5369 = vrot.slane %v4848, 4
    %v5370 = vmax.f32 %v4848, %v5369
    %v5371 = vrot.slane %v5370, 2
    %v5372 = vmax.f32 %v5370, %v5371
    %v5373 = vrot.slane %v5372, 1
    %v5374 = vmax.f32 %v5372, %v5373
    %v5375 = vrot.slane %v4849, 4
    %v5376 = vmax.f32 %v4849, %v5375
    %v5377 = vrot.slane %v5376, 2
    %v5378 = vmax.f32 %v5376, %v5377
    %v5379 = vrot.slane %v5378, 1
    %v5380 = vmax.f32 %v5378, %v5379
    %v5381 = vrot.slane %v4850, 4
    %v5382 = vmax.f32 %v4850, %v5381
    %v5383 = vrot.slane %v5382, 2
    %v5384 = vmax.f32 %v5382, %v5383
    %v5385 = vrot.slane %v5384, 1
    %v5386 = vmax.f32 %v5384, %v5385
    %v5387 = vrot.slane %v4851, 4
    %v5388 = vmax.f32 %v4851, %v5387
    %v5389 = vrot.slane %v5388, 2
    %v5390 = vmax.f32 %v5388, %v5389
    %v5391 = vrot.slane %v5390, 1
    %v5392 = vmax.f32 %v5390, %v5391
    %v5393 = vrot.slane %v4852, 4
    %v5394 = vmax.f32 %v4852, %v5393
    %v5395 = vrot.slane %v5394, 2
    %v5396 = vmax.f32 %v5394, %v5395
    %v5397 = vrot.slane %v5396, 1
    %v5398 = vmax.f32 %v5396, %v5397
    %v5399 = vrot.slane %v4853, 4
    %v5400 = vmax.f32 %v4853, %v5399
    %v5401 = vrot.slane %v5400, 2
    %v5402 = vmax.f32 %v5400, %v5401
    %v5403 = vrot.slane %v5402, 1
    %v5404 = vmax.f32 %v5402, %v5403
    %v5405 = vrot.slane %v4854, 4
    %v5406 = vmax.f32 %v4854, %v5405
    %v5407 = vrot.slane %v5406, 2
    %v5408 = vmax.f32 %v5406, %v5407
    %v5409 = vrot.slane %v5408, 1
    %v5410 = vmax.f32 %v5408, %v5409
    %v5411 = vrot.slane %v4855, 4
    %v5412 = vmax.f32 %v4855, %v5411
    %v5413 = vrot.slane %v5412, 2
    %v5414 = vmax.f32 %v5412, %v5413
    %v5415 = vrot.slane %v5414, 1
    %v5416 = vmax.f32 %v5414, %v5415
    %v5417 = vrot.slane %v4856, 4
    %v5418 = vmax.f32 %v4856, %v5417
    %v5419 = vrot.slane %v5418, 2
    %v5420 = vmax.f32 %v5418, %v5419
    %v5421 = vrot.slane %v5420, 1
    %v5422 = vmax.f32 %v5420, %v5421
    %v5423 = vrot.slane %v4857, 4
    %v5424 = vmax.f32 %v4857, %v5423
    %v5425 = vrot.slane %v5424, 2
    %v5426 = vmax.f32 %v5424, %v5425
    %v5427 = vrot.slane %v5426, 1
    %v5428 = vmax.f32 %v5426, %v5427
    %v5429 = vrot.slane %v4858, 4
    %v5430 = vmax.f32 %v4858, %v5429
    %v5431 = vrot.slane %v5430, 2
    %v5432 = vmax.f32 %v5430, %v5431
    %v5433 = vrot.slane %v5432, 1
    %v5434 = vmax.f32 %v5432, %v5433
    %v5435 = vrot.slane %v4859, 4
    %v5436 = vmax.f32 %v4859, %v5435
    %v5437 = vrot.slane %v5436, 2
    %v5438 = vmax.f32 %v5436, %v5437
    %v5439 = vrot.slane %v5438, 1
    %v5440 = vmax.f32 %v5438, %v5439
    %v5441 = vrot.slane %v4860, 4
    %v5442 = vmax.f32 %v4860, %v5441
    %v5443 = vrot.slane %v5442, 2
    %v5444 = vmax.f32 %v5442, %v5443
    %v5445 = vrot.slane %v5444, 1
    %v5446 = vmax.f32 %v5444, %v5445
    %v5447 = vrot.slane %v4861, 4
    %v5448 = vmax.f32 %v4861, %v5447
    %v5449 = vrot.slane %v5448, 2
    %v5450 = vmax.f32 %v5448, %v5449
    %v5451 = vrot.slane %v5450, 1
    %v5452 = vmax.f32 %v5450, %v5451
    %v5453 = vrot.slane %v4862, 4
    %v5454 = vmax.f32 %v4862, %v5453
    %v5455 = vrot.slane %v5454, 2
    %v5456 = vmax.f32 %v5454, %v5455
    %v5457 = vrot.slane %v5456, 1
    %v5458 = vmax.f32 %v5456, %v5457
    %v5459 = vrot.slane %v4863, 4
    %v5460 = vmax.f32 %v4863, %v5459
    %v5461 = vrot.slane %v5460, 2
    %v5462 = vmax.f32 %v5460, %v5461
    %v5463 = vrot.slane %v5462, 1
    %v5464 = vmax.f32 %v5462, %v5463
    %v5465 = vrot.slane %v4864, 4
    %v5466 = vmax.f32 %v4864, %v5465
    %v5467 = vrot.slane %v5466, 2
    %v5468 = vmax.f32 %v5466, %v5467
    %v5469 = vrot.slane %v5468, 1
    %v5470 = vmax.f32 %v5468, %v5469
    %v5471 = vrot.slane %v4865, 4
    %v5472 = vmax.f32 %v4865, %v5471
    %v5473 = vrot.slane %v5472, 2
    %v5474 = vmax.f32 %v5472, %v5473
    %v5475 = vrot.slane %v5474, 1
    %v5476 = vmax.f32 %v5474, %v5475
    %v5477 = vrot.slane %v4866, 4
    %v5478 = vmax.f32 %v4866, %v5477
    %v5479 = vrot.slane %v5478, 2
    %v5480 = vmax.f32 %v5478, %v5479
    %v5481 = vrot.slane %v5480, 1
    %v5482 = vmax.f32 %v5480, %v5481
    %v5483 = vrot.slane %v4867, 4
    %v5484 = vmax.f32 %v4867, %v5483
    %v5485 = vrot.slane %v5484, 2
    %v5486 = vmax.f32 %v5484, %v5485
    %v5487 = vrot.slane %v5486, 1
    %v5488 = vmax.f32 %v5486, %v5487
    %v5489 = vrot.slane %v4868, 4
    %v5490 = vmax.f32 %v4868, %v5489
    %v5491 = vrot.slane %v5490, 2
    %v5492 = vmax.f32 %v5490, %v5491
    %v5493 = vrot.slane %v5492, 1
    %v5494 = vmax.f32 %v5492, %v5493
    %v5495 = vrot.slane %v4869, 4
    %v5496 = vmax.f32 %v4869, %v5495
    %v5497 = vrot.slane %v5496, 2
    %v5498 = vmax.f32 %v5496, %v5497
    %v5499 = vrot.slane %v5498, 1
    %v5500 = vmax.f32 %v5498, %v5499
    %v5501 = vrot.slane %v4870, 4
    %v5502 = vmax.f32 %v4870, %v5501
    %v5503 = vrot.slane %v5502, 2
    %v5504 = vmax.f32 %v5502, %v5503
    %v5505 = vrot.slane %v5504, 1
    %v5506 = vmax.f32 %v5504, %v5505
    %v5507 = vrot.slane %v4871, 4
    %v5508 = vmax.f32 %v4871, %v5507
    %v5509 = vrot.slane %v5508, 2
    %v5510 = vmax.f32 %v5508, %v5509
    %v5511 = vrot.slane %v5510, 1
    %v5512 = vmax.f32 %v5510, %v5511
    %v5513 = vrot.slane %v4872, 4
    %v5514 = vmax.f32 %v4872, %v5513
    %v5515 = vrot.slane %v5514, 2
    %v5516 = vmax.f32 %v5514, %v5515
    %v5517 = vrot.slane %v5516, 1
    %v5518 = vmax.f32 %v5516, %v5517
    %v5519 = vrot.slane %v4873, 4
    %v5520 = vmax.f32 %v4873, %v5519
    %v5521 = vrot.slane %v5520, 2
    %v5522 = vmax.f32 %v5520, %v5521
    %v5523 = vrot.slane %v5522, 1
    %v5524 = vmax.f32 %v5522, %v5523
    %v5525 = vrot.slane %v4874, 4
    %v5526 = vmax.f32 %v4874, %v5525
    %v5527 = vrot.slane %v5526, 2
    %v5528 = vmax.f32 %v5526, %v5527
    %v5529 = vrot.slane %v5528, 1
    %v5530 = vmax.f32 %v5528, %v5529
    %v5531 = vrot.slane %v4875, 4
    %v5532 = vmax.f32 %v4875, %v5531
    %v5533 = vrot.slane %v5532, 2
    %v5534 = vmax.f32 %v5532, %v5533
    %v5535 = vrot.slane %v5534, 1
    %v5536 = vmax.f32 %v5534, %v5535
    %v5537 = vrot.slane %v4876, 4
    %v5538 = vmax.f32 %v4876, %v5537
    %v5539 = vrot.slane %v5538, 2
    %v5540 = vmax.f32 %v5538, %v5539
    %v5541 = vrot.slane %v5540, 1
    %v5542 = vmax.f32 %v5540, %v5541
    %v5543 = vrot.slane %v4877, 4
    %v5544 = vmax.f32 %v4877, %v5543
    %v5545 = vrot.slane %v5544, 2
    %v5546 = vmax.f32 %v5544, %v5545
    %v5547 = vrot.slane %v5546, 1
    %v5548 = vmax.f32 %v5546, %v5547
    %v5549 = vrot.slane %v4878, 4
    %v5550 = vmax.f32 %v4878, %v5549
    %v5551 = vrot.slane %v5550, 2
    %v5552 = vmax.f32 %v5550, %v5551
    %v5553 = vrot.slane %v5552, 1
    %v5554 = vmax.f32 %v5552, %v5553
    %v5555 = vrot.slane %v4879, 4
    %v5556 = vmax.f32 %v4879, %v5555
    %v5557 = vrot.slane %v5556, 2
    %v5558 = vmax.f32 %v5556, %v5557
    %v5559 = vrot.slane %v5558, 1
    %v5560 = vmax.f32 %v5558, %v5559
    %v5561 = vrot.slane %v4880, 4
    %v5562 = vmax.f32 %v4880, %v5561
    %v5563 = vrot.slane %v5562, 2
    %v5564 = vmax.f32 %v5562, %v5563
    %v5565 = vrot.slane %v5564, 1
    %v5566 = vmax.f32 %v5564, %v5565
    %v5567 = vrot.slane %v4881, 4
    %v5568 = vmax.f32 %v4881, %v5567
    %v5569 = vrot.slane %v5568, 2
    %v5570 = vmax.f32 %v5568, %v5569
    %v5571 = vrot.slane %v5570, 1
    %v5572 = vmax.f32 %v5570, %v5571
    %v5573 = vrot.slane %v4882, 4
    %v5574 = vmax.f32 %v4882, %v5573
    %v5575 = vrot.slane %v5574, 2
    %v5576 = vmax.f32 %v5574, %v5575
    %v5577 = vrot.slane %v5576, 1
    %v5578 = vmax.f32 %v5576, %v5577
    %v5579 = vrot.slane %v4883, 4
    %v5580 = vmax.f32 %v4883, %v5579
    %v5581 = vrot.slane %v5580, 2
    %v5582 = vmax.f32 %v5580, %v5581
    %v5583 = vrot.slane %v5582, 1
    %v5584 = vmax.f32 %v5582, %v5583
    %v5585 = vrot.slane %v4884, 4
    %v5586 = vmax.f32 %v4884, %v5585
    %v5587 = vrot.slane %v5586, 2
    %v5588 = vmax.f32 %v5586, %v5587
    %v5589 = vrot.slane %v5588, 1
    %v5590 = vmax.f32 %v5588, %v5589
    %v5591 = vrot.slane %v4885, 4
    %v5592 = vmax.f32 %v4885, %v5591
    %v5593 = vrot.slane %v5592, 2
    %v5594 = vmax.f32 %v5592, %v5593
    %v5595 = vrot.slane %v5594, 1
    %v5596 = vmax.f32 %v5594, %v5595
    %v5597 = vrot.slane %v4886, 4
    %v5598 = vmax.f32 %v4886, %v5597
    %v5599 = vrot.slane %v5598, 2
    %v5600 = vmax.f32 %v5598, %v5599
    %v5601 = vrot.slane %v5600, 1
    %v5602 = vmax.f32 %v5600, %v5601
    %v5603 = vrot.slane %v4887, 4
    %v5604 = vmax.f32 %v4887, %v5603
    %v5605 = vrot.slane %v5604, 2
    %v5606 = vmax.f32 %v5604, %v5605
    %v5607 = vrot.slane %v5606, 1
    %v5608 = vmax.f32 %v5606, %v5607
    %v5609 = vrot.slane %v4888, 4
    %v5610 = vmax.f32 %v4888, %v5609
    %v5611 = vrot.slane %v5610, 2
    %v5612 = vmax.f32 %v5610, %v5611
    %v5613 = vrot.slane %v5612, 1
    %v5614 = vmax.f32 %v5612, %v5613
    %v5615 = vrot.slane %v4889, 4
    %v5616 = vmax.f32 %v4889, %v5615
    %v5617 = vrot.slane %v5616, 2
    %v5618 = vmax.f32 %v5616, %v5617
    %v5619 = vrot.slane %v5618, 1
    %v5620 = vmax.f32 %v5618, %v5619
    %v5621 = vrot.slane %v4890, 4
    %v5622 = vmax.f32 %v4890, %v5621
    %v5623 = vrot.slane %v5622, 2
    %v5624 = vmax.f32 %v5622, %v5623
    %v5625 = vrot.slane %v5624, 1
    %v5626 = vmax.f32 %v5624, %v5625
    %v5627 = vrot.slane %v4891, 4
    %v5628 = vmax.f32 %v4891, %v5627
    %v5629 = vrot.slane %v5628, 2
    %v5630 = vmax.f32 %v5628, %v5629
    %v5631 = vrot.slane %v5630, 1
    %v5632 = vmax.f32 %v5630, %v5631
    %v5633 = vrot.slane %v4892, 4
    %v5634 = vmax.f32 %v4892, %v5633
    %v5635 = vrot.slane %v5634, 2
    %v5636 = vmax.f32 %v5634, %v5635
    %v5637 = vrot.slane %v5636, 1
    %v5638 = vmax.f32 %v5636, %v5637
    %v5639 = vrot.slane %v4893, 4
    %v5640 = vmax.f32 %v4893, %v5639
    %v5641 = vrot.slane %v5640, 2
    %v5642 = vmax.f32 %v5640, %v5641
    %v5643 = vrot.slane %v5642, 1
    %v5644 = vmax.f32 %v5642, %v5643
    %v5645 = vrot.slane %v4894, 4
    %v5646 = vmax.f32 %v4894, %v5645
    %v5647 = vrot.slane %v5646, 2
    %v5648 = vmax.f32 %v5646, %v5647
    %v5649 = vrot.slane %v5648, 1
    %v5650 = vmax.f32 %v5648, %v5649
    %v5651 = vrot.slane %v4895, 4
    %v5652 = vmax.f32 %v4895, %v5651
    %v5653 = vrot.slane %v5652, 2
    %v5654 = vmax.f32 %v5652, %v5653
    %v5655 = vrot.slane %v5654, 1
    %v5656 = vmax.f32 %v5654, %v5655
    %v5657 = vrot.slane %v4896, 4
    %v5658 = vmax.f32 %v4896, %v5657
    %v5659 = vrot.slane %v5658, 2
    %v5660 = vmax.f32 %v5658, %v5659
    %v5661 = vrot.slane %v5660, 1
    %v5662 = vmax.f32 %v5660, %v5661
    %v5663 = vrot.slane %v4897, 4
    %v5664 = vmax.f32 %v4897, %v5663
    %v5665 = vrot.slane %v5664, 2
    %v5666 = vmax.f32 %v5664, %v5665
    %v5667 = vrot.slane %v5666, 1
    %v5668 = vmax.f32 %v5666, %v5667
    %v5669 = vrot.slane %v4898, 4
    %v5670 = vmax.f32 %v4898, %v5669
    %v5671 = vrot.slane %v5670, 2
    %v5672 = vmax.f32 %v5670, %v5671
    %v5673 = vrot.slane %v5672, 1
    %v5674 = vmax.f32 %v5672, %v5673
    %v5675 = vrot.slane %v4899, 4
    %v5676 = vmax.f32 %v4899, %v5675
    %v5677 = vrot.slane %v5676, 2
    %v5678 = vmax.f32 %v5676, %v5677
    %v5679 = vrot.slane %v5678, 1
    %v5680 = vmax.f32 %v5678, %v5679
    %v5681 = vrot.slane %v4900, 4
    %v5682 = vmax.f32 %v4900, %v5681
    %v5683 = vrot.slane %v5682, 2
    %v5684 = vmax.f32 %v5682, %v5683
    %v5685 = vrot.slane %v5684, 1
    %v5686 = vmax.f32 %v5684, %v5685
    %v5687 = vrot.slane %v4901, 4
    %v5688 = vmax.f32 %v4901, %v5687
    %v5689 = vrot.slane %v5688, 2
    %v5690 = vmax.f32 %v5688, %v5689
    %v5691 = vrot.slane %v5690, 1
    %v5692 = vmax.f32 %v5690, %v5691
    %v5693 = vrot.slane %v4902, 4
    %v5694 = vmax.f32 %v4902, %v5693
    %v5695 = vrot.slane %v5694, 2
    %v5696 = vmax.f32 %v5694, %v5695
    %v5697 = vrot.slane %v5696, 1
    %v5698 = vmax.f32 %v5696, %v5697
    %v5699 = vrot.slane %v4903, 4
    %v5700 = vmax.f32 %v4903, %v5699
    %v5701 = vrot.slane %v5700, 2
    %v5702 = vmax.f32 %v5700, %v5701
    %v5703 = vrot.slane %v5702, 1
    %v5704 = vmax.f32 %v5702, %v5703
    %v5705 = vrot.slane %v4904, 4
    %v5706 = vmax.f32 %v4904, %v5705
    %v5707 = vrot.slane %v5706, 2
    %v5708 = vmax.f32 %v5706, %v5707
    %v5709 = vrot.slane %v5708, 1
    %v5710 = vmax.f32 %v5708, %v5709
    %v5711 = vrot.slane %v4905, 4
    %v5712 = vmax.f32 %v4905, %v5711
    %v5713 = vrot.slane %v5712, 2
    %v5714 = vmax.f32 %v5712, %v5713
    %v5715 = vrot.slane %v5714, 1
    %v5716 = vmax.f32 %v5714, %v5715
    %v5717 = vrot.slane %v4906, 4
    %v5718 = vmax.f32 %v4906, %v5717
    %v5719 = vrot.slane %v5718, 2
    %v5720 = vmax.f32 %v5718, %v5719
    %v5721 = vrot.slane %v5720, 1
    %v5722 = vmax.f32 %v5720, %v5721
    %v5723 = vrot.slane %v4907, 4
    %v5724 = vmax.f32 %v4907, %v5723
    %v5725 = vrot.slane %v5724, 2
    %v5726 = vmax.f32 %v5724, %v5725
    %v5727 = vrot.slane %v5726, 1
    %v5728 = vmax.f32 %v5726, %v5727
    %v5729 = vrot.slane %v4908, 4
    %v5730 = vmax.f32 %v4908, %v5729
    %v5731 = vrot.slane %v5730, 2
    %v5732 = vmax.f32 %v5730, %v5731
    %v5733 = vrot.slane %v5732, 1
    %v5734 = vmax.f32 %v5732, %v5733
    %v5735 = vrot.slane %v4909, 4
    %v5736 = vmax.f32 %v4909, %v5735
    %v5737 = vrot.slane %v5736, 2
    %v5738 = vmax.f32 %v5736, %v5737
    %v5739 = vrot.slane %v5738, 1
    %v5740 = vmax.f32 %v5738, %v5739
    %v5741 = vrot.slane %v4910, 4
    %v5742 = vmax.f32 %v4910, %v5741
    %v5743 = vrot.slane %v5742, 2
    %v5744 = vmax.f32 %v5742, %v5743
    %v5745 = vrot.slane %v5744, 1
    %v5746 = vmax.f32 %v5744, %v5745
    %v5747 = vrot.slane %v4911, 4
    %v5748 = vmax.f32 %v4911, %v5747
    %v5749 = vrot.slane %v5748, 2
    %v5750 = vmax.f32 %v5748, %v5749
    %v5751 = vrot.slane %v5750, 1
    %v5752 = vmax.f32 %v5750, %v5751
    %v5753 = vrot.slane %v4912, 4
    %v5754 = vmax.f32 %v4912, %v5753
    %v5755 = vrot.slane %v5754, 2
    %v5756 = vmax.f32 %v5754, %v5755
    %v5757 = vrot.slane %v5756, 1
    %v5758 = vmax.f32 %v5756, %v5757
    %v5759 = vrot.slane %v4913, 4
    %v5760 = vmax.f32 %v4913, %v5759
    %v5761 = vrot.slane %v5760, 2
    %v5762 = vmax.f32 %v5760, %v5761
    %v5763 = vrot.slane %v5762, 1
    %v5764 = vmax.f32 %v5762, %v5763
    %v5765 = vrot.slane %v4914, 4
    %v5766 = vmax.f32 %v4914, %v5765
    %v5767 = vrot.slane %v5766, 2
    %v5768 = vmax.f32 %v5766, %v5767
    %v5769 = vrot.slane %v5768, 1
    %v5770 = vmax.f32 %v5768, %v5769
    %v5771 = vrot.slane %v4915, 4
    %v5772 = vmax.f32 %v4915, %v5771
    %v5773 = vrot.slane %v5772, 2
    %v5774 = vmax.f32 %v5772, %v5773
    %v5775 = vrot.slane %v5774, 1
    %v5776 = vmax.f32 %v5774, %v5775
    %v5777 = vrot.slane %v4916, 4
    %v5778 = vmax.f32 %v4916, %v5777
    %v5779 = vrot.slane %v5778, 2
    %v5780 = vmax.f32 %v5778, %v5779
    %v5781 = vrot.slane %v5780, 1
    %v5782 = vmax.f32 %v5780, %v5781
    %v5783 = vrot.slane %v4917, 4
    %v5784 = vmax.f32 %v4917, %v5783
    %v5785 = vrot.slane %v5784, 2
    %v5786 = vmax.f32 %v5784, %v5785
    %v5787 = vrot.slane %v5786, 1
    %v5788 = vmax.f32 %v5786, %v5787
    %v5789 = vrot.slane %v4918, 4
    %v5790 = vmax.f32 %v4918, %v5789
    %v5791 = vrot.slane %v5790, 2
    %v5792 = vmax.f32 %v5790, %v5791
    %v5793 = vrot.slane %v5792, 1
    %v5794 = vmax.f32 %v5792, %v5793
    %v5795 = vrot.slane %v4919, 4
    %v5796 = vmax.f32 %v4919, %v5795
    %v5797 = vrot.slane %v5796, 2
    %v5798 = vmax.f32 %v5796, %v5797
    %v5799 = vrot.slane %v5798, 1
    %v5800 = vmax.f32 %v5798, %v5799
    %v5801 = vrot.slane %v4920, 4
    %v5802 = vmax.f32 %v4920, %v5801
    %v5803 = vrot.slane %v5802, 2
    %v5804 = vmax.f32 %v5802, %v5803
    %v5805 = vrot.slane %v5804, 1
    %v5806 = vmax.f32 %v5804, %v5805
    %v5807 = vrot.slane %v4921, 4
    %v5808 = vmax.f32 %v4921, %v5807
    %v5809 = vrot.slane %v5808, 2
    %v5810 = vmax.f32 %v5808, %v5809
    %v5811 = vrot.slane %v5810, 1
    %v5812 = vmax.f32 %v5810, %v5811
    %v5813 = vrot.slane %v4922, 4
    %v5814 = vmax.f32 %v4922, %v5813
    %v5815 = vrot.slane %v5814, 2
    %v5816 = vmax.f32 %v5814, %v5815
    %v5817 = vrot.slane %v5816, 1
    %v5818 = vmax.f32 %v5816, %v5817
    %v5819 = vrot.slane %v4923, 4
    %v5820 = vmax.f32 %v4923, %v5819
    %v5821 = vrot.slane %v5820, 2
    %v5822 = vmax.f32 %v5820, %v5821
    %v5823 = vrot.slane %v5822, 1
    %v5824 = vmax.f32 %v5822, %v5823
    %v5825 = vrot.slane %v4924, 4
    %v5826 = vmax.f32 %v4924, %v5825
    %v5827 = vrot.slane %v5826, 2
    %v5828 = vmax.f32 %v5826, %v5827
    %v5829 = vrot.slane %v5828, 1
    %v5830 = vmax.f32 %v5828, %v5829
    %v5831 = vrot.slane %v4925, 4
    %v5832 = vmax.f32 %v4925, %v5831
    %v5833 = vrot.slane %v5832, 2
    %v5834 = vmax.f32 %v5832, %v5833
    %v5835 = vrot.slane %v5834, 1
    %v5836 = vmax.f32 %v5834, %v5835
    %v5837 = vrot.slane %v4926, 4
    %v5838 = vmax.f32 %v4926, %v5837
    %v5839 = vrot.slane %v5838, 2
    %v5840 = vmax.f32 %v5838, %v5839
    %v5841 = vrot.slane %v5840, 1
    %v5842 = vmax.f32 %v5840, %v5841
    %v5843 = vrot.slane %v4927, 4
    %v5844 = vmax.f32 %v4927, %v5843
    %v5845 = vrot.slane %v5844, 2
    %v5846 = vmax.f32 %v5844, %v5845
    %v5847 = vrot.slane %v5846, 1
    %v5848 = vmax.f32 %v5846, %v5847
    %v5849 = vrot.slane %v4928, 4
    %v5850 = vmax.f32 %v4928, %v5849
    %v5851 = vrot.slane %v5850, 2
    %v5852 = vmax.f32 %v5850, %v5851
    %v5853 = vrot.slane %v5852, 1
    %v5854 = vmax.f32 %v5852, %v5853
    %v5855 = vrot.slane %v4929, 4
    %v5856 = vmax.f32 %v4929, %v5855
    %v5857 = vrot.slane %v5856, 2
    %v5858 = vmax.f32 %v5856, %v5857
    %v5859 = vrot.slane %v5858, 1
    %v5860 = vmax.f32 %v5858, %v5859
    %v5861 = vrot.slane %v4930, 4
    %v5862 = vmax.f32 %v4930, %v5861
    %v5863 = vrot.slane %v5862, 2
    %v5864 = vmax.f32 %v5862, %v5863
    %v5865 = vrot.slane %v5864, 1
    %v5866 = vmax.f32 %v5864, %v5865
    %v5867 = vrot.slane %v4931, 4
    %v5868 = vmax.f32 %v4931, %v5867
    %v5869 = vrot.slane %v5868, 2
    %v5870 = vmax.f32 %v5868, %v5869
    %v5871 = vrot.slane %v5870, 1
    %v5872 = vmax.f32 %v5870, %v5871
    %v5873 = vrot.slane %v4932, 4
    %v5874 = vmax.f32 %v4932, %v5873
    %v5875 = vrot.slane %v5874, 2
    %v5876 = vmax.f32 %v5874, %v5875
    %v5877 = vrot.slane %v5876, 1
    %v5878 = vmax.f32 %v5876, %v5877
    %v5879 = vrot.slane %v4933, 4
    %v5880 = vmax.f32 %v4933, %v5879
    %v5881 = vrot.slane %v5880, 2
    %v5882 = vmax.f32 %v5880, %v5881
    %v5883 = vrot.slane %v5882, 1
    %v5884 = vmax.f32 %v5882, %v5883
    %v5885 = vrot.slane %v4934, 4
    %v5886 = vmax.f32 %v4934, %v5885
    %v5887 = vrot.slane %v5886, 2
    %v5888 = vmax.f32 %v5886, %v5887
    %v5889 = vrot.slane %v5888, 1
    %v5890 = vmax.f32 %v5888, %v5889
    %v5891 = vrot.slane %v4935, 4
    %v5892 = vmax.f32 %v4935, %v5891
    %v5893 = vrot.slane %v5892, 2
    %v5894 = vmax.f32 %v5892, %v5893
    %v5895 = vrot.slane %v5894, 1
    %v5896 = vmax.f32 %v5894, %v5895
    %v5897 = vrot.slane %v4936, 4
    %v5898 = vmax.f32 %v4936, %v5897
    %v5899 = vrot.slane %v5898, 2
    %v5900 = vmax.f32 %v5898, %v5899
    %v5901 = vrot.slane %v5900, 1
    %v5902 = vmax.f32 %v5900, %v5901
    %v5903 = vrot.slane %v4937, 4
    %v5904 = vmax.f32 %v4937, %v5903
    %v5905 = vrot.slane %v5904, 2
    %v5906 = vmax.f32 %v5904, %v5905
    %v5907 = vrot.slane %v5906, 1
    %v5908 = vmax.f32 %v5906, %v5907
    %v5909 = vrot.slane %v4938, 4
    %v5910 = vmax.f32 %v4938, %v5909
    %v5911 = vrot.slane %v5910, 2
    %v5912 = vmax.f32 %v5910, %v5911
    %v5913 = vrot.slane %v5912, 1
    %v5914 = vmax.f32 %v5912, %v5913
    %v5915 = vrot.slane %v4939, 4
    %v5916 = vmax.f32 %v4939, %v5915
    %v5917 = vrot.slane %v5916, 2
    %v5918 = vmax.f32 %v5916, %v5917
    %v5919 = vrot.slane %v5918, 1
    %v5920 = vmax.f32 %v5918, %v5919
    %v5921 = vrot.slane %v4940, 4
    %v5922 = vmax.f32 %v4940, %v5921
    %v5923 = vrot.slane %v5922, 2
    %v5924 = vmax.f32 %v5922, %v5923
    %v5925 = vrot.slane %v5924, 1
    %v5926 = vmax.f32 %v5924, %v5925
    %v5927 = vrot.slane %v4941, 4
    %v5928 = vmax.f32 %v4941, %v5927
    %v5929 = vrot.slane %v5928, 2
    %v5930 = vmax.f32 %v5928, %v5929
    %v5931 = vrot.slane %v5930, 1
    %v5932 = vmax.f32 %v5930, %v5931
    %v5933 = vrot.slane %v4942, 4
    %v5934 = vmax.f32 %v4942, %v5933
    %v5935 = vrot.slane %v5934, 2
    %v5936 = vmax.f32 %v5934, %v5935
    %v5937 = vrot.slane %v5936, 1
    %v5938 = vmax.f32 %v5936, %v5937
    %v5939 = vrot.slane %v4943, 4
    %v5940 = vmax.f32 %v4943, %v5939
    %v5941 = vrot.slane %v5940, 2
    %v5942 = vmax.f32 %v5940, %v5941
    %v5943 = vrot.slane %v5942, 1
    %v5944 = vmax.f32 %v5942, %v5943
    %v5945 = vrot.slane %v4944, 4
    %v5946 = vmax.f32 %v4944, %v5945
    %v5947 = vrot.slane %v5946, 2
    %v5948 = vmax.f32 %v5946, %v5947
    %v5949 = vrot.slane %v5948, 1
    %v5950 = vmax.f32 %v5948, %v5949
    %v5951 = vrot.slane %v4945, 4
    %v5952 = vmax.f32 %v4945, %v5951
    %v5953 = vrot.slane %v5952, 2
    %v5954 = vmax.f32 %v5952, %v5953
    %v5955 = vrot.slane %v5954, 1
    %v5956 = vmax.f32 %v5954, %v5955
    %v5957 = vrot.slane %v4946, 4
    %v5958 = vmax.f32 %v4946, %v5957
    %v5959 = vrot.slane %v5958, 2
    %v5960 = vmax.f32 %v5958, %v5959
    %v5961 = vrot.slane %v5960, 1
    %v5962 = vmax.f32 %v5960, %v5961
    %v5963 = vrot.slane %v4947, 4
    %v5964 = vmax.f32 %v4947, %v5963
    %v5965 = vrot.slane %v5964, 2
    %v5966 = vmax.f32 %v5964, %v5965
    %v5967 = vrot.slane %v5966, 1
    %v5968 = vmax.f32 %v5966, %v5967
    %v5969 = vrot.slane %v4948, 4
    %v5970 = vmax.f32 %v4948, %v5969
    %v5971 = vrot.slane %v5970, 2
    %v5972 = vmax.f32 %v5970, %v5971
    %v5973 = vrot.slane %v5972, 1
    %v5974 = vmax.f32 %v5972, %v5973
    %v5975 = vrot.slane %v4949, 4
    %v5976 = vmax.f32 %v4949, %v5975
    %v5977 = vrot.slane %v5976, 2
    %v5978 = vmax.f32 %v5976, %v5977
    %v5979 = vrot.slane %v5978, 1
    %v5980 = vmax.f32 %v5978, %v5979
    %v5981 = vrot.slane %v4950, 4
    %v5982 = vmax.f32 %v4950, %v5981
    %v5983 = vrot.slane %v5982, 2
    %v5984 = vmax.f32 %v5982, %v5983
    %v5985 = vrot.slane %v5984, 1
    %v5986 = vmax.f32 %v5984, %v5985
    %v5987 = vrot.slane %v4951, 4
    %v5988 = vmax.f32 %v4951, %v5987
    %v5989 = vrot.slane %v5988, 2
    %v5990 = vmax.f32 %v5988, %v5989
    %v5991 = vrot.slane %v5990, 1
    %v5992 = vmax.f32 %v5990, %v5991
    %v5993 = vrot.slane %v4952, 4
    %v5994 = vmax.f32 %v4952, %v5993
    %v5995 = vrot.slane %v5994, 2
    %v5996 = vmax.f32 %v5994, %v5995
    %v5997 = vrot.slane %v5996, 1
    %v5998 = vmax.f32 %v5996, %v5997
    %v5999 = vrot.slane %v4953, 4
    %v6000 = vmax.f32 %v4953, %v5999
    %v6001 = vrot.slane %v6000, 2
    %v6002 = vmax.f32 %v6000, %v6001
    %v6003 = vrot.slane %v6002, 1
    %v6004 = vmax.f32 %v6002, %v6003
    %v6005 = vrot.slane %v4954, 4
    %v6006 = vmax.f32 %v4954, %v6005
    %v6007 = vrot.slane %v6006, 2
    %v6008 = vmax.f32 %v6006, %v6007
    %v6009 = vrot.slane %v6008, 1
    %v6010 = vmax.f32 %v6008, %v6009
    %v6011 = vrot.slane %v4955, 4
    %v6012 = vmax.f32 %v4955, %v6011
    %v6013 = vrot.slane %v6012, 2
    %v6014 = vmax.f32 %v6012, %v6013
    %v6015 = vrot.slane %v6014, 1
    %v6016 = vmax.f32 %v6014, %v6015
    %v6017 = vrot.slane %v4956, 4
    %v6018 = vmax.f32 %v4956, %v6017
    %v6019 = vrot.slane %v6018, 2
    %v6020 = vmax.f32 %v6018, %v6019
    %v6021 = vrot.slane %v6020, 1
    %v6022 = vmax.f32 %v6020, %v6021
    %v6023 = vrot.slane %v4957, 4
    %v6024 = vmax.f32 %v4957, %v6023
    %v6025 = vrot.slane %v6024, 2
    %v6026 = vmax.f32 %v6024, %v6025
    %v6027 = vrot.slane %v6026, 1
    %v6028 = vmax.f32 %v6026, %v6027
    %v6029 = vrot.slane %v4958, 4
    %v6030 = vmax.f32 %v4958, %v6029
    %v6031 = vrot.slane %v6030, 2
    %v6032 = vmax.f32 %v6030, %v6031
    %v6033 = vrot.slane %v6032, 1
    %v6034 = vmax.f32 %v6032, %v6033
    %v6035 = vrot.slane %v4959, 4
    %v6036 = vmax.f32 %v4959, %v6035
    %v6037 = vrot.slane %v6036, 2
    %v6038 = vmax.f32 %v6036, %v6037
    %v6039 = vrot.slane %v6038, 1
    %v6040 = vmax.f32 %v6038, %v6039
    %v6041 = vrot.slane %v4960, 4
    %v6042 = vmax.f32 %v4960, %v6041
    %v6043 = vrot.slane %v6042, 2
    %v6044 = vmax.f32 %v6042, %v6043
    %v6045 = vrot.slane %v6044, 1
    %v6046 = vmax.f32 %v6044, %v6045
    %v6047 = vrot.slane %v4961, 4
    %v6048 = vmax.f32 %v4961, %v6047
    %v6049 = vrot.slane %v6048, 2
    %v6050 = vmax.f32 %v6048, %v6049
    %v6051 = vrot.slane %v6050, 1
    %v6052 = vmax.f32 %v6050, %v6051
    %v6053 = vrot.slane %v4962, 4
    %v6054 = vmax.f32 %v4962, %v6053
    %v6055 = vrot.slane %v6054, 2
    %v6056 = vmax.f32 %v6054, %v6055
    %v6057 = vrot.slane %v6056, 1
    %v6058 = vmax.f32 %v6056, %v6057
    %v6059 = vrot.slane %v4963, 4
    %v6060 = vmax.f32 %v4963, %v6059
    %v6061 = vrot.slane %v6060, 2
    %v6062 = vmax.f32 %v6060, %v6061
    %v6063 = vrot.slane %v6062, 1
    %v6064 = vmax.f32 %v6062, %v6063
    %v6065 = vrot.slane %v4964, 4
    %v6066 = vmax.f32 %v4964, %v6065
    %v6067 = vrot.slane %v6066, 2
    %v6068 = vmax.f32 %v6066, %v6067
    %v6069 = vrot.slane %v6068, 1
    %v6070 = vmax.f32 %v6068, %v6069
    %v6071 = vrot.slane %v4965, 4
    %v6072 = vmax.f32 %v4965, %v6071
    %v6073 = vrot.slane %v6072, 2
    %v6074 = vmax.f32 %v6072, %v6073
    %v6075 = vrot.slane %v6074, 1
    %v6076 = vmax.f32 %v6074, %v6075
    %v6077 = vrot.slane %v4966, 4
    %v6078 = vmax.f32 %v4966, %v6077
    %v6079 = vrot.slane %v6078, 2
    %v6080 = vmax.f32 %v6078, %v6079
    %v6081 = vrot.slane %v6080, 1
    %v6082 = vmax.f32 %v6080, %v6081
    %v6083 = vrot.slane %v4967, 4
    %v6084 = vmax.f32 %v4967, %v6083
    %v6085 = vrot.slane %v6084, 2
    %v6086 = vmax.f32 %v6084, %v6085
    %v6087 = vrot.slane %v6086, 1
    %v6088 = vmax.f32 %v6086, %v6087
    %v6089 = vrot.slane %v4968, 4
    %v6090 = vmax.f32 %v4968, %v6089
    %v6091 = vrot.slane %v6090, 2
    %v6092 = vmax.f32 %v6090, %v6091
    %v6093 = vrot.slane %v6092, 1
    %v6094 = vmax.f32 %v6092, %v6093
    %v6095 = vrot.slane %v4969, 4
    %v6096 = vmax.f32 %v4969, %v6095
    %v6097 = vrot.slane %v6096, 2
    %v6098 = vmax.f32 %v6096, %v6097
    %v6099 = vrot.slane %v6098, 1
    %v6100 = vmax.f32 %v6098, %v6099
    %v6101 = vrot.slane %v4970, 4
    %v6102 = vmax.f32 %v4970, %v6101
    %v6103 = vrot.slane %v6102, 2
    %v6104 = vmax.f32 %v6102, %v6103
    %v6105 = vrot.slane %v6104, 1
    %v6106 = vmax.f32 %v6104, %v6105
    %v6107 = vrot.slane %v4971, 4
    %v6108 = vmax.f32 %v4971, %v6107
    %v6109 = vrot.slane %v6108, 2
    %v6110 = vmax.f32 %v6108, %v6109
    %v6111 = vrot.slane %v6110, 1
    %v6112 = vmax.f32 %v6110, %v6111
    %v6113 = vrot.slane %v4972, 4
    %v6114 = vmax.f32 %v4972, %v6113
    %v6115 = vrot.slane %v6114, 2
    %v6116 = vmax.f32 %v6114, %v6115
    %v6117 = vrot.slane %v6116, 1
    %v6118 = vmax.f32 %v6116, %v6117
    %v6119 = vrot.slane %v4973, 4
    %v6120 = vmax.f32 %v4973, %v6119
    %v6121 = vrot.slane %v6120, 2
    %v6122 = vmax.f32 %v6120, %v6121
    %v6123 = vrot.slane %v6122, 1
    %v6124 = vmax.f32 %v6122, %v6123
    %v6125 = vrot.slane %v4974, 4
    %v6126 = vmax.f32 %v4974, %v6125
    %v6127 = vrot.slane %v6126, 2
    %v6128 = vmax.f32 %v6126, %v6127
    %v6129 = vrot.slane %v6128, 1
    %v6130 = vmax.f32 %v6128, %v6129
    %v6131 = vrot.slane %v4975, 4
    %v6132 = vmax.f32 %v4975, %v6131
    %v6133 = vrot.slane %v6132, 2
    %v6134 = vmax.f32 %v6132, %v6133
    %v6135 = vrot.slane %v6134, 1
    %v6136 = vmax.f32 %v6134, %v6135
    %v6137 = vrot.slane %v4976, 4
    %v6138 = vmax.f32 %v4976, %v6137
    %v6139 = vrot.slane %v6138, 2
    %v6140 = vmax.f32 %v6138, %v6139
    %v6141 = vrot.slane %v6140, 1
    %v6142 = vmax.f32 %v6140, %v6141
    %v6143 = vrot.slane %v4977, 4
    %v6144 = vmax.f32 %v4977, %v6143
    %v6145 = vrot.slane %v6144, 2
    %v6146 = vmax.f32 %v6144, %v6145
    %v6147 = vrot.slane %v6146, 1
    %v6148 = vmax.f32 %v6146, %v6147
    %v6149 = vrot.slane %v4978, 4
    %v6150 = vmax.f32 %v4978, %v6149
    %v6151 = vrot.slane %v6150, 2
    %v6152 = vmax.f32 %v6150, %v6151
    %v6153 = vrot.slane %v6152, 1
    %v6154 = vmax.f32 %v6152, %v6153
    %v6155 = vrot.slane %v4979, 4
    %v6156 = vmax.f32 %v4979, %v6155
    %v6157 = vrot.slane %v6156, 2
    %v6158 = vmax.f32 %v6156, %v6157
    %v6159 = vrot.slane %v6158, 1
    %v6160 = vmax.f32 %v6158, %v6159
    %v6161 = vrot.slane %v4980, 4
    %v6162 = vmax.f32 %v4980, %v6161
    %v6163 = vrot.slane %v6162, 2
    %v6164 = vmax.f32 %v6162, %v6163
    %v6165 = vrot.slane %v6164, 1
    %v6166 = vmax.f32 %v6164, %v6165
    %v6167 = vrot.slane %v4981, 4
    %v6168 = vmax.f32 %v4981, %v6167
    %v6169 = vrot.slane %v6168, 2
    %v6170 = vmax.f32 %v6168, %v6169
    %v6171 = vrot.slane %v6170, 1
    %v6172 = vmax.f32 %v6170, %v6171
    %v6173 = vrot.slane %v4982, 4
    %v6174 = vmax.f32 %v4982, %v6173
    %v6175 = vrot.slane %v6174, 2
    %v6176 = vmax.f32 %v6174, %v6175
    %v6177 = vrot.slane %v6176, 1
    %v6178 = vmax.f32 %v6176, %v6177
    %v6179 = vrot.slane %v4983, 4
    %v6180 = vmax.f32 %v4983, %v6179
    %v6181 = vrot.slane %v6180, 2
    %v6182 = vmax.f32 %v6180, %v6181
    %v6183 = vrot.slane %v6182, 1
    %v6184 = vmax.f32 %v6182, %v6183
    %v6185 = vrot.slane %v4984, 4
    %v6186 = vmax.f32 %v4984, %v6185
    %v6187 = vrot.slane %v6186, 2
    %v6188 = vmax.f32 %v6186, %v6187
    %v6189 = vrot.slane %v6188, 1
    %v6190 = vmax.f32 %v6188, %v6189
    %v6191 = vrot.slane %v4985, 4
    %v6192 = vmax.f32 %v4985, %v6191
    %v6193 = vrot.slane %v6192, 2
    %v6194 = vmax.f32 %v6192, %v6193
    %v6195 = vrot.slane %v6194, 1
    %v6196 = vmax.f32 %v6194, %v6195
    %v6197 = vrot.slane %v4986, 4
    %v6198 = vmax.f32 %v4986, %v6197
    %v6199 = vrot.slane %v6198, 2
    %v6200 = vmax.f32 %v6198, %v6199
    %v6201 = vrot.slane %v6200, 1
    %v6202 = vmax.f32 %v6200, %v6201
    %v6203 = vrot.slane %v4987, 4
    %v6204 = vmax.f32 %v4987, %v6203
    %v6205 = vrot.slane %v6204, 2
    %v6206 = vmax.f32 %v6204, %v6205
    %v6207 = vrot.slane %v6206, 1
    %v6208 = vmax.f32 %v6206, %v6207
    %v6209 = vrot.slane %v4988, 4
    %v6210 = vmax.f32 %v4988, %v6209
    %v6211 = vrot.slane %v6210, 2
    %v6212 = vmax.f32 %v6210, %v6211
    %v6213 = vrot.slane %v6212, 1
    %v6214 = vmax.f32 %v6212, %v6213
    %v6215 = vrot.slane %v4989, 4
    %v6216 = vmax.f32 %v4989, %v6215
    %v6217 = vrot.slane %v6216, 2
    %v6218 = vmax.f32 %v6216, %v6217
    %v6219 = vrot.slane %v6218, 1
    %v6220 = vmax.f32 %v6218, %v6219
    %v6221 = vrot.slane %v4990, 4
    %v6222 = vmax.f32 %v4990, %v6221
    %v6223 = vrot.slane %v6222, 2
    %v6224 = vmax.f32 %v6222, %v6223
    %v6225 = vrot.slane %v6224, 1
    %v6226 = vmax.f32 %v6224, %v6225
    %v6227 = vrot.slane %v4991, 4
    %v6228 = vmax.f32 %v4991, %v6227
    %v6229 = vrot.slane %v6228, 2
    %v6230 = vmax.f32 %v6228, %v6229
    %v6231 = vrot.slane %v6230, 1
    %v6232 = vmax.f32 %v6230, %v6231
    %v6233 = vrot.slane %v4992, 4
    %v6234 = vmax.f32 %v4992, %v6233
    %v6235 = vrot.slane %v6234, 2
    %v6236 = vmax.f32 %v6234, %v6235
    %v6237 = vrot.slane %v6236, 1
    %v6238 = vmax.f32 %v6236, %v6237
    %v6239 = vrot.slane %v4993, 4
    %v6240 = vmax.f32 %v4993, %v6239
    %v6241 = vrot.slane %v6240, 2
    %v6242 = vmax.f32 %v6240, %v6241
    %v6243 = vrot.slane %v6242, 1
    %v6244 = vmax.f32 %v6242, %v6243
    %v6245 = vrot.slane %v4994, 4
    %v6246 = vmax.f32 %v4994, %v6245
    %v6247 = vrot.slane %v6246, 2
    %v6248 = vmax.f32 %v6246, %v6247
    %v6249 = vrot.slane %v6248, 1
    %v6250 = vmax.f32 %v6248, %v6249
    %v6251 = vrot.slane %v4995, 4
    %v6252 = vmax.f32 %v4995, %v6251
    %v6253 = vrot.slane %v6252, 2
    %v6254 = vmax.f32 %v6252, %v6253
    %v6255 = vrot.slane %v6254, 1
    %v6256 = vmax.f32 %v6254, %v6255
    %v6257 = vrot.slane %v4996, 4
    %v6258 = vmax.f32 %v4996, %v6257
    %v6259 = vrot.slane %v6258, 2
    %v6260 = vmax.f32 %v6258, %v6259
    %v6261 = vrot.slane %v6260, 1
    %v6262 = vmax.f32 %v6260, %v6261
    %v6263 = vrot.slane %v4997, 4
    %v6264 = vmax.f32 %v4997, %v6263
    %v6265 = vrot.slane %v6264, 2
    %v6266 = vmax.f32 %v6264, %v6265
    %v6267 = vrot.slane %v6266, 1
    %v6268 = vmax.f32 %v6266, %v6267
    %v6269 = vrot.slane %v4998, 4
    %v6270 = vmax.f32 %v4998, %v6269
    %v6271 = vrot.slane %v6270, 2
    %v6272 = vmax.f32 %v6270, %v6271
    %v6273 = vrot.slane %v6272, 1
    %v6274 = vmax.f32 %v6272, %v6273
    %v6275 = vrot.slane %v4999, 4
    %v6276 = vmax.f32 %v4999, %v6275
    %v6277 = vrot.slane %v6276, 2
    %v6278 = vmax.f32 %v6276, %v6277
    %v6279 = vrot.slane %v6278, 1
    %v6280 = vmax.f32 %v6278, %v6279
    %v6281 = vrot.slane %v5000, 4
    %v6282 = vmax.f32 %v5000, %v6281
    %v6283 = vrot.slane %v6282, 2
    %v6284 = vmax.f32 %v6282, %v6283
    %v6285 = vrot.slane %v6284, 1
    %v6286 = vmax.f32 %v6284, %v6285
    %v6287 = vrot.slane %v5001, 4
    %v6288 = vmax.f32 %v5001, %v6287
    %v6289 = vrot.slane %v6288, 2
    %v6290 = vmax.f32 %v6288, %v6289
    %v6291 = vrot.slane %v6290, 1
    %v6292 = vmax.f32 %v6290, %v6291
    %v6293 = vrot.slane %v5002, 4
    %v6294 = vmax.f32 %v5002, %v6293
    %v6295 = vrot.slane %v6294, 2
    %v6296 = vmax.f32 %v6294, %v6295
    %v6297 = vrot.slane %v6296, 1
    %v6298 = vmax.f32 %v6296, %v6297
    %v6299 = vrot.slane %v5003, 4
    %v6300 = vmax.f32 %v5003, %v6299
    %v6301 = vrot.slane %v6300, 2
    %v6302 = vmax.f32 %v6300, %v6301
    %v6303 = vrot.slane %v6302, 1
    %v6304 = vmax.f32 %v6302, %v6303
    %v6305 = vrot.slane %v5004, 4
    %v6306 = vmax.f32 %v5004, %v6305
    %v6307 = vrot.slane %v6306, 2
    %v6308 = vmax.f32 %v6306, %v6307
    %v6309 = vrot.slane %v6308, 1
    %v6310 = vmax.f32 %v6308, %v6309
    %v6311 = vrot.slane %v5005, 4
    %v6312 = vmax.f32 %v5005, %v6311
    %v6313 = vrot.slane %v6312, 2
    %v6314 = vmax.f32 %v6312, %v6313
    %v6315 = vrot.slane %v6314, 1
    %v6316 = vmax.f32 %v6314, %v6315
    %v6317 = vrot.slane %v5006, 4
    %v6318 = vmax.f32 %v5006, %v6317
    %v6319 = vrot.slane %v6318, 2
    %v6320 = vmax.f32 %v6318, %v6319
    %v6321 = vrot.slane %v6320, 1
    %v6322 = vmax.f32 %v6320, %v6321
    %v6323 = vrot.slane %v5007, 4
    %v6324 = vmax.f32 %v5007, %v6323
    %v6325 = vrot.slane %v6324, 2
    %v6326 = vmax.f32 %v6324, %v6325
    %v6327 = vrot.slane %v6326, 1
    %v6328 = vmax.f32 %v6326, %v6327
    %v6329 = vrot.slane %v5008, 4
    %v6330 = vmax.f32 %v5008, %v6329
    %v6331 = vrot.slane %v6330, 2
    %v6332 = vmax.f32 %v6330, %v6331
    %v6333 = vrot.slane %v6332, 1
    %v6334 = vmax.f32 %v6332, %v6333
    %v6335 = vrot.slane %v5009, 4
    %v6336 = vmax.f32 %v5009, %v6335
    %v6337 = vrot.slane %v6336, 2
    %v6338 = vmax.f32 %v6336, %v6337
    %v6339 = vrot.slane %v6338, 1
    %v6340 = vmax.f32 %v6338, %v6339
    %v6341 = vrot.slane %v5010, 4
    %v6342 = vmax.f32 %v5010, %v6341
    %v6343 = vrot.slane %v6342, 2
    %v6344 = vmax.f32 %v6342, %v6343
    %v6345 = vrot.slane %v6344, 1
    %v6346 = vmax.f32 %v6344, %v6345
    %v6347 = vrot.slane %v5011, 4
    %v6348 = vmax.f32 %v5011, %v6347
    %v6349 = vrot.slane %v6348, 2
    %v6350 = vmax.f32 %v6348, %v6349
    %v6351 = vrot.slane %v6350, 1
    %v6352 = vmax.f32 %v6350, %v6351
    %v6353 = vrot.slane %v5012, 4
    %v6354 = vmax.f32 %v5012, %v6353
    %v6355 = vrot.slane %v6354, 2
    %v6356 = vmax.f32 %v6354, %v6355
    %v6357 = vrot.slane %v6356, 1
    %v6358 = vmax.f32 %v6356, %v6357
    %v6359 = vrot.slane %v5013, 4
    %v6360 = vmax.f32 %v5013, %v6359
    %v6361 = vrot.slane %v6360, 2
    %v6362 = vmax.f32 %v6360, %v6361
    %v6363 = vrot.slane %v6362, 1
    %v6364 = vmax.f32 %v6362, %v6363
    %v6365 = vrot.slane %v5014, 4
    %v6366 = vmax.f32 %v5014, %v6365
    %v6367 = vrot.slane %v6366, 2
    %v6368 = vmax.f32 %v6366, %v6367
    %v6369 = vrot.slane %v6368, 1
    %v6370 = vmax.f32 %v6368, %v6369
    %v6371 = vrot.slane %v5015, 4
    %v6372 = vmax.f32 %v5015, %v6371
    %v6373 = vrot.slane %v6372, 2
    %v6374 = vmax.f32 %v6372, %v6373
    %v6375 = vrot.slane %v6374, 1
    %v6376 = vmax.f32 %v6374, %v6375
    %v6377 = vrot.slane %v5016, 4
    %v6378 = vmax.f32 %v5016, %v6377
    %v6379 = vrot.slane %v6378, 2
    %v6380 = vmax.f32 %v6378, %v6379
    %v6381 = vrot.slane %v6380, 1
    %v6382 = vmax.f32 %v6380, %v6381
    %v6383 = vrot.slane %v5017, 4
    %v6384 = vmax.f32 %v5017, %v6383
    %v6385 = vrot.slane %v6384, 2
    %v6386 = vmax.f32 %v6384, %v6385
    %v6387 = vrot.slane %v6386, 1
    %v6388 = vmax.f32 %v6386, %v6387
    %v6389 = vrot.slane %v5018, 4
    %v6390 = vmax.f32 %v5018, %v6389
    %v6391 = vrot.slane %v6390, 2
    %v6392 = vmax.f32 %v6390, %v6391
    %v6393 = vrot.slane %v6392, 1
    %v6394 = vmax.f32 %v6392, %v6393
    %v6395 = vrot.slane %v5019, 4
    %v6396 = vmax.f32 %v5019, %v6395
    %v6397 = vrot.slane %v6396, 2
    %v6398 = vmax.f32 %v6396, %v6397
    %v6399 = vrot.slane %v6398, 1
    %v6400 = vmax.f32 %v6398, %v6399
    %v6401 = vrot.slane %v5020, 4
    %v6402 = vmax.f32 %v5020, %v6401
    %v6403 = vrot.slane %v6402, 2
    %v6404 = vmax.f32 %v6402, %v6403
    %v6405 = vrot.slane %v6404, 1
    %v6406 = vmax.f32 %v6404, %v6405
    %v6407 = vrot.slane %v5021, 4
    %v6408 = vmax.f32 %v5021, %v6407
    %v6409 = vrot.slane %v6408, 2
    %v6410 = vmax.f32 %v6408, %v6409
    %v6411 = vrot.slane %v6410, 1
    %v6412 = vmax.f32 %v6410, %v6411
    %v6413 = vrot.slane %v5022, 4
    %v6414 = vmax.f32 %v5022, %v6413
    %v6415 = vrot.slane %v6414, 2
    %v6416 = vmax.f32 %v6414, %v6415
    %v6417 = vrot.slane %v6416, 1
    %v6418 = vmax.f32 %v6416, %v6417
    %v6419 = vrot.slane %v5023, 4
    %v6420 = vmax.f32 %v5023, %v6419
    %v6421 = vrot.slane %v6420, 2
    %v6422 = vmax.f32 %v6420, %v6421
    %v6423 = vrot.slane %v6422, 1
    %v6424 = vmax.f32 %v6422, %v6423
    %v6425 = vrot.slane %v5024, 4
    %v6426 = vmax.f32 %v5024, %v6425
    %v6427 = vrot.slane %v6426, 2
    %v6428 = vmax.f32 %v6426, %v6427
    %v6429 = vrot.slane %v6428, 1
    %v6430 = vmax.f32 %v6428, %v6429
    %v6431 = vrot.slane %v5025, 4
    %v6432 = vmax.f32 %v5025, %v6431
    %v6433 = vrot.slane %v6432, 2
    %v6434 = vmax.f32 %v6432, %v6433
    %v6435 = vrot.slane %v6434, 1
    %v6436 = vmax.f32 %v6434, %v6435
    %v6437 = vrot.slane %v5026, 4
    %v6438 = vmax.f32 %v5026, %v6437
    %v6439 = vrot.slane %v6438, 2
    %v6440 = vmax.f32 %v6438, %v6439
    %v6441 = vrot.slane %v6440, 1
    %v6442 = vmax.f32 %v6440, %v6441
    %v6443 = vrot.slane %v5027, 4
    %v6444 = vmax.f32 %v5027, %v6443
    %v6445 = vrot.slane %v6444, 2
    %v6446 = vmax.f32 %v6444, %v6445
    %v6447 = vrot.slane %v6446, 1
    %v6448 = vmax.f32 %v6446, %v6447
    %v6449 = vrot.slane %v5028, 4
    %v6450 = vmax.f32 %v5028, %v6449
    %v6451 = vrot.slane %v6450, 2
    %v6452 = vmax.f32 %v6450, %v6451
    %v6453 = vrot.slane %v6452, 1
    %v6454 = vmax.f32 %v6452, %v6453
    %v6455 = vrot.slane %v5029, 4
    %v6456 = vmax.f32 %v5029, %v6455
    %v6457 = vrot.slane %v6456, 2
    %v6458 = vmax.f32 %v6456, %v6457
    %v6459 = vrot.slane %v6458, 1
    %v6460 = vmax.f32 %v6458, %v6459
    %v6461 = vrot.slane %v5030, 4
    %v6462 = vmax.f32 %v5030, %v6461
    %v6463 = vrot.slane %v6462, 2
    %v6464 = vmax.f32 %v6462, %v6463
    %v6465 = vrot.slane %v6464, 1
    %v6466 = vmax.f32 %v6464, %v6465
    %v6467 = vrot.slane %v5031, 4
    %v6468 = vmax.f32 %v5031, %v6467
    %v6469 = vrot.slane %v6468, 2
    %v6470 = vmax.f32 %v6468, %v6469
    %v6471 = vrot.slane %v6470, 1
    %v6472 = vmax.f32 %v6470, %v6471
    %v6473 = vrot.slane %v5032, 4
    %v6474 = vmax.f32 %v5032, %v6473
    %v6475 = vrot.slane %v6474, 2
    %v6476 = vmax.f32 %v6474, %v6475
    %v6477 = vrot.slane %v6476, 1
    %v6478 = vmax.f32 %v6476, %v6477
    %v6479 = vrot.slane %v5033, 4
    %v6480 = vmax.f32 %v5033, %v6479
    %v6481 = vrot.slane %v6480, 2
    %v6482 = vmax.f32 %v6480, %v6481
    %v6483 = vrot.slane %v6482, 1
    %v6484 = vmax.f32 %v6482, %v6483
    %v6485 = vrot.slane %v5034, 4
    %v6486 = vmax.f32 %v5034, %v6485
    %v6487 = vrot.slane %v6486, 2
    %v6488 = vmax.f32 %v6486, %v6487
    %v6489 = vrot.slane %v6488, 1
    %v6490 = vmax.f32 %v6488, %v6489
    %v6491 = vrot.slane %v5035, 4
    %v6492 = vmax.f32 %v5035, %v6491
    %v6493 = vrot.slane %v6492, 2
    %v6494 = vmax.f32 %v6492, %v6493
    %v6495 = vrot.slane %v6494, 1
    %v6496 = vmax.f32 %v6494, %v6495
    %v6497 = vrot.slane %v5036, 4
    %v6498 = vmax.f32 %v5036, %v6497
    %v6499 = vrot.slane %v6498, 2
    %v6500 = vmax.f32 %v6498, %v6499
    %v6501 = vrot.slane %v6500, 1
    %v6502 = vmax.f32 %v6500, %v6501
    %v6503 = vrot.slane %v5037, 4
    %v6504 = vmax.f32 %v5037, %v6503
    %v6505 = vrot.slane %v6504, 2
    %v6506 = vmax.f32 %v6504, %v6505
    %v6507 = vrot.slane %v6506, 1
    %v6508 = vmax.f32 %v6506, %v6507
    %v6509 = vrot.slane %v5038, 4
    %v6510 = vmax.f32 %v5038, %v6509
    %v6511 = vrot.slane %v6510, 2
    %v6512 = vmax.f32 %v6510, %v6511
    %v6513 = vrot.slane %v6512, 1
    %v6514 = vmax.f32 %v6512, %v6513
    %v6515 = vrot.slane %v5039, 4
    %v6516 = vmax.f32 %v5039, %v6515
    %v6517 = vrot.slane %v6516, 2
    %v6518 = vmax.f32 %v6516, %v6517
    %v6519 = vrot.slane %v6518, 1
    %v6520 = vmax.f32 %v6518, %v6519
    %v6521 = vrot.slane %v5040, 4
    %v6522 = vmax.f32 %v5040, %v6521
    %v6523 = vrot.slane %v6522, 2
    %v6524 = vmax.f32 %v6522, %v6523
    %v6525 = vrot.slane %v6524, 1
    %v6526 = vmax.f32 %v6524, %v6525
    %v6527 = vrot.slane %v5041, 4
    %v6528 = vmax.f32 %v5041, %v6527
    %v6529 = vrot.slane %v6528, 2
    %v6530 = vmax.f32 %v6528, %v6529
    %v6531 = vrot.slane %v6530, 1
    %v6532 = vmax.f32 %v6530, %v6531
    %v6533 = vrot.slane %v5042, 4
    %v6534 = vmax.f32 %v5042, %v6533
    %v6535 = vrot.slane %v6534, 2
    %v6536 = vmax.f32 %v6534, %v6535
    %v6537 = vrot.slane %v6536, 1
    %v6538 = vmax.f32 %v6536, %v6537
    %v6539 = vrot.slane %v5043, 4
    %v6540 = vmax.f32 %v5043, %v6539
    %v6541 = vrot.slane %v6540, 2
    %v6542 = vmax.f32 %v6540, %v6541
    %v6543 = vrot.slane %v6542, 1
    %v6544 = vmax.f32 %v6542, %v6543
    %v6545 = vrot.slane %v5044, 4
    %v6546 = vmax.f32 %v5044, %v6545
    %v6547 = vrot.slane %v6546, 2
    %v6548 = vmax.f32 %v6546, %v6547
    %v6549 = vrot.slane %v6548, 1
    %v6550 = vmax.f32 %v6548, %v6549
    %v6551 = vrot.slane %v5045, 4
    %v6552 = vmax.f32 %v5045, %v6551
    %v6553 = vrot.slane %v6552, 2
    %v6554 = vmax.f32 %v6552, %v6553
    %v6555 = vrot.slane %v6554, 1
    %v6556 = vmax.f32 %v6554, %v6555
    %v6557 = vrot.slane %v5046, 4
    %v6558 = vmax.f32 %v5046, %v6557
    %v6559 = vrot.slane %v6558, 2
    %v6560 = vmax.f32 %v6558, %v6559
    %v6561 = vrot.slane %v6560, 1
    %v6562 = vmax.f32 %v6560, %v6561
    %v6563 = vrot.slane %v5047, 4
    %v6564 = vmax.f32 %v5047, %v6563
    %v6565 = vrot.slane %v6564, 2
    %v6566 = vmax.f32 %v6564, %v6565
    %v6567 = vrot.slane %v6566, 1
    %v6568 = vmax.f32 %v6566, %v6567
    %v6569 = vrot.slane %v5048, 4
    %v6570 = vmax.f32 %v5048, %v6569
    %v6571 = vrot.slane %v6570, 2
    %v6572 = vmax.f32 %v6570, %v6571
    %v6573 = vrot.slane %v6572, 1
    %v6574 = vmax.f32 %v6572, %v6573
    %v6575 = vrot.slane %v5049, 4
    %v6576 = vmax.f32 %v5049, %v6575
    %v6577 = vrot.slane %v6576, 2
    %v6578 = vmax.f32 %v6576, %v6577
    %v6579 = vrot.slane %v6578, 1
    %v6580 = vmax.f32 %v6578, %v6579
    %v6581 = vrot.slane %v5050, 4
    %v6582 = vmax.f32 %v5050, %v6581
    %v6583 = vrot.slane %v6582, 2
    %v6584 = vmax.f32 %v6582, %v6583
    %v6585 = vrot.slane %v6584, 1
    %v6586 = vmax.f32 %v6584, %v6585
    %v6587 = vld [vmem:[#allocation5] sm:$0xff]
    %v6588 = vld [vmem:[#allocation5 + $0x8] sm:$0xff]
    %v6589 = vld [vmem:[#allocation5 + $0x10] sm:$0xff]
    %v6590 = vld [vmem:[#allocation5 + $0x18] sm:$0xff]
    %v6591 = vld [vmem:[#allocation5 + $0x20] sm:$0xff]
    %v6592 = vld [vmem:[#allocation5 + $0x28] sm:$0xff]
    %v6593 = vld [vmem:[#allocation5 + $0x30] sm:$0xff]
    %v6594 = vld [vmem:[#allocation5 + $0x38] sm:$0xff]
    %v6595 = vld [vmem:[#allocation5 + $0x40] sm:$0xff]
    %v6596 = vld [vmem:[#allocation5 + $0x48] sm:$0xff]
    %v6597 = vld [vmem:[#allocation5 + $0x50] sm:$0xff]
    %v6598 = vld [vmem:[#allocation5 + $0x58] sm:$0xff]
    %v6599 = vld [vmem:[#allocation5 + $0x60] sm:$0xff]
    %v6600 = vld [vmem:[#allocation5 + $0x68] sm:$0xff]
    %v6601 = vld [vmem:[#allocation5 + $0x70] sm:$0xff]
    %v6602 = vld [vmem:[#allocation5 + $0x78] sm:$0xff]
    %v6603 = vld [vmem:[#allocation5 + $0x80] sm:$0xff]
    %v6604 = vld [vmem:[#allocation5 + $0x88] sm:$0xff]
    %v6605 = vld [vmem:[#allocation5 + $0x90] sm:$0xff]
    %v6606 = vld [vmem:[#allocation5 + $0x98] sm:$0xff]
    %v6607 = vld [vmem:[#allocation5 + $0xa0] sm:$0xff]
    %v6608 = vld [vmem:[#allocation5 + $0xa8] sm:$0xff]
    %v6609 = vld [vmem:[#allocation5 + $0xb0] sm:$0xff]
    %v6610 = vld [vmem:[#allocation5 + $0xb8] sm:$0xff]
    %v6611 = vld [vmem:[#allocation5 + $0xc0] sm:$0xff]
    %v6612 = vld [vmem:[#allocation5 + $0xc8] sm:$0xff]
    %v6613 = vld [vmem:[#allocation5 + $0xd0] sm:$0xff]
    %v6614 = vld [vmem:[#allocation5 + $0xd8] sm:$0xff]
    %v6615 = vld [vmem:[#allocation5 + $0xe0] sm:$0xff]
    %v6616 = vld [vmem:[#allocation5 + $0xe8] sm:$0xff]
    %v6617 = vld [vmem:[#allocation5 + $0xf0] sm:$0xff]
    %v6618 = vld [vmem:[#allocation5 + $0xf8] sm:$0xff]
    %v6619 = vld [vmem:[#allocation11] sm:$0xff]
    %v6620 = vld [vmem:[#allocation11 + $0x8] sm:$0xff]
    %v6621 = vld [vmem:[#allocation11 + $0x10] sm:$0xff]
    %v6622 = vld [vmem:[#allocation11 + $0x18] sm:$0xff]
    %vm6623 = vcmask 64512
    %v6625 = vsel %vm6623, %v6587, 0
    %v6628 = vsel %vm6623, %v6588, 0
    %v6631 = vsel %vm6623, %v6589, 0
    %v6634 = vsel %vm6623, %v6590, 0
    %v6637 = vsel %vm6623, %v6591, 0
    %v6640 = vsel %vm6623, %v6592, 0
    %v6643 = vsel %vm6623, %v6593, 0
    %v6646 = vsel %vm6623, %v6594, 0
    %v6649 = vsel %vm6623, %v6595, 0
    %v6652 = vsel %vm6623, %v6596, 0
    %v6655 = vsel %vm6623, %v6597, 0
    %v6658 = vsel %vm6623, %v6598, 0
    %v6661 = vsel %vm6623, %v6599, 0
    %v6664 = vsel %vm6623, %v6600, 0
    %v6667 = vsel %vm6623, %v6601, 0
    %v6670 = vsel %vm6623, %v6602, 0
    %v6673 = vsel %vm6623, %v6603, 0
    %v6676 = vsel %vm6623, %v6604, 0
    %v6679 = vsel %vm6623, %v6605, 0
    %v6682 = vsel %vm6623, %v6606, 0
    %v6685 = vsel %vm6623, %v6607, 0
    %v6688 = vsel %vm6623, %v6608, 0
    %v6691 = vsel %vm6623, %v6609, 0
    %v6694 = vsel %vm6623, %v6610, 0
    %v6697 = vsel %vm6623, %v6611, 0
    %v6700 = vsel %vm6623, %v6612, 0
    %v6703 = vsel %vm6623, %v6613, 0
    %v6706 = vsel %vm6623, %v6614, 0
    %v6709 = vsel %vm6623, %v6615, 0
    %v6712 = vsel %vm6623, %v6616, 0
    %v6715 = vsel %vm6623, %v6617, 0
    %v6718 = vsel %vm6623, %v6618, 0
    %6720 = vmatprep.subr.mxu0 %v6620
    %6721 = vmatpush1.msra.mxu0 %v6619
    %6722 = vmatprep.subr.mxu0 0.0
    %6723 = vmatpush1.msra.mxu0 0.0
    %6724 = vmatprep.subr.mxu0 0.0
    %6725 = vmatpush1.msra.mxu0 0.0
    %6726 = vmatprep.subr.mxu0 0.0
    %6727 = vmatpush1.msra.mxu0 0.0
    %6728 = vmatprep.subr.mxu0 0.0
    %6729 = vmatpush1.msra.mxu0 0.0
    %6730 = vmatprep.subr.mxu0 0.0
    %6731 = vmatpush1.msra.mxu0 0.0
    %6732 = vmatprep.subr.mxu0 0.0
    %6733 = vmatpush1.msra.mxu0 0.0
    %6734 = vmatprep.subr.mxu0 0.0
    %6735 = vmatpush1.msra.mxu0 0.0
    %6736 = vmatprep.subr.mxu0 0.0
    %6737 = vmatpush1.msra.mxu0 0.0
    %6738 = vmatprep.subr.mxu0 0.0
    %6739 = vmatpush1.msra.mxu0 0.0
    %6740 = vmatprep.subr.mxu0 0.0
    %6741 = vmatpush1.msra.mxu0 0.0
    %6742 = vmatprep.subr.mxu0 0.0
    %6743 = vmatpush1.msra.mxu0 0.0
    %6744 = vmatprep.subr.mxu0 0.0
    %6745 = vmatpush1.msra.mxu0 0.0
    %6746 = vmatprep.subr.mxu0 0.0
    %6747 = vmatpush1.msra.mxu0 0.0
    %6748 = vmatprep.subr.mxu0 0.0
    %6749 = vmatpush1.msra.mxu0 0.0
    %6750 = vmatprep.subr.mxu0 0.0
    %6751 = vmatpush1.msra.mxu0 0.0
    %6752 = vmatprep.subr.mxu0 0.0
    %6753 = vmatpush1.msra.mxu0 0.0
    %6754 = vmatprep.subr.mxu0 0.0
    %6755 = vmatpush1.msra.mxu0 0.0
    %6756 = vmatprep.subr.mxu0 0.0
    %6757 = vmatpush1.msra.mxu0 0.0
    %6758 = vmatprep.subr.mxu0 0.0
    %6759 = vmatpush1.msra.mxu0 0.0
    %6760 = vmatprep.subr.mxu0 0.0
    %6761 = vmatpush1.msra.mxu0 0.0
    %6762 = vmatprep.subr.mxu0 0.0
    %6763 = vmatpush1.msra.mxu0 0.0
    %6764 = vmatprep.subr.mxu0 0.0
    %6765 = vmatpush1.msra.mxu0 0.0
    %6766 = vmatprep.subr.mxu0 0.0
    %6767 = vmatpush1.msra.mxu0 0.0
    %6768 = vmatprep.subr.mxu0 0.0
    %6769 = vmatpush1.msra.mxu0 0.0
    %6770 = vmatprep.subr.mxu0 0.0
    %6771 = vmatpush1.msra.mxu0 0.0
    %6772 = vmatprep.subr.mxu0 0.0
    %6773 = vmatpush1.msra.mxu0 0.0
    %6774 = vmatprep.subr.mxu0 0.0
    %6775 = vmatpush1.msra.mxu0 0.0
    %6776 = vmatprep.subr.mxu0 0.0
    %6777 = vmatpush1.msra.mxu0 0.0
    %6778 = vmatprep.subr.mxu0 0.0
    %6779 = vmatpush1.msra.mxu0 0.0
    %6780 = vmatprep.subr.mxu0 0.0
    %6781 = vmatpush1.msra.mxu0 0.0
    %6782 = vmatprep.subr.mxu0 0.0
    %6783 = vmatpush1.msra.mxu0 0.0
    %6784 = vmatprep.mubr.f32.mxu0 0.0
    %6785 = vmatmul.mubr.f32.gmra.mrb[0].mxu0 %v6625
    %v6786 = vpop.f32.mrb[0].mxu0
    %v6787 = vadd.f32 0.0, %v6786
    %v6788 = vpop.f32.mrb[0].mxu0
    %v6789 = vadd.f32 0.0, %v6788
    %6790 = vmatprep.mubr.f32.mxu0 0.0
    %6791 = vmatmul.mubr.f32.gmra.mrb[0].mxu0 %v6628
    %v6792 = vpop.f32.mrb[0].mxu0
    %v6793 = vadd.f32 0.0, %v6792
    %v6794 = vpop.f32.mrb[0].mxu0
    %v6795 = vadd.f32 0.0, %v6794
    %6796 = vmatprep.mubr.f32.mxu0 0.0
    %6797 = vmatmul.mubr.f32.gmra.mrb[0].mxu0 %v6631
    %v6798 = vpop.f32.mrb[0].mxu0
    %v6799 = vadd.f32 0.0, %v6798
    %v6800 = vpop.f32.mrb[0].mxu0
    %v6801 = vadd.f32 0.0, %v6800
    %6802 = vmatprep.mubr.f32.mxu0 0.0
    %6803 = vmatmul.mubr.f32.gmra.mrb[0].mxu0 %v6634
    %v6804 = vpop.f32.mrb[0].mxu0
    %v6805 = vadd.f32 0.0, %v6804
    %v6806 = vpop.f32.mrb[0].mxu0
    %v6807 = vadd.f32 0.0, %v6806
    %6808 = vmatprep.mubr.f32.mxu0 0.0
    %6809 = vmatmul.mubr.f32.gmra.mrb[0].mxu0 %v6637
    %v6810 = vpop.f32.mrb[0].mxu0
    %v6811 = vadd.f32 0.0, %v6810
    %v6812 = vpop.f32.mrb[0].mxu0
    %v6813 = vadd.f32 0.0, %v6812
    %6814 = vmatprep.mubr.f32.mxu0 0.0
    %6815 = vmatmul.mubr.f32.gmra.mrb[0].mxu0 %v6640
    %v6816 = vpop.f32.mrb[0].mxu0
    %v6817 = vadd.f32 0.0, %v6816
    %v6818 = vpop.f32.mrb[0].mxu0
    %v6819 = vadd.f32 0.0, %v6818
    %6820 = vmatprep.mubr.f32.mxu0 0.0
    %6821 = vmatmul.mubr.f32.gmra.mrb[0].mxu0 %v6643
    %v6822 = vpop.f32.mrb[0].mxu0
    %v6823 = vadd.f32 0.0, %v6822
    %v6824 = vpop.f32.mrb[0].mxu0
    %v6825 = vadd.f32 0.0, %v6824
    %6826 = vmatprep.mubr.f32.mxu0 0.0
    %6827 = vmatmul.mubr.f32.gmra.mrb[0].mxu0 %v6646
    %v6828 = vpop.f32.mrb[0].mxu0
    %v6829 = vadd.f32 0.0, %v6828
    %v6830 = vpop.f32.mrb[0].mxu0
    %v6831 = vadd.f32 0.0, %v6830
    %6832 = vmatprep.mubr.f32.mxu0 0.0
    %6833 = vmatmul.mubr.f32.gmra.mrb[0].mxu0 %v6649
    %v6834 = vpop.f32.mrb[0].mxu0
    %v6835 = vadd.f32 0.0, %v6834
    %v6836 = vpop.f32.mrb[0].mxu0
    %v6837 = vadd.f32 0.0, %v6836
    %6838 = vmatprep.mubr.f32.mxu0 0.0
    %6839 = vmatmul.mubr.f32.gmra.mrb[0].mxu0 %v6652
    %v6840 = vpop.f32.mrb[0].mxu0
    %v6841 = vadd.f32 0.0, %v6840
    %v6842 = vpop.f32.mrb[0].mxu0
    %v6843 = vadd.f32 0.0, %v6842
    %6844 = vmatprep.mubr.f32.mxu0 0.0
    %6845 = vmatmul.mubr.f32.gmra.mrb[0].mxu0 %v6655
    %v6846 = vpop.f32.mrb[0].mxu0
    %v6847 = vadd.f32 0.0, %v6846
    %v6848 = vpop.f32.mrb[0].mxu0
    %v6849 = vadd.f32 0.0, %v6848
    %6850 = vmatprep.mubr.f32.mxu0 0.0
    %6851 = vmatmul.mubr.f32.gmra.mrb[0].mxu0 %v6658
    %v6852 = vpop.f32.mrb[0].mxu0
    %v6853 = vadd.f32 0.0, %v6852
    %v6854 = vpop.f32.mrb[0].mxu0
    %v6855 = vadd.f32 0.0, %v6854
    %6856 = vmatprep.mubr.f32.mxu0 0.0
    %6857 = vmatmul.mubr.f32.gmra.mrb[0].mxu0 %v6661
    %v6858 = vpop.f32.mrb[0].mxu0
    %v6859 = vadd.f32 0.0, %v6858
    %v6860 = vpop.f32.mrb[0].mxu0
    %v6861 = vadd.f32 0.0, %v6860
    %6862 = vmatprep.mubr.f32.mxu0 0.0
    %6863 = vmatmul.mubr.f32.gmra.mrb[0].mxu0 %v6664
    %v6864 = vpop.f32.mrb[0].mxu0
    %v6865 = vadd.f32 0.0, %v6864
    %v6866 = vpop.f32.mrb[0].mxu0
    %v6867 = vadd.f32 0.0, %v6866
    %6868 = vmatprep.mubr.f32.mxu0 0.0
    %6869 = vmatmul.mubr.f32.gmra.mrb[0].mxu0 %v6667
    %v6870 = vpop.f32.mrb[0].mxu0
    %v6871 = vadd.f32 0.0, %v6870
    %v6872 = vpop.f32.mrb[0].mxu0
    %v6873 = vadd.f32 0.0, %v6872
    %6874 = vmatprep.mubr.f32.mxu0 0.0
    %6875 = vmatmul.mubr.f32.gmra.mrb[0].mxu0 %v6670
    %v6876 = vpop.f32.mrb[0].mxu0
    %v6877 = vadd.f32 0.0, %v6876
    %v6878 = vpop.f32.mrb[0].mxu0
    %v6879 = vadd.f32 0.0, %v6878
    %6880 = vmatprep.mubr.f32.mxu0 0.0
    %6881 = vmatmul.mubr.f32.gmra.mrb[0].mxu0 %v6673
    %v6882 = vpop.f32.mrb[0].mxu0
    %v6883 = vadd.f32 0.0, %v6882
    %v6884 = vpop.f32.mrb[0].mxu0
    %v6885 = vadd.f32 0.0, %v6884
    %6886 = vmatprep.mubr.f32.mxu0 0.0
    %6887 = vmatmul.mubr.f32.gmra.mrb[0].mxu0 %v6676
    %v6888 = vpop.f32.mrb[0].mxu0
    %v6889 = vadd.f32 0.0, %v6888
    %v6890 = vpop.f32.mrb[0].mxu0
    %v6891 = vadd.f32 0.0, %v6890
    %6892 = vmatprep.mubr.f32.mxu0 0.0
    %6893 = vmatmul.mubr.f32.gmra.mrb[0].mxu0 %v6679
    %v6894 = vpop.f32.mrb[0].mxu0
    %v6895 = vadd.f32 0.0, %v6894
    %v6896 = vpop.f32.mrb[0].mxu0
    %v6897 = vadd.f32 0.0, %v6896
    %6898 = vmatprep.mubr.f32.mxu0 0.0
    %6899 = vmatmul.mubr.f32.gmra.mrb[0].mxu0 %v6682
    %v6900 = vpop.f32.mrb[0].mxu0
    %v6901 = vadd.f32 0.0, %v6900
    %v6902 = vpop.f32.mrb[0].mxu0
    %v6903 = vadd.f32 0.0, %v6902
    %6904 = vmatprep.mubr.f32.mxu0 0.0
    %6905 = vmatmul.mubr.f32.gmra.mrb[0].mxu0 %v6685
    %v6906 = vpop.f32.mrb[0].mxu0
    %v6907 = vadd.f32 0.0, %v6906
    %v6908 = vpop.f32.mrb[0].mxu0
    %v6909 = vadd.f32 0.0, %v6908
    %6910 = vmatprep.mubr.f32.mxu0 0.0
    %6911 = vmatmul.mubr.f32.gmra.mrb[0].mxu0 %v6688
    %v6912 = vpop.f32.mrb[0].mxu0
    %v6913 = vadd.f32 0.0, %v6912
    %v6914 = vpop.f32.mrb[0].mxu0
    %v6915 = vadd.f32 0.0, %v6914
    %6916 = vmatprep.mubr.f32.mxu0 0.0
    %6917 = vmatmul.mubr.f32.gmra.mrb[0].mxu0 %v6691
    %v6918 = vpop.f32.mrb[0].mxu0
    %v6919 = vadd.f32 0.0, %v6918
    %v6920 = vpop.f32.mrb[0].mxu0
    %v6921 = vadd.f32 0.0, %v6920
    %6922 = vmatprep.mubr.f32.mxu0 0.0
    %6923 = vmatmul.mubr.f32.gmra.mrb[0].mxu0 %v6694
    %v6924 = vpop.f32.mrb[0].mxu0
    %v6925 = vadd.f32 0.0, %v6924
    %v6926 = vpop.f32.mrb[0].mxu0
    %v6927 = vadd.f32 0.0, %v6926
    %6928 = vmatprep.mubr.f32.mxu0 0.0
    %6929 = vmatmul.mubr.f32.gmra.mrb[0].mxu0 %v6697
    %v6930 = vpop.f32.mrb[0].mxu0
    %v6931 = vadd.f32 0.0, %v6930
    %v6932 = vpop.f32.mrb[0].mxu0
    %v6933 = vadd.f32 0.0, %v6932
    %6934 = vmatprep.mubr.f32.mxu0 0.0
    %6935 = vmatmul.mubr.f32.gmra.mrb[0].mxu0 %v6700
    %v6936 = vpop.f32.mrb[0].mxu0
    %v6937 = vadd.f32 0.0, %v6936
    %v6938 = vpop.f32.mrb[0].mxu0
    %v6939 = vadd.f32 0.0, %v6938
    %6940 = vmatprep.mubr.f32.mxu0 0.0
    %6941 = vmatmul.mubr.f32.gmra.mrb[0].mxu0 %v6703
    %v6942 = vpop.f32.mrb[0].mxu0
    %v6943 = vadd.f32 0.0, %v6942
    %v6944 = vpop.f32.mrb[0].mxu0
    %v6945 = vadd.f32 0.0, %v6944
    %6946 = vmatprep.mubr.f32.mxu0 0.0
    %6947 = vmatmul.mubr.f32.gmra.mrb[0].mxu0 %v6706
    %v6948 = vpop.f32.mrb[0].mxu0
    %v6949 = vadd.f32 0.0, %v6948
    %v6950 = vpop.f32.mrb[0].mxu0
    %v6951 = vadd.f32 0.0, %v6950
    %6952 = vmatprep.mubr.f32.mxu0 0.0
    %6953 = vmatmul.mubr.f32.gmra.mrb[0].mxu0 %v6709
    %v6954 = vpop.f32.mrb[0].mxu0
    %v6955 = vadd.f32 0.0, %v6954
    %v6956 = vpop.f32.mrb[0].mxu0
    %v6957 = vadd.f32 0.0, %v6956
    %6958 = vmatprep.mubr.f32.mxu0 0.0
    %6959 = vmatmul.mubr.f32.gmra.mrb[0].mxu0 %v6712
    %v6960 = vpop.f32.mrb[0].mxu0
    %v6961 = vadd.f32 0.0, %v6960
    %v6962 = vpop.f32.mrb[0].mxu0
    %v6963 = vadd.f32 0.0, %v6962
    %6964 = vmatprep.mubr.f32.mxu0 0.0
    %6965 = vmatmul.mubr.f32.gmra.mrb[0].mxu0 %v6715
    %v6966 = vpop.f32.mrb[0].mxu0
    %v6967 = vadd.f32 0.0, %v6966
    %v6968 = vpop.f32.mrb[0].mxu0
    %v6969 = vadd.f32 0.0, %v6968
    %6970 = vmatprep.mubr.f32.mxu0 0.0
    %6971 = vmatmul.mubr.f32.gmra.mrb[0].mxu0 %v6718
    %v6972 = vpop.f32.mrb[0].mxu0
    %v6973 = vadd.f32 0.0, %v6972
    %v6974 = vpop.f32.mrb[0].mxu0
    %v6975 = vadd.f32 0.0, %v6974
    %6976 = vdwg.mxu0
    %6977 = vmatprep.subr.mxu0 %v6622
    %6978 = vmatpush1.msra.mxu0 %v6621
    %6979 = vmatprep.subr.mxu0 0.0
    %6980 = vmatpush1.msra.mxu0 0.0
    %6981 = vmatprep.subr.mxu0 0.0
    %6982 = vmatpush1.msra.mxu0 0.0
    %6983 = vmatprep.subr.mxu0 0.0
    %6984 = vmatpush1.msra.mxu0 0.0
    %6985 = vmatprep.subr.mxu0 0.0
    %6986 = vmatpush1.msra.mxu0 0.0
    %6987 = vmatprep.subr.mxu0 0.0
    %6988 = vmatpush1.msra.mxu0 0.0
    %6989 = vmatprep.subr.mxu0 0.0
    %6990 = vmatpush1.msra.mxu0 0.0
    %6991 = vmatprep.subr.mxu0 0.0
    %6992 = vmatpush1.msra.mxu0 0.0
    %6993 = vmatprep.subr.mxu0 0.0
    %6994 = vmatpush1.msra.mxu0 0.0
    %6995 = vmatprep.subr.mxu0 0.0
    %6996 = vmatpush1.msra.mxu0 0.0
    %6997 = vmatprep.subr.mxu0 0.0
    %6998 = vmatpush1.msra.mxu0 0.0
    %6999 = vmatprep.subr.mxu0 0.0
    %7000 = vmatpush1.msra.mxu0 0.0
    %7001 = vmatprep.subr.mxu0 0.0
    %7002 = vmatpush1.msra.mxu0 0.0
    %7003 = vmatprep.subr.mxu0 0.0
    %7004 = vmatpush1.msra.mxu0 0.0
    %7005 = vmatprep.subr.mxu0 0.0
    %7006 = vmatpush1.msra.mxu0 0.0
    %7007 = vmatprep.subr.mxu0 0.0
    %7008 = vmatpush1.msra.mxu0 0.0
    %7009 = vmatprep.subr.mxu0 0.0
    %7010 = vmatpush1.msra.mxu0 0.0
    %7011 = vmatprep.subr.mxu0 0.0
    %7012 = vmatpush1.msra.mxu0 0.0
    %7013 = vmatprep.subr.mxu0 0.0
    %7014 = vmatpush1.msra.mxu0 0.0
    %7015 = vmatprep.subr.mxu0 0.0
    %7016 = vmatpush1.msra.mxu0 0.0
    %7017 = vmatprep.subr.mxu0 0.0
    %7018 = vmatpush1.msra.mxu0 0.0
    %7019 = vmatprep.subr.mxu0 0.0
    %7020 = vmatpush1.msra.mxu0 0.0
    %7021 = vmatprep.subr.mxu0 0.0
    %7022 = vmatpush1.msra.mxu0 0.0
    %7023 = vmatprep.subr.mxu0 0.0
    %7024 = vmatpush1.msra.mxu0 0.0
    %7025 = vmatprep.subr.mxu0 0.0
    %7026 = vmatpush1.msra.mxu0 0.0
    %7027 = vmatprep.subr.mxu0 0.0
    %7028 = vmatpush1.msra.mxu0 0.0
    %7029 = vmatprep.subr.mxu0 0.0
    %7030 = vmatpush1.msra.mxu0 0.0
    %7031 = vmatprep.subr.mxu0 0.0
    %7032 = vmatpush1.msra.mxu0 0.0
    %7033 = vmatprep.subr.mxu0 0.0
    %7034 = vmatpush1.msra.mxu0 0.0
    %7035 = vmatprep.subr.mxu0 0.0
    %7036 = vmatpush1.msra.mxu0 0.0
    %7037 = vmatprep.subr.mxu0 0.0
    %7038 = vmatpush1.msra.mxu0 0.0
    %7039 = vmatprep.subr.mxu0 0.0
    %7040 = vmatpush1.msra.mxu0 0.0
    %7041 = vmatprep.mubr.f32.mxu0 0.0
    %7042 = vmatmul.mubr.f32.gmra.mrb[0].mxu0 %v6625
    %v7043 = vpop.f32.mrb[0].mxu0
    %v7044 = vadd.f32 0.0, %v7043
    %v7045 = vpop.f32.mrb[0].mxu0
    %v7046 = vadd.f32 0.0, %v7045
    %7047 = vmatprep.mubr.f32.mxu0 0.0
    %7048 = vmatmul.mubr.f32.gmra.mrb[0].mxu0 %v6628
    %v7049 = vpop.f32.mrb[0].mxu0
    %v7050 = vadd.f32 0.0, %v7049
    %v7051 = vpop.f32.mrb[0].mxu0
    %v7052 = vadd.f32 0.0, %v7051
    %7053 = vmatprep.mubr.f32.mxu0 0.0
    %7054 = vmatmul.mubr.f32.gmra.mrb[0].mxu0 %v6631
    %v7055 = vpop.f32.mrb[0].mxu0
    %v7056 = vadd.f32 0.0, %v7055
    %v7057 = vpop.f32.mrb[0].mxu0
    %v7058 = vadd.f32 0.0, %v7057
    %7059 = vmatprep.mubr.f32.mxu0 0.0
    %7060 = vmatmul.mubr.f32.gmra.mrb[0].mxu0 %v6634
    %v7061 = vpop.f32.mrb[0].mxu0
    %v7062 = vadd.f32 0.0, %v7061
    %v7063 = vpop.f32.mrb[0].mxu0
    %v7064 = vadd.f32 0.0, %v7063
    %7065 = vmatprep.mubr.f32.mxu0 0.0
    %7066 = vmatmul.mubr.f32.gmra.mrb[0].mxu0 %v6637
    %v7067 = vpop.f32.mrb[0].mxu0
    %v7068 = vadd.f32 0.0, %v7067
    %v7069 = vpop.f32.mrb[0].mxu0
    %v7070 = vadd.f32 0.0, %v7069
    %7071 = vmatprep.mubr.f32.mxu0 0.0
    %7072 = vmatmul.mubr.f32.gmra.mrb[0].mxu0 %v6640
    %v7073 = vpop.f32.mrb[0].mxu0
    %v7074 = vadd.f32 0.0, %v7073
    %v7075 = vpop.f32.mrb[0].mxu0
    %v7076 = vadd.f32 0.0, %v7075
    %7077 = vmatprep.mubr.f32.mxu0 0.0
    %7078 = vmatmul.mubr.f32.gmra.mrb[0].mxu0 %v6643
    %v7079 = vpop.f32.mrb[0].mxu0
    %v7080 = vadd.f32 0.0, %v7079
    %v7081 = vpop.f32.mrb[0].mxu0
    %v7082 = vadd.f32 0.0, %v7081
    %7083 = vmatprep.mubr.f32.mxu0 0.0
    %7084 = vmatmul.mubr.f32.gmra.mrb[0].mxu0 %v6646
    %v7085 = vpop.f32.mrb[0].mxu0
    %v7086 = vadd.f32 0.0, %v7085
    %v7087 = vpop.f32.mrb[0].mxu0
    %v7088 = vadd.f32 0.0, %v7087
    %7089 = vmatprep.mubr.f32.mxu0 0.0
    %7090 = vmatmul.mubr.f32.gmra.mrb[0].mxu0 %v6649
    %v7091 = vpop.f32.mrb[0].mxu0
    %v7092 = vadd.f32 0.0, %v7091
    %v7093 = vpop.f32.mrb[0].mxu0
    %v7094 = vadd.f32 0.0, %v7093
    %7095 = vmatprep.mubr.f32.mxu0 0.0
    %7096 = vmatmul.mubr.f32.gmra.mrb[0].mxu0 %v6652
    %v7097 = vpop.f32.mrb[0].mxu0
    %v7098 = vadd.f32 0.0, %v7097
    %v7099 = vpop.f32.mrb[0].mxu0
    %v7100 = vadd.f32 0.0, %v7099
    %7101 = vmatprep.mubr.f32.mxu0 0.0
    %7102 = vmatmul.mubr.f32.gmra.mrb[0].mxu0 %v6655
    %v7103 = vpop.f32.mrb[0].mxu0
    %v7104 = vadd.f32 0.0, %v7103
    %v7105 = vpop.f32.mrb[0].mxu0
    %v7106 = vadd.f32 0.0, %v7105
    %7107 = vmatprep.mubr.f32.mxu0 0.0
    %7108 = vmatmul.mubr.f32.gmra.mrb[0].mxu0 %v6658
    %v7109 = vpop.f32.mrb[0].mxu0
    %v7110 = vadd.f32 0.0, %v7109
    %v7111 = vpop.f32.mrb[0].mxu0
    %v7112 = vadd.f32 0.0, %v7111
    %7113 = vmatprep.mubr.f32.mxu0 0.0
    %7114 = vmatmul.mubr.f32.gmra.mrb[0].mxu0 %v6661
    %v7115 = vpop.f32.mrb[0].mxu0
    %v7116 = vadd.f32 0.0, %v7115
    %v7117 = vpop.f32.mrb[0].mxu0
    %v7118 = vadd.f32 0.0, %v7117
    %7119 = vmatprep.mubr.f32.mxu0 0.0
    %7120 = vmatmul.mubr.f32.gmra.mrb[0].mxu0 %v6664
    %v7121 = vpop.f32.mrb[0].mxu0
    %v7122 = vadd.f32 0.0, %v7121
    %v7123 = vpop.f32.mrb[0].mxu0
    %v7124 = vadd.f32 0.0, %v7123
    %7125 = vmatprep.mubr.f32.mxu0 0.0
    %7126 = vmatmul.mubr.f32.gmra.mrb[0].mxu0 %v6667
    %v7127 = vpop.f32.mrb[0].mxu0
    %v7128 = vadd.f32 0.0, %v7127
    %v7129 = vpop.f32.mrb[0].mxu0
    %v7130 = vadd.f32 0.0, %v7129
    %7131 = vmatprep.mubr.f32.mxu0 0.0
    %7132 = vmatmul.mubr.f32.gmra.mrb[0].mxu0 %v6670
    %v7133 = vpop.f32.mrb[0].mxu0
    %v7134 = vadd.f32 0.0, %v7133
    %v7135 = vpop.f32.mrb[0].mxu0
    %v7136 = vadd.f32 0.0, %v7135
    %7137 = vmatprep.mubr.f32.mxu0 0.0
    %7138 = vmatmul.mubr.f32.gmra.mrb[0].mxu0 %v6673
    %v7139 = vpop.f32.mrb[0].mxu0
    %v7140 = vadd.f32 0.0, %v7139
    %v7141 = vpop.f32.mrb[0].mxu0
    %v7142 = vadd.f32 0.0, %v7141
    %7143 = vmatprep.mubr.f32.mxu0 0.0
    %7144 = vmatmul.mubr.f32.gmra.mrb[0].mxu0 %v6676
    %v7145 = vpop.f32.mrb[0].mxu0
    %v7146 = vadd.f32 0.0, %v7145
    %v7147 = vpop.f32.mrb[0].mxu0
    %v7148 = vadd.f32 0.0, %v7147
    %7149 = vmatprep.mubr.f32.mxu0 0.0
    %7150 = vmatmul.mubr.f32.gmra.mrb[0].mxu0 %v6679
    %v7151 = vpop.f32.mrb[0].mxu0
    %v7152 = vadd.f32 0.0, %v7151
    %v7153 = vpop.f32.mrb[0].mxu0
    %v7154 = vadd.f32 0.0, %v7153
    %7155 = vmatprep.mubr.f32.mxu0 0.0
    %7156 = vmatmul.mubr.f32.gmra.mrb[0].mxu0 %v6682
    %v7157 = vpop.f32.mrb[0].mxu0
    %v7158 = vadd.f32 0.0, %v7157
    %v7159 = vpop.f32.mrb[0].mxu0
    %v7160 = vadd.f32 0.0, %v7159
    %7161 = vmatprep.mubr.f32.mxu0 0.0
    %7162 = vmatmul.mubr.f32.gmra.mrb[0].mxu0 %v6685
    %v7163 = vpop.f32.mrb[0].mxu0
    %v7164 = vadd.f32 0.0, %v7163
    %v7165 = vpop.f32.mrb[0].mxu0
    %v7166 = vadd.f32 0.0, %v7165
    %7167 = vmatprep.mubr.f32.mxu0 0.0
    %7168 = vmatmul.mubr.f32.gmra.mrb[0].mxu0 %v6688
    %v7169 = vpop.f32.mrb[0].mxu0
    %v7170 = vadd.f32 0.0, %v7169
    %v7171 = vpop.f32.mrb[0].mxu0
    %v7172 = vadd.f32 0.0, %v7171
    %7173 = vmatprep.mubr.f32.mxu0 0.0
    %7174 = vmatmul.mubr.f32.gmra.mrb[0].mxu0 %v6691
    %v7175 = vpop.f32.mrb[0].mxu0
    %v7176 = vadd.f32 0.0, %v7175
    %v7177 = vpop.f32.mrb[0].mxu0
    %v7178 = vadd.f32 0.0, %v7177
    %7179 = vmatprep.mubr.f32.mxu0 0.0
    %7180 = vmatmul.mubr.f32.gmra.mrb[0].mxu0 %v6694
    %v7181 = vpop.f32.mrb[0].mxu0
    %v7182 = vadd.f32 0.0, %v7181
    %v7183 = vpop.f32.mrb[0].mxu0
    %v7184 = vadd.f32 0.0, %v7183
    %7185 = vmatprep.mubr.f32.mxu0 0.0
    %7186 = vmatmul.mubr.f32.gmra.mrb[0].mxu0 %v6697
    %v7187 = vpop.f32.mrb[0].mxu0
    %v7188 = vadd.f32 0.0, %v7187
    %v7189 = vpop.f32.mrb[0].mxu0
    %v7190 = vadd.f32 0.0, %v7189
    %7191 = vmatprep.mubr.f32.mxu0 0.0
    %7192 = vmatmul.mubr.f32.gmra.mrb[0].mxu0 %v6700
    %v7193 = vpop.f32.mrb[0].mxu0
    %v7194 = vadd.f32 0.0, %v7193
    %v7195 = vpop.f32.mrb[0].mxu0
    %v7196 = vadd.f32 0.0, %v7195
    %7197 = vmatprep.mubr.f32.mxu0 0.0
    %7198 = vmatmul.mubr.f32.gmra.mrb[0].mxu0 %v6703
    %v7199 = vpop.f32.mrb[0].mxu0
    %v7200 = vadd.f32 0.0, %v7199
    %v7201 = vpop.f32.mrb[0].mxu0
    %v7202 = vadd.f32 0.0, %v7201
    %7203 = vmatprep.mubr.f32.mxu0 0.0
    %7204 = vmatmul.mubr.f32.gmra.mrb[0].mxu0 %v6706
    %v7205 = vpop.f32.mrb[0].mxu0
    %v7206 = vadd.f32 0.0, %v7205
    %v7207 = vpop.f32.mrb[0].mxu0
    %v7208 = vadd.f32 0.0, %v7207
    %7209 = vmatprep.mubr.f32.mxu0 0.0
    %7210 = vmatmul.mubr.f32.gmra.mrb[0].mxu0 %v6709
    %v7211 = vpop.f32.mrb[0].mxu0
    %v7212 = vadd.f32 0.0, %v7211
    %v7213 = vpop.f32.mrb[0].mxu0
    %v7214 = vadd.f32 0.0, %v7213
    %7215 = vmatprep.mubr.f32.mxu0 0.0
    %7216 = vmatmul.mubr.f32.gmra.mrb[0].mxu0 %v6712
    %v7217 = vpop.f32.mrb[0].mxu0
    %v7218 = vadd.f32 0.0, %v7217
    %v7219 = vpop.f32.mrb[0].mxu0
    %v7220 = vadd.f32 0.0, %v7219
    %7221 = vmatprep.mubr.f32.mxu0 0.0
    %7222 = vmatmul.mubr.f32.gmra.mrb[0].mxu0 %v6715
    %v7223 = vpop.f32.mrb[0].mxu0
    %v7224 = vadd.f32 0.0, %v7223
    %v7225 = vpop.f32.mrb[0].mxu0
    %v7226 = vadd.f32 0.0, %v7225
    %7227 = vmatprep.mubr.f32.mxu0 0.0
    %7228 = vmatmul.mubr.f32.gmra.mrb[0].mxu0 %v6718
    %v7229 = vpop.f32.mrb[0].mxu0
    %v7230 = vadd.f32 0.0, %v7229
    %v7231 = vpop.f32.mrb[0].mxu0
    %v7232 = vadd.f32 0.0, %v7231
    %7233 = vdwg.mxu0
    %v7234 = vpack.c.bf16 %v5056, %v5056
    %v7235 = vpack.c.bf16 %v5062, %v5062
    %v7236 = vpack.c.bf16 %v5068, %v5068
    %v7237 = vpack.c.bf16 %v5074, %v5074
    %v7238 = vpack.c.bf16 %v5080, %v5080
    %v7239 = vpack.c.bf16 %v5086, %v5086
    %v7240 = vpack.c.bf16 %v5092, %v5092
    %v7241 = vpack.c.bf16 %v5098, %v5098
    %v7242 = vpack.c.bf16 %v5104, %v5104
    %v7243 = vpack.c.bf16 %v5110, %v5110
    %v7244 = vpack.c.bf16 %v5116, %v5116
    %v7245 = vpack.c.bf16 %v5122, %v5122
    %v7246 = vpack.c.bf16 %v5128, %v5128
    %v7247 = vpack.c.bf16 %v5134, %v5134
    %v7248 = vpack.c.bf16 %v5140, %v5140
    %v7249 = vpack.c.bf16 %v5146, %v5146
    %v7250 = vpack.c.bf16 %v5152, %v5152
    %v7251 = vpack.c.bf16 %v5158, %v5158
    %v7252 = vpack.c.bf16 %v5164, %v5164
    %v7253 = vpack.c.bf16 %v5170, %v5170
    %v7254 = vpack.c.bf16 %v5176, %v5176
    %v7255 = vpack.c.bf16 %v5182, %v5182
    %v7256 = vpack.c.bf16 %v5188, %v5188
    %v7257 = vpack.c.bf16 %v5194, %v5194
    %v7258 = vpack.c.bf16 %v5200, %v5200
    %v7259 = vpack.c.bf16 %v5206, %v5206
    %v7260 = vpack.c.bf16 %v5212, %v5212
    %v7261 = vpack.c.bf16 %v5218, %v5218
    %v7262 = vpack.c.bf16 %v5224, %v5224
    %v7263 = vpack.c.bf16 %v5230, %v5230
    %v7264 = vpack.c.bf16 %v5236, %v5236
    %v7265 = vpack.c.bf16 %v5242, %v5242
    %v7266 = vpack.c.bf16 %v5248, %v5248
    %v7267 = vpack.c.bf16 %v5254, %v5254
    %v7268 = vpack.c.bf16 %v5260, %v5260
    %v7269 = vpack.c.bf16 %v5266, %v5266
    %v7270 = vpack.c.bf16 %v5272, %v5272
    %v7271 = vpack.c.bf16 %v5278, %v5278
    %v7272 = vpack.c.bf16 %v5284, %v5284
    %v7273 = vpack.c.bf16 %v5290, %v5290
    %v7274 = vpack.c.bf16 %v5296, %v5296
    %v7275 = vpack.c.bf16 %v5302, %v5302
    %v7276 = vpack.c.bf16 %v5308, %v5308
    %v7277 = vpack.c.bf16 %v5314, %v5314
    %v7278 = vpack.c.bf16 %v5320, %v5320
    %v7279 = vpack.c.bf16 %v5326, %v5326
    %v7280 = vpack.c.bf16 %v5332, %v5332
    %v7281 = vpack.c.bf16 %v5338, %v5338
    %v7282 = vpack.c.bf16 %v5344, %v5344
    %v7283 = vpack.c.bf16 %v5350, %v5350
    %v7284 = vpack.c.bf16 %v5356, %v5356
    %v7285 = vpack.c.bf16 %v5362, %v5362
    %v7286 = vpack.c.bf16 %v5368, %v5368
    %v7287 = vpack.c.bf16 %v5374, %v5374
    %v7288 = vpack.c.bf16 %v5380, %v5380
    %v7289 = vpack.c.bf16 %v5386, %v5386
    %v7290 = vpack.c.bf16 %v5392, %v5392
    %v7291 = vpack.c.bf16 %v5398, %v5398
    %v7292 = vpack.c.bf16 %v5404, %v5404
    %v7293 = vpack.c.bf16 %v5410, %v5410
    %v7294 = vpack.c.bf16 %v5416, %v5416
    %v7295 = vpack.c.bf16 %v5422, %v5422
    %v7296 = vpack.c.bf16 %v5428, %v5428
    %v7297 = vpack.c.bf16 %v5434, %v5434
    %v7298 = vpack.c.bf16 %v5440, %v5440
    %v7299 = vpack.c.bf16 %v5446, %v5446
    %v7300 = vpack.c.bf16 %v5452, %v5452
    %v7301 = vpack.c.bf16 %v5458, %v5458
    %v7302 = vpack.c.bf16 %v5464, %v5464
    %v7303 = vpack.c.bf16 %v5470, %v5470
    %v7304 = vpack.c.bf16 %v5476, %v5476
    %v7305 = vpack.c.bf16 %v5482, %v5482
    %v7306 = vpack.c.bf16 %v5488, %v5488
    %v7307 = vpack.c.bf16 %v5494, %v5494
    %v7308 = vpack.c.bf16 %v5500, %v5500
    %v7309 = vpack.c.bf16 %v5506, %v5506
    %v7310 = vpack.c.bf16 %v5512, %v5512
    %v7311 = vpack.c.bf16 %v5518, %v5518
    %v7312 = vpack.c.bf16 %v5524, %v5524
    %v7313 = vpack.c.bf16 %v5530, %v5530
    %v7314 = vpack.c.bf16 %v5536, %v5536
    %v7315 = vpack.c.bf16 %v5542, %v5542
    %v7316 = vpack.c.bf16 %v5548, %v5548
    %v7317 = vpack.c.bf16 %v5554, %v5554
    %v7318 = vpack.c.bf16 %v5560, %v5560
    %v7319 = vpack.c.bf16 %v5566, %v5566
    %v7320 = vpack.c.bf16 %v5572, %v5572
    %v7321 = vpack.c.bf16 %v5578, %v5578
    %v7322 = vpack.c.bf16 %v5584, %v5584
    %v7323 = vpack.c.bf16 %v5590, %v5590
    %v7324 = vpack.c.bf16 %v5596, %v5596
    %v7325 = vpack.c.bf16 %v5602, %v5602
    %v7326 = vpack.c.bf16 %v5608, %v5608
    %v7327 = vpack.c.bf16 %v5614, %v5614
    %v7328 = vpack.c.bf16 %v5620, %v5620
    %v7329 = vpack.c.bf16 %v5626, %v5626
    %v7330 = vpack.c.bf16 %v5632, %v5632
    %v7331 = vpack.c.bf16 %v5638, %v5638
    %v7332 = vpack.c.bf16 %v5644, %v5644
    %v7333 = vpack.c.bf16 %v5650, %v5650
    %v7334 = vpack.c.bf16 %v5656, %v5656
    %v7335 = vpack.c.bf16 %v5662, %v5662
    %v7336 = vpack.c.bf16 %v5668, %v5668
    %v7337 = vpack.c.bf16 %v5674, %v5674
    %v7338 = vpack.c.bf16 %v5680, %v5680
    %v7339 = vpack.c.bf16 %v5686, %v5686
    %v7340 = vpack.c.bf16 %v5692, %v5692
    %v7341 = vpack.c.bf16 %v5698, %v5698
    %v7342 = vpack.c.bf16 %v5704, %v5704
    %v7343 = vpack.c.bf16 %v5710, %v5710
    %v7344 = vpack.c.bf16 %v5716, %v5716
    %v7345 = vpack.c.bf16 %v5722, %v5722
    %v7346 = vpack.c.bf16 %v5728, %v5728
    %v7347 = vpack.c.bf16 %v5734, %v5734
    %v7348 = vpack.c.bf16 %v5740, %v5740
    %v7349 = vpack.c.bf16 %v5746, %v5746
    %v7350 = vpack.c.bf16 %v5752, %v5752
    %v7351 = vpack.c.bf16 %v5758, %v5758
    %v7352 = vpack.c.bf16 %v5764, %v5764
    %v7353 = vpack.c.bf16 %v5770, %v5770
    %v7354 = vpack.c.bf16 %v5776, %v5776
    %v7355 = vpack.c.bf16 %v5782, %v5782
    %v7356 = vpack.c.bf16 %v5788, %v5788
    %v7357 = vpack.c.bf16 %v5794, %v5794
    %v7358 = vpack.c.bf16 %v5800, %v5800
    %v7359 = vpack.c.bf16 %v5806, %v5806
    %v7360 = vpack.c.bf16 %v5812, %v5812
    %v7361 = vpack.c.bf16 %v5818, %v5818
    %v7362 = vpack.c.bf16 %v5824, %v5824
    %v7363 = vpack.c.bf16 %v5830, %v5830
    %v7364 = vpack.c.bf16 %v5836, %v5836
    %v7365 = vpack.c.bf16 %v5842, %v5842
    %v7366 = vpack.c.bf16 %v5848, %v5848
    %v7367 = vpack.c.bf16 %v5854, %v5854
    %v7368 = vpack.c.bf16 %v5860, %v5860
    %v7369 = vpack.c.bf16 %v5866, %v5866
    %v7370 = vpack.c.bf16 %v5872, %v5872
    %v7371 = vpack.c.bf16 %v5878, %v5878
    %v7372 = vpack.c.bf16 %v5884, %v5884
    %v7373 = vpack.c.bf16 %v5890, %v5890
    %v7374 = vpack.c.bf16 %v5896, %v5896
    %v7375 = vpack.c.bf16 %v5902, %v5902
    %v7376 = vpack.c.bf16 %v5908, %v5908
    %v7377 = vpack.c.bf16 %v5914, %v5914
    %v7378 = vpack.c.bf16 %v5920, %v5920
    %v7379 = vpack.c.bf16 %v5926, %v5926
    %v7380 = vpack.c.bf16 %v5932, %v5932
    %v7381 = vpack.c.bf16 %v5938, %v5938
    %v7382 = vpack.c.bf16 %v5944, %v5944
    %v7383 = vpack.c.bf16 %v5950, %v5950
    %v7384 = vpack.c.bf16 %v5956, %v5956
    %v7385 = vpack.c.bf16 %v5962, %v5962
    %v7386 = vpack.c.bf16 %v5968, %v5968
    %v7387 = vpack.c.bf16 %v5974, %v5974
    %v7388 = vpack.c.bf16 %v5980, %v5980
    %v7389 = vpack.c.bf16 %v5986, %v5986
    %v7390 = vpack.c.bf16 %v5992, %v5992
    %v7391 = vpack.c.bf16 %v5998, %v5998
    %v7392 = vpack.c.bf16 %v6004, %v6004
    %v7393 = vpack.c.bf16 %v6010, %v6010
    %v7394 = vpack.c.bf16 %v6016, %v6016
    %v7395 = vpack.c.bf16 %v6022, %v6022
    %v7396 = vpack.c.bf16 %v6028, %v6028
    %v7397 = vpack.c.bf16 %v6034, %v6034
    %v7398 = vpack.c.bf16 %v6040, %v6040
    %v7399 = vpack.c.bf16 %v6046, %v6046
    %v7400 = vpack.c.bf16 %v6052, %v6052
    %v7401 = vpack.c.bf16 %v6058, %v6058
    %v7402 = vpack.c.bf16 %v6064, %v6064
    %v7403 = vpack.c.bf16 %v6070, %v6070
    %v7404 = vpack.c.bf16 %v6076, %v6076
    %v7405 = vpack.c.bf16 %v6082, %v6082
    %v7406 = vpack.c.bf16 %v6088, %v6088
    %v7407 = vpack.c.bf16 %v6094, %v6094
    %v7408 = vpack.c.bf16 %v6100, %v6100
    %v7409 = vpack.c.bf16 %v6106, %v6106
    %v7410 = vpack.c.bf16 %v6112, %v6112
    %v7411 = vpack.c.bf16 %v6118, %v6118
    %v7412 = vpack.c.bf16 %v6124, %v6124
    %v7413 = vpack.c.bf16 %v6130, %v6130
    %v7414 = vpack.c.bf16 %v6136, %v6136
    %v7415 = vpack.c.bf16 %v6142, %v6142
    %v7416 = vpack.c.bf16 %v6148, %v6148
    %v7417 = vpack.c.bf16 %v6154, %v6154
    %v7418 = vpack.c.bf16 %v6160, %v6160
    %v7419 = vpack.c.bf16 %v6166, %v6166
    %v7420 = vpack.c.bf16 %v6172, %v6172
    %v7421 = vpack.c.bf16 %v6178, %v6178
    %v7422 = vpack.c.bf16 %v6184, %v6184
    %v7423 = vpack.c.bf16 %v6190, %v6190
    %v7424 = vpack.c.bf16 %v6196, %v6196
    %v7425 = vpack.c.bf16 %v6202, %v6202
    %v7426 = vpack.c.bf16 %v6208, %v6208
    %v7427 = vpack.c.bf16 %v6214, %v6214
    %v7428 = vpack.c.bf16 %v6220, %v6220
    %v7429 = vpack.c.bf16 %v6226, %v6226
    %v7430 = vpack.c.bf16 %v6232, %v6232
    %v7431 = vpack.c.bf16 %v6238, %v6238
    %v7432 = vpack.c.bf16 %v6244, %v6244
    %v7433 = vpack.c.bf16 %v6250, %v6250
    %v7434 = vpack.c.bf16 %v6256, %v6256
    %v7435 = vpack.c.bf16 %v6262, %v6262
    %v7436 = vpack.c.bf16 %v6268, %v6268
    %v7437 = vpack.c.bf16 %v6274, %v6274
    %v7438 = vpack.c.bf16 %v6280, %v6280
    %v7439 = vpack.c.bf16 %v6286, %v6286
    %v7440 = vpack.c.bf16 %v6292, %v6292
    %v7441 = vpack.c.bf16 %v6298, %v6298
    %v7442 = vpack.c.bf16 %v6304, %v6304
    %v7443 = vpack.c.bf16 %v6310, %v6310
    %v7444 = vpack.c.bf16 %v6316, %v6316
    %v7445 = vpack.c.bf16 %v6322, %v6322
    %v7446 = vpack.c.bf16 %v6328, %v6328
    %v7447 = vpack.c.bf16 %v6334, %v6334
    %v7448 = vpack.c.bf16 %v6340, %v6340
    %v7449 = vpack.c.bf16 %v6346, %v6346
    %v7450 = vpack.c.bf16 %v6352, %v6352
    %v7451 = vpack.c.bf16 %v6358, %v6358
    %v7452 = vpack.c.bf16 %v6364, %v6364
    %v7453 = vpack.c.bf16 %v6370, %v6370
    %v7454 = vpack.c.bf16 %v6376, %v6376
    %v7455 = vpack.c.bf16 %v6382, %v6382
    %v7456 = vpack.c.bf16 %v6388, %v6388
    %v7457 = vpack.c.bf16 %v6394, %v6394
    %v7458 = vpack.c.bf16 %v6400, %v6400
    %v7459 = vpack.c.bf16 %v6406, %v6406
    %v7460 = vpack.c.bf16 %v6412, %v6412
    %v7461 = vpack.c.bf16 %v6418, %v6418
    %v7462 = vpack.c.bf16 %v6424, %v6424
    %v7463 = vpack.c.bf16 %v6430, %v6430
    %v7464 = vpack.c.bf16 %v6436, %v6436
    %v7465 = vpack.c.bf16 %v6442, %v6442
    %v7466 = vpack.c.bf16 %v6448, %v6448
    %v7467 = vpack.c.bf16 %v6454, %v6454
    %v7468 = vpack.c.bf16 %v6460, %v6460
    %v7469 = vpack.c.bf16 %v6466, %v6466
    %v7470 = vpack.c.bf16 %v6472, %v6472
    %v7471 = vpack.c.bf16 %v6478, %v6478
    %v7472 = vpack.c.bf16 %v6484, %v6484
    %v7473 = vpack.c.bf16 %v6490, %v6490
    %v7474 = vpack.c.bf16 %v6496, %v6496
    %v7475 = vpack.c.bf16 %v6502, %v6502
    %v7476 = vpack.c.bf16 %v6508, %v6508
    %v7477 = vpack.c.bf16 %v6514, %v6514
    %v7478 = vpack.c.bf16 %v6520, %v6520
    %v7479 = vpack.c.bf16 %v6526, %v6526
    %v7480 = vpack.c.bf16 %v6532, %v6532
    %v7481 = vpack.c.bf16 %v6538, %v6538
    %v7482 = vpack.c.bf16 %v6544, %v6544
    %v7483 = vpack.c.bf16 %v6550, %v6550
    %v7484 = vpack.c.bf16 %v6556, %v6556
    %v7485 = vpack.c.bf16 %v6562, %v6562
    %v7486 = vpack.c.bf16 %v6568, %v6568
    %v7487 = vpack.c.bf16 %v6574, %v6574
    %v7488 = vpack.c.bf16 %v6580, %v6580
    %v7489 = vpack.c.bf16 %v6586, %v6586
    %v7490 = vld [vmem:[#allocation10] sm:$0xff]
    %v7491 = vld [vmem:[#allocation10 + $0x8] sm:$0xff]
    %v7492 = vld [vmem:[#allocation10 + $0x10] sm:$0xff]
    %v7493 = vld [vmem:[#allocation10 + $0x18] sm:$0xff]
    %v7494 = vld [vmem:[#allocation10 + $0x20] sm:$0xff]
    %v7495 = vld [vmem:[#allocation10 + $0x28] sm:$0xff]
    %v7496 = vld [vmem:[#allocation10 + $0x30] sm:$0xff]
    %v7497 = vld [vmem:[#allocation10 + $0x38] sm:$0xff]
    %v7498 = vld [vmem:[#allocation10 + $0x40] sm:$0xff]
    %v7499 = vld [vmem:[#allocation10 + $0x48] sm:$0xff]
    %v7500 = vld [vmem:[#allocation10 + $0x50] sm:$0xff]
    %v7501 = vld [vmem:[#allocation10 + $0x58] sm:$0xff]
    %v7502 = vld [vmem:[#allocation10 + $0x60] sm:$0xff]
    %v7503 = vld [vmem:[#allocation10 + $0x68] sm:$0xff]
    %v7504 = vld [vmem:[#allocation10 + $0x70] sm:$0xff]
    %v7505 = vld [vmem:[#allocation10 + $0x78] sm:$0xff]
    %v7762 = vunpack.c.l.b16 %v7234
    %v7763 = vunpack.c.l.b16 %v7235
    %v7764 = vunpack.c.l.b16 %v7236
    %v7765 = vunpack.c.l.b16 %v7237
    %v7766 = vunpack.c.l.b16 %v7238
    %v7767 = vunpack.c.l.b16 %v7239
    %v7768 = vunpack.c.l.b16 %v7240
    %v7769 = vunpack.c.l.b16 %v7241
    %v7770 = vunpack.c.l.b16 %v7242
    %v7771 = vunpack.c.l.b16 %v7243
    %v7772 = vunpack.c.l.b16 %v7244
    %v7773 = vunpack.c.l.b16 %v7245
    %v7774 = vunpack.c.l.b16 %v7246
    %v7775 = vunpack.c.l.b16 %v7247
    %v7776 = vunpack.c.l.b16 %v7248
    %v7777 = vunpack.c.l.b16 %v7249
    %v7778 = vunpack.c.l.b16 %v7250
    %v7779 = vunpack.c.l.b16 %v7251
    %v7780 = vunpack.c.l.b16 %v7252
    %v7781 = vunpack.c.l.b16 %v7253
    %v7782 = vunpack.c.l.b16 %v7254
    %v7783 = vunpack.c.l.b16 %v7255
    %v7784 = vunpack.c.l.b16 %v7256
    %v7785 = vunpack.c.l.b16 %v7257
    %v7786 = vunpack.c.l.b16 %v7258
    %v7787 = vunpack.c.l.b16 %v7259
    %v7788 = vunpack.c.l.b16 %v7260
    %v7789 = vunpack.c.l.b16 %v7261
    %v7790 = vunpack.c.l.b16 %v7262
    %v7791 = vunpack.c.l.b16 %v7263
    %v7792 = vunpack.c.l.b16 %v7264
    %v7793 = vunpack.c.l.b16 %v7265
    %v7794 = vunpack.c.l.b16 %v7266
    %v7795 = vunpack.c.l.b16 %v7267
    %v7796 = vunpack.c.l.b16 %v7268
    %v7797 = vunpack.c.l.b16 %v7269
    %v7798 = vunpack.c.l.b16 %v7270
    %v7799 = vunpack.c.l.b16 %v7271
    %v7800 = vunpack.c.l.b16 %v7272
    %v7801 = vunpack.c.l.b16 %v7273
    %v7802 = vunpack.c.l.b16 %v7274
    %v7803 = vunpack.c.l.b16 %v7275
    %v7804 = vunpack.c.l.b16 %v7276
    %v7805 = vunpack.c.l.b16 %v7277
    %v7806 = vunpack.c.l.b16 %v7278
    %v7807 = vunpack.c.l.b16 %v7279
    %v7808 = vunpack.c.l.b16 %v7280
    %v7809 = vunpack.c.l.b16 %v7281
    %v7810 = vunpack.c.l.b16 %v7282
    %v7811 = vunpack.c.l.b16 %v7283
    %v7812 = vunpack.c.l.b16 %v7284
    %v7813 = vunpack.c.l.b16 %v7285
    %v7814 = vunpack.c.l.b16 %v7286
    %v7815 = vunpack.c.l.b16 %v7287
    %v7816 = vunpack.c.l.b16 %v7288
    %v7817 = vunpack.c.l.b16 %v7289
    %v7818 = vunpack.c.l.b16 %v7290
    %v7819 = vunpack.c.l.b16 %v7291
    %v7820 = vunpack.c.l.b16 %v7292
    %v7821 = vunpack.c.l.b16 %v7293
    %v7822 = vunpack.c.l.b16 %v7294
    %v7823 = vunpack.c.l.b16 %v7295
    %v7824 = vunpack.c.l.b16 %v7296
    %v7825 = vunpack.c.l.b16 %v7297
    %v7826 = vunpack.c.l.b16 %v7298
    %v7827 = vunpack.c.l.b16 %v7299
    %v7828 = vunpack.c.l.b16 %v7300
    %v7829 = vunpack.c.l.b16 %v7301
    %v7830 = vunpack.c.l.b16 %v7302
    %v7831 = vunpack.c.l.b16 %v7303
    %v7832 = vunpack.c.l.b16 %v7304
    %v7833 = vunpack.c.l.b16 %v7305
    %v7834 = vunpack.c.l.b16 %v7306
    %v7835 = vunpack.c.l.b16 %v7307
    %v7836 = vunpack.c.l.b16 %v7308
    %v7837 = vunpack.c.l.b16 %v7309
    %v7838 = vunpack.c.l.b16 %v7310
    %v7839 = vunpack.c.l.b16 %v7311
    %v7840 = vunpack.c.l.b16 %v7312
    %v7841 = vunpack.c.l.b16 %v7313
    %v7842 = vunpack.c.l.b16 %v7314
    %v7843 = vunpack.c.l.b16 %v7315
    %v7844 = vunpack.c.l.b16 %v7316
    %v7845 = vunpack.c.l.b16 %v7317
    %v7846 = vunpack.c.l.b16 %v7318
    %v7847 = vunpack.c.l.b16 %v7319
    %v7848 = vunpack.c.l.b16 %v7320
    %v7849 = vunpack.c.l.b16 %v7321
    %v7850 = vunpack.c.l.b16 %v7322
    %v7851 = vunpack.c.l.b16 %v7323
    %v7852 = vunpack.c.l.b16 %v7324
    %v7853 = vunpack.c.l.b16 %v7325
    %v7854 = vunpack.c.l.b16 %v7326
    %v7855 = vunpack.c.l.b16 %v7327
    %v7856 = vunpack.c.l.b16 %v7328
    %v7857 = vunpack.c.l.b16 %v7329
    %v7858 = vunpack.c.l.b16 %v7330
    %v7859 = vunpack.c.l.b16 %v7331
    %v7860 = vunpack.c.l.b16 %v7332
    %v7861 = vunpack.c.l.b16 %v7333
    %v7862 = vunpack.c.l.b16 %v7334
    %v7863 = vunpack.c.l.b16 %v7335
    %v7864 = vunpack.c.l.b16 %v7336
    %v7865 = vunpack.c.l.b16 %v7337
    %v7866 = vunpack.c.l.b16 %v7338
    %v7867 = vunpack.c.l.b16 %v7339
    %v7868 = vunpack.c.l.b16 %v7340
    %v7869 = vunpack.c.l.b16 %v7341
    %v7870 = vunpack.c.l.b16 %v7342
    %v7871 = vunpack.c.l.b16 %v7343
    %v7872 = vunpack.c.l.b16 %v7344
    %v7873 = vunpack.c.l.b16 %v7345
    %v7874 = vunpack.c.l.b16 %v7346
    %v7875 = vunpack.c.l.b16 %v7347
    %v7876 = vunpack.c.l.b16 %v7348
    %v7877 = vunpack.c.l.b16 %v7349
    %v7878 = vunpack.c.l.b16 %v7350
    %v7879 = vunpack.c.l.b16 %v7351
    %v7880 = vunpack.c.l.b16 %v7352
    %v7881 = vunpack.c.l.b16 %v7353
    %v7882 = vunpack.c.l.b16 %v7354
    %v7883 = vunpack.c.l.b16 %v7355
    %v7884 = vunpack.c.l.b16 %v7356
    %v7885 = vunpack.c.l.b16 %v7357
    %v7886 = vunpack.c.l.b16 %v7358
    %v7887 = vunpack.c.l.b16 %v7359
    %v7888 = vunpack.c.l.b16 %v7360
    %v7889 = vunpack.c.l.b16 %v7361
    %v7890 = vunpack.c.l.b16 %v7362
    %v7891 = vunpack.c.l.b16 %v7363
    %v7892 = vunpack.c.l.b16 %v7364
    %v7893 = vunpack.c.l.b16 %v7365
    %v7894 = vunpack.c.l.b16 %v7366
    %v7895 = vunpack.c.l.b16 %v7367
    %v7896 = vunpack.c.l.b16 %v7368
    %v7897 = vunpack.c.l.b16 %v7369
    %v7898 = vunpack.c.l.b16 %v7370
    %v7899 = vunpack.c.l.b16 %v7371
    %v7900 = vunpack.c.l.b16 %v7372
    %v7901 = vunpack.c.l.b16 %v7373
    %v7902 = vunpack.c.l.b16 %v7374
    %v7903 = vunpack.c.l.b16 %v7375
    %v7904 = vunpack.c.l.b16 %v7376
    %v7905 = vunpack.c.l.b16 %v7377
    %v7906 = vunpack.c.l.b16 %v7378
    %v7907 = vunpack.c.l.b16 %v7379
    %v7908 = vunpack.c.l.b16 %v7380
    %v7909 = vunpack.c.l.b16 %v7381
    %v7910 = vunpack.c.l.b16 %v7382
    %v7911 = vunpack.c.l.b16 %v7383
    %v7912 = vunpack.c.l.b16 %v7384
    %v7913 = vunpack.c.l.b16 %v7385
    %v7914 = vunpack.c.l.b16 %v7386
    %v7915 = vunpack.c.l.b16 %v7387
    %v7916 = vunpack.c.l.b16 %v7388
    %v7917 = vunpack.c.l.b16 %v7389
    %v7918 = vunpack.c.l.b16 %v7390
    %v7919 = vunpack.c.l.b16 %v7391
    %v7920 = vunpack.c.l.b16 %v7392
    %v7921 = vunpack.c.l.b16 %v7393
    %v7922 = vunpack.c.l.b16 %v7394
    %v7923 = vunpack.c.l.b16 %v7395
    %v7924 = vunpack.c.l.b16 %v7396
    %v7925 = vunpack.c.l.b16 %v7397
    %v7926 = vunpack.c.l.b16 %v7398
    %v7927 = vunpack.c.l.b16 %v7399
    %v7928 = vunpack.c.l.b16 %v7400
    %v7929 = vunpack.c.l.b16 %v7401
    %v7930 = vunpack.c.l.b16 %v7402
    %v7931 = vunpack.c.l.b16 %v7403
    %v7932 = vunpack.c.l.b16 %v7404
    %v7933 = vunpack.c.l.b16 %v7405
    %v7934 = vunpack.c.l.b16 %v7406
    %v7935 = vunpack.c.l.b16 %v7407
    %v7936 = vunpack.c.l.b16 %v7408
    %v7937 = vunpack.c.l.b16 %v7409
    %v7938 = vunpack.c.l.b16 %v7410
    %v7939 = vunpack.c.l.b16 %v7411
    %v7940 = vunpack.c.l.b16 %v7412
    %v7941 = vunpack.c.l.b16 %v7413
    %v7942 = vunpack.c.l.b16 %v7414
    %v7943 = vunpack.c.l.b16 %v7415
    %v7944 = vunpack.c.l.b16 %v7416
    %v7945 = vunpack.c.l.b16 %v7417
    %v7946 = vunpack.c.l.b16 %v7418
    %v7947 = vunpack.c.l.b16 %v7419
    %v7948 = vunpack.c.l.b16 %v7420
    %v7949 = vunpack.c.l.b16 %v7421
    %v7950 = vunpack.c.l.b16 %v7422
    %v7951 = vunpack.c.l.b16 %v7423
    %v7952 = vunpack.c.l.b16 %v7424
    %v7953 = vunpack.c.l.b16 %v7425
    %v7954 = vunpack.c.l.b16 %v7426
    %v7955 = vunpack.c.l.b16 %v7427
    %v7956 = vunpack.c.l.b16 %v7428
    %v7957 = vunpack.c.l.b16 %v7429
    %v7958 = vunpack.c.l.b16 %v7430
    %v7959 = vunpack.c.l.b16 %v7431
    %v7960 = vunpack.c.l.b16 %v7432
    %v7961 = vunpack.c.l.b16 %v7433
    %v7962 = vunpack.c.l.b16 %v7434
    %v7963 = vunpack.c.l.b16 %v7435
    %v7964 = vunpack.c.l.b16 %v7436
    %v7965 = vunpack.c.l.b16 %v7437
    %v7966 = vunpack.c.l.b16 %v7438
    %v7967 = vunpack.c.l.b16 %v7439
    %v7968 = vunpack.c.l.b16 %v7440
    %v7969 = vunpack.c.l.b16 %v7441
    %v7970 = vunpack.c.l.b16 %v7442
    %v7971 = vunpack.c.l.b16 %v7443
    %v7972 = vunpack.c.l.b16 %v7444
    %v7973 = vunpack.c.l.b16 %v7445
    %v7974 = vunpack.c.l.b16 %v7446
    %v7975 = vunpack.c.l.b16 %v7447
    %v7976 = vunpack.c.l.b16 %v7448
    %v7977 = vunpack.c.l.b16 %v7449
    %v7978 = vunpack.c.l.b16 %v7450
    %v7979 = vunpack.c.l.b16 %v7451
    %v7980 = vunpack.c.l.b16 %v7452
    %v7981 = vunpack.c.l.b16 %v7453
    %v7982 = vunpack.c.l.b16 %v7454
    %v7983 = vunpack.c.l.b16 %v7455
    %v7984 = vunpack.c.l.b16 %v7456
    %v7985 = vunpack.c.l.b16 %v7457
    %v7986 = vunpack.c.l.b16 %v7458
    %v7987 = vunpack.c.l.b16 %v7459
    %v7988 = vunpack.c.l.b16 %v7460
    %v7989 = vunpack.c.l.b16 %v7461
    %v7990 = vunpack.c.l.b16 %v7462
    %v7991 = vunpack.c.l.b16 %v7463
    %v7992 = vunpack.c.l.b16 %v7464
    %v7993 = vunpack.c.l.b16 %v7465
    %v7994 = vunpack.c.l.b16 %v7466
    %v7995 = vunpack.c.l.b16 %v7467
    %v7996 = vunpack.c.l.b16 %v7468
    %v7997 = vunpack.c.l.b16 %v7469
    %v7998 = vunpack.c.l.b16 %v7470
    %v7999 = vunpack.c.l.b16 %v7471
    %v8000 = vunpack.c.l.b16 %v7472
    %v8001 = vunpack.c.l.b16 %v7473
    %v8002 = vunpack.c.l.b16 %v7474
    %v8003 = vunpack.c.l.b16 %v7475
    %v8004 = vunpack.c.l.b16 %v7476
    %v8005 = vunpack.c.l.b16 %v7477
    %v8006 = vunpack.c.l.b16 %v7478
    %v8007 = vunpack.c.l.b16 %v7479
    %v8008 = vunpack.c.l.b16 %v7480
    %v8009 = vunpack.c.l.b16 %v7481
    %v8010 = vunpack.c.l.b16 %v7482
    %v8011 = vunpack.c.l.b16 %v7483
    %v8012 = vunpack.c.l.b16 %v7484
    %v8013 = vunpack.c.l.b16 %v7485
    %v8014 = vunpack.c.l.b16 %v7486
    %v8015 = vunpack.c.l.b16 %v7487
    %v8016 = vunpack.c.l.b16 %v7488
    %v8017 = vunpack.c.l.b16 %v7489
    %vm8018 = vcmask 1041409
    %v8019 = vsel %vm8018, %v7763, %v7762
    %vm8020 = vcmask 1042434
    %v8021 = vsel %vm8020, %v7764, %v8019
    %vm8022 = vcmask 1043459
    %v8023 = vsel %vm8022, %v7765, %v8021
    %vm8024 = vcmask 1044484
    %v8025 = vsel %vm8024, %v7766, %v8023
    %vm8026 = vcmask 1045509
    %v8027 = vsel %vm8026, %v7767, %v8025
    %vm8028 = vcmask 1046534
    %v8029 = vsel %vm8028, %v7768, %v8027
    %vm8030 = vcmask 1047559
    %v8031 = vsel %vm8030, %v7769, %v8029
    %v8032 = vsel %vm8018, %v7771, %v7770
    %v8033 = vsel %vm8020, %v7772, %v8032
    %v8034 = vsel %vm8022, %v7773, %v8033
    %v8035 = vsel %vm8024, %v7774, %v8034
    %v8036 = vsel %vm8026, %v7775, %v8035
    %v8037 = vsel %vm8028, %v7776, %v8036
    %v8038 = vsel %vm8030, %v7777, %v8037
    %v8039 = vsel %vm8018, %v7779, %v7778
    %v8040 = vsel %vm8020, %v7780, %v8039
    %v8041 = vsel %vm8022, %v7781, %v8040
    %v8042 = vsel %vm8024, %v7782, %v8041
    %v8043 = vsel %vm8026, %v7783, %v8042
    %v8044 = vsel %vm8028, %v7784, %v8043
    %v8045 = vsel %vm8030, %v7785, %v8044
    %v8046 = vsel %vm8018, %v7787, %v7786
    %v8047 = vsel %vm8020, %v7788, %v8046
    %v8048 = vsel %vm8022, %v7789, %v8047
    %v8049 = vsel %vm8024, %v7790, %v8048
    %v8050 = vsel %vm8026, %v7791, %v8049
    %v8051 = vsel %vm8028, %v7792, %v8050
    %v8052 = vsel %vm8030, %v7793, %v8051
    %v8053 = vsel %vm8018, %v7795, %v7794
    %v8054 = vsel %vm8020, %v7796, %v8053
    %v8055 = vsel %vm8022, %v7797, %v8054
    %v8056 = vsel %vm8024, %v7798, %v8055
    %v8057 = vsel %vm8026, %v7799, %v8056
    %v8058 = vsel %vm8028, %v7800, %v8057
    %v8059 = vsel %vm8030, %v7801, %v8058
    %v8060 = vsel %vm8018, %v7803, %v7802
    %v8061 = vsel %vm8020, %v7804, %v8060
    %v8062 = vsel %vm8022, %v7805, %v8061
    %v8063 = vsel %vm8024, %v7806, %v8062
    %v8064 = vsel %vm8026, %v7807, %v8063
    %v8065 = vsel %vm8028, %v7808, %v8064
    %v8066 = vsel %vm8030, %v7809, %v8065
    %v8067 = vsel %vm8018, %v7811, %v7810
    %v8068 = vsel %vm8020, %v7812, %v8067
    %v8069 = vsel %vm8022, %v7813, %v8068
    %v8070 = vsel %vm8024, %v7814, %v8069
    %v8071 = vsel %vm8026, %v7815, %v8070
    %v8072 = vsel %vm8028, %v7816, %v8071
    %v8073 = vsel %vm8030, %v7817, %v8072
    %v8074 = vsel %vm8018, %v7819, %v7818
    %v8075 = vsel %vm8020, %v7820, %v8074
    %v8076 = vsel %vm8022, %v7821, %v8075
    %v8077 = vsel %vm8024, %v7822, %v8076
    %v8078 = vsel %vm8026, %v7823, %v8077
    %v8079 = vsel %vm8028, %v7824, %v8078
    %v8080 = vsel %vm8030, %v7825, %v8079
    %v8081 = vsel %vm8018, %v7827, %v7826
    %v8082 = vsel %vm8020, %v7828, %v8081
    %v8083 = vsel %vm8022, %v7829, %v8082
    %v8084 = vsel %vm8024, %v7830, %v8083
    %v8085 = vsel %vm8026, %v7831, %v8084
    %v8086 = vsel %vm8028, %v7832, %v8085
    %v8087 = vsel %vm8030, %v7833, %v8086
    %v8088 = vsel %vm8018, %v7835, %v7834
    %v8089 = vsel %vm8020, %v7836, %v8088
    %v8090 = vsel %vm8022, %v7837, %v8089
    %v8091 = vsel %vm8024, %v7838, %v8090
    %v8092 = vsel %vm8026, %v7839, %v8091
    %v8093 = vsel %vm8028, %v7840, %v8092
    %v8094 = vsel %vm8030, %v7841, %v8093
    %v8095 = vsel %vm8018, %v7843, %v7842
    %v8096 = vsel %vm8020, %v7844, %v8095
    %v8097 = vsel %vm8022, %v7845, %v8096
    %v8098 = vsel %vm8024, %v7846, %v8097
    %v8099 = vsel %vm8026, %v7847, %v8098
    %v8100 = vsel %vm8028, %v7848, %v8099
    %v8101 = vsel %vm8030, %v7849, %v8100
    %v8102 = vsel %vm8018, %v7851, %v7850
    %v8103 = vsel %vm8020, %v7852, %v8102
    %v8104 = vsel %vm8022, %v7853, %v8103
    %v8105 = vsel %vm8024, %v7854, %v8104
    %v8106 = vsel %vm8026, %v7855, %v8105
    %v8107 = vsel %vm8028, %v7856, %v8106
    %v8108 = vsel %vm8030, %v7857, %v8107
    %v8109 = vsel %vm8018, %v7859, %v7858
    %v8110 = vsel %vm8020, %v7860, %v8109
    %v8111 = vsel %vm8022, %v7861, %v8110
    %v8112 = vsel %vm8024, %v7862, %v8111
    %v8113 = vsel %vm8026, %v7863, %v8112
    %v8114 = vsel %vm8028, %v7864, %v8113
    %v8115 = vsel %vm8030, %v7865, %v8114
    %v8116 = vsel %vm8018, %v7867, %v7866
    %v8117 = vsel %vm8020, %v7868, %v8116
    %v8118 = vsel %vm8022, %v7869, %v8117
    %v8119 = vsel %vm8024, %v7870, %v8118
    %v8120 = vsel %vm8026, %v7871, %v8119
    %v8121 = vsel %vm8028, %v7872, %v8120
    %v8122 = vsel %vm8030, %v7873, %v8121
    %v8123 = vsel %vm8018, %v7875, %v7874
    %v8124 = vsel %vm8020, %v7876, %v8123
    %v8125 = vsel %vm8022, %v7877, %v8124
    %v8126 = vsel %vm8024, %v7878, %v8125
    %v8127 = vsel %vm8026, %v7879, %v8126
    %v8128 = vsel %vm8028, %v7880, %v8127
    %v8129 = vsel %vm8030, %v7881, %v8128
    %v8130 = vsel %vm8018, %v7883, %v7882
    %v8131 = vsel %vm8020, %v7884, %v8130
    %v8132 = vsel %vm8022, %v7885, %v8131
    %v8133 = vsel %vm8024, %v7886, %v8132
    %v8134 = vsel %vm8026, %v7887, %v8133
    %v8135 = vsel %vm8028, %v7888, %v8134
    %v8136 = vsel %vm8030, %v7889, %v8135
    %v8137 = vsel %vm8018, %v7891, %v7890
    %v8138 = vsel %vm8020, %v7892, %v8137
    %v8139 = vsel %vm8022, %v7893, %v8138
    %v8140 = vsel %vm8024, %v7894, %v8139
    %v8141 = vsel %vm8026, %v7895, %v8140
    %v8142 = vsel %vm8028, %v7896, %v8141
    %v8143 = vsel %vm8030, %v7897, %v8142
    %v8144 = vsel %vm8018, %v7899, %v7898
    %v8145 = vsel %vm8020, %v7900, %v8144
    %v8146 = vsel %vm8022, %v7901, %v8145
    %v8147 = vsel %vm8024, %v7902, %v8146
    %v8148 = vsel %vm8026, %v7903, %v8147
    %v8149 = vsel %vm8028, %v7904, %v8148
    %v8150 = vsel %vm8030, %v7905, %v8149
    %v8151 = vsel %vm8018, %v7907, %v7906
    %v8152 = vsel %vm8020, %v7908, %v8151
    %v8153 = vsel %vm8022, %v7909, %v8152
    %v8154 = vsel %vm8024, %v7910, %v8153
    %v8155 = vsel %vm8026, %v7911, %v8154
    %v8156 = vsel %vm8028, %v7912, %v8155
    %v8157 = vsel %vm8030, %v7913, %v8156
    %v8158 = vsel %vm8018, %v7915, %v7914
    %v8159 = vsel %vm8020, %v7916, %v8158
    %v8160 = vsel %vm8022, %v7917, %v8159
    %v8161 = vsel %vm8024, %v7918, %v8160
    %v8162 = vsel %vm8026, %v7919, %v8161
    %v8163 = vsel %vm8028, %v7920, %v8162
    %v8164 = vsel %vm8030, %v7921, %v8163
    %v8165 = vsel %vm8018, %v7923, %v7922
    %v8166 = vsel %vm8020, %v7924, %v8165
    %v8167 = vsel %vm8022, %v7925, %v8166
    %v8168 = vsel %vm8024, %v7926, %v8167
    %v8169 = vsel %vm8026, %v7927, %v8168
    %v8170 = vsel %vm8028, %v7928, %v8169
    %v8171 = vsel %vm8030, %v7929, %v8170
    %v8172 = vsel %vm8018, %v7931, %v7930
    %v8173 = vsel %vm8020, %v7932, %v8172
    %v8174 = vsel %vm8022, %v7933, %v8173
    %v8175 = vsel %vm8024, %v7934, %v8174
    %v8176 = vsel %vm8026, %v7935, %v8175
    %v8177 = vsel %vm8028, %v7936, %v8176
    %v8178 = vsel %vm8030, %v7937, %v8177
    %v8179 = vsel %vm8018, %v7939, %v7938
    %v8180 = vsel %vm8020, %v7940, %v8179
    %v8181 = vsel %vm8022, %v7941, %v8180
    %v8182 = vsel %vm8024, %v7942, %v8181
    %v8183 = vsel %vm8026, %v7943, %v8182
    %v8184 = vsel %vm8028, %v7944, %v8183
    %v8185 = vsel %vm8030, %v7945, %v8184
    %v8186 = vsel %vm8018, %v7947, %v7946
    %v8187 = vsel %vm8020, %v7948, %v8186
    %v8188 = vsel %vm8022, %v7949, %v8187
    %v8189 = vsel %vm8024, %v7950, %v8188
    %v8190 = vsel %vm8026, %v7951, %v8189
    %v8191 = vsel %vm8028, %v7952, %v8190
    %v8192 = vsel %vm8030, %v7953, %v8191
    %v8193 = vsel %vm8018, %v7955, %v7954
    %v8194 = vsel %vm8020, %v7956, %v8193
    %v8195 = vsel %vm8022, %v7957, %v8194
    %v8196 = vsel %vm8024, %v7958, %v8195
    %v8197 = vsel %vm8026, %v7959, %v8196
    %v8198 = vsel %vm8028, %v7960, %v8197
    %v8199 = vsel %vm8030, %v7961, %v8198
    %v8200 = vsel %vm8018, %v7963, %v7962
    %v8201 = vsel %vm8020, %v7964, %v8200
    %v8202 = vsel %vm8022, %v7965, %v8201
    %v8203 = vsel %vm8024, %v7966, %v8202
    %v8204 = vsel %vm8026, %v7967, %v8203
    %v8205 = vsel %vm8028, %v7968, %v8204
    %v8206 = vsel %vm8030, %v7969, %v8205
    %v8207 = vsel %vm8018, %v7971, %v7970
    %v8208 = vsel %vm8020, %v7972, %v8207
    %v8209 = vsel %vm8022, %v7973, %v8208
    %v8210 = vsel %vm8024, %v7974, %v8209
    %v8211 = vsel %vm8026, %v7975, %v8210
    %v8212 = vsel %vm8028, %v7976, %v8211
    %v8213 = vsel %vm8030, %v7977, %v8212
    %v8214 = vsel %vm8018, %v7979, %v7978
    %v8215 = vsel %vm8020, %v7980, %v8214
    %v8216 = vsel %vm8022, %v7981, %v8215
    %v8217 = vsel %vm8024, %v7982, %v8216
    %v8218 = vsel %vm8026, %v7983, %v8217
    %v8219 = vsel %vm8028, %v7984, %v8218
    %v8220 = vsel %vm8030, %v7985, %v8219
    %v8221 = vsel %vm8018, %v7987, %v7986
    %v8222 = vsel %vm8020, %v7988, %v8221
    %v8223 = vsel %vm8022, %v7989, %v8222
    %v8224 = vsel %vm8024, %v7990, %v8223
    %v8225 = vsel %vm8026, %v7991, %v8224
    %v8226 = vsel %vm8028, %v7992, %v8225
    %v8227 = vsel %vm8030, %v7993, %v8226
    %v8228 = vsel %vm8018, %v7995, %v7994
    %v8229 = vsel %vm8020, %v7996, %v8228
    %v8230 = vsel %vm8022, %v7997, %v8229
    %v8231 = vsel %vm8024, %v7998, %v8230
    %v8232 = vsel %vm8026, %v7999, %v8231
    %v8233 = vsel %vm8028, %v8000, %v8232
    %v8234 = vsel %vm8030, %v8001, %v8233
    %v8235 = vsel %vm8018, %v8003, %v8002
    %v8236 = vsel %vm8020, %v8004, %v8235
    %v8237 = vsel %vm8022, %v8005, %v8236
    %v8238 = vsel %vm8024, %v8006, %v8237
    %v8239 = vsel %vm8026, %v8007, %v8238
    %v8240 = vsel %vm8028, %v8008, %v8239
    %v8241 = vsel %vm8030, %v8009, %v8240
    %v8242 = vsel %vm8018, %v8011, %v8010
    %v8243 = vsel %vm8020, %v8012, %v8242
    %v8244 = vsel %vm8022, %v8013, %v8243
    %v8245 = vsel %vm8024, %v8014, %v8244
    %v8246 = vsel %vm8026, %v8015, %v8245
    %v8247 = vsel %vm8028, %v8016, %v8246
    %v8248 = vsel %vm8030, %v8017, %v8247
    %v8249 = vpack.c.b16 %v8038, %v8031
    %v8250 = vpack.c.b16 %v8052, %v8045
    %v8251 = vpack.c.b16 %v8066, %v8059
    %v8252 = vpack.c.b16 %v8080, %v8073
    %v8253 = vpack.c.b16 %v8094, %v8087
    %v8254 = vpack.c.b16 %v8108, %v8101
    %v8255 = vpack.c.b16 %v8122, %v8115
    %v8256 = vpack.c.b16 %v8136, %v8129
    %v8257 = vpack.c.b16 %v8150, %v8143
    %v8258 = vpack.c.b16 %v8164, %v8157
    %v8259 = vpack.c.b16 %v8178, %v8171
    %v8260 = vpack.c.b16 %v8192, %v8185
    %v8261 = vpack.c.b16 %v8206, %v8199
    %v8262 = vpack.c.b16 %v8220, %v8213
    %v8263 = vpack.c.b16 %v8234, %v8227
    %v8264 = vpack.c.b16 %v8248, %v8241
    %v8297 = vunpack.c.l.b16 %v7490
    %v8298 = vunpack.c.h.b16 %v7490
    %v8299 = vunpack.c.l.b16 %v7491
    %v8300 = vunpack.c.h.b16 %v7491
    %v8301 = vunpack.c.l.b16 %v7492
    %v8302 = vunpack.c.h.b16 %v7492
    %v8303 = vunpack.c.l.b16 %v7493
    %v8304 = vunpack.c.h.b16 %v7493
    %v8305 = vunpack.c.l.b16 %v7494
    %v8306 = vunpack.c.h.b16 %v7494
    %v8307 = vunpack.c.l.b16 %v7495
    %v8308 = vunpack.c.h.b16 %v7495
    %v8309 = vunpack.c.l.b16 %v7496
    %v8310 = vunpack.c.h.b16 %v7496
    %v8311 = vunpack.c.l.b16 %v7497
    %v8312 = vunpack.c.h.b16 %v7497
    %v8313 = vunpack.c.l.b16 %v7498
    %v8314 = vunpack.c.h.b16 %v7498
    %v8315 = vunpack.c.l.b16 %v7499
    %v8316 = vunpack.c.h.b16 %v7499
    %v8317 = vunpack.c.l.b16 %v7500
    %v8318 = vunpack.c.h.b16 %v7500
    %v8319 = vunpack.c.l.b16 %v7501
    %v8320 = vunpack.c.h.b16 %v7501
    %v8321 = vunpack.c.l.b16 %v7502
    %v8322 = vunpack.c.h.b16 %v7502
    %v8323 = vunpack.c.l.b16 %v7503
    %v8324 = vunpack.c.h.b16 %v7503
    %v8325 = vunpack.c.l.b16 %v7504
    %v8326 = vunpack.c.h.b16 %v7504
    %v8327 = vunpack.c.l.b16 %v7505
    %v8328 = vunpack.c.h.b16 %v7505
    %v8329 = vpack.c.b16 %v8299, %v8297
    %v8330 = vpack.c.b16 %v8300, %v8298
    %v8331 = vpack.c.b16 %v8303, %v8301
    %v8332 = vpack.c.b16 %v8304, %v8302
    %v8333 = vpack.c.b16 %v8307, %v8305
    %v8334 = vpack.c.b16 %v8308, %v8306
    %v8335 = vpack.c.b16 %v8311, %v8309
    %v8336 = vpack.c.b16 %v8312, %v8310
    %v8337 = vpack.c.b16 %v8315, %v8313
    %v8338 = vpack.c.b16 %v8316, %v8314
    %v8339 = vpack.c.b16 %v8319, %v8317
    %v8340 = vpack.c.b16 %v8320, %v8318
    %v8341 = vpack.c.b16 %v8323, %v8321
    %v8342 = vpack.c.b16 %v8324, %v8322
    %v8343 = vpack.c.b16 %v8327, %v8325
    %v8344 = vpack.c.b16 %v8328, %v8326
    %8361 = vmatprep.subr.bf16.mxu0 %v8330
    %8362 = vmatpush1.bf16.msra.mxu0 %v8329
    %8363 = vmatprep.subr.bf16.mxu0 %v8332
    %8364 = vmatpush1.bf16.msra.mxu0 %v8331
    %8365 = vmatprep.subr.bf16.mxu0 %v8334
    %8366 = vmatpush1.bf16.msra.mxu0 %v8333
    %8367 = vmatprep.subr.bf16.mxu0 %v8336
    %8368 = vmatpush1.bf16.msra.mxu0 %v8335
    %8369 = vmatprep.subr.bf16.mxu0 %v8338
    %8370 = vmatpush1.bf16.msra.mxu0 %v8337
    %8371 = vmatprep.subr.bf16.mxu0 %v8340
    %8372 = vmatpush1.bf16.msra.mxu0 %v8339
    %8373 = vmatprep.subr.bf16.mxu0 %v8342
    %8374 = vmatpush1.bf16.msra.mxu0 %v8341
    %8375 = vmatprep.subr.bf16.mxu0 %v8344
    %8376 = vmatpush1.bf16.msra.mxu0 %v8343
    %8377 = vmatprep.subr.bf16.mxu0 0
    %8378 = vmatpush1.bf16.msra.mxu0 0
    %8379 = vmatprep.subr.bf16.mxu0 0
    %8380 = vmatpush1.bf16.msra.mxu0 0
    %8381 = vmatprep.subr.bf16.mxu0 0
    %8382 = vmatpush1.bf16.msra.mxu0 0
    %8383 = vmatprep.subr.bf16.mxu0 0
    %8384 = vmatpush1.bf16.msra.mxu0 0
    %8385 = vmatprep.subr.bf16.mxu0 0
    %8386 = vmatpush1.bf16.msra.mxu0 0
    %8387 = vmatprep.subr.bf16.mxu0 0
    %8388 = vmatpush1.bf16.msra.mxu0 0
    %8389 = vmatprep.subr.bf16.mxu0 0
    %8390 = vmatpush1.bf16.msra.mxu0 0
    %8391 = vmatprep.subr.bf16.mxu0 0
    %8392 = vmatpush1.bf16.msra.mxu0 0
    %8393 = vmatprep.mubr.bf16.mxu0 0
    %8394 = vmatmul.mubr.bf16.gmra.mrb[0].mxu0 %v8249
    %v8395 = vpop.f32.mrb[0].mxu0
    %v8396 = vadd.f32 0.0, %v8395
    %v8397 = vpop.f32.mrb[0].mxu0
    %v8398 = vadd.f32 0.0, %v8397
    %v8399 = vpop.f32.mrb[0].mxu0
    %v8400 = vadd.f32 0.0, %v8399
    %v8401 = vpop.f32.mrb[0].mxu0
    %8402 = vmatprep.mubr.bf16.mxu0 0
    %8403 = vmatmul.mubr.bf16.gmra.mrb[0].mxu0 %v8250
    %v8404 = vpop.f32.mrb[0].mxu0
    %v8405 = vadd.f32 0.0, %v8404
    %v8406 = vpop.f32.mrb[0].mxu0
    %v8407 = vadd.f32 0.0, %v8406
    %v8408 = vpop.f32.mrb[0].mxu0
    %v8409 = vadd.f32 0.0, %v8408
    %v8410 = vpop.f32.mrb[0].mxu0
    %8411 = vmatprep.mubr.bf16.mxu0 0
    %8412 = vmatmul.mubr.bf16.gmra.mrb[0].mxu0 %v8251
    %v8413 = vpop.f32.mrb[0].mxu0
    %v8414 = vadd.f32 0.0, %v8413
    %v8415 = vpop.f32.mrb[0].mxu0
    %v8416 = vadd.f32 0.0, %v8415
    %v8417 = vpop.f32.mrb[0].mxu0
    %v8418 = vadd.f32 0.0, %v8417
    %v8419 = vpop.f32.mrb[0].mxu0
    %8420 = vmatprep.mubr.bf16.mxu0 0
    %8421 = vmatmul.mubr.bf16.gmra.mrb[0].mxu0 %v8252
    %v8422 = vpop.f32.mrb[0].mxu0
    %v8423 = vadd.f32 0.0, %v8422
    %v8424 = vpop.f32.mrb[0].mxu0
    %v8425 = vadd.f32 0.0, %v8424
    %v8426 = vpop.f32.mrb[0].mxu0
    %v8427 = vadd.f32 0.0, %v8426
    %v8428 = vpop.f32.mrb[0].mxu0
    %8429 = vmatprep.mubr.bf16.mxu0 0
    %8430 = vmatmul.mubr.bf16.gmra.mrb[0].mxu0 %v8253
    %v8431 = vpop.f32.mrb[0].mxu0
    %v8432 = vadd.f32 0.0, %v8431
    %v8433 = vpop.f32.mrb[0].mxu0
    %v8434 = vadd.f32 0.0, %v8433
    %v8435 = vpop.f32.mrb[0].mxu0
    %v8436 = vadd.f32 0.0, %v8435
    %v8437 = vpop.f32.mrb[0].mxu0
    %8438 = vmatprep.mubr.bf16.mxu0 0
    %8439 = vmatmul.mubr.bf16.gmra.mrb[0].mxu0 %v8254
    %v8440 = vpop.f32.mrb[0].mxu0
    %v8441 = vadd.f32 0.0, %v8440
    %v8442 = vpop.f32.mrb[0].mxu0
    %v8443 = vadd.f32 0.0, %v8442
    %v8444 = vpop.f32.mrb[0].mxu0
    %v8445 = vadd.f32 0.0, %v8444
    %v8446 = vpop.f32.mrb[0].mxu0
    %8447 = vmatprep.mubr.bf16.mxu0 0
    %8448 = vmatmul.mubr.bf16.gmra.mrb[0].mxu0 %v8255
    %v8449 = vpop.f32.mrb[0].mxu0
    %v8450 = vadd.f32 0.0, %v8449
    %v8451 = vpop.f32.mrb[0].mxu0
    %v8452 = vadd.f32 0.0, %v8451
    %v8453 = vpop.f32.mrb[0].mxu0
    %v8454 = vadd.f32 0.0, %v8453
    %v8455 = vpop.f32.mrb[0].mxu0
    %8456 = vmatprep.mubr.bf16.mxu0 0
    %8457 = vmatmul.mubr.bf16.gmra.mrb[0].mxu0 %v8256
    %v8458 = vpop.f32.mrb[0].mxu0
    %v8459 = vadd.f32 0.0, %v8458
    %v8460 = vpop.f32.mrb[0].mxu0
    %v8461 = vadd.f32 0.0, %v8460
    %v8462 = vpop.f32.mrb[0].mxu0
    %v8463 = vadd.f32 0.0, %v8462
    %v8464 = vpop.f32.mrb[0].mxu0
    %8465 = vmatprep.mubr.bf16.mxu0 0
    %8466 = vmatmul.mubr.bf16.gmra.mrb[0].mxu0 %v8257
    %v8467 = vpop.f32.mrb[0].mxu0
    %v8468 = vadd.f32 0.0, %v8467
    %v8469 = vpop.f32.mrb[0].mxu0
    %v8470 = vadd.f32 0.0, %v8469
    %v8471 = vpop.f32.mrb[0].mxu0
    %v8472 = vadd.f32 0.0, %v8471
    %v8473 = vpop.f32.mrb[0].mxu0
    %8474 = vmatprep.mubr.bf16.mxu0 0
    %8475 = vmatmul.mubr.bf16.gmra.mrb[0].mxu0 %v8258
    %v8476 = vpop.f32.mrb[0].mxu0
    %v8477 = vadd.f32 0.0, %v8476
    %v8478 = vpop.f32.mrb[0].mxu0
    %v8479 = vadd.f32 0.0, %v8478
    %v8480 = vpop.f32.mrb[0].mxu0
    %v8481 = vadd.f32 0.0, %v8480
    %v8482 = vpop.f32.mrb[0].mxu0
    %8483 = vmatprep.mubr.bf16.mxu0 0
    %8484 = vmatmul.mubr.bf16.gmra.mrb[0].mxu0 %v8259
    %v8485 = vpop.f32.mrb[0].mxu0
    %v8486 = vadd.f32 0.0, %v8485
    %v8487 = vpop.f32.mrb[0].mxu0
    %v8488 = vadd.f32 0.0, %v8487
    %v8489 = vpop.f32.mrb[0].mxu0
    %v8490 = vadd.f32 0.0, %v8489
    %v8491 = vpop.f32.mrb[0].mxu0
    %8492 = vmatprep.mubr.bf16.mxu0 0
    %8493 = vmatmul.mubr.bf16.gmra.mrb[0].mxu0 %v8260
    %v8494 = vpop.f32.mrb[0].mxu0
    %v8495 = vadd.f32 0.0, %v8494
    %v8496 = vpop.f32.mrb[0].mxu0
    %v8497 = vadd.f32 0.0, %v8496
    %v8498 = vpop.f32.mrb[0].mxu0
    %v8499 = vadd.f32 0.0, %v8498
    %v8500 = vpop.f32.mrb[0].mxu0
    %8501 = vmatprep.mubr.bf16.mxu0 0
    %8502 = vmatmul.mubr.bf16.gmra.mrb[0].mxu0 %v8261
    %v8503 = vpop.f32.mrb[0].mxu0
    %v8504 = vadd.f32 0.0, %v8503
    %v8505 = vpop.f32.mrb[0].mxu0
    %v8506 = vadd.f32 0.0, %v8505
    %v8507 = vpop.f32.mrb[0].mxu0
    %v8508 = vadd.f32 0.0, %v8507
    %v8509 = vpop.f32.mrb[0].mxu0
    %8510 = vmatprep.mubr.bf16.mxu0 0
    %8511 = vmatmul.mubr.bf16.gmra.mrb[0].mxu0 %v8262
    %v8512 = vpop.f32.mrb[0].mxu0
    %v8513 = vadd.f32 0.0, %v8512
    %v8514 = vpop.f32.mrb[0].mxu0
    %v8515 = vadd.f32 0.0, %v8514
    %v8516 = vpop.f32.mrb[0].mxu0
    %v8517 = vadd.f32 0.0, %v8516
    %v8518 = vpop.f32.mrb[0].mxu0
    %8519 = vmatprep.mubr.bf16.mxu0 0
    %8520 = vmatmul.mubr.bf16.gmra.mrb[0].mxu0 %v8263
    %v8521 = vpop.f32.mrb[0].mxu0
    %v8522 = vadd.f32 0.0, %v8521
    %v8523 = vpop.f32.mrb[0].mxu0
    %v8524 = vadd.f32 0.0, %v8523
    %v8525 = vpop.f32.mrb[0].mxu0
    %v8526 = vadd.f32 0.0, %v8525
    %v8527 = vpop.f32.mrb[0].mxu0
    %8528 = vmatprep.mubr.bf16.mxu0 0
    %8529 = vmatmul.mubr.bf16.gmra.mrb[0].mxu0 %v8264
    %v8530 = vpop.f32.mrb[0].mxu0
    %v8531 = vadd.f32 0.0, %v8530
    %v8532 = vpop.f32.mrb[0].mxu0
    %v8533 = vadd.f32 0.0, %v8532
    %v8534 = vpop.f32.mrb[0].mxu0
    %v8535 = vadd.f32 0.0, %v8534
    %v8536 = vpop.f32.mrb[0].mxu0
    %8537 = vdwg.mxu0
    %v8538 = vlaneseq
    %v8539 = vshrl.u32 %v8538, 7
    %v8540 = vsub.s32 0, %v8539
    %v8541 = vrot.slane %v8398, %v8540
    %v8542 = vlaneseq
    %v8543 = vshrl.u32 %v8542, 7
    %v8544 = vsub.s32 0, %v8543
    %v8545 = vrot.slane %v8407, %v8544
    %v8546 = vlaneseq
    %v8547 = vshrl.u32 %v8546, 7
    %v8548 = vsub.s32 0, %v8547
    %v8549 = vrot.slane %v8416, %v8548
    %v8550 = vlaneseq
    %v8551 = vshrl.u32 %v8550, 7
    %v8552 = vsub.s32 0, %v8551
    %v8553 = vrot.slane %v8425, %v8552
    %v8554 = vlaneseq
    %v8555 = vshrl.u32 %v8554, 7
    %v8556 = vsub.s32 0, %v8555
    %v8557 = vrot.slane %v8434, %v8556
    %v8558 = vlaneseq
    %v8559 = vshrl.u32 %v8558, 7
    %v8560 = vsub.s32 0, %v8559
    %v8561 = vrot.slane %v8443, %v8560
    %v8562 = vlaneseq
    %v8563 = vshrl.u32 %v8562, 7
    %v8564 = vsub.s32 0, %v8563
    %v8565 = vrot.slane %v8452, %v8564
    %v8566 = vlaneseq
    %v8567 = vshrl.u32 %v8566, 7
    %v8568 = vsub.s32 0, %v8567
    %v8569 = vrot.slane %v8461, %v8568
    %v8570 = vlaneseq
    %v8571 = vshrl.u32 %v8570, 7
    %v8572 = vsub.s32 0, %v8571
    %v8573 = vrot.slane %v8470, %v8572
    %v8574 = vlaneseq
    %v8575 = vshrl.u32 %v8574, 7
    %v8576 = vsub.s32 0, %v8575
    %v8577 = vrot.slane %v8479, %v8576
    %v8578 = vlaneseq
    %v8579 = vshrl.u32 %v8578, 7
    %v8580 = vsub.s32 0, %v8579
    %v8581 = vrot.slane %v8488, %v8580
    %v8582 = vlaneseq
    %v8583 = vshrl.u32 %v8582, 7
    %v8584 = vsub.s32 0, %v8583
    %v8585 = vrot.slane %v8497, %v8584
    %v8586 = vlaneseq
    %v8587 = vshrl.u32 %v8586, 7
    %v8588 = vsub.s32 0, %v8587
    %v8589 = vrot.slane %v8506, %v8588
    %v8590 = vlaneseq
    %v8591 = vshrl.u32 %v8590, 7
    %v8592 = vsub.s32 0, %v8591
    %v8593 = vrot.slane %v8515, %v8592
    %v8594 = vlaneseq
    %v8595 = vshrl.u32 %v8594, 7
    %v8596 = vsub.s32 0, %v8595
    %v8597 = vrot.slane %v8524, %v8596
    %v8598 = vlaneseq
    %v8599 = vshrl.u32 %v8598, 7
    %v8600 = vsub.s32 0, %v8599
    %v8601 = vrot.slane %v8533, %v8600
    %v8602 = vsub.f32 %v8396, %v8541
    %v8603 = vsub.f32 %v8400, %v8541
    %v8604 = vsub.f32 %v8405, %v8545
    %v8605 = vsub.f32 %v8409, %v8545
    %v8606 = vsub.f32 %v8414, %v8549
    %v8607 = vsub.f32 %v8418, %v8549
    %v8608 = vsub.f32 %v8423, %v8553
    %v8609 = vsub.f32 %v8427, %v8553
    %v8610 = vsub.f32 %v8432, %v8557
    %v8611 = vsub.f32 %v8436, %v8557
    %v8612 = vsub.f32 %v8441, %v8561
    %v8613 = vsub.f32 %v8445, %v8561
    %v8614 = vsub.f32 %v8450, %v8565
    %v8615 = vsub.f32 %v8454, %v8565
    %v8616 = vsub.f32 %v8459, %v8569
    %v8617 = vsub.f32 %v8463, %v8569
    %v8618 = vsub.f32 %v8468, %v8573
    %v8619 = vsub.f32 %v8472, %v8573
    %v8620 = vsub.f32 %v8477, %v8577
    %v8621 = vsub.f32 %v8481, %v8577
    %v8622 = vsub.f32 %v8486, %v8581
    %v8623 = vsub.f32 %v8490, %v8581
    %v8624 = vsub.f32 %v8495, %v8585
    %v8625 = vsub.f32 %v8499, %v8585
    %v8626 = vsub.f32 %v8504, %v8589
    %v8627 = vsub.f32 %v8508, %v8589
    %v8628 = vsub.f32 %v8513, %v8593
    %v8629 = vsub.f32 %v8517, %v8593
    %v8630 = vsub.f32 %v8522, %v8597
    %v8631 = vsub.f32 %v8526, %v8597
    %v8632 = vsub.f32 %v8531, %v8601
    %v8633 = vsub.f32 %v8535, %v8601
    %v8634 = vadd.f32 %v8602, %v6787
    %v8635 = vadd.f32 %v8603, %v6793
    %v8636 = vadd.f32 %v8604, %v6799
    %v8637 = vadd.f32 %v8605, %v6805
    %v8638 = vadd.f32 %v8606, %v6811
    %v8639 = vadd.f32 %v8607, %v6817
    %v8640 = vadd.f32 %v8608, %v6823
    %v8641 = vadd.f32 %v8609, %v6829
    %v8642 = vadd.f32 %v8610, %v6835
    %v8643 = vadd.f32 %v8611, %v6841
    %v8644 = vadd.f32 %v8612, %v6847
    %v8645 = vadd.f32 %v8613, %v6853
    %v8646 = vadd.f32 %v8614, %v6859
    %v8647 = vadd.f32 %v8615, %v6865
    %v8648 = vadd.f32 %v8616, %v6871
    %v8649 = vadd.f32 %v8617, %v6877
    %v8650 = vadd.f32 %v8618, %v6883
    %v8651 = vadd.f32 %v8619, %v6889
    %v8652 = vadd.f32 %v8620, %v6895
    %v8653 = vadd.f32 %v8621, %v6901
    %v8654 = vadd.f32 %v8622, %v6907
    %v8655 = vadd.f32 %v8623, %v6913
    %v8656 = vadd.f32 %v8624, %v6919
    %v8657 = vadd.f32 %v8625, %v6925
    %v8658 = vadd.f32 %v8626, %v6931
    %v8659 = vadd.f32 %v8627, %v6937
    %v8660 = vadd.f32 %v8628, %v6943
    %v8661 = vadd.f32 %v8629, %v6949
    %v8662 = vadd.f32 %v8630, %v6955
    %v8663 = vadd.f32 %v8631, %v6961
    %v8664 = vadd.f32 %v8632, %v6967
    %v8665 = vadd.f32 %v8633, %v6973
    %v8666 = vmul.f32 %v8634, 0.1
    %v8667 = vmul.f32 %v8635, 0.1
    %v8668 = vmul.f32 %v8636, 0.1
    %v8669 = vmul.f32 %v8637, 0.1
    %v8670 = vmul.f32 %v8638, 0.1
    %v8671 = vmul.f32 %v8639, 0.1
    %v8672 = vmul.f32 %v8640, 0.1
    %v8673 = vmul.f32 %v8641, 0.1
    %v8674 = vmul.f32 %v8642, 0.1
    %v8675 = vmul.f32 %v8643, 0.1
    %v8676 = vmul.f32 %v8644, 0.1
    %v8677 = vmul.f32 %v8645, 0.1
    %v8678 = vmul.f32 %v8646, 0.1
    %v8679 = vmul.f32 %v8647, 0.1
    %v8680 = vmul.f32 %v8648, 0.1
    %v8681 = vmul.f32 %v8649, 0.1
    %v8682 = vmul.f32 %v8650, 0.1
    %v8683 = vmul.f32 %v8651, 0.1
    %v8684 = vmul.f32 %v8652, 0.1
    %v8685 = vmul.f32 %v8653, 0.1
    %v8686 = vmul.f32 %v8654, 0.1
    %v8687 = vmul.f32 %v8655, 0.1
    %v8688 = vmul.f32 %v8656, 0.1
    %v8689 = vmul.f32 %v8657, 0.1
    %v8690 = vmul.f32 %v8658, 0.1
    %v8691 = vmul.f32 %v8659, 0.1
    %v8692 = vmul.f32 %v8660, 0.1
    %v8693 = vmul.f32 %v8661, 0.1
    %v8694 = vmul.f32 %v8662, 0.1
    %v8695 = vmul.f32 %v8663, 0.1
    %v8696 = vmul.f32 %v8664, 0.1
    %v8697 = vmul.f32 %v8665, 0.1
    %v8698 = vmax.f32 %v8634, %v8666
    %v8699 = vmax.f32 %v8635, %v8667
    %v8700 = vmax.f32 %v8636, %v8668
    %v8701 = vmax.f32 %v8637, %v8669
    %v8702 = vmax.f32 %v8638, %v8670
    %v8703 = vmax.f32 %v8639, %v8671
    %v8704 = vmax.f32 %v8640, %v8672
    %v8705 = vmax.f32 %v8641, %v8673
    %v8706 = vmax.f32 %v8642, %v8674
    %v8707 = vmax.f32 %v8643, %v8675
    %v8708 = vmax.f32 %v8644, %v8676
    %v8709 = vmax.f32 %v8645, %v8677
    %v8710 = vmax.f32 %v8646, %v8678
    %v8711 = vmax.f32 %v8647, %v8679
    %v8712 = vmax.f32 %v8648, %v8680
    %v8713 = vmax.f32 %v8649, %v8681
    %v8714 = vmax.f32 %v8650, %v8682
    %v8715 = vmax.f32 %v8651, %v8683
    %v8716 = vmax.f32 %v8652, %v8684
    %v8717 = vmax.f32 %v8653, %v8685
    %v8718 = vmax.f32 %v8654, %v8686
    %v8719 = vmax.f32 %v8655, %v8687
    %v8720 = vmax.f32 %v8656, %v8688
    %v8721 = vmax.f32 %v8657, %v8689
    %v8722 = vmax.f32 %v8658, %v8690
    %v8723 = vmax.f32 %v8659, %v8691
    %v8724 = vmax.f32 %v8660, %v8692
    %v8725 = vmax.f32 %v8661, %v8693
    %v8726 = vmax.f32 %v8662, %v8694
    %v8727 = vmax.f32 %v8663, %v8695
    %v8728 = vmax.f32 %v8664, %v8696
    %v8729 = vmax.f32 %v8665, %v8697
    %v8730 = vpack.c.bf16 %v8699, %v8698
    %v8731 = vpack.c.bf16 %v8701, %v8700
    %v8732 = vpack.c.bf16 %v8703, %v8702
    %v8733 = vpack.c.bf16 %v8705, %v8704
    %v8734 = vpack.c.bf16 %v8707, %v8706
    %v8735 = vpack.c.bf16 %v8709, %v8708
    %v8736 = vpack.c.bf16 %v8711, %v8710
    %v8737 = vpack.c.bf16 %v8713, %v8712
    %v8738 = vpack.c.bf16 %v8715, %v8714
    %v8739 = vpack.c.bf16 %v8717, %v8716
    %v8740 = vpack.c.bf16 %v8719, %v8718
    %v8741 = vpack.c.bf16 %v8721, %v8720
    %v8742 = vpack.c.bf16 %v8723, %v8722
    %v8743 = vpack.c.bf16 %v8725, %v8724
    %v8744 = vpack.c.bf16 %v8727, %v8726
    %v8745 = vpack.c.bf16 %v8729, %v8728
    %s8746 = scalar_lea.vmem [#allocation10], 128
    %v8747 = vld [vmem:[%s8746] sm:$0xff]
    %v8748 = vld [vmem:[%s8746 + $0x8] sm:$0xff]
    %v8749 = vld [vmem:[%s8746 + $0x10] sm:$0xff]
    %v8750 = vld [vmem:[%s8746 + $0x18] sm:$0xff]
    %v8751 = vld [vmem:[%s8746 + $0x20] sm:$0xff]
    %v8752 = vld [vmem:[%s8746 + $0x28] sm:$0xff]
    %v8753 = vld [vmem:[%s8746 + $0x30] sm:$0xff]
    %v8754 = vld [vmem:[%s8746 + $0x38] sm:$0xff]
    %v8755 = vld [vmem:[%s8746 + $0x40] sm:$0xff]
    %v8756 = vld [vmem:[%s8746 + $0x48] sm:$0xff]
    %v8757 = vld [vmem:[%s8746 + $0x50] sm:$0xff]
    %v8758 = vld [vmem:[%s8746 + $0x58] sm:$0xff]
    %v8759 = vld [vmem:[%s8746 + $0x60] sm:$0xff]
    %v8760 = vld [vmem:[%s8746 + $0x68] sm:$0xff]
    %v8761 = vld [vmem:[%s8746 + $0x70] sm:$0xff]
    %v8762 = vld [vmem:[%s8746 + $0x78] sm:$0xff]
    %v8779 = vunpack.c.l.b16 %v8747
    %v8780 = vunpack.c.h.b16 %v8747
    %v8781 = vunpack.c.l.b16 %v8748
    %v8782 = vunpack.c.h.b16 %v8748
    %v8783 = vunpack.c.l.b16 %v8749
    %v8784 = vunpack.c.h.b16 %v8749
    %v8785 = vunpack.c.l.b16 %v8750
    %v8786 = vunpack.c.h.b16 %v8750
    %v8787 = vunpack.c.l.b16 %v8751
    %v8788 = vunpack.c.h.b16 %v8751
    %v8789 = vunpack.c.l.b16 %v8752
    %v8790 = vunpack.c.h.b16 %v8752
    %v8791 = vunpack.c.l.b16 %v8753
    %v8792 = vunpack.c.h.b16 %v8753
    %v8793 = vunpack.c.l.b16 %v8754
    %v8794 = vunpack.c.h.b16 %v8754
    %v8795 = vunpack.c.l.b16 %v8755
    %v8796 = vunpack.c.h.b16 %v8755
    %v8797 = vunpack.c.l.b16 %v8756
    %v8798 = vunpack.c.h.b16 %v8756
    %v8799 = vunpack.c.l.b16 %v8757
    %v8800 = vunpack.c.h.b16 %v8757
    %v8801 = vunpack.c.l.b16 %v8758
    %v8802 = vunpack.c.h.b16 %v8758
    %v8803 = vunpack.c.l.b16 %v8759
    %v8804 = vunpack.c.h.b16 %v8759
    %v8805 = vunpack.c.l.b16 %v8760
    %v8806 = vunpack.c.h.b16 %v8760
    %v8807 = vunpack.c.l.b16 %v8761
    %v8808 = vunpack.c.h.b16 %v8761
    %v8809 = vunpack.c.l.b16 %v8762
    %v8810 = vunpack.c.h.b16 %v8762
    %v8811 = vpack.c.b16 %v8781, %v8779
    %v8812 = vpack.c.b16 %v8782, %v8780
    %v8813 = vpack.c.b16 %v8785, %v8783
    %v8814 = vpack.c.b16 %v8786, %v8784
    %v8815 = vpack.c.b16 %v8789, %v8787
    %v8816 = vpack.c.b16 %v8790, %v8788
    %v8817 = vpack.c.b16 %v8793, %v8791
    %v8818 = vpack.c.b16 %v8794, %v8792
    %v8819 = vpack.c.b16 %v8797, %v8795
    %v8820 = vpack.c.b16 %v8798, %v8796
    %v8821 = vpack.c.b16 %v8801, %v8799
    %v8822 = vpack.c.b16 %v8802, %v8800
    %v8823 = vpack.c.b16 %v8805, %v8803
    %v8824 = vpack.c.b16 %v8806, %v8804
    %v8825 = vpack.c.b16 %v8809, %v8807
    %v8826 = vpack.c.b16 %v8810, %v8808
    %8843 = vmatprep.subr.bf16.mxu0 %v8812
    %8844 = vmatpush1.bf16.msra.mxu0 %v8811
    %8845 = vmatprep.subr.bf16.mxu0 %v8814
    %8846 = vmatpush1.bf16.msra.mxu0 %v8813
    %8847 = vmatprep.subr.bf16.mxu0 %v8816
    %8848 = vmatpush1.bf16.msra.mxu0 %v8815
    %8849 = vmatprep.subr.bf16.mxu0 %v8818
    %8850 = vmatpush1.bf16.msra.mxu0 %v8817
    %8851 = vmatprep.subr.bf16.mxu0 %v8820
    %8852 = vmatpush1.bf16.msra.mxu0 %v8819
    %8853 = vmatprep.subr.bf16.mxu0 %v8822
    %8854 = vmatpush1.bf16.msra.mxu0 %v8821
    %8855 = vmatprep.subr.bf16.mxu0 %v8824
    %8856 = vmatpush1.bf16.msra.mxu0 %v8823
    %8857 = vmatprep.subr.bf16.mxu0 %v8826
    %8858 = vmatpush1.bf16.msra.mxu0 %v8825
    %8859 = vmatprep.subr.bf16.mxu0 0
    %8860 = vmatpush1.bf16.msra.mxu0 0
    %8861 = vmatprep.subr.bf16.mxu0 0
    %8862 = vmatpush1.bf16.msra.mxu0 0
    %8863 = vmatprep.subr.bf16.mxu0 0
    %8864 = vmatpush1.bf16.msra.mxu0 0
    %8865 = vmatprep.subr.bf16.mxu0 0
    %8866 = vmatpush1.bf16.msra.mxu0 0
    %8867 = vmatprep.subr.bf16.mxu0 0
    %8868 = vmatpush1.bf16.msra.mxu0 0
    %8869 = vmatprep.subr.bf16.mxu0 0
    %8870 = vmatpush1.bf16.msra.mxu0 0
    %8871 = vmatprep.subr.bf16.mxu0 0
    %8872 = vmatpush1.bf16.msra.mxu0 0
    %8873 = vmatprep.subr.bf16.mxu0 0
    %8874 = vmatpush1.bf16.msra.mxu0 0
    %8875 = vmatprep.mubr.bf16.mxu0 0
    %8876 = vmatmul.mubr.bf16.gmra.mrb[0].mxu0 %v8730
    %v8877 = vpop.f32.mrb[0].mxu0
    %v8878 = vadd.f32 0.0, %v8877
    %v8879 = vpop.f32.mrb[0].mxu0
    %v8880 = vadd.f32 0.0, %v8879
    %v8881 = vpop.f32.mrb[0].mxu0
    %v8882 = vadd.f32 0.0, %v8881
    %v8883 = vpop.f32.mrb[0].mxu0
    %8884 = vmatprep.mubr.bf16.mxu0 0
    %8885 = vmatmul.mubr.bf16.gmra.mrb[0].mxu0 %v8731
    %v8886 = vpop.f32.mrb[0].mxu0
    %v8887 = vadd.f32 0.0, %v8886
    %v8888 = vpop.f32.mrb[0].mxu0
    %v8889 = vadd.f32 0.0, %v8888
    %v8890 = vpop.f32.mrb[0].mxu0
    %v8891 = vadd.f32 0.0, %v8890
    %v8892 = vpop.f32.mrb[0].mxu0
    %8893 = vmatprep.mubr.bf16.mxu0 0
    %8894 = vmatmul.mubr.bf16.gmra.mrb[0].mxu0 %v8732
    %v8895 = vpop.f32.mrb[0].mxu0
    %v8896 = vadd.f32 0.0, %v8895
    %v8897 = vpop.f32.mrb[0].mxu0
    %v8898 = vadd.f32 0.0, %v8897
    %v8899 = vpop.f32.mrb[0].mxu0
    %v8900 = vadd.f32 0.0, %v8899
    %v8901 = vpop.f32.mrb[0].mxu0
    %8902 = vmatprep.mubr.bf16.mxu0 0
    %8903 = vmatmul.mubr.bf16.gmra.mrb[0].mxu0 %v8733
    %v8904 = vpop.f32.mrb[0].mxu0
    %v8905 = vadd.f32 0.0, %v8904
    %v8906 = vpop.f32.mrb[0].mxu0
    %v8907 = vadd.f32 0.0, %v8906
    %v8908 = vpop.f32.mrb[0].mxu0
    %v8909 = vadd.f32 0.0, %v8908
    %v8910 = vpop.f32.mrb[0].mxu0
    %8911 = vmatprep.mubr.bf16.mxu0 0
    %8912 = vmatmul.mubr.bf16.gmra.mrb[0].mxu0 %v8734
    %v8913 = vpop.f32.mrb[0].mxu0
    %v8914 = vadd.f32 0.0, %v8913
    %v8915 = vpop.f32.mrb[0].mxu0
    %v8916 = vadd.f32 0.0, %v8915
    %v8917 = vpop.f32.mrb[0].mxu0
    %v8918 = vadd.f32 0.0, %v8917
    %v8919 = vpop.f32.mrb[0].mxu0
    %8920 = vmatprep.mubr.bf16.mxu0 0
    %8921 = vmatmul.mubr.bf16.gmra.mrb[0].mxu0 %v8735
    %v8922 = vpop.f32.mrb[0].mxu0
    %v8923 = vadd.f32 0.0, %v8922
    %v8924 = vpop.f32.mrb[0].mxu0
    %v8925 = vadd.f32 0.0, %v8924
    %v8926 = vpop.f32.mrb[0].mxu0
    %v8927 = vadd.f32 0.0, %v8926
    %v8928 = vpop.f32.mrb[0].mxu0
    %8929 = vmatprep.mubr.bf16.mxu0 0
    %8930 = vmatmul.mubr.bf16.gmra.mrb[0].mxu0 %v8736
    %v8931 = vpop.f32.mrb[0].mxu0
    %v8932 = vadd.f32 0.0, %v8931
    %v8933 = vpop.f32.mrb[0].mxu0
    %v8934 = vadd.f32 0.0, %v8933
    %v8935 = vpop.f32.mrb[0].mxu0
    %v8936 = vadd.f32 0.0, %v8935
    %v8937 = vpop.f32.mrb[0].mxu0
    %8938 = vmatprep.mubr.bf16.mxu0 0
    %8939 = vmatmul.mubr.bf16.gmra.mrb[0].mxu0 %v8737
    %v8940 = vpop.f32.mrb[0].mxu0
    %v8941 = vadd.f32 0.0, %v8940
    %v8942 = vpop.f32.mrb[0].mxu0
    %v8943 = vadd.f32 0.0, %v8942
    %v8944 = vpop.f32.mrb[0].mxu0
    %v8945 = vadd.f32 0.0, %v8944
    %v8946 = vpop.f32.mrb[0].mxu0
    %8947 = vmatprep.mubr.bf16.mxu0 0
    %8948 = vmatmul.mubr.bf16.gmra.mrb[0].mxu0 %v8738
    %v8949 = vpop.f32.mrb[0].mxu0
    %v8950 = vadd.f32 0.0, %v8949
    %v8951 = vpop.f32.mrb[0].mxu0
    %v8952 = vadd.f32 0.0, %v8951
    %v8953 = vpop.f32.mrb[0].mxu0
    %v8954 = vadd.f32 0.0, %v8953
    %v8955 = vpop.f32.mrb[0].mxu0
    %8956 = vmatprep.mubr.bf16.mxu0 0
    %8957 = vmatmul.mubr.bf16.gmra.mrb[0].mxu0 %v8739
    %v8958 = vpop.f32.mrb[0].mxu0
    %v8959 = vadd.f32 0.0, %v8958
    %v8960 = vpop.f32.mrb[0].mxu0
    %v8961 = vadd.f32 0.0, %v8960
    %v8962 = vpop.f32.mrb[0].mxu0
    %v8963 = vadd.f32 0.0, %v8962
    %v8964 = vpop.f32.mrb[0].mxu0
    %8965 = vmatprep.mubr.bf16.mxu0 0
    %8966 = vmatmul.mubr.bf16.gmra.mrb[0].mxu0 %v8740
    %v8967 = vpop.f32.mrb[0].mxu0
    %v8968 = vadd.f32 0.0, %v8967
    %v8969 = vpop.f32.mrb[0].mxu0
    %v8970 = vadd.f32 0.0, %v8969
    %v8971 = vpop.f32.mrb[0].mxu0
    %v8972 = vadd.f32 0.0, %v8971
    %v8973 = vpop.f32.mrb[0].mxu0
    %8974 = vmatprep.mubr.bf16.mxu0 0
    %8975 = vmatmul.mubr.bf16.gmra.mrb[0].mxu0 %v8741
    %v8976 = vpop.f32.mrb[0].mxu0
    %v8977 = vadd.f32 0.0, %v8976
    %v8978 = vpop.f32.mrb[0].mxu0
    %v8979 = vadd.f32 0.0, %v8978
    %v8980 = vpop.f32.mrb[0].mxu0
    %v8981 = vadd.f32 0.0, %v8980
    %v8982 = vpop.f32.mrb[0].mxu0
    %8983 = vmatprep.mubr.bf16.mxu0 0
    %8984 = vmatmul.mubr.bf16.gmra.mrb[0].mxu0 %v8742
    %v8985 = vpop.f32.mrb[0].mxu0
    %v8986 = vadd.f32 0.0, %v8985
    %v8987 = vpop.f32.mrb[0].mxu0
    %v8988 = vadd.f32 0.0, %v8987
    %v8989 = vpop.f32.mrb[0].mxu0
    %v8990 = vadd.f32 0.0, %v8989
    %v8991 = vpop.f32.mrb[0].mxu0
    %8992 = vmatprep.mubr.bf16.mxu0 0
    %8993 = vmatmul.mubr.bf16.gmra.mrb[0].mxu0 %v8743
    %v8994 = vpop.f32.mrb[0].mxu0
    %v8995 = vadd.f32 0.0, %v8994
    %v8996 = vpop.f32.mrb[0].mxu0
    %v8997 = vadd.f32 0.0, %v8996
    %v8998 = vpop.f32.mrb[0].mxu0
    %v8999 = vadd.f32 0.0, %v8998
    %v9000 = vpop.f32.mrb[0].mxu0
    %9001 = vmatprep.mubr.bf16.mxu0 0
    %9002 = vmatmul.mubr.bf16.gmra.mrb[0].mxu0 %v8744
    %v9003 = vpop.f32.mrb[0].mxu0
    %v9004 = vadd.f32 0.0, %v9003
    %v9005 = vpop.f32.mrb[0].mxu0
    %v9006 = vadd.f32 0.0, %v9005
    %v9007 = vpop.f32.mrb[0].mxu0
    %v9008 = vadd.f32 0.0, %v9007
    %v9009 = vpop.f32.mrb[0].mxu0
    %9010 = vmatprep.mubr.bf16.mxu0 0
    %9011 = vmatmul.mubr.bf16.gmra.mrb[0].mxu0 %v8745
    %v9012 = vpop.f32.mrb[0].mxu0
    %v9013 = vadd.f32 0.0, %v9012
    %v9014 = vpop.f32.mrb[0].mxu0
    %v9015 = vadd.f32 0.0, %v9014
    %v9016 = vpop.f32.mrb[0].mxu0
    %v9017 = vadd.f32 0.0, %v9016
    %v9018 = vpop.f32.mrb[0].mxu0
    %9019 = vdwg.mxu0
    %v9020 = vlaneseq
    %v9021 = vshrl.u32 %v9020, 7
    %v9022 = vsub.s32 0, %v9021
    %v9023 = vrot.slane %v8880, %v9022
    %v9024 = vlaneseq
    %v9025 = vshrl.u32 %v9024, 7
    %v9026 = vsub.s32 0, %v9025
    %v9027 = vrot.slane %v8889, %v9026
    %v9028 = vlaneseq
    %v9029 = vshrl.u32 %v9028, 7
    %v9030 = vsub.s32 0, %v9029
    %v9031 = vrot.slane %v8898, %v9030
    %v9032 = vlaneseq
    %v9033 = vshrl.u32 %v9032, 7
    %v9034 = vsub.s32 0, %v9033
    %v9035 = vrot.slane %v8907, %v9034
    %v9036 = vlaneseq
    %v9037 = vshrl.u32 %v9036, 7
    %v9038 = vsub.s32 0, %v9037
    %v9039 = vrot.slane %v8916, %v9038
    %v9040 = vlaneseq
    %v9041 = vshrl.u32 %v9040, 7
    %v9042 = vsub.s32 0, %v9041
    %v9043 = vrot.slane %v8925, %v9042
    %v9044 = vlaneseq
    %v9045 = vshrl.u32 %v9044, 7
    %v9046 = vsub.s32 0, %v9045
    %v9047 = vrot.slane %v8934, %v9046
    %v9048 = vlaneseq
    %v9049 = vshrl.u32 %v9048, 7
    %v9050 = vsub.s32 0, %v9049
    %v9051 = vrot.slane %v8943, %v9050
    %v9052 = vlaneseq
    %v9053 = vshrl.u32 %v9052, 7
    %v9054 = vsub.s32 0, %v9053
    %v9055 = vrot.slane %v8952, %v9054
    %v9056 = vlaneseq
    %v9057 = vshrl.u32 %v9056, 7
    %v9058 = vsub.s32 0, %v9057
    %v9059 = vrot.slane %v8961, %v9058
    %v9060 = vlaneseq
    %v9061 = vshrl.u32 %v9060, 7
    %v9062 = vsub.s32 0, %v9061
    %v9063 = vrot.slane %v8970, %v9062
    %v9064 = vlaneseq
    %v9065 = vshrl.u32 %v9064, 7
    %v9066 = vsub.s32 0, %v9065
    %v9067 = vrot.slane %v8979, %v9066
    %v9068 = vlaneseq
    %v9069 = vshrl.u32 %v9068, 7
    %v9070 = vsub.s32 0, %v9069
    %v9071 = vrot.slane %v8988, %v9070
    %v9072 = vlaneseq
    %v9073 = vshrl.u32 %v9072, 7
    %v9074 = vsub.s32 0, %v9073
    %v9075 = vrot.slane %v8997, %v9074
    %v9076 = vlaneseq
    %v9077 = vshrl.u32 %v9076, 7
    %v9078 = vsub.s32 0, %v9077
    %v9079 = vrot.slane %v9006, %v9078
    %v9080 = vlaneseq
    %v9081 = vshrl.u32 %v9080, 7
    %v9082 = vsub.s32 0, %v9081
    %v9083 = vrot.slane %v9015, %v9082
    %v9084 = vsub.f32 %v8878, %v9023
    %v9085 = vsub.f32 %v8882, %v9023
    %v9086 = vsub.f32 %v8887, %v9027
    %v9087 = vsub.f32 %v8891, %v9027
    %v9088 = vsub.f32 %v8896, %v9031
    %v9089 = vsub.f32 %v8900, %v9031
    %v9090 = vsub.f32 %v8905, %v9035
    %v9091 = vsub.f32 %v8909, %v9035
    %v9092 = vsub.f32 %v8914, %v9039
    %v9093 = vsub.f32 %v8918, %v9039
    %v9094 = vsub.f32 %v8923, %v9043
    %v9095 = vsub.f32 %v8927, %v9043
    %v9096 = vsub.f32 %v8932, %v9047
    %v9097 = vsub.f32 %v8936, %v9047
    %v9098 = vsub.f32 %v8941, %v9051
    %v9099 = vsub.f32 %v8945, %v9051
    %v9100 = vsub.f32 %v8950, %v9055
    %v9101 = vsub.f32 %v8954, %v9055
    %v9102 = vsub.f32 %v8959, %v9059
    %v9103 = vsub.f32 %v8963, %v9059
    %v9104 = vsub.f32 %v8968, %v9063
    %v9105 = vsub.f32 %v8972, %v9063
    %v9106 = vsub.f32 %v8977, %v9067
    %v9107 = vsub.f32 %v8981, %v9067
    %v9108 = vsub.f32 %v8986, %v9071
    %v9109 = vsub.f32 %v8990, %v9071
    %v9110 = vsub.f32 %v8995, %v9075
    %v9111 = vsub.f32 %v8999, %v9075
    %v9112 = vsub.f32 %v9004, %v9079
    %v9113 = vsub.f32 %v9008, %v9079
    %v9114 = vsub.f32 %v9013, %v9083
    %v9115 = vsub.f32 %v9017, %v9083
    %v9116 = vadd.f32 %v9084, %v6789
    %v9117 = vadd.f32 %v9085, %v6795
    %v9118 = vadd.f32 %v9086, %v6801
    %v9119 = vadd.f32 %v9087, %v6807
    %v9120 = vadd.f32 %v9088, %v6813
    %v9121 = vadd.f32 %v9089, %v6819
    %v9122 = vadd.f32 %v9090, %v6825
    %v9123 = vadd.f32 %v9091, %v6831
    %v9124 = vadd.f32 %v9092, %v6837
    %v9125 = vadd.f32 %v9093, %v6843
    %v9126 = vadd.f32 %v9094, %v6849
    %v9127 = vadd.f32 %v9095, %v6855
    %v9128 = vadd.f32 %v9096, %v6861
    %v9129 = vadd.f32 %v9097, %v6867
    %v9130 = vadd.f32 %v9098, %v6873
    %v9131 = vadd.f32 %v9099, %v6879
    %v9132 = vadd.f32 %v9100, %v6885
    %v9133 = vadd.f32 %v9101, %v6891
    %v9134 = vadd.f32 %v9102, %v6897
    %v9135 = vadd.f32 %v9103, %v6903
    %v9136 = vadd.f32 %v9104, %v6909
    %v9137 = vadd.f32 %v9105, %v6915
    %v9138 = vadd.f32 %v9106, %v6921
    %v9139 = vadd.f32 %v9107, %v6927
    %v9140 = vadd.f32 %v9108, %v6933
    %v9141 = vadd.f32 %v9109, %v6939
    %v9142 = vadd.f32 %v9110, %v6945
    %v9143 = vadd.f32 %v9111, %v6951
    %v9144 = vadd.f32 %v9112, %v6957
    %v9145 = vadd.f32 %v9113, %v6963
    %v9146 = vadd.f32 %v9114, %v6969
    %v9147 = vadd.f32 %v9115, %v6975
    %v9148 = vmul.f32 %v9116, 0.1
    %v9149 = vmul.f32 %v9117, 0.1
    %v9150 = vmul.f32 %v9118, 0.1
    %v9151 = vmul.f32 %v9119, 0.1
    %v9152 = vmul.f32 %v9120, 0.1
    %v9153 = vmul.f32 %v9121, 0.1
    %v9154 = vmul.f32 %v9122, 0.1
    %v9155 = vmul.f32 %v9123, 0.1
    %v9156 = vmul.f32 %v9124, 0.1
    %v9157 = vmul.f32 %v9125, 0.1
    %v9158 = vmul.f32 %v9126, 0.1
    %v9159 = vmul.f32 %v9127, 0.1
    %v9160 = vmul.f32 %v9128, 0.1
    %v9161 = vmul.f32 %v9129, 0.1
    %v9162 = vmul.f32 %v9130, 0.1
    %v9163 = vmul.f32 %v9131, 0.1
    %v9164 = vmul.f32 %v9132, 0.1
    %v9165 = vmul.f32 %v9133, 0.1
    %v9166 = vmul.f32 %v9134, 0.1
    %v9167 = vmul.f32 %v9135, 0.1
    %v9168 = vmul.f32 %v9136, 0.1
    %v9169 = vmul.f32 %v9137, 0.1
    %v9170 = vmul.f32 %v9138, 0.1
    %v9171 = vmul.f32 %v9139, 0.1
    %v9172 = vmul.f32 %v9140, 0.1
    %v9173 = vmul.f32 %v9141, 0.1
    %v9174 = vmul.f32 %v9142, 0.1
    %v9175 = vmul.f32 %v9143, 0.1
    %v9176 = vmul.f32 %v9144, 0.1
    %v9177 = vmul.f32 %v9145, 0.1
    %v9178 = vmul.f32 %v9146, 0.1
    %v9179 = vmul.f32 %v9147, 0.1
    %v9180 = vmax.f32 %v9116, %v9148
    %v9181 = vmax.f32 %v9117, %v9149
    %v9182 = vmax.f32 %v9118, %v9150
    %v9183 = vmax.f32 %v9119, %v9151
    %v9184 = vmax.f32 %v9120, %v9152
    %v9185 = vmax.f32 %v9121, %v9153
    %v9186 = vmax.f32 %v9122, %v9154
    %v9187 = vmax.f32 %v9123, %v9155
    %v9188 = vmax.f32 %v9124, %v9156
    %v9189 = vmax.f32 %v9125, %v9157
    %v9190 = vmax.f32 %v9126, %v9158
    %v9191 = vmax.f32 %v9127, %v9159
    %v9192 = vmax.f32 %v9128, %v9160
    %v9193 = vmax.f32 %v9129, %v9161
    %v9194 = vmax.f32 %v9130, %v9162
    %v9195 = vmax.f32 %v9131, %v9163
    %v9196 = vmax.f32 %v9132, %v9164
    %v9197 = vmax.f32 %v9133, %v9165
    %v9198 = vmax.f32 %v9134, %v9166
    %v9199 = vmax.f32 %v9135, %v9167
    %v9200 = vmax.f32 %v9136, %v9168
    %v9201 = vmax.f32 %v9137, %v9169
    %v9202 = vmax.f32 %v9138, %v9170
    %v9203 = vmax.f32 %v9139, %v9171
    %v9204 = vmax.f32 %v9140, %v9172
    %v9205 = vmax.f32 %v9141, %v9173
    %v9206 = vmax.f32 %v9142, %v9174
    %v9207 = vmax.f32 %v9143, %v9175
    %v9208 = vmax.f32 %v9144, %v9176
    %v9209 = vmax.f32 %v9145, %v9177
    %v9210 = vmax.f32 %v9146, %v9178
    %v9211 = vmax.f32 %v9147, %v9179
    %v9212 = vpack.c.bf16 %v9181, %v9180
    %v9213 = vpack.c.bf16 %v9183, %v9182
    %v9214 = vpack.c.bf16 %v9185, %v9184
    %v9215 = vpack.c.bf16 %v9187, %v9186
    %v9216 = vpack.c.bf16 %v9189, %v9188
    %v9217 = vpack.c.bf16 %v9191, %v9190
    %v9218 = vpack.c.bf16 %v9193, %v9192
    %v9219 = vpack.c.bf16 %v9195, %v9194
    %v9220 = vpack.c.bf16 %v9197, %v9196
    %v9221 = vpack.c.bf16 %v9199, %v9198
    %v9222 = vpack.c.bf16 %v9201, %v9200
    %v9223 = vpack.c.bf16 %v9203, %v9202
    %v9224 = vpack.c.bf16 %v9205, %v9204
    %v9225 = vpack.c.bf16 %v9207, %v9206
    %v9226 = vpack.c.bf16 %v9209, %v9208
    %v9227 = vpack.c.bf16 %v9211, %v9210
    %s9228 = scalar_lea.vmem [#allocation10], 256
    %v9229 = vld [vmem:[%s9228] sm:$0xff]
    %v9230 = vld [vmem:[%s9228 + $0x8] sm:$0xff]
    %v9231 = vld [vmem:[%s9228 + $0x10] sm:$0xff]
    %v9232 = vld [vmem:[%s9228 + $0x18] sm:$0xff]
    %v9233 = vld [vmem:[%s9228 + $0x20] sm:$0xff]
    %v9234 = vld [vmem:[%s9228 + $0x28] sm:$0xff]
    %v9235 = vld [vmem:[%s9228 + $0x30] sm:$0xff]
    %v9236 = vld [vmem:[%s9228 + $0x38] sm:$0xff]
    %v9237 = vld [vmem:[%s9228 + $0x40] sm:$0xff]
    %v9238 = vld [vmem:[%s9228 + $0x48] sm:$0xff]
    %v9239 = vld [vmem:[%s9228 + $0x50] sm:$0xff]
    %v9240 = vld [vmem:[%s9228 + $0x58] sm:$0xff]
    %v9241 = vld [vmem:[%s9228 + $0x60] sm:$0xff]
    %v9242 = vld [vmem:[%s9228 + $0x68] sm:$0xff]
    %v9243 = vld [vmem:[%s9228 + $0x70] sm:$0xff]
    %v9244 = vld [vmem:[%s9228 + $0x78] sm:$0xff]
    %v9261 = vunpack.c.l.b16 %v9229
    %v9262 = vunpack.c.h.b16 %v9229
    %v9263 = vunpack.c.l.b16 %v9230
    %v9264 = vunpack.c.h.b16 %v9230
    %v9265 = vunpack.c.l.b16 %v9231
    %v9266 = vunpack.c.h.b16 %v9231
    %v9267 = vunpack.c.l.b16 %v9232
    %v9268 = vunpack.c.h.b16 %v9232
    %v9269 = vunpack.c.l.b16 %v9233
    %v9270 = vunpack.c.h.b16 %v9233
    %v9271 = vunpack.c.l.b16 %v9234
    %v9272 = vunpack.c.h.b16 %v9234
    %v9273 = vunpack.c.l.b16 %v9235
    %v9274 = vunpack.c.h.b16 %v9235
    %v9275 = vunpack.c.l.b16 %v9236
    %v9276 = vunpack.c.h.b16 %v9236
    %v9277 = vunpack.c.l.b16 %v9237
    %v9278 = vunpack.c.h.b16 %v9237
    %v9279 = vunpack.c.l.b16 %v9238
    %v9280 = vunpack.c.h.b16 %v9238
    %v9281 = vunpack.c.l.b16 %v9239
    %v9282 = vunpack.c.h.b16 %v9239
    %v9283 = vunpack.c.l.b16 %v9240
    %v9284 = vunpack.c.h.b16 %v9240
    %v9285 = vunpack.c.l.b16 %v9241
    %v9286 = vunpack.c.h.b16 %v9241
    %v9287 = vunpack.c.l.b16 %v9242
    %v9288 = vunpack.c.h.b16 %v9242
    %v9289 = vunpack.c.l.b16 %v9243
    %v9290 = vunpack.c.h.b16 %v9243
    %v9291 = vunpack.c.l.b16 %v9244
    %v9292 = vunpack.c.h.b16 %v9244
    %v9293 = vpack.c.b16 %v9263, %v9261
    %v9294 = vpack.c.b16 %v9264, %v9262
    %v9295 = vpack.c.b16 %v9267, %v9265
    %v9296 = vpack.c.b16 %v9268, %v9266
    %v9297 = vpack.c.b16 %v9271, %v9269
    %v9298 = vpack.c.b16 %v9272, %v9270
    %v9299 = vpack.c.b16 %v9275, %v9273
    %v9300 = vpack.c.b16 %v9276, %v9274
    %v9301 = vpack.c.b16 %v9279, %v9277
    %v9302 = vpack.c.b16 %v9280, %v9278
    %v9303 = vpack.c.b16 %v9283, %v9281
    %v9304 = vpack.c.b16 %v9284, %v9282
    %v9305 = vpack.c.b16 %v9287, %v9285
    %v9306 = vpack.c.b16 %v9288, %v9286
    %v9307 = vpack.c.b16 %v9291, %v9289
    %v9308 = vpack.c.b16 %v9292, %v9290
    %9325 = vmatprep.subr.bf16.mxu0 %v9294
    %9326 = vmatpush1.bf16.msra.mxu0 %v9293
    %9327 = vmatprep.subr.bf16.mxu0 %v9296
    %9328 = vmatpush1.bf16.msra.mxu0 %v9295
    %9329 = vmatprep.subr.bf16.mxu0 %v9298
    %9330 = vmatpush1.bf16.msra.mxu0 %v9297
    %9331 = vmatprep.subr.bf16.mxu0 %v9300
    %9332 = vmatpush1.bf16.msra.mxu0 %v9299
    %9333 = vmatprep.subr.bf16.mxu0 %v9302
    %9334 = vmatpush1.bf16.msra.mxu0 %v9301
    %9335 = vmatprep.subr.bf16.mxu0 %v9304
    %9336 = vmatpush1.bf16.msra.mxu0 %v9303
    %9337 = vmatprep.subr.bf16.mxu0 %v9306
    %9338 = vmatpush1.bf16.msra.mxu0 %v9305
    %9339 = vmatprep.subr.bf16.mxu0 %v9308
    %9340 = vmatpush1.bf16.msra.mxu0 %v9307
    %9341 = vmatprep.subr.bf16.mxu0 0
    %9342 = vmatpush1.bf16.msra.mxu0 0
    %9343 = vmatprep.subr.bf16.mxu0 0
    %9344 = vmatpush1.bf16.msra.mxu0 0
    %9345 = vmatprep.subr.bf16.mxu0 0
    %9346 = vmatpush1.bf16.msra.mxu0 0
    %9347 = vmatprep.subr.bf16.mxu0 0
    %9348 = vmatpush1.bf16.msra.mxu0 0
    %9349 = vmatprep.subr.bf16.mxu0 0
    %9350 = vmatpush1.bf16.msra.mxu0 0
    %9351 = vmatprep.subr.bf16.mxu0 0
    %9352 = vmatpush1.bf16.msra.mxu0 0
    %9353 = vmatprep.subr.bf16.mxu0 0
    %9354 = vmatpush1.bf16.msra.mxu0 0
    %9355 = vmatprep.subr.bf16.mxu0 0
    %9356 = vmatpush1.bf16.msra.mxu0 0
    %9357 = vmatprep.mubr.bf16.mxu0 0
    %9358 = vmatmul.mubr.bf16.gmra.mrb[0].mxu0 %v9212
    %v9359 = vpop.f32.mrb[0].mxu0
    %v9360 = vadd.f32 0.0, %v9359
    %v9361 = vpop.f32.mrb[0].mxu0
    %v9362 = vadd.f32 0.0, %v9361
    %v9363 = vpop.f32.mrb[0].mxu0
    %v9364 = vadd.f32 0.0, %v9363
    %v9365 = vpop.f32.mrb[0].mxu0
    %9366 = vmatprep.mubr.bf16.mxu0 0
    %9367 = vmatmul.mubr.bf16.gmra.mrb[0].mxu0 %v9213
    %v9368 = vpop.f32.mrb[0].mxu0
    %v9369 = vadd.f32 0.0, %v9368
    %v9370 = vpop.f32.mrb[0].mxu0
    %v9371 = vadd.f32 0.0, %v9370
    %v9372 = vpop.f32.mrb[0].mxu0
    %v9373 = vadd.f32 0.0, %v9372
    %v9374 = vpop.f32.mrb[0].mxu0
    %9375 = vmatprep.mubr.bf16.mxu0 0
    %9376 = vmatmul.mubr.bf16.gmra.mrb[0].mxu0 %v9214
    %v9377 = vpop.f32.mrb[0].mxu0
    %v9378 = vadd.f32 0.0, %v9377
    %v9379 = vpop.f32.mrb[0].mxu0
    %v9380 = vadd.f32 0.0, %v9379
    %v9381 = vpop.f32.mrb[0].mxu0
    %v9382 = vadd.f32 0.0, %v9381
    %v9383 = vpop.f32.mrb[0].mxu0
    %9384 = vmatprep.mubr.bf16.mxu0 0
    %9385 = vmatmul.mubr.bf16.gmra.mrb[0].mxu0 %v9215
    %v9386 = vpop.f32.mrb[0].mxu0
    %v9387 = vadd.f32 0.0, %v9386
    %v9388 = vpop.f32.mrb[0].mxu0
    %v9389 = vadd.f32 0.0, %v9388
    %v9390 = vpop.f32.mrb[0].mxu0
    %v9391 = vadd.f32 0.0, %v9390
    %v9392 = vpop.f32.mrb[0].mxu0
    %9393 = vmatprep.mubr.bf16.mxu0 0
    %9394 = vmatmul.mubr.bf16.gmra.mrb[0].mxu0 %v9216
    %v9395 = vpop.f32.mrb[0].mxu0
    %v9396 = vadd.f32 0.0, %v9395
    %v9397 = vpop.f32.mrb[0].mxu0
    %v9398 = vadd.f32 0.0, %v9397
    %v9399 = vpop.f32.mrb[0].mxu0
    %v9400 = vadd.f32 0.0, %v9399
    %v9401 = vpop.f32.mrb[0].mxu0
    %9402 = vmatprep.mubr.bf16.mxu0 0
    %9403 = vmatmul.mubr.bf16.gmra.mrb[0].mxu0 %v9217
    %v9404 = vpop.f32.mrb[0].mxu0
    %v9405 = vadd.f32 0.0, %v9404
    %v9406 = vpop.f32.mrb[0].mxu0
    %v9407 = vadd.f32 0.0, %v9406
    %v9408 = vpop.f32.mrb[0].mxu0
    %v9409 = vadd.f32 0.0, %v9408
    %v9410 = vpop.f32.mrb[0].mxu0
    %9411 = vmatprep.mubr.bf16.mxu0 0
    %9412 = vmatmul.mubr.bf16.gmra.mrb[0].mxu0 %v9218
    %v9413 = vpop.f32.mrb[0].mxu0
    %v9414 = vadd.f32 0.0, %v9413
    %v9415 = vpop.f32.mrb[0].mxu0
    %v9416 = vadd.f32 0.0, %v9415
    %v9417 = vpop.f32.mrb[0].mxu0
    %v9418 = vadd.f32 0.0, %v9417
    %v9419 = vpop.f32.mrb[0].mxu0
    %9420 = vmatprep.mubr.bf16.mxu0 0
    %9421 = vmatmul.mubr.bf16.gmra.mrb[0].mxu0 %v9219
    %v9422 = vpop.f32.mrb[0].mxu0
    %v9423 = vadd.f32 0.0, %v9422
    %v9424 = vpop.f32.mrb[0].mxu0
    %v9425 = vadd.f32 0.0, %v9424
    %v9426 = vpop.f32.mrb[0].mxu0
    %v9427 = vadd.f32 0.0, %v9426
    %v9428 = vpop.f32.mrb[0].mxu0
    %9429 = vmatprep.mubr.bf16.mxu0 0
    %9430 = vmatmul.mubr.bf16.gmra.mrb[0].mxu0 %v9220
    %v9431 = vpop.f32.mrb[0].mxu0
    %v9432 = vadd.f32 0.0, %v9431
    %v9433 = vpop.f32.mrb[0].mxu0
    %v9434 = vadd.f32 0.0, %v9433
    %v9435 = vpop.f32.mrb[0].mxu0
    %v9436 = vadd.f32 0.0, %v9435
    %v9437 = vpop.f32.mrb[0].mxu0
    %9438 = vmatprep.mubr.bf16.mxu0 0
    %9439 = vmatmul.mubr.bf16.gmra.mrb[0].mxu0 %v9221
    %v9440 = vpop.f32.mrb[0].mxu0
    %v9441 = vadd.f32 0.0, %v9440
    %v9442 = vpop.f32.mrb[0].mxu0
    %v9443 = vadd.f32 0.0, %v9442
    %v9444 = vpop.f32.mrb[0].mxu0
    %v9445 = vadd.f32 0.0, %v9444
    %v9446 = vpop.f32.mrb[0].mxu0
    %9447 = vmatprep.mubr.bf16.mxu0 0
    %9448 = vmatmul.mubr.bf16.gmra.mrb[0].mxu0 %v9222
    %v9449 = vpop.f32.mrb[0].mxu0
    %v9450 = vadd.f32 0.0, %v9449
    %v9451 = vpop.f32.mrb[0].mxu0
    %v9452 = vadd.f32 0.0, %v9451
    %v9453 = vpop.f32.mrb[0].mxu0
    %v9454 = vadd.f32 0.0, %v9453
    %v9455 = vpop.f32.mrb[0].mxu0
    %9456 = vmatprep.mubr.bf16.mxu0 0
    %9457 = vmatmul.mubr.bf16.gmra.mrb[0].mxu0 %v9223
    %v9458 = vpop.f32.mrb[0].mxu0
    %v9459 = vadd.f32 0.0, %v9458
    %v9460 = vpop.f32.mrb[0].mxu0
    %v9461 = vadd.f32 0.0, %v9460
    %v9462 = vpop.f32.mrb[0].mxu0
    %v9463 = vadd.f32 0.0, %v9462
    %v9464 = vpop.f32.mrb[0].mxu0
    %9465 = vmatprep.mubr.bf16.mxu0 0
    %9466 = vmatmul.mubr.bf16.gmra.mrb[0].mxu0 %v9224
    %v9467 = vpop.f32.mrb[0].mxu0
    %v9468 = vadd.f32 0.0, %v9467
    %v9469 = vpop.f32.mrb[0].mxu0
    %v9470 = vadd.f32 0.0, %v9469
    %v9471 = vpop.f32.mrb[0].mxu0
    %v9472 = vadd.f32 0.0, %v9471
    %v9473 = vpop.f32.mrb[0].mxu0
    %9474 = vmatprep.mubr.bf16.mxu0 0
    %9475 = vmatmul.mubr.bf16.gmra.mrb[0].mxu0 %v9225
    %v9476 = vpop.f32.mrb[0].mxu0
    %v9477 = vadd.f32 0.0, %v9476
    %v9478 = vpop.f32.mrb[0].mxu0
    %v9479 = vadd.f32 0.0, %v9478
    %v9480 = vpop.f32.mrb[0].mxu0
    %v9481 = vadd.f32 0.0, %v9480
    %v9482 = vpop.f32.mrb[0].mxu0
    %9483 = vmatprep.mubr.bf16.mxu0 0
    %9484 = vmatmul.mubr.bf16.gmra.mrb[0].mxu0 %v9226
    %v9485 = vpop.f32.mrb[0].mxu0
    %v9486 = vadd.f32 0.0, %v9485
    %v9487 = vpop.f32.mrb[0].mxu0
    %v9488 = vadd.f32 0.0, %v9487
    %v9489 = vpop.f32.mrb[0].mxu0
    %v9490 = vadd.f32 0.0, %v9489
    %v9491 = vpop.f32.mrb[0].mxu0
    %9492 = vmatprep.mubr.bf16.mxu0 0
    %9493 = vmatmul.mubr.bf16.gmra.mrb[0].mxu0 %v9227
    %v9494 = vpop.f32.mrb[0].mxu0
    %v9495 = vadd.f32 0.0, %v9494
    %v9496 = vpop.f32.mrb[0].mxu0
    %v9497 = vadd.f32 0.0, %v9496
    %v9498 = vpop.f32.mrb[0].mxu0
    %v9499 = vadd.f32 0.0, %v9498
    %v9500 = vpop.f32.mrb[0].mxu0
    %9501 = vdwg.mxu0
    %v9502 = vlaneseq
    %v9503 = vshrl.u32 %v9502, 7
    %v9504 = vsub.s32 0, %v9503
    %v9505 = vrot.slane %v9362, %v9504
    %v9506 = vlaneseq
    %v9507 = vshrl.u32 %v9506, 7
    %v9508 = vsub.s32 0, %v9507
    %v9509 = vrot.slane %v9371, %v9508
    %v9510 = vlaneseq
    %v9511 = vshrl.u32 %v9510, 7
    %v9512 = vsub.s32 0, %v9511
    %v9513 = vrot.slane %v9380, %v9512
    %v9514 = vlaneseq
    %v9515 = vshrl.u32 %v9514, 7
    %v9516 = vsub.s32 0, %v9515
    %v9517 = vrot.slane %v9389, %v9516
    %v9518 = vlaneseq
    %v9519 = vshrl.u32 %v9518, 7
    %v9520 = vsub.s32 0, %v9519
    %v9521 = vrot.slane %v9398, %v9520
    %v9522 = vlaneseq
    %v9523 = vshrl.u32 %v9522, 7
    %v9524 = vsub.s32 0, %v9523
    %v9525 = vrot.slane %v9407, %v9524
    %v9526 = vlaneseq
    %v9527 = vshrl.u32 %v9526, 7
    %v9528 = vsub.s32 0, %v9527
    %v9529 = vrot.slane %v9416, %v9528
    %v9530 = vlaneseq
    %v9531 = vshrl.u32 %v9530, 7
    %v9532 = vsub.s32 0, %v9531
    %v9533 = vrot.slane %v9425, %v9532
    %v9534 = vlaneseq
    %v9535 = vshrl.u32 %v9534, 7
    %v9536 = vsub.s32 0, %v9535
    %v9537 = vrot.slane %v9434, %v9536
    %v9538 = vlaneseq
    %v9539 = vshrl.u32 %v9538, 7
    %v9540 = vsub.s32 0, %v9539
    %v9541 = vrot.slane %v9443, %v9540
    %v9542 = vlaneseq
    %v9543 = vshrl.u32 %v9542, 7
    %v9544 = vsub.s32 0, %v9543
    %v9545 = vrot.slane %v9452, %v9544
    %v9546 = vlaneseq
    %v9547 = vshrl.u32 %v9546, 7
    %v9548 = vsub.s32 0, %v9547
    %v9549 = vrot.slane %v9461, %v9548
    %v9550 = vlaneseq
    %v9551 = vshrl.u32 %v9550, 7
    %v9552 = vsub.s32 0, %v9551
    %v9553 = vrot.slane %v9470, %v9552
    %v9554 = vlaneseq
    %v9555 = vshrl.u32 %v9554, 7
    %v9556 = vsub.s32 0, %v9555
    %v9557 = vrot.slane %v9479, %v9556
    %v9558 = vlaneseq
    %v9559 = vshrl.u32 %v9558, 7
    %v9560 = vsub.s32 0, %v9559
    %v9561 = vrot.slane %v9488, %v9560
    %v9562 = vlaneseq
    %v9563 = vshrl.u32 %v9562, 7
    %v9564 = vsub.s32 0, %v9563
    %v9565 = vrot.slane %v9497, %v9564
    %v9566 = vsub.f32 %v9360, %v9505
    %v9567 = vsub.f32 %v9364, %v9505
    %v9568 = vsub.f32 %v9369, %v9509
    %v9569 = vsub.f32 %v9373, %v9509
    %v9570 = vsub.f32 %v9378, %v9513
    %v9571 = vsub.f32 %v9382, %v9513
    %v9572 = vsub.f32 %v9387, %v9517
    %v9573 = vsub.f32 %v9391, %v9517
    %v9574 = vsub.f32 %v9396, %v9521
    %v9575 = vsub.f32 %v9400, %v9521
    %v9576 = vsub.f32 %v9405, %v9525
    %v9577 = vsub.f32 %v9409, %v9525
    %v9578 = vsub.f32 %v9414, %v9529
    %v9579 = vsub.f32 %v9418, %v9529
    %v9580 = vsub.f32 %v9423, %v9533
    %v9581 = vsub.f32 %v9427, %v9533
    %v9582 = vsub.f32 %v9432, %v9537
    %v9583 = vsub.f32 %v9436, %v9537
    %v9584 = vsub.f32 %v9441, %v9541
    %v9585 = vsub.f32 %v9445, %v9541
    %v9586 = vsub.f32 %v9450, %v9545
    %v9587 = vsub.f32 %v9454, %v9545
    %v9588 = vsub.f32 %v9459, %v9549
    %v9589 = vsub.f32 %v9463, %v9549
    %v9590 = vsub.f32 %v9468, %v9553
    %v9591 = vsub.f32 %v9472, %v9553
    %v9592 = vsub.f32 %v9477, %v9557
    %v9593 = vsub.f32 %v9481, %v9557
    %v9594 = vsub.f32 %v9486, %v9561
    %v9595 = vsub.f32 %v9490, %v9561
    %v9596 = vsub.f32 %v9495, %v9565
    %v9597 = vsub.f32 %v9499, %v9565
    %v9598 = vadd.f32 %v9566, %v7044
    %v9599 = vadd.f32 %v9567, %v7050
    %v9600 = vadd.f32 %v9568, %v7056
    %v9601 = vadd.f32 %v9569, %v7062
    %v9602 = vadd.f32 %v9570, %v7068
    %v9603 = vadd.f32 %v9571, %v7074
    %v9604 = vadd.f32 %v9572, %v7080
    %v9605 = vadd.f32 %v9573, %v7086
    %v9606 = vadd.f32 %v9574, %v7092
    %v9607 = vadd.f32 %v9575, %v7098
    %v9608 = vadd.f32 %v9576, %v7104
    %v9609 = vadd.f32 %v9577, %v7110
    %v9610 = vadd.f32 %v9578, %v7116
    %v9611 = vadd.f32 %v9579, %v7122
    %v9612 = vadd.f32 %v9580, %v7128
    %v9613 = vadd.f32 %v9581, %v7134
    %v9614 = vadd.f32 %v9582, %v7140
    %v9615 = vadd.f32 %v9583, %v7146
    %v9616 = vadd.f32 %v9584, %v7152
    %v9617 = vadd.f32 %v9585, %v7158
    %v9618 = vadd.f32 %v9586, %v7164
    %v9619 = vadd.f32 %v9587, %v7170
    %v9620 = vadd.f32 %v9588, %v7176
    %v9621 = vadd.f32 %v9589, %v7182
    %v9622 = vadd.f32 %v9590, %v7188
    %v9623 = vadd.f32 %v9591, %v7194
    %v9624 = vadd.f32 %v9592, %v7200
    %v9625 = vadd.f32 %v9593, %v7206
    %v9626 = vadd.f32 %v9594, %v7212
    %v9627 = vadd.f32 %v9595, %v7218
    %v9628 = vadd.f32 %v9596, %v7224
    %v9629 = vadd.f32 %v9597, %v7230
    %v9630 = vmul.f32 %v9598, 0.1
    %v9631 = vmul.f32 %v9599, 0.1
    %v9632 = vmul.f32 %v9600, 0.1
    %v9633 = vmul.f32 %v9601, 0.1
    %v9634 = vmul.f32 %v9602, 0.1
    %v9635 = vmul.f32 %v9603, 0.1
    %v9636 = vmul.f32 %v9604, 0.1
    %v9637 = vmul.f32 %v9605, 0.1
    %v9638 = vmul.f32 %v9606, 0.1
    %v9639 = vmul.f32 %v9607, 0.1
    %v9640 = vmul.f32 %v9608, 0.1
    %v9641 = vmul.f32 %v9609, 0.1
    %v9642 = vmul.f32 %v9610, 0.1
    %v9643 = vmul.f32 %v9611, 0.1
    %v9644 = vmul.f32 %v9612, 0.1
    %v9645 = vmul.f32 %v9613, 0.1
    %v9646 = vmul.f32 %v9614, 0.1
    %v9647 = vmul.f32 %v9615, 0.1
    %v9648 = vmul.f32 %v9616, 0.1
    %v9649 = vmul.f32 %v9617, 0.1
    %v9650 = vmul.f32 %v9618, 0.1
    %v9651 = vmul.f32 %v9619, 0.1
    %v9652 = vmul.f32 %v9620, 0.1
    %v9653 = vmul.f32 %v9621, 0.1
    %v9654 = vmul.f32 %v9622, 0.1
    %v9655 = vmul.f32 %v9623, 0.1
    %v9656 = vmul.f32 %v9624, 0.1
    %v9657 = vmul.f32 %v9625, 0.1
    %v9658 = vmul.f32 %v9626, 0.1
    %v9659 = vmul.f32 %v9627, 0.1
    %v9660 = vmul.f32 %v9628, 0.1
    %v9661 = vmul.f32 %v9629, 0.1
    %v9662 = vmax.f32 %v9598, %v9630
    %v9663 = vmax.f32 %v9599, %v9631
    %v9664 = vmax.f32 %v9600, %v9632
    %v9665 = vmax.f32 %v9601, %v9633
    %v9666 = vmax.f32 %v9602, %v9634
    %v9667 = vmax.f32 %v9603, %v9635
    %v9668 = vmax.f32 %v9604, %v9636
    %v9669 = vmax.f32 %v9605, %v9637
    %v9670 = vmax.f32 %v9606, %v9638
    %v9671 = vmax.f32 %v9607, %v9639
    %v9672 = vmax.f32 %v9608, %v9640
    %v9673 = vmax.f32 %v9609, %v9641
    %v9674 = vmax.f32 %v9610, %v9642
    %v9675 = vmax.f32 %v9611, %v9643
    %v9676 = vmax.f32 %v9612, %v9644
    %v9677 = vmax.f32 %v9613, %v9645
    %v9678 = vmax.f32 %v9614, %v9646
    %v9679 = vmax.f32 %v9615, %v9647
    %v9680 = vmax.f32 %v9616, %v9648
    %v9681 = vmax.f32 %v9617, %v9649
    %v9682 = vmax.f32 %v9618, %v9650
    %v9683 = vmax.f32 %v9619, %v9651
    %v9684 = vmax.f32 %v9620, %v9652
    %v9685 = vmax.f32 %v9621, %v9653
    %v9686 = vmax.f32 %v9622, %v9654
    %v9687 = vmax.f32 %v9623, %v9655
    %v9688 = vmax.f32 %v9624, %v9656
    %v9689 = vmax.f32 %v9625, %v9657
    %v9690 = vmax.f32 %v9626, %v9658
    %v9691 = vmax.f32 %v9627, %v9659
    %v9692 = vmax.f32 %v9628, %v9660
    %v9693 = vmax.f32 %v9629, %v9661
    %v9694 = vpack.c.bf16 %v9663, %v9662
    %v9695 = vpack.c.bf16 %v9665, %v9664
    %v9696 = vpack.c.bf16 %v9667, %v9666
    %v9697 = vpack.c.bf16 %v9669, %v9668
    %v9698 = vpack.c.bf16 %v9671, %v9670
    %v9699 = vpack.c.bf16 %v9673, %v9672
    %v9700 = vpack.c.bf16 %v9675, %v9674
    %v9701 = vpack.c.bf16 %v9677, %v9676
    %v9702 = vpack.c.bf16 %v9679, %v9678
    %v9703 = vpack.c.bf16 %v9681, %v9680
    %v9704 = vpack.c.bf16 %v9683, %v9682
    %v9705 = vpack.c.bf16 %v9685, %v9684
    %v9706 = vpack.c.bf16 %v9687, %v9686
    %v9707 = vpack.c.bf16 %v9689, %v9688
    %v9708 = vpack.c.bf16 %v9691, %v9690
    %v9709 = vpack.c.bf16 %v9693, %v9692
    %s9710 = scalar_lea.vmem [#allocation10], 384
    %v9711 = vld [vmem:[%s9710] sm:$0xff]
    %v9712 = vld [vmem:[%s9710 + $0x8] sm:$0xff]
    %v9713 = vld [vmem:[%s9710 + $0x10] sm:$0xff]
    %v9714 = vld [vmem:[%s9710 + $0x18] sm:$0xff]
    %v9715 = vld [vmem:[%s9710 + $0x20] sm:$0xff]
    %v9716 = vld [vmem:[%s9710 + $0x28] sm:$0xff]
    %v9717 = vld [vmem:[%s9710 + $0x30] sm:$0xff]
    %v9718 = vld [vmem:[%s9710 + $0x38] sm:$0xff]
    %v9719 = vld [vmem:[%s9710 + $0x40] sm:$0xff]
    %v9720 = vld [vmem:[%s9710 + $0x48] sm:$0xff]
    %v9721 = vld [vmem:[%s9710 + $0x50] sm:$0xff]
    %v9722 = vld [vmem:[%s9710 + $0x58] sm:$0xff]
    %v9723 = vld [vmem:[%s9710 + $0x60] sm:$0xff]
    %v9724 = vld [vmem:[%s9710 + $0x68] sm:$0xff]
    %v9725 = vld [vmem:[%s9710 + $0x70] sm:$0xff]
    %v9726 = vld [vmem:[%s9710 + $0x78] sm:$0xff]
    %v9743 = vunpack.c.l.b16 %v9711
    %v9744 = vunpack.c.h.b16 %v9711
    %v9745 = vunpack.c.l.b16 %v9712
    %v9746 = vunpack.c.h.b16 %v9712
    %v9747 = vunpack.c.l.b16 %v9713
    %v9748 = vunpack.c.h.b16 %v9713
    %v9749 = vunpack.c.l.b16 %v9714
    %v9750 = vunpack.c.h.b16 %v9714
    %v9751 = vunpack.c.l.b16 %v9715
    %v9752 = vunpack.c.h.b16 %v9715
    %v9753 = vunpack.c.l.b16 %v9716
    %v9754 = vunpack.c.h.b16 %v9716
    %v9755 = vunpack.c.l.b16 %v9717
    %v9756 = vunpack.c.h.b16 %v9717
    %v9757 = vunpack.c.l.b16 %v9718
    %v9758 = vunpack.c.h.b16 %v9718
    %v9759 = vunpack.c.l.b16 %v9719
    %v9760 = vunpack.c.h.b16 %v9719
    %v9761 = vunpack.c.l.b16 %v9720
    %v9762 = vunpack.c.h.b16 %v9720
    %v9763 = vunpack.c.l.b16 %v9721
    %v9764 = vunpack.c.h.b16 %v9721
    %v9765 = vunpack.c.l.b16 %v9722
    %v9766 = vunpack.c.h.b16 %v9722
    %v9767 = vunpack.c.l.b16 %v9723
    %v9768 = vunpack.c.h.b16 %v9723
    %v9769 = vunpack.c.l.b16 %v9724
    %v9770 = vunpack.c.h.b16 %v9724
    %v9771 = vunpack.c.l.b16 %v9725
    %v9772 = vunpack.c.h.b16 %v9725
    %v9773 = vunpack.c.l.b16 %v9726
    %v9774 = vunpack.c.h.b16 %v9726
    %v9775 = vpack.c.b16 %v9745, %v9743
    %v9776 = vpack.c.b16 %v9746, %v9744
    %v9777 = vpack.c.b16 %v9749, %v9747
    %v9778 = vpack.c.b16 %v9750, %v9748
    %v9779 = vpack.c.b16 %v9753, %v9751
    %v9780 = vpack.c.b16 %v9754, %v9752
    %v9781 = vpack.c.b16 %v9757, %v9755
    %v9782 = vpack.c.b16 %v9758, %v9756
    %v9783 = vpack.c.b16 %v9761, %v9759
    %v9784 = vpack.c.b16 %v9762, %v9760
    %v9785 = vpack.c.b16 %v9765, %v9763
    %v9786 = vpack.c.b16 %v9766, %v9764
    %v9787 = vpack.c.b16 %v9769, %v9767
    %v9788 = vpack.c.b16 %v9770, %v9768
    %v9789 = vpack.c.b16 %v9773, %v9771
    %v9790 = vpack.c.b16 %v9774, %v9772
    %9807 = vmatprep.subr.bf16.mxu0 %v9776
    %9808 = vmatpush1.bf16.msra.mxu0 %v9775
    %9809 = vmatprep.subr.bf16.mxu0 %v9778
    %9810 = vmatpush1.bf16.msra.mxu0 %v9777
    %9811 = vmatprep.subr.bf16.mxu0 %v9780
    %9812 = vmatpush1.bf16.msra.mxu0 %v9779
    %9813 = vmatprep.subr.bf16.mxu0 %v9782
    %9814 = vmatpush1.bf16.msra.mxu0 %v9781
    %9815 = vmatprep.subr.bf16.mxu0 %v9784
    %9816 = vmatpush1.bf16.msra.mxu0 %v9783
    %9817 = vmatprep.subr.bf16.mxu0 %v9786
    %9818 = vmatpush1.bf16.msra.mxu0 %v9785
    %9819 = vmatprep.subr.bf16.mxu0 %v9788
    %9820 = vmatpush1.bf16.msra.mxu0 %v9787
    %9821 = vmatprep.subr.bf16.mxu0 %v9790
    %9822 = vmatpush1.bf16.msra.mxu0 %v9789
    %9823 = vmatprep.subr.bf16.mxu0 0
    %9824 = vmatpush1.bf16.msra.mxu0 0
    %9825 = vmatprep.subr.bf16.mxu0 0
    %9826 = vmatpush1.bf16.msra.mxu0 0
    %9827 = vmatprep.subr.bf16.mxu0 0
    %9828 = vmatpush1.bf16.msra.mxu0 0
    %9829 = vmatprep.subr.bf16.mxu0 0
    %9830 = vmatpush1.bf16.msra.mxu0 0
    %9831 = vmatprep.subr.bf16.mxu0 0
    %9832 = vmatpush1.bf16.msra.mxu0 0
    %9833 = vmatprep.subr.bf16.mxu0 0
    %9834 = vmatpush1.bf16.msra.mxu0 0
    %9835 = vmatprep.subr.bf16.mxu0 0
    %9836 = vmatpush1.bf16.msra.mxu0 0
    %9837 = vmatprep.subr.bf16.mxu0 0
    %9838 = vmatpush1.bf16.msra.mxu0 0
    %9839 = vmatprep.mubr.bf16.mxu0 0
    %9840 = vmatmul.mubr.bf16.gmra.mrb[0].mxu0 %v9694
    %v9841 = vpop.f32.mrb[0].mxu0
    %v9842 = vadd.f32 0.0, %v9841
    %v9843 = vpop.f32.mrb[0].mxu0
    %v9844 = vadd.f32 0.0, %v9843
    %v9845 = vpop.f32.mrb[0].mxu0
    %v9846 = vadd.f32 0.0, %v9845
    %v9847 = vpop.f32.mrb[0].mxu0
    %9848 = vmatprep.mubr.bf16.mxu0 0
    %9849 = vmatmul.mubr.bf16.gmra.mrb[0].mxu0 %v9695
    %v9850 = vpop.f32.mrb[0].mxu0
    %v9851 = vadd.f32 0.0, %v9850
    %v9852 = vpop.f32.mrb[0].mxu0
    %v9853 = vadd.f32 0.0, %v9852
    %v9854 = vpop.f32.mrb[0].mxu0
    %v9855 = vadd.f32 0.0, %v9854
    %v9856 = vpop.f32.mrb[0].mxu0
    %9857 = vmatprep.mubr.bf16.mxu0 0
    %9858 = vmatmul.mubr.bf16.gmra.mrb[0].mxu0 %v9696
    %v9859 = vpop.f32.mrb[0].mxu0
    %v9860 = vadd.f32 0.0, %v9859
    %v9861 = vpop.f32.mrb[0].mxu0
    %v9862 = vadd.f32 0.0, %v9861
    %v9863 = vpop.f32.mrb[0].mxu0
    %v9864 = vadd.f32 0.0, %v9863
    %v9865 = vpop.f32.mrb[0].mxu0
    %9866 = vmatprep.mubr.bf16.mxu0 0
    %9867 = vmatmul.mubr.bf16.gmra.mrb[0].mxu0 %v9697
    %v9868 = vpop.f32.mrb[0].mxu0
    %v9869 = vadd.f32 0.0, %v9868
    %v9870 = vpop.f32.mrb[0].mxu0
    %v9871 = vadd.f32 0.0, %v9870
    %v9872 = vpop.f32.mrb[0].mxu0
    %v9873 = vadd.f32 0.0, %v9872
    %v9874 = vpop.f32.mrb[0].mxu0
    %9875 = vmatprep.mubr.bf16.mxu0 0
    %9876 = vmatmul.mubr.bf16.gmra.mrb[0].mxu0 %v9698
    %v9877 = vpop.f32.mrb[0].mxu0
    %v9878 = vadd.f32 0.0, %v9877
    %v9879 = vpop.f32.mrb[0].mxu0
    %v9880 = vadd.f32 0.0, %v9879
    %v9881 = vpop.f32.mrb[0].mxu0
    %v9882 = vadd.f32 0.0, %v9881
    %v9883 = vpop.f32.mrb[0].mxu0
    %9884 = vmatprep.mubr.bf16.mxu0 0
    %9885 = vmatmul.mubr.bf16.gmra.mrb[0].mxu0 %v9699
    %v9886 = vpop.f32.mrb[0].mxu0
    %v9887 = vadd.f32 0.0, %v9886
    %v9888 = vpop.f32.mrb[0].mxu0
    %v9889 = vadd.f32 0.0, %v9888
    %v9890 = vpop.f32.mrb[0].mxu0
    %v9891 = vadd.f32 0.0, %v9890
    %v9892 = vpop.f32.mrb[0].mxu0
    %9893 = vmatprep.mubr.bf16.mxu0 0
    %9894 = vmatmul.mubr.bf16.gmra.mrb[0].mxu0 %v9700
    %v9895 = vpop.f32.mrb[0].mxu0
    %v9896 = vadd.f32 0.0, %v9895
    %v9897 = vpop.f32.mrb[0].mxu0
    %v9898 = vadd.f32 0.0, %v9897
    %v9899 = vpop.f32.mrb[0].mxu0
    %v9900 = vadd.f32 0.0, %v9899
    %v9901 = vpop.f32.mrb[0].mxu0
    %9902 = vmatprep.mubr.bf16.mxu0 0
    %9903 = vmatmul.mubr.bf16.gmra.mrb[0].mxu0 %v9701
    %v9904 = vpop.f32.mrb[0].mxu0
    %v9905 = vadd.f32 0.0, %v9904
    %v9906 = vpop.f32.mrb[0].mxu0
    %v9907 = vadd.f32 0.0, %v9906
    %v9908 = vpop.f32.mrb[0].mxu0
    %v9909 = vadd.f32 0.0, %v9908
    %v9910 = vpop.f32.mrb[0].mxu0
    %9911 = vmatprep.mubr.bf16.mxu0 0
    %9912 = vmatmul.mubr.bf16.gmra.mrb[0].mxu0 %v9702
    %v9913 = vpop.f32.mrb[0].mxu0
    %v9914 = vadd.f32 0.0, %v9913
    %v9915 = vpop.f32.mrb[0].mxu0
    %v9916 = vadd.f32 0.0, %v9915
    %v9917 = vpop.f32.mrb[0].mxu0
    %v9918 = vadd.f32 0.0, %v9917
    %v9919 = vpop.f32.mrb[0].mxu0
    %9920 = vmatprep.mubr.bf16.mxu0 0
    %9921 = vmatmul.mubr.bf16.gmra.mrb[0].mxu0 %v9703
    %v9922 = vpop.f32.mrb[0].mxu0
    %v9923 = vadd.f32 0.0, %v9922
    %v9924 = vpop.f32.mrb[0].mxu0
    %v9925 = vadd.f32 0.0, %v9924
    %v9926 = vpop.f32.mrb[0].mxu0
    %v9927 = vadd.f32 0.0, %v9926
    %v9928 = vpop.f32.mrb[0].mxu0
    %9929 = vmatprep.mubr.bf16.mxu0 0
    %9930 = vmatmul.mubr.bf16.gmra.mrb[0].mxu0 %v9704
    %v9931 = vpop.f32.mrb[0].mxu0
    %v9932 = vadd.f32 0.0, %v9931
    %v9933 = vpop.f32.mrb[0].mxu0
    %v9934 = vadd.f32 0.0, %v9933
    %v9935 = vpop.f32.mrb[0].mxu0
    %v9936 = vadd.f32 0.0, %v9935
    %v9937 = vpop.f32.mrb[0].mxu0
    %9938 = vmatprep.mubr.bf16.mxu0 0
    %9939 = vmatmul.mubr.bf16.gmra.mrb[0].mxu0 %v9705
    %v9940 = vpop.f32.mrb[0].mxu0
    %v9941 = vadd.f32 0.0, %v9940
    %v9942 = vpop.f32.mrb[0].mxu0
    %v9943 = vadd.f32 0.0, %v9942
    %v9944 = vpop.f32.mrb[0].mxu0
    %v9945 = vadd.f32 0.0, %v9944
    %v9946 = vpop.f32.mrb[0].mxu0
    %9947 = vmatprep.mubr.bf16.mxu0 0
    %9948 = vmatmul.mubr.bf16.gmra.mrb[0].mxu0 %v9706
    %v9949 = vpop.f32.mrb[0].mxu0
    %v9950 = vadd.f32 0.0, %v9949
    %v9951 = vpop.f32.mrb[0].mxu0
    %v9952 = vadd.f32 0.0, %v9951
    %v9953 = vpop.f32.mrb[0].mxu0
    %v9954 = vadd.f32 0.0, %v9953
    %v9955 = vpop.f32.mrb[0].mxu0
    %9956 = vmatprep.mubr.bf16.mxu0 0
    %9957 = vmatmul.mubr.bf16.gmra.mrb[0].mxu0 %v9707
    %v9958 = vpop.f32.mrb[0].mxu0
    %v9959 = vadd.f32 0.0, %v9958
    %v9960 = vpop.f32.mrb[0].mxu0
    %v9961 = vadd.f32 0.0, %v9960
    %v9962 = vpop.f32.mrb[0].mxu0
    %v9963 = vadd.f32 0.0, %v9962
    %v9964 = vpop.f32.mrb[0].mxu0
    %9965 = vmatprep.mubr.bf16.mxu0 0
    %9966 = vmatmul.mubr.bf16.gmra.mrb[0].mxu0 %v9708
    %v9967 = vpop.f32.mrb[0].mxu0
    %v9968 = vadd.f32 0.0, %v9967
    %v9969 = vpop.f32.mrb[0].mxu0
    %v9970 = vadd.f32 0.0, %v9969
    %v9971 = vpop.f32.mrb[0].mxu0
    %v9972 = vadd.f32 0.0, %v9971
    %v9973 = vpop.f32.mrb[0].mxu0
    %9974 = vmatprep.mubr.bf16.mxu0 0
    %9975 = vmatmul.mubr.bf16.gmra.mrb[0].mxu0 %v9709
    %v9976 = vpop.f32.mrb[0].mxu0
    %v9977 = vadd.f32 0.0, %v9976
    %v9978 = vpop.f32.mrb[0].mxu0
    %v9979 = vadd.f32 0.0, %v9978
    %v9980 = vpop.f32.mrb[0].mxu0
    %v9981 = vadd.f32 0.0, %v9980
    %v9982 = vpop.f32.mrb[0].mxu0
    %9983 = vdwg.mxu0
    %v9984 = vlaneseq
    %v9985 = vshrl.u32 %v9984, 7
    %v9986 = vsub.s32 0, %v9985
    %v9987 = vrot.slane %v9844, %v9986
    %v9988 = vlaneseq
    %v9989 = vshrl.u32 %v9988, 7
    %v9990 = vsub.s32 0, %v9989
    %v9991 = vrot.slane %v9853, %v9990
    %v9992 = vlaneseq
    %v9993 = vshrl.u32 %v9992, 7
    %v9994 = vsub.s32 0, %v9993
    %v9995 = vrot.slane %v9862, %v9994
    %v9996 = vlaneseq
    %v9997 = vshrl.u32 %v9996, 7
    %v9998 = vsub.s32 0, %v9997
    %v9999 = vrot.slane %v9871, %v9998
    %v10000 = vlaneseq
    %v10001 = vshrl.u32 %v10000, 7
    %v10002 = vsub.s32 0, %v10001
    %v10003 = vrot.slane %v9880, %v10002
    %v10004 = vlaneseq
    %v10005 = vshrl.u32 %v10004, 7
    %v10006 = vsub.s32 0, %v10005
    %v10007 = vrot.slane %v9889, %v10006
    %v10008 = vlaneseq
    %v10009 = vshrl.u32 %v10008, 7
    %v10010 = vsub.s32 0, %v10009
    %v10011 = vrot.slane %v9898, %v10010
    %v10012 = vlaneseq
    %v10013 = vshrl.u32 %v10012, 7
    %v10014 = vsub.s32 0, %v10013
    %v10015 = vrot.slane %v9907, %v10014
    %v10016 = vlaneseq
    %v10017 = vshrl.u32 %v10016, 7
    %v10018 = vsub.s32 0, %v10017
    %v10019 = vrot.slane %v9916, %v10018
    %v10020 = vlaneseq
    %v10021 = vshrl.u32 %v10020, 7
    %v10022 = vsub.s32 0, %v10021
    %v10023 = vrot.slane %v9925, %v10022
    %v10024 = vlaneseq
    %v10025 = vshrl.u32 %v10024, 7
    %v10026 = vsub.s32 0, %v10025
    %v10027 = vrot.slane %v9934, %v10026
    %v10028 = vlaneseq
    %v10029 = vshrl.u32 %v10028, 7
    %v10030 = vsub.s32 0, %v10029
    %v10031 = vrot.slane %v9943, %v10030
    %v10032 = vlaneseq
    %v10033 = vshrl.u32 %v10032, 7
    %v10034 = vsub.s32 0, %v10033
    %v10035 = vrot.slane %v9952, %v10034
    %v10036 = vlaneseq
    %v10037 = vshrl.u32 %v10036, 7
    %v10038 = vsub.s32 0, %v10037
    %v10039 = vrot.slane %v9961, %v10038
    %v10040 = vlaneseq
    %v10041 = vshrl.u32 %v10040, 7
    %v10042 = vsub.s32 0, %v10041
    %v10043 = vrot.slane %v9970, %v10042
    %v10044 = vlaneseq
    %v10045 = vshrl.u32 %v10044, 7
    %v10046 = vsub.s32 0, %v10045
    %v10047 = vrot.slane %v9979, %v10046
    %v10048 = vsub.f32 %v9842, %v9987
    %v10049 = vsub.f32 %v9846, %v9987
    %v10050 = vsub.f32 %v9851, %v9991
    %v10051 = vsub.f32 %v9855, %v9991
    %v10052 = vsub.f32 %v9860, %v9995
    %v10053 = vsub.f32 %v9864, %v9995
    %v10054 = vsub.f32 %v9869, %v9999
    %v10055 = vsub.f32 %v9873, %v9999
    %v10056 = vsub.f32 %v9878, %v10003
    %v10057 = vsub.f32 %v9882, %v10003
    %v10058 = vsub.f32 %v9887, %v10007
    %v10059 = vsub.f32 %v9891, %v10007
    %v10060 = vsub.f32 %v9896, %v10011
    %v10061 = vsub.f32 %v9900, %v10011
    %v10062 = vsub.f32 %v9905, %v10015
    %v10063 = vsub.f32 %v9909, %v10015
    %v10064 = vsub.f32 %v9914, %v10019
    %v10065 = vsub.f32 %v9918, %v10019
    %v10066 = vsub.f32 %v9923, %v10023
    %v10067 = vsub.f32 %v9927, %v10023
    %v10068 = vsub.f32 %v9932, %v10027
    %v10069 = vsub.f32 %v9936, %v10027
    %v10070 = vsub.f32 %v9941, %v10031
    %v10071 = vsub.f32 %v9945, %v10031
    %v10072 = vsub.f32 %v9950, %v10035
    %v10073 = vsub.f32 %v9954, %v10035
    %v10074 = vsub.f32 %v9959, %v10039
    %v10075 = vsub.f32 %v9963, %v10039
    %v10076 = vsub.f32 %v9968, %v10043
    %v10077 = vsub.f32 %v9972, %v10043
    %v10078 = vsub.f32 %v9977, %v10047
    %v10079 = vsub.f32 %v9981, %v10047
    %v10080 = vadd.f32 %v10048, %v7046
    %v10081 = vadd.f32 %v10049, %v7052
    %v10082 = vadd.f32 %v10050, %v7058
    %v10083 = vadd.f32 %v10051, %v7064
    %v10084 = vadd.f32 %v10052, %v7070
    %v10085 = vadd.f32 %v10053, %v7076
    %v10086 = vadd.f32 %v10054, %v7082
    %v10087 = vadd.f32 %v10055, %v7088
    %v10088 = vadd.f32 %v10056, %v7094
    %v10089 = vadd.f32 %v10057, %v7100
    %v10090 = vadd.f32 %v10058, %v7106
    %v10091 = vadd.f32 %v10059, %v7112
    %v10092 = vadd.f32 %v10060, %v7118
    %v10093 = vadd.f32 %v10061, %v7124
    %v10094 = vadd.f32 %v10062, %v7130
    %v10095 = vadd.f32 %v10063, %v7136
    %v10096 = vadd.f32 %v10064, %v7142
    %v10097 = vadd.f32 %v10065, %v7148
    %v10098 = vadd.f32 %v10066, %v7154
    %v10099 = vadd.f32 %v10067, %v7160
    %v10100 = vadd.f32 %v10068, %v7166
    %v10101 = vadd.f32 %v10069, %v7172
    %v10102 = vadd.f32 %v10070, %v7178
    %v10103 = vadd.f32 %v10071, %v7184
    %v10104 = vadd.f32 %v10072, %v7190
    %v10105 = vadd.f32 %v10073, %v7196
    %v10106 = vadd.f32 %v10074, %v7202
    %v10107 = vadd.f32 %v10075, %v7208
    %v10108 = vadd.f32 %v10076, %v7214
    %v10109 = vadd.f32 %v10077, %v7220
    %v10110 = vadd.f32 %v10078, %v7226
    %v10111 = vadd.f32 %v10079, %v7232
    %v10112 = vmul.f32 %v10080, 0.1
    %v10113 = vmul.f32 %v10081, 0.1
    %v10114 = vmul.f32 %v10082, 0.1
    %v10115 = vmul.f32 %v10083, 0.1
    %v10116 = vmul.f32 %v10084, 0.1
    %v10117 = vmul.f32 %v10085, 0.1
    %v10118 = vmul.f32 %v10086, 0.1
    %v10119 = vmul.f32 %v10087, 0.1
    %v10120 = vmul.f32 %v10088, 0.1
    %v10121 = vmul.f32 %v10089, 0.1
    %v10122 = vmul.f32 %v10090, 0.1
    %v10123 = vmul.f32 %v10091, 0.1
    %v10124 = vmul.f32 %v10092, 0.1
    %v10125 = vmul.f32 %v10093, 0.1
    %v10126 = vmul.f32 %v10094, 0.1
    %v10127 = vmul.f32 %v10095, 0.1
    %v10128 = vmul.f32 %v10096, 0.1
    %v10129 = vmul.f32 %v10097, 0.1
    %v10130 = vmul.f32 %v10098, 0.1
    %v10131 = vmul.f32 %v10099, 0.1
    %v10132 = vmul.f32 %v10100, 0.1
    %v10133 = vmul.f32 %v10101, 0.1
    %v10134 = vmul.f32 %v10102, 0.1
    %v10135 = vmul.f32 %v10103, 0.1
    %v10136 = vmul.f32 %v10104, 0.1
    %v10137 = vmul.f32 %v10105, 0.1
    %v10138 = vmul.f32 %v10106, 0.1
    %v10139 = vmul.f32 %v10107, 0.1
    %v10140 = vmul.f32 %v10108, 0.1
    %v10141 = vmul.f32 %v10109, 0.1
    %v10142 = vmul.f32 %v10110, 0.1
    %v10143 = vmul.f32 %v10111, 0.1
    %v10144 = vmax.f32 %v10080, %v10112
    %v10145 = vmax.f32 %v10081, %v10113
    %v10146 = vmax.f32 %v10082, %v10114
    %v10147 = vmax.f32 %v10083, %v10115
    %v10148 = vmax.f32 %v10084, %v10116
    %v10149 = vmax.f32 %v10085, %v10117
    %v10150 = vmax.f32 %v10086, %v10118
    %v10151 = vmax.f32 %v10087, %v10119
    %v10152 = vmax.f32 %v10088, %v10120
    %v10153 = vmax.f32 %v10089, %v10121
    %v10154 = vmax.f32 %v10090, %v10122
    %v10155 = vmax.f32 %v10091, %v10123
    %v10156 = vmax.f32 %v10092, %v10124
    %v10157 = vmax.f32 %v10093, %v10125
    %v10158 = vmax.f32 %v10094, %v10126
    %v10159 = vmax.f32 %v10095, %v10127
    %v10160 = vmax.f32 %v10096, %v10128
    %v10161 = vmax.f32 %v10097, %v10129
    %v10162 = vmax.f32 %v10098, %v10130
    %v10163 = vmax.f32 %v10099, %v10131
    %v10164 = vmax.f32 %v10100, %v10132
    %v10165 = vmax.f32 %v10101, %v10133
    %v10166 = vmax.f32 %v10102, %v10134
    %v10167 = vmax.f32 %v10103, %v10135
    %v10168 = vmax.f32 %v10104, %v10136
    %v10169 = vmax.f32 %v10105, %v10137
    %v10170 = vmax.f32 %v10106, %v10138
    %v10171 = vmax.f32 %v10107, %v10139
    %v10172 = vmax.f32 %v10108, %v10140
    %v10173 = vmax.f32 %v10109, %v10141
    %v10174 = vmax.f32 %v10110, %v10142
    %v10175 = vmax.f32 %v10111, %v10143
    %v10176 = vmax.f32 %v10144, %v10145
    %v10177 = vrot.slane %v10176, 4
    %v10178 = vmax.f32 %v10176, %v10177
    %v10179 = vrot.slane %v10178, 2
    %v10180 = vmax.f32 %v10178, %v10179
    %v10181 = vrot.slane %v10180, 1
    %v10182 = vmax.f32 %v10180, %v10181
    %v10183 = vmax.f32 %v10146, %v10147
    %v10184 = vrot.slane %v10183, 4
    %v10185 = vmax.f32 %v10183, %v10184
    %v10186 = vrot.slane %v10185, 2
    %v10187 = vmax.f32 %v10185, %v10186
    %v10188 = vrot.slane %v10187, 1
    %v10189 = vmax.f32 %v10187, %v10188
    %v10190 = vmax.f32 %v10148, %v10149
    %v10191 = vrot.slane %v10190, 4
    %v10192 = vmax.f32 %v10190, %v10191
    %v10193 = vrot.slane %v10192, 2
    %v10194 = vmax.f32 %v10192, %v10193
    %v10195 = vrot.slane %v10194, 1
    %v10196 = vmax.f32 %v10194, %v10195
    %v10197 = vmax.f32 %v10150, %v10151
    %v10198 = vrot.slane %v10197, 4
    %v10199 = vmax.f32 %v10197, %v10198
    %v10200 = vrot.slane %v10199, 2
    %v10201 = vmax.f32 %v10199, %v10200
    %v10202 = vrot.slane %v10201, 1
    %v10203 = vmax.f32 %v10201, %v10202
    %v10204 = vmax.f32 %v10152, %v10153
    %v10205 = vrot.slane %v10204, 4
    %v10206 = vmax.f32 %v10204, %v10205
    %v10207 = vrot.slane %v10206, 2
    %v10208 = vmax.f32 %v10206, %v10207
    %v10209 = vrot.slane %v10208, 1
    %v10210 = vmax.f32 %v10208, %v10209
    %v10211 = vmax.f32 %v10154, %v10155
    %v10212 = vrot.slane %v10211, 4
    %v10213 = vmax.f32 %v10211, %v10212
    %v10214 = vrot.slane %v10213, 2
    %v10215 = vmax.f32 %v10213, %v10214
    %v10216 = vrot.slane %v10215, 1
    %v10217 = vmax.f32 %v10215, %v10216
    %v10218 = vmax.f32 %v10156, %v10157
    %v10219 = vrot.slane %v10218, 4
    %v10220 = vmax.f32 %v10218, %v10219
    %v10221 = vrot.slane %v10220, 2
    %v10222 = vmax.f32 %v10220, %v10221
    %v10223 = vrot.slane %v10222, 1
    %v10224 = vmax.f32 %v10222, %v10223
    %v10225 = vmax.f32 %v10158, %v10159
    %v10226 = vrot.slane %v10225, 4
    %v10227 = vmax.f32 %v10225, %v10226
    %v10228 = vrot.slane %v10227, 2
    %v10229 = vmax.f32 %v10227, %v10228
    %v10230 = vrot.slane %v10229, 1
    %v10231 = vmax.f32 %v10229, %v10230
    %v10232 = vmax.f32 %v10160, %v10161
    %v10233 = vrot.slane %v10232, 4
    %v10234 = vmax.f32 %v10232, %v10233
    %v10235 = vrot.slane %v10234, 2
    %v10236 = vmax.f32 %v10234, %v10235
    %v10237 = vrot.slane %v10236, 1
    %v10238 = vmax.f32 %v10236, %v10237
    %v10239 = vmax.f32 %v10162, %v10163
    %v10240 = vrot.slane %v10239, 4
    %v10241 = vmax.f32 %v10239, %v10240
    %v10242 = vrot.slane %v10241, 2
    %v10243 = vmax.f32 %v10241, %v10242
    %v10244 = vrot.slane %v10243, 1
    %v10245 = vmax.f32 %v10243, %v10244
    %v10246 = vmax.f32 %v10164, %v10165
    %v10247 = vrot.slane %v10246, 4
    %v10248 = vmax.f32 %v10246, %v10247
    %v10249 = vrot.slane %v10248, 2
    %v10250 = vmax.f32 %v10248, %v10249
    %v10251 = vrot.slane %v10250, 1
    %v10252 = vmax.f32 %v10250, %v10251
    %v10253 = vmax.f32 %v10166, %v10167
    %v10254 = vrot.slane %v10253, 4
    %v10255 = vmax.f32 %v10253, %v10254
    %v10256 = vrot.slane %v10255, 2
    %v10257 = vmax.f32 %v10255, %v10256
    %v10258 = vrot.slane %v10257, 1
    %v10259 = vmax.f32 %v10257, %v10258
    %v10260 = vmax.f32 %v10168, %v10169
    %v10261 = vrot.slane %v10260, 4
    %v10262 = vmax.f32 %v10260, %v10261
    %v10263 = vrot.slane %v10262, 2
    %v10264 = vmax.f32 %v10262, %v10263
    %v10265 = vrot.slane %v10264, 1
    %v10266 = vmax.f32 %v10264, %v10265
    %v10267 = vmax.f32 %v10170, %v10171
    %v10268 = vrot.slane %v10267, 4
    %v10269 = vmax.f32 %v10267, %v10268
    %v10270 = vrot.slane %v10269, 2
    %v10271 = vmax.f32 %v10269, %v10270
    %v10272 = vrot.slane %v10271, 1
    %v10273 = vmax.f32 %v10271, %v10272
    %v10274 = vmax.f32 %v10172, %v10173
    %v10275 = vrot.slane %v10274, 4
    %v10276 = vmax.f32 %v10274, %v10275
    %v10277 = vrot.slane %v10276, 2
    %v10278 = vmax.f32 %v10276, %v10277
    %v10279 = vrot.slane %v10278, 1
    %v10280 = vmax.f32 %v10278, %v10279
    %v10281 = vmax.f32 %v10174, %v10175
    %v10282 = vrot.slane %v10281, 4
    %v10283 = vmax.f32 %v10281, %v10282
    %v10284 = vrot.slane %v10283, 2
    %v10285 = vmax.f32 %v10283, %v10284
    %v10286 = vrot.slane %v10285, 1
    %v10287 = vmax.f32 %v10285, %v10286
    %v10304 = vsel %vm8018, %v10189, %v10182
    %v10305 = vsel %vm8020, %v10196, %v10304
    %v10306 = vsel %vm8022, %v10203, %v10305
    %v10307 = vsel %vm8024, %v10210, %v10306
    %v10308 = vsel %vm8026, %v10217, %v10307
    %v10309 = vsel %vm8028, %v10224, %v10308
    %v10310 = vsel %vm8030, %v10231, %v10309
    %v10311 = vsel %vm8018, %v10245, %v10238
    %v10312 = vsel %vm8020, %v10252, %v10311
    %v10313 = vsel %vm8022, %v10259, %v10312
    %v10314 = vsel %vm8024, %v10266, %v10313
    %v10315 = vsel %vm8026, %v10273, %v10314
    %v10316 = vsel %vm8028, %v10280, %v10315
    %v10317 = vsel %vm8030, %v10287, %v10316
    %10320 = vst [vmem:[#allocation13] sm:$0xff] %v10310
    %10321 = vst [vmem:[#allocation13 + $0x8] sm:$0xff] %v10317
    // Predicated region
    $region50: #{single_hierarchy_forward.1} parent=1 // pred_check
      _
    $region51: #{single_hierarchy_forward.1} parent=1 // pred_check_branch
      %10323 = sbr.rel (0) target = $region53
    $region52: #{single_hierarchy_forward.1} parent=1 // pred_region
      %s10325 = ssub.s32 256, 256
      %10326 = vsyncadd [#allocation4], %s10325
      %s10327 = sshll.u32 [#allocation13], 4
      %s10328 = int_to_ptr.vmem [resolvable:$true] %s10327
      %10333 = dma.vmem_to_hbm [thread:$0]  %s10328, 256, %s6, [#allocation4], 128, 128, 8
    $region53: #{single_hierarchy_forward.1} parent=1 // pred_fallthru
      _
    // Predicated region
    $region54: #{single_hierarchy_forward.1} parent=1 // pred_check
      _
    $region55: #{single_hierarchy_forward.1} parent=1 // pred_check_branch
      %10335 = sbr.rel (0) target = $region57
    $region56: #{single_hierarchy_forward.1} parent=1 // pred_region
      %10336 = dma.done [#allocation4], 256
    $region57: #{single_hierarchy_forward.1} parent=1 // pred_fallthru
      _
    %10337 = vsyncpa [#allocation3], 1
    %10338 = vsyncpa [#allocation6], 1
    %10339 = vsyncpa [#allocation9], 1
    %10340 = vsyncpa [#allocation12], 1
    %10341 = vsyncpa [#allocation4], 1

</llo_original>
